<compile_context>
chip_gen: v7x
topology: tpu7x:2x2x1
jax: 0.10.0
libtpu: 0.0.40
codegen_flags: <defaults>
</compile_context>

<pallas_src>
import jax
import jax.numpy as jnp
from jax.experimental import pallas as pl
from jax.experimental.pallas import tpu as pltpu


# ----------------------------------------------------------------------------
# Pallas kernels
# ----------------------------------------------------------------------------
def _conv_bn_lrelu_kernel(p_ref, w_ref, shift_ref, o_ref):
    """patches (tm, K) @ weight (K, Cout) [BN scale pre-folded] + shift -> LeakyReLU."""
    acc = jnp.dot(p_ref[...], w_ref[...], preferred_element_type=jnp.float32)
    y = acc + shift_ref[...]
    o_ref[...] = jnp.where(y >= 0.0, y, 0.2 * y).astype(o_ref.dtype)


def _head_kernel(p_ref, w4_ref, s4_ref, w1_ref, b1_ref, w2_ref, b2_ref, o_ref,
                 yflat_ref):
    """Fused conv4 (+folded BN, LeakyReLU) + fc1 (+ReLU) + fc2 (+sigmoid).

    p_ref rows are ordered (spatial s = h*4+w, batch-within-block nw) with 8 batch rows
    per block, so every 8-row slice below is sublane-tile aligned.  The conv4 activation
    is relaid out once into `yflat_ref` as (batch, s*C4 + c); fc1 is then a single
    K = 16*C4 matmul (the PyTorch NCHW flatten permutation is folded into w1).
    """
    c4 = w4_ref.shape[1]

    # conv4 + BN shift + LeakyReLU(0.2), f32 accumulation -> (16*8, c4)
    y = jnp.dot(p_ref[...], w4_ref[...], preferred_element_type=jnp.float32)
    y = y + s4_ref[...]
    y = jnp.where(y >= 0.0, y, 0.2 * y)

    # One-time relayout (s-major rows, c lanes) -> (batch rows, s*c4 + c lanes).
    for s in range(16):
        yflat_ref[:, s * c4:(s + 1) * c4] = y[s * 8:(s + 1) * 8, :].astype(yflat_ref.dtype)

    # fc1 as a single K = 16*c4 matmul, then ReLU.
    h = jnp.dot(yflat_ref[...], w1_ref[...], preferred_element_type=jnp.float32)
    h = jnp.maximum(h + b1_ref[...], 0.0)

    # fc2 + sigmoid
    z = jnp.dot(h, w2_ref[...], preferred_element_type=jnp.float32) + b2_ref[...]
    o_ref[...] = 1.0 / (1.0 + jnp.exp(-z))


# ----------------------------------------------------------------------------
# Tiling helpers
# ----------------------------------------------------------------------------
def _tensorcores_per_chip():
    """Splitting a grid that would otherwise be 1 step only pays off with >1 TC (v7x)."""
    try:
        kind = jax.devices()[0].device_kind.lower()
    except Exception:
        return 1
    return 2 if "v7" in kind else 1


def _pick_tile(m, bytes_per_row, n_cores=1, max_block_bytes=1 << 20):
    """Largest multiple-of-8 divisor of m whose input block stays <= max_block_bytes.
    On multi-TensorCore chips, split once more so the grid has >= 2 parallel steps."""
    if m % 8 != 0:
        return m
    cap = max(8, max_block_bytes // max(1, bytes_per_row))
    best = 8
    t = 8
    while t <= min(m, cap):
        if m % t == 0:
            best = t
        t += 8
    if n_cores > 1 and best == m and m >= 16 and (m // 2) % 8 == 0:
        best = m // 2
    return best


# ----------------------------------------------------------------------------
# Pallas wrappers
# ----------------------------------------------------------------------------
def conv_bn_lrelu(patches, w, shift, n_cores=1):
    """patches: (M, K) bf16, w: (K, Cout) bf16 (BN scale folded), shift: (1, Cout) f32."""
    M, K = patches.shape
    Cout = w.shape[1]
    tm = _pick_tile(M, K * patches.dtype.itemsize, n_cores=n_cores)
    assert M % tm == 0
    return pl.pallas_call(
        _conv_bn_lrelu_kernel,
        out_shape=jax.ShapeDtypeStruct((M, Cout), jnp.bfloat16),
        grid_spec=pltpu.PrefetchScalarGridSpec(
            num_scalar_prefetch=0,
            grid=(M // tm,),
            in_specs=[
                pl.BlockSpec((tm, K), lambda i: (i, 0)),
                pl.BlockSpec((K, Cout), lambda i: (0, 0)),
                pl.BlockSpec((1, Cout), lambda i: (0, 0)),
            ],
            out_specs=pl.BlockSpec((tm, Cout), lambda i: (i, 0)),
        ),
        compiler_params=pltpu.CompilerParams(dimension_semantics=("parallel",)),
    )(patches, w, shift)


def head_fused(p4, w4, s4, w1, b1, w2, b2, nb_blocks):
    """Fused conv4 + fc1 + fc2 with a parallel grid over 8-row batch blocks."""
    M, K4 = p4.shape
    mblk = M // nb_blocks
    assert mblk == 16 * 8 and M % nb_blocks == 0
    C4 = w4.shape[1]
    return pl.pallas_call(
        _head_kernel,
        out_shape=jax.ShapeDtypeStruct((nb_blocks * 8, 1), jnp.float32),
        grid_spec=pltpu.PrefetchScalarGridSpec(
            num_scalar_prefetch=0,
            grid=(nb_blocks,),
            in_specs=[
                pl.BlockSpec((mblk, K4), lambda i: (i, 0)),
                pl.BlockSpec(w4.shape, lambda i: (0, 0)),
                pl.BlockSpec(s4.shape, lambda i: (0, 0)),
                pl.BlockSpec(w1.shape, lambda i: (0, 0)),
                pl.BlockSpec(b1.shape, lambda i: (0, 0)),
                pl.BlockSpec(w2.shape, lambda i: (0, 0)),
                pl.BlockSpec(b2.shape, lambda i: (0, 0)),
            ],
            out_specs=pl.BlockSpec((8, 1), lambda i: (i, 0)),
            scratch_shapes=[pltpu.VMEM((8, 16 * C4), jnp.bfloat16)],
        ),
        compiler_params=pltpu.CompilerParams(dimension_semantics=("parallel",)),
    )(p4, w4, s4, w1, b1, w2, b2)


# ----------------------------------------------------------------------------
# JAX glue: im2col for 4x4 / stride 2 / pad 1 conv (real channel counts only)
# ----------------------------------------------------------------------------
def im2col_4x4_s2_p1(x_nhwc):
    """x: (N, H, W, C) -> patches (N, OH, OW, 16, C); tap index t = kh*4 + kw."""
    N, H, W, C = x_nhwc.shape
    xp = jnp.pad(x_nhwc, ((0, 0), (1, 1), (1, 1), (0, 0)))
    OH, OW = H // 2, W // 2
    cols = []
    for i in range(4):
        for j in range(4):
            cols.append(xp[:, i:i + 2 * OH:2, j:j + 2 * OW:2, :])
    p = jnp.stack(cols, axis=3)                      # (N, OH, OW, 16, C)
    return p, (N, OH, OW)


# ----------------------------------------------------------------------------
# Parameters: raw (PyTorch-layout, f32) and packed (kernel-ready) versions
# ----------------------------------------------------------------------------
def make_params(key, num_node=8):
    n = num_node
    conv_chs = [(1, n), (n, 2 * n), (2 * n, 4 * n), (4 * n, 8 * n)]
    keys = jax.random.split(key, 24)
    ki = 0
    raw = {}
    for li, (cin, cout) in enumerate(conv_chs, start=1):
        raw[f"conv{li}_w"] = 0.05 * jax.random.normal(keys[ki], (cout, cin, 4, 4), jnp.float32); ki += 1
        gamma = 1.0 + 0.1 * jax.random.normal(keys[ki], (cout,), jnp.float32); ki += 1
        beta = 0.1 * jax.random.normal(keys[ki], (cout,), jnp.float32); ki += 1
        mean = 0.05 * jax.random.normal(keys[ki], (cout,), jnp.float32); ki += 1
        var = 0.5 + jnp.abs(jax.random.normal(keys[ki], (cout,), jnp.float32)); ki += 1
        raw[f"bn{li}"] = (gamma, beta, mean, var)
    fc1_in, fc1_out = 16 * 8 * n, 8 * n
    raw["fc1_w"] = 0.02 * jax.random.normal(keys[ki], (fc1_out, fc1_in), jnp.float32); ki += 1
    raw["fc1_b"] = 0.01 * jax.random.normal(keys[ki], (fc1_out,), jnp.float32); ki += 1
    raw["fc2_w"] = 0.02 * jax.random.normal(keys[ki], (1, fc1_out), jnp.float32); ki += 1
    raw["fc2_b"] = 0.01 * jax.random.normal(keys[ki], (1,), jnp.float32); ki += 1
    return raw


def pack_params(raw, num_node=8):
    """Fold eval-mode BN scale into weights, fold the NCHW flatten permutation into fc1,
    and cast matmul operands to bf16.  No channel zero-padding anywhere."""
    n = num_node
    eps = 1e-5
    conv_chs = [(1, n), (n, 2 * n), (2 * n, 4 * n), (4 * n, 8 * n)]
    p = {}
    for li, (cin, cout) in enumerate(conv_chs, start=1):
        gamma, beta, mean, var = raw[f"bn{li}"]
        scale = gamma / jnp.sqrt(var + eps)
        shift = beta - mean * scale
        w = jnp.transpose(raw[f"conv{li}_w"], (2, 3, 1, 0)) * scale       # (4,4,cin,cout)
        p[f"conv{li}_w"] = w.reshape(16 * cin, cout).astype(jnp.bfloat16)
        p[f"conv{li}_shift"] = shift.reshape(1, cout).astype(jnp.float32)

    c4 = 8 * n          # conv4 output channels
    f1 = 8 * n          # fc1 output features
    # fc1 weight reindexed so row index = s*c4 + c matches the kernel's in-VMEM flatten;
    # PyTorch's NCHW .view() flat index is c*16 + s.
    w1 = raw["fc1_w"].reshape(f1, c4, 16)                         # [f, c, s]
    w1 = jnp.transpose(w1, (2, 1, 0)).reshape(16 * c4, f1)        # [s*c4 + c, f]
    p["fc1_w"] = w1.astype(jnp.bfloat16)
    p["fc1_b"] = raw["fc1_b"].reshape(1, f1).astype(jnp.float32)
    p["fc2_w"] = jnp.transpose(raw["fc2_w"]).astype(jnp.float32)  # (f1, 1)
    p["fc2_b"] = raw["fc2_b"].reshape(1, 1).astype(jnp.float32)
    return p


# ----------------------------------------------------------------------------
# Forward pass (matches Discriminator.forward, eval-mode BN)
# ----------------------------------------------------------------------------
def discriminator_forward(params, x_nchw):
    n_cores = _tensorcores_per_chip()
    x = jnp.transpose(x_nchw, (0, 2, 3, 1)).astype(jnp.bfloat16)          # NCHW -> NHWC

    # conv1..conv3: im2col (XLA glue, real channel counts) + Pallas matmul kernel.
    for li in (1, 2, 3):
        p, (N, OH, OW) = im2col_4x4_s2_p1(x)
        y = conv_bn_lrelu(p.reshape(N * OH * OW, -1),
                          params[f"conv{li}_w"], params[f"conv{li}_shift"], n_cores)
        x = y.reshape(N, OH, OW, -1)

    # conv4 + fc1 + fc2 fused head.  Batch padded to a multiple of 8; patch rows are
    # ordered (batch-block, spatial s, batch-within-block) so each grid step handles a
    # (16*8, K4) block and all in-kernel slices are 8-row aligned.
    p, (N, OH, OW) = im2col_4x4_s2_p1(x)                                  # (N, 4, 4, 16, C3)
    npad = ((N + 7) // 8) * 8
    nb = npad // 8
    p = jnp.pad(p, ((0, npad - N), (0, 0), (0, 0), (0, 0), (0, 0)))
    c3 = p.shape[-1]
    p4 = p.reshape(nb, 8, OH, OW, 16, c3)
    p4 = jnp.transpose(p4, (0, 2, 3, 1, 4, 5)).reshape(nb * OH * OW * 8, 16 * c3)

    out = head_fused(p4, params["conv4_w"], params["conv4_shift"],
                     params["fc1_w"], params["fc1_b"],
                     params["fc2_w"], params["fc2_b"], nb)
    return out.reshape(-1)[:N]


# ----------------------------------------------------------------------------
# References
# ----------------------------------------------------------------------------
def reference_forward_packed(params, x_nchw):
    """Same math/precision as the Pallas path (bf16 operands, f32 accumulation)."""
    x = jnp.transpose(x_nchw, (0, 2, 3, 1)).astype(jnp.bfloat16)
    for li in (1, 2, 3):
        p, (N, OH, OW) = im2col_4x4_s2_p1(x)
        y = jnp.dot(p.reshape(N * OH * OW, -1), params[f"conv{li}_w"],
                    preferred_element_type=jnp.float32) + params[f"conv{li}_shift"]
        y = jnp.where(y >= 0.0, y, 0.2 * y).astype(jnp.bfloat16)
        x = y.reshape(N, OH, OW, -1)
    p, (N, OH, OW) = im2col_4x4_s2_p1(x)
    c3 = p.shape[-1]
    y = jnp.dot(p.reshape(N * 16, 16 * c3), params["conv4_w"],
                preferred_element_type=jnp.float32) + params["conv4_shift"]
    y = jnp.where(y >= 0.0, y, 0.2 * y)
    c4 = y.shape[-1]
    yflat = y.reshape(N, 16 * c4).astype(jnp.bfloat16)        # feature index = s*c4 + c
    h = jnp.maximum(jnp.dot(yflat, params["fc1_w"], preferred_element_type=jnp.float32)
                    + params["fc1_b"], 0.0)
    z = jnp.dot(h, params["fc2_w"], preferred_element_type=jnp.float32) + params["fc2_b"]
    return (1.0 / (1.0 + jnp.exp(-z))).reshape(-1)


def reference_forward_f32(raw, x_nchw, num_node=8):
    """Module-faithful f32 reference (eval-mode BN), PyTorch layouts."""
    n = num_node
    eps = 1e-5
    x = jnp.transpose(x_nchw, (0, 2, 3, 1)).astype(jnp.float32)
    conv_chs = [(1, n), (n, 2 * n), (2 * n, 4 * n), (4 * n, 8 * n)]
    for li, (cin, cout) in enumerate(conv_chs, start=1):
        p, (N, OH, OW) = im2col_4x4_s2_p1(x)
        w = jnp.transpose(raw[f"conv{li}_w"], (2, 3, 1, 0)).reshape(16 * cin, cout)
        gamma, beta, mean, var = raw[f"bn{li}"]
        y = p.reshape(N * OH * OW, 16 * cin) @ w
        y = (y - mean) / jnp.sqrt(var + eps) * gamma + beta
        y = jnp.where(y >= 0.0, y, 0.2 * y)
        x = y.reshape(N, OH, OW, cout)
    flat = jnp.transpose(x, (0, 3, 1, 2)).reshape(x.shape[0], -1)          # NCHW flatten
    h = jnp.maximum(flat @ raw["fc1_w"].T + raw["fc1_b"], 0.0)
    z = h @ raw["fc2_w"].T + raw["fc2_b"]
    return (1.0 / (1.0 + jnp.exp(-z))).reshape(-1)


if __name__ == "__main__":
    NUM_NODE = 8     # small synthetic config (PyTorch default is 64; packing is generic)
    BATCH = 2
    key = jax.random.PRNGKey(0)
    k_param, k_x = jax.random.split(key)

    raw = make_params(k_param, num_node=NUM_NODE)
    params = pack_params(raw, num_node=NUM_NODE)
    # fc1 expects 4*4*8*num_node features => 64x64 spatial input, 1 channel.
    x = jax.random.normal(k_x, (BATCH, 1, 64, 64), jnp.float32)

    forward = jax.jit(discriminator_forward)
    out = jax.block_until_ready(forward(params, x))
    assert out.shape == (BATCH,), out.shape

    # Same-precision (bf16/f32) plain-JAX reference: tight tolerance.
    ref = jax.block_until_ready(reference_forward_packed(params, x))
    assert jnp.allclose(out, ref, atol=5e-3, rtol=5e-3), (out, ref)

    # Module-faithful f32 reference: loose tolerance covers the bf16 matmul inputs.
    ref32 = jax.block_until_ready(reference_forward_f32(raw, x, num_node=NUM_NODE))
    assert jnp.allclose(out, ref32, atol=5e-2, rtol=5e-2), (out, ref32)

    print("KERNEL_OK")
</pallas_src>

<mosaic_0001>
module attributes {stable_mosaic.version = 11 : i64} {
  func.func @_conv_bn_lrelu_kernel(%arg0: i32, %arg1: memref<2048x16xbf16, #tpu.memory_space<vmem>>, %arg2: memref<16x8xbf16, #tpu.memory_space<vmem>>, %arg3: memref<1x8xf32, #tpu.memory_space<vmem>>, %arg4: memref<2048x8xbf16, #tpu.memory_space<vmem>>) attributes {dimension_semantics = [#tpu.dimension_semantics<parallel>], iteration_bounds = array<i64: 1>, scalar_prefetch = 0 : i64, scratch_operands = 0 : i64, tpu.core_type = #tpu.core_type<tc>, window_params = [{transform_indices = @transform_0, window_bounds = array<i64: 2048, 16>}, {pipeline_mode = #tpu.pipeline_mode<synchronous>, transform_indices = @transform_1, window_bounds = array<i64: 16, 8>}, {pipeline_mode = #tpu.pipeline_mode<synchronous>, transform_indices = @transform_2, window_bounds = array<i64: 1, 8>}, {transform_indices = @transform_3, window_bounds = array<i64: 2048, 8>}]} {
    %c0 = arith.constant 0 : index
    %c0_0 = arith.constant 0 : index
    %0 = vector.load %arg1[%c0, %c0_0] : memref<2048x16xbf16, #tpu.memory_space<vmem>>, vector<2048x16xbf16>
    %c0_1 = arith.constant 0 : index
    %c0_2 = arith.constant 0 : index
    %1 = vector.load %arg2[%c0_1, %c0_2] : memref<16x8xbf16, #tpu.memory_space<vmem>>, vector<16x8xbf16>
    %cst = arith.constant dense<0.000000e+00> : vector<2048x8xf32>
    %2 = tpu.matmul %0, %1, %cst {dimension_numbers = #tpu.dot_dimension_numbers<[1], [0], [0], [1], [0, 0, 1, 1], [], []>} : vector<2048x16xbf16>, vector<16x8xbf16>, vector<2048x8xf32> -> vector<2048x8xf32>
    %c0_3 = arith.constant 0 : index
    %c0_4 = arith.constant 0 : index
    %3 = vector.load %arg3[%c0_3, %c0_4] : memref<1x8xf32, #tpu.memory_space<vmem>>, vector<1x8xf32>
    %4 = vector.broadcast %3 : vector<1x8xf32> to vector<2048x8xf32>
    %5 = arith.addf %2, %4 : vector<2048x8xf32>
    %cst_5 = arith.constant 0.000000e+00 : f32
    %6 = vector.broadcast %cst_5 : f32 to vector<2048x8xf32>
    %7 = arith.cmpf oge, %5, %6 : vector<2048x8xf32>
    %cst_6 = arith.constant 2.000000e-01 : f32
    %8 = vector.broadcast %cst_6 : f32 to vector<2048x8xf32>
    %9 = arith.mulf %8, %5 : vector<2048x8xf32>
    %10 = arith.select %7, %5, %9 : vector<2048x8xi1>, vector<2048x8xf32>
    %11 = arith.truncf %10 : vector<2048x8xf32> to vector<2048x8xbf16>
    %c0_7 = arith.constant 0 : index
    %c0_8 = arith.constant 0 : index
    %12 = vector.load %arg4[%c0_7, %c0_8] : memref<2048x8xbf16, #tpu.memory_space<vmem>>, vector<2048x8xbf16>
    tpu.vector_store %arg4[%c0_7, %c0_8], %11 {strides = array<i32>} : memref<2048x8xbf16, #tpu.memory_space<vmem>>, vector<2048x8xbf16>,
    return
  }
  func.func @transform_0(%arg0: i32) -> (i32, i32) {
    %c0_i32 = arith.constant 0 : i32
    %c0_i32_0 = arith.constant 0 : i32
    return %arg0, %c0_i32 : i32, i32
  }
  func.func @transform_1(%arg0: i32) -> (i32, i32) {
    %c0_i32 = arith.constant 0 : i32
    %c0_i32_0 = arith.constant 0 : i32
    %c0_i32_1 = arith.constant 0 : i32
    return %c0_i32, %c0_i32_0 : i32, i32
  }
  func.func @transform_2(%arg0: i32) -> (i32, i32) {
    %c0_i32 = arith.constant 0 : i32
    %c0_i32_0 = arith.constant 0 : i32
    %c0_i32_1 = arith.constant 0 : i32
    return %c0_i32, %c0_i32_0 : i32, i32
  }
  func.func @transform_3(%arg0: i32) -> (i32, i32) {
    %c0_i32 = arith.constant 0 : i32
    %c0_i32_0 = arith.constant 0 : i32
    return %arg0, %c0_i32 : i32, i32
  }
}

module attributes {stable_mosaic.version = 11 : i64} {
  func.func @_conv_bn_lrelu_kernel(%arg0: i32, %arg1: memref<512x128xbf16, #tpu.memory_space<vmem>>, %arg2: memref<128x16xbf16, #tpu.memory_space<vmem>>, %arg3: memref<1x16xf32, #tpu.memory_space<vmem>>, %arg4: memref<512x16xbf16, #tpu.memory_space<vmem>>) attributes {dimension_semantics = [#tpu.dimension_semantics<parallel>], iteration_bounds = array<i64: 1>, scalar_prefetch = 0 : i64, scratch_operands = 0 : i64, tpu.core_type = #tpu.core_type<tc>, window_params = [{transform_indices = @transform_0, window_bounds = array<i64: 512, 128>}, {pipeline_mode = #tpu.pipeline_mode<synchronous>, transform_indices = @transform_1, window_bounds = array<i64: 128, 16>}, {pipeline_mode = #tpu.pipeline_mode<synchronous>, transform_indices = @transform_2, window_bounds = array<i64: 1, 16>}, {transform_indices = @transform_3, window_bounds = array<i64: 512, 16>}]} {
    %c0 = arith.constant 0 : index
    %c0_0 = arith.constant 0 : index
    %0 = vector.load %arg1[%c0, %c0_0] : memref<512x128xbf16, #tpu.memory_space<vmem>>, vector<512x128xbf16>
    %c0_1 = arith.constant 0 : index
    %c0_2 = arith.constant 0 : index
    %1 = vector.load %arg2[%c0_1, %c0_2] : memref<128x16xbf16, #tpu.memory_space<vmem>>, vector<128x16xbf16>
    %cst = arith.constant dense<0.000000e+00> : vector<512x16xf32>
    %2 = tpu.matmul %0, %1, %cst {dimension_numbers = #tpu.dot_dimension_numbers<[1], [0], [0], [1], [0, 0, 1, 1], [], []>} : vector<512x128xbf16>, vector<128x16xbf16>, vector<512x16xf32> -> vector<512x16xf32>
    %c0_3 = arith.constant 0 : index
    %c0_4 = arith.constant 0 : index
    %3 = vector.load %arg3[%c0_3, %c0_4] : memref<1x16xf32, #tpu.memory_space<vmem>>, vector<1x16xf32>
    %4 = vector.broadcast %3 : vector<1x16xf32> to vector<512x16xf32>
    %5 = arith.addf %2, %4 : vector<512x16xf32>
    %cst_5 = arith.constant 0.000000e+00 : f32
    %6 = vector.broadcast %cst_5 : f32 to vector<512x16xf32>
    %7 = arith.cmpf oge, %5, %6 : vector<512x16xf32>
    %cst_6 = arith.constant 2.000000e-01 : f32
    %8 = vector.broadcast %cst_6 : f32 to vector<512x16xf32>
    %9 = arith.mulf %8, %5 : vector<512x16xf32>
    %10 = arith.select %7, %5, %9 : vector<512x16xi1>, vector<512x16xf32>
    %11 = arith.truncf %10 : vector<512x16xf32> to vector<512x16xbf16>
    %c0_7 = arith.constant 0 : index
    %c0_8 = arith.constant 0 : index
    %12 = vector.load %arg4[%c0_7, %c0_8] : memref<512x16xbf16, #tpu.memory_space<vmem>>, vector<512x16xbf16>
    tpu.vector_store %arg4[%c0_7, %c0_8], %11 {strides = array<i32>} : memref<512x16xbf16, #tpu.memory_space<vmem>>, vector<512x16xbf16>,
    return
  }
  func.func @transform_0(%arg0: i32) -> (i32, i32) {
    %c0_i32 = arith.constant 0 : i32
    %c0_i32_0 = arith.constant 0 : i32
    return %arg0, %c0_i32 : i32, i32
  }
  func.func @transform_1(%arg0: i32) -> (i32, i32) {
    %c0_i32 = arith.constant 0 : i32
    %c0_i32_0 = arith.constant 0 : i32
    %c0_i32_1 = arith.constant 0 : i32
    return %c0_i32, %c0_i32_0 : i32, i32
  }
  func.func @transform_2(%arg0: i32) -> (i32, i32) {
    %c0_i32 = arith.constant 0 : i32
    %c0_i32_0 = arith.constant 0 : i32
    %c0_i32_1 = arith.constant 0 : i32
    return %c0_i32, %c0_i32_0 : i32, i32
  }
  func.func @transform_3(%arg0: i32) -> (i32, i32) {
    %c0_i32 = arith.constant 0 : i32
    %c0_i32_0 = arith.constant 0 : i32
    return %arg0, %c0_i32 : i32, i32
  }
}

module attributes {stable_mosaic.version = 11 : i64} {
  func.func @_conv_bn_lrelu_kernel(%arg0: i32, %arg1: memref<128x256xbf16, #tpu.memory_space<vmem>>, %arg2: memref<256x32xbf16, #tpu.memory_space<vmem>>, %arg3: memref<1x32xf32, #tpu.memory_space<vmem>>, %arg4: memref<128x32xbf16, #tpu.memory_space<vmem>>) attributes {dimension_semantics = [#tpu.dimension_semantics<parallel>], iteration_bounds = array<i64: 1>, scalar_prefetch = 0 : i64, scratch_operands = 0 : i64, tpu.core_type = #tpu.core_type<tc>, window_params = [{transform_indices = @transform_0, window_bounds = array<i64: 128, 256>}, {pipeline_mode = #tpu.pipeline_mode<synchronous>, transform_indices = @transform_1, window_bounds = array<i64: 256, 32>}, {pipeline_mode = #tpu.pipeline_mode<synchronous>, transform_indices = @transform_2, window_bounds = array<i64: 1, 32>}, {transform_indices = @transform_3, window_bounds = array<i64: 128, 32>}]} {
    %c0 = arith.constant 0 : index
    %c0_0 = arith.constant 0 : index
    %0 = vector.load %arg1[%c0, %c0_0] : memref<128x256xbf16, #tpu.memory_space<vmem>>, vector<128x256xbf16>
    %c0_1 = arith.constant 0 : index
    %c0_2 = arith.constant 0 : index
    %1 = vector.load %arg2[%c0_1, %c0_2] : memref<256x32xbf16, #tpu.memory_space<vmem>>, vector<256x32xbf16>
    %cst = arith.constant dense<0.000000e+00> : vector<128x32xf32>
    %2 = tpu.matmul %0, %1, %cst {dimension_numbers = #tpu.dot_dimension_numbers<[1], [0], [0], [1], [0, 0, 1, 1], [], []>} : vector<128x256xbf16>, vector<256x32xbf16>, vector<128x32xf32> -> vector<128x32xf32>
    %c0_3 = arith.constant 0 : index
    %c0_4 = arith.constant 0 : index
    %3 = vector.load %arg3[%c0_3, %c0_4] : memref<1x32xf32, #tpu.memory_space<vmem>>, vector<1x32xf32>
    %4 = vector.broadcast %3 : vector<1x32xf32> to vector<128x32xf32>
    %5 = arith.addf %2, %4 : vector<128x32xf32>
    %cst_5 = arith.constant 0.000000e+00 : f32
    %6 = vector.broadcast %cst_5 : f32 to vector<128x32xf32>
    %7 = arith.cmpf oge, %5, %6 : vector<128x32xf32>
    %cst_6 = arith.constant 2.000000e-01 : f32
    %8 = vector.broadcast %cst_6 : f32 to vector<128x32xf32>
    %9 = arith.mulf %8, %5 : vector<128x32xf32>
    %10 = arith.select %7, %5, %9 : vector<128x32xi1>, vector<128x32xf32>
    %11 = arith.truncf %10 : vector<128x32xf32> to vector<128x32xbf16>
    %c0_7 = arith.constant 0 : index
    %c0_8 = arith.constant 0 : index
    %12 = vector.load %arg4[%c0_7, %c0_8] : memref<128x32xbf16, #tpu.memory_space<vmem>>, vector<128x32xbf16>
    tpu.vector_store %arg4[%c0_7, %c0_8], %11 {strides = array<i32>} : memref<128x32xbf16, #tpu.memory_space<vmem>>, vector<128x32xbf16>,
    return
  }
  func.func @transform_0(%arg0: i32) -> (i32, i32) {
    %c0_i32 = arith.constant 0 : i32
    %c0_i32_0 = arith.constant 0 : i32
    return %arg0, %c0_i32 : i32, i32
  }
  func.func @transform_1(%arg0: i32) -> (i32, i32) {
    %c0_i32 = arith.constant 0 : i32
    %c0_i32_0 = arith.constant 0 : i32
    %c0_i32_1 = arith.constant 0 : i32
    return %c0_i32, %c0_i32_0 : i32, i32
  }
  func.func @transform_2(%arg0: i32) -> (i32, i32) {
    %c0_i32 = arith.constant 0 : i32
    %c0_i32_0 = arith.constant 0 : i32
    %c0_i32_1 = arith.constant 0 : i32
    return %c0_i32, %c0_i32_0 : i32, i32
  }
  func.func @transform_3(%arg0: i32) -> (i32, i32) {
    %c0_i32 = arith.constant 0 : i32
    %c0_i32_0 = arith.constant 0 : i32
    return %arg0, %c0_i32 : i32, i32
  }
}

module attributes {stable_mosaic.version = 11 : i64} {
  func.func @_head_kernel(%arg0: i32, %arg1: memref<128x512xbf16, #tpu.memory_space<vmem>>, %arg2: memref<512x64xbf16, #tpu.memory_space<vmem>>, %arg3: memref<1x64xf32, #tpu.memory_space<vmem>>, %arg4: memref<1024x64xbf16, #tpu.memory_space<vmem>>, %arg5: memref<1x64xf32, #tpu.memory_space<vmem>>, %arg6: memref<64x1xf32, #tpu.memory_space<vmem>>, %arg7: memref<1x1xf32, #tpu.memory_space<vmem>>, %arg8: memref<8x1xf32, #tpu.memory_space<vmem>>, %arg9: memref<8x1024xbf16, #tpu.memory_space<vmem>>) attributes {dimension_semantics = [#tpu.dimension_semantics<parallel>], iteration_bounds = array<i64: 1>, scalar_prefetch = 0 : i64, scratch_operands = 1 : i64, tpu.core_type = #tpu.core_type<tc>, window_params = [{transform_indices = @transform_0, window_bounds = array<i64: 128, 512>}, {pipeline_mode = #tpu.pipeline_mode<synchronous>, transform_indices = @transform_1, window_bounds = array<i64: 512, 64>}, {pipeline_mode = #tpu.pipeline_mode<synchronous>, transform_indices = @transform_2, window_bounds = array<i64: 1, 64>}, {pipeline_mode = #tpu.pipeline_mode<synchronous>, transform_indices = @transform_3, window_bounds = array<i64: 1024, 64>}, {pipeline_mode = #tpu.pipeline_mode<synchronous>, transform_indices = @transform_4, window_bounds = array<i64: 1, 64>}, {pipeline_mode = #tpu.pipeline_mode<synchronous>, transform_indices = @transform_5, window_bounds = array<i64: 64, 1>}, {pipeline_mode = #tpu.pipeline_mode<synchronous>, transform_indices = @transform_6, window_bounds = array<i64: 1, 1>}, {transform_indices = @transform_7, window_bounds = array<i64: 8, 1>}]} {
    %c0 = arith.constant 0 : index
    %c0_0 = arith.constant 0 : index
    %0 = vector.load %arg1[%c0, %c0_0] : memref<128x512xbf16, #tpu.memory_space<vmem>>, vector<128x512xbf16>
    %c0_1 = arith.constant 0 : index
    %c0_2 = arith.constant 0 : index
    %1 = vector.load %arg2[%c0_1, %c0_2] : memref<512x64xbf16, #tpu.memory_space<vmem>>, vector<512x64xbf16>
    %cst = arith.constant dense<0.000000e+00> : vector<128x64xf32>
    %2 = tpu.matmul %0, %1, %cst {dimension_numbers = #tpu.dot_dimension_numbers<[1], [0], [0], [1], [0, 0, 1, 1], [], []>} : vector<128x512xbf16>, vector<512x64xbf16>, vector<128x64xf32> -> vector<128x64xf32>
    %c0_3 = arith.constant 0 : index
    %c0_4 = arith.constant 0 : index
    %3 = vector.load %arg3[%c0_3, %c0_4] : memref<1x64xf32, #tpu.memory_space<vmem>>, vector<1x64xf32>
    %4 = vector.broadcast %3 : vector<1x64xf32> to vector<128x64xf32>
    %5 = arith.addf %2, %4 : vector<128x64xf32>
    %cst_5 = arith.constant 0.000000e+00 : f32
    %6 = vector.broadcast %cst_5 : f32 to vector<128x64xf32>
    %7 = arith.cmpf oge, %5, %6 : vector<128x64xf32>
    %cst_6 = arith.constant 2.000000e-01 : f32
    %8 = vector.broadcast %cst_6 : f32 to vector<128x64xf32>
    %9 = arith.mulf %8, %5 : vector<128x64xf32>
    %10 = arith.select %7, %5, %9 : vector<128x64xi1>, vector<128x64xf32>
    %11 = vector.extract_strided_slice %10 {offsets = [0, 0], sizes = [8, 64], strides = [1, 1]} : vector<128x64xf32> to vector<8x64xf32>
    %12 = arith.truncf %11 : vector<8x64xf32> to vector<8x64xbf16>
    %c0_7 = arith.constant 0 : index
    %c0_8 = arith.constant 0 : index
    %13 = vector.load %arg9[%c0_7, %c0_8] : memref<8x1024xbf16, #tpu.memory_space<vmem>>, vector<8x64xbf16>
    tpu.vector_store %arg9[%c0_7, %c0_8], %12 {strides = array<i32>} : memref<8x1024xbf16, #tpu.memory_space<vmem>>, vector<8x64xbf16>,
    %14 = vector.extract_strided_slice %10 {offsets = [8, 0], sizes = [8, 64], strides = [1, 1]} : vector<128x64xf32> to vector<8x64xf32>
    %15 = arith.truncf %14 : vector<8x64xf32> to vector<8x64xbf16>
    %c0_9 = arith.constant 0 : index
    %c64 = arith.constant 64 : index
    %16 = vector.load %arg9[%c0_9, %c64] : memref<8x1024xbf16, #tpu.memory_space<vmem>>, vector<8x64xbf16>
    tpu.vector_store %arg9[%c0_9, %c64], %15 {strides = array<i32>} : memref<8x1024xbf16, #tpu.memory_space<vmem>>, vector<8x64xbf16>,
    %17 = vector.extract_strided_slice %10 {offsets = [16, 0], sizes = [8, 64], strides = [1, 1]} : vector<128x64xf32> to vector<8x64xf32>
    %18 = arith.truncf %17 : vector<8x64xf32> to vector<8x64xbf16>
    %c0_10 = arith.constant 0 : index
    %c128 = arith.constant 128 : index
    %19 = vector.load %arg9[%c0_10, %c128] : memref<8x1024xbf16, #tpu.memory_space<vmem>>, vector<8x64xbf16>
    tpu.vector_store %arg9[%c0_10, %c128], %18 {strides = array<i32>} : memref<8x1024xbf16, #tpu.memory_space<vmem>>, vector<8x64xbf16>,
    %20 = vector.extract_strided_slice %10 {offsets = [24, 0], sizes = [8, 64], strides = [1, 1]} : vector<128x64xf32> to vector<8x64xf32>
    %21 = arith.truncf %20 : vector<8x64xf32> to vector<8x64xbf16>
    %c0_11 = arith.constant 0 : index
    %c192 = arith.constant 192 : index
    %22 = vector.load %arg9[%c0_11, %c192] : memref<8x1024xbf16, #tpu.memory_space<vmem>>, vector<8x64xbf16>
    tpu.vector_store %arg9[%c0_11, %c192], %21 {strides = array<i32>} : memref<8x1024xbf16, #tpu.memory_space<vmem>>, vector<8x64xbf16>,
    %23 = vector.extract_strided_slice %10 {offsets = [32, 0], sizes = [8, 64], strides = [1, 1]} : vector<128x64xf32> to vector<8x64xf32>
    %24 = arith.truncf %23 : vector<8x64xf32> to vector<8x64xbf16>
    %c0_12 = arith.constant 0 : index
    %c256 = arith.constant 256 : index
    %25 = vector.load %arg9[%c0_12, %c256] : memref<8x1024xbf16, #tpu.memory_space<vmem>>, vector<8x64xbf16>
    tpu.vector_store %arg9[%c0_12, %c256], %24 {strides = array<i32>} : memref<8x1024xbf16, #tpu.memory_space<vmem>>, vector<8x64xbf16>,
    %26 = vector.extract_strided_slice %10 {offsets = [40, 0], sizes = [8, 64], strides = [1, 1]} : vector<128x64xf32> to vector<8x64xf32>
    %27 = arith.truncf %26 : vector<8x64xf32> to vector<8x64xbf16>
    %c0_13 = arith.constant 0 : index
    %c320 = arith.constant 320 : index
    %28 = vector.load %arg9[%c0_13, %c320] : memref<8x1024xbf16, #tpu.memory_space<vmem>>, vector<8x64xbf16>
    tpu.vector_store %arg9[%c0_13, %c320], %27 {strides = array<i32>} : memref<8x1024xbf16, #tpu.memory_space<vmem>>, vector<8x64xbf16>,
    %29 = vector.extract_strided_slice %10 {offsets = [48, 0], sizes = [8, 64], strides = [1, 1]} : vector<128x64xf32> to vector<8x64xf32>
    %30 = arith.truncf %29 : vector<8x64xf32> to vector<8x64xbf16>
    %c0_14 = arith.constant 0 : index
    %c384 = arith.constant 384 : index
    %31 = vector.load %arg9[%c0_14, %c384] : memref<8x1024xbf16, #tpu.memory_space<vmem>>, vector<8x64xbf16>
    tpu.vector_store %arg9[%c0_14, %c384], %30 {strides = array<i32>} : memref<8x1024xbf16, #tpu.memory_space<vmem>>, vector<8x64xbf16>,
    %32 = vector.extract_strided_slice %10 {offsets = [56, 0], sizes = [8, 64], strides = [1, 1]} : vector<128x64xf32> to vector<8x64xf32>
    %33 = arith.truncf %32 : vector<8x64xf32> to vector<8x64xbf16>
    %c0_15 = arith.constant 0 : index
    %c448 = arith.constant 448 : index
    %34 = vector.load %arg9[%c0_15, %c448] : memref<8x1024xbf16, #tpu.memory_space<vmem>>, vector<8x64xbf16>
    tpu.vector_store %arg9[%c0_15, %c448], %33 {strides = array<i32>} : memref<8x1024xbf16, #tpu.memory_space<vmem>>, vector<8x64xbf16>,
    %35 = vector.extract_strided_slice %10 {offsets = [64, 0], sizes = [8, 64], strides = [1, 1]} : vector<128x64xf32> to vector<8x64xf32>
    %36 = arith.truncf %35 : vector<8x64xf32> to vector<8x64xbf16>
    %c0_16 = arith.constant 0 : index
    %c512 = arith.constant 512 : index
    %37 = vector.load %arg9[%c0_16, %c512] : memref<8x1024xbf16, #tpu.memory_space<vmem>>, vector<8x64xbf16>
    tpu.vector_store %arg9[%c0_16, %c512], %36 {strides = array<i32>} : memref<8x1024xbf16, #tpu.memory_space<vmem>>, vector<8x64xbf16>,
    %38 = vector.extract_strided_slice %10 {offsets = [72, 0], sizes = [8, 64], strides = [1, 1]} : vector<128x64xf32> to vector<8x64xf32>
    %39 = arith.truncf %38 : vector<8x64xf32> to vector<8x64xbf16>
    %c0_17 = arith.constant 0 : index
    %c576 = arith.constant 576 : index
    %40 = vector.load %arg9[%c0_17, %c576] : memref<8x1024xbf16, #tpu.memory_space<vmem>>, vector<8x64xbf16>
    tpu.vector_store %arg9[%c0_17, %c576], %39 {strides = array<i32>} : memref<8x1024xbf16, #tpu.memory_space<vmem>>, vector<8x64xbf16>,
    %41 = vector.extract_strided_slice %10 {offsets = [80, 0], sizes = [8, 64], strides = [1, 1]} : vector<128x64xf32> to vector<8x64xf32>
    %42 = arith.truncf %41 : vector<8x64xf32> to vector<8x64xbf16>
    %c0_18 = arith.constant 0 : index
    %c640 = arith.constant 640 : index
    %43 = vector.load %arg9[%c0_18, %c640] : memref<8x1024xbf16, #tpu.memory_space<vmem>>, vector<8x64xbf16>
    tpu.vector_store %arg9[%c0_18, %c640], %42 {strides = array<i32>} : memref<8x1024xbf16, #tpu.memory_space<vmem>>, vector<8x64xbf16>,
    %44 = vector.extract_strided_slice %10 {offsets = [88, 0], sizes = [8, 64], strides = [1, 1]} : vector<128x64xf32> to vector<8x64xf32>
    %45 = arith.truncf %44 : vector<8x64xf32> to vector<8x64xbf16>
    %c0_19 = arith.constant 0 : index
    %c704 = arith.constant 704 : index
    %46 = vector.load %arg9[%c0_19, %c704] : memref<8x1024xbf16, #tpu.memory_space<vmem>>, vector<8x64xbf16>
    tpu.vector_store %arg9[%c0_19, %c704], %45 {strides = array<i32>} : memref<8x1024xbf16, #tpu.memory_space<vmem>>, vector<8x64xbf16>,
    %47 = vector.extract_strided_slice %10 {offsets = [96, 0], sizes = [8, 64], strides = [1, 1]} : vector<128x64xf32> to vector<8x64xf32>
    %48 = arith.truncf %47 : vector<8x64xf32> to vector<8x64xbf16>
    %c0_20 = arith.constant 0 : index
    %c768 = arith.constant 768 : index
    %49 = vector.load %arg9[%c0_20, %c768] : memref<8x1024xbf16, #tpu.memory_space<vmem>>, vector<8x64xbf16>
    tpu.vector_store %arg9[%c0_20, %c768], %48 {strides = array<i32>} : memref<8x1024xbf16, #tpu.memory_space<vmem>>, vector<8x64xbf16>,
    %50 = vector.extract_strided_slice %10 {offsets = [104, 0], sizes = [8, 64], strides = [1, 1]} : vector<128x64xf32> to vector<8x64xf32>
    %51 = arith.truncf %50 : vector<8x64xf32> to vector<8x64xbf16>
    %c0_21 = arith.constant 0 : index
    %c832 = arith.constant 832 : index
    %52 = vector.load %arg9[%c0_21, %c832] : memref<8x1024xbf16, #tpu.memory_space<vmem>>, vector<8x64xbf16>
    tpu.vector_store %arg9[%c0_21, %c832], %51 {strides = array<i32>} : memref<8x1024xbf16, #tpu.memory_space<vmem>>, vector<8x64xbf16>,
    %53 = vector.extract_strided_slice %10 {offsets = [112, 0], sizes = [8, 64], strides = [1, 1]} : vector<128x64xf32> to vector<8x64xf32>
    %54 = arith.truncf %53 : vector<8x64xf32> to vector<8x64xbf16>
    %c0_22 = arith.constant 0 : index
    %c896 = arith.constant 896 : index
    %55 = vector.load %arg9[%c0_22, %c896] : memref<8x1024xbf16, #tpu.memory_space<vmem>>, vector<8x64xbf16>
    tpu.vector_store %arg9[%c0_22, %c896], %54 {strides = array<i32>} : memref<8x1024xbf16, #tpu.memory_space<vmem>>, vector<8x64xbf16>,
    %56 = vector.extract_strided_slice %10 {offsets = [120, 0], sizes = [8, 64], strides = [1, 1]} : vector<128x64xf32> to vector<8x64xf32>
    %57 = arith.truncf %56 : vector<8x64xf32> to vector<8x64xbf16>
    %c0_23 = arith.constant 0 : index
    %c960 = arith.constant 960 : index
    %58 = vector.load %arg9[%c0_23, %c960] : memref<8x1024xbf16, #tpu.memory_space<vmem>>, vector<8x64xbf16>
    tpu.vector_store %arg9[%c0_23, %c960], %57 {strides = array<i32>} : memref<8x1024xbf16, #tpu.memory_space<vmem>>, vector<8x64xbf16>,
    %c0_24 = arith.constant 0 : index
    %c0_25 = arith.constant 0 : index
    %59 = vector.load %arg9[%c0_24, %c0_25] : memref<8x1024xbf16, #tpu.memory_space<vmem>>, vector<8x1024xbf16>
    %c0_26 = arith.constant 0 : index
    %c0_27 = arith.constant 0 : index
    %60 = vector.load %arg4[%c0_26, %c0_27] : memref<1024x64xbf16, #tpu.memory_space<vmem>>, vector<1024x64xbf16>
    %cst_28 = arith.constant dense<0.000000e+00> : vector<8x64xf32>
    %61 = tpu.matmul %59, %60, %cst_28 {dimension_numbers = #tpu.dot_dimension_numbers<[1], [0], [0], [1], [0, 0, 1, 1], [], []>} : vector<8x1024xbf16>, vector<1024x64xbf16>, vector<8x64xf32> -> vector<8x64xf32>
    %c0_29 = arith.constant 0 : index
    %c0_30 = arith.constant 0 : index
    %62 = vector.load %arg5[%c0_29, %c0_30] : memref<1x64xf32, #tpu.memory_space<vmem>>, vector<1x64xf32>
    %63 = vector.broadcast %62 : vector<1x64xf32> to vector<8x64xf32>
    %64 = arith.addf %61, %63 : vector<8x64xf32>
    %cst_31 = arith.constant 0.000000e+00 : f32
    %65 = vector.broadcast %cst_31 : f32 to vector<8x64xf32>
    %66 = arith.maximumf %64, %65 : vector<8x64xf32>
    %c0_32 = arith.constant 0 : index
    %c0_33 = arith.constant 0 : index
    %67 = vector.load %arg6[%c0_32, %c0_33] : memref<64x1xf32, #tpu.memory_space<vmem>>, vector<64x1xf32>
    %cst_34 = arith.constant dense<0.000000e+00> : vector<8x1xf32>
    %68 = tpu.matmul %66, %67, %cst_34 {dimension_numbers = #tpu.dot_dimension_numbers<[1], [0], [0], [1], [0, 0, 1, 1], [], []>} : vector<8x64xf32>, vector<64x1xf32>, vector<8x1xf32> -> vector<8x1xf32>
    %c0_35 = arith.constant 0 : index
    %c0_36 = arith.constant 0 : index
    %69 = vector.load %arg7[%c0_35, %c0_36] : memref<1x1xf32, #tpu.memory_space<vmem>>, vector<1x1xf32>
    %70 = vector.broadcast %69 : vector<1x1xf32> to vector<8x1xf32>
    %71 = arith.addf %68, %70 : vector<8x1xf32>
    %cst_37 = arith.constant 0.000000e+00 : f32
    %72 = vector.broadcast %cst_37 : f32 to vector<8x1xf32>
    %73 = arith.subf %72, %71 : vector<8x1xf32>
    %74 = math.exp %73 : vector<8x1xf32>
    %cst_38 = arith.constant 1.000000e+00 : f32
    %75 = vector.broadcast %cst_38 : f32 to vector<8x1xf32>
    %76 = arith.addf %75, %74 : vector<8x1xf32>
    %cst_39 = arith.constant 1.000000e+00 : f32
    %77 = vector.broadcast %cst_39 : f32 to vector<8x1xf32>
    %78 = arith.divf %77, %76 : vector<8x1xf32>
    %c0_40 = arith.constant 0 : index
    %c0_41 = arith.constant 0 : index
    %79 = vector.load %arg8[%c0_40, %c0_41] : memref<8x1xf32, #tpu.memory_space<vmem>>, vector<8x1xf32>
    tpu.vector_store %arg8[%c0_40, %c0_41], %78 {strides = array<i32>} : memref<8x1xf32, #tpu.memory_space<vmem>>, vector<8x1xf32>,
    return
  }
  func.func @transform_0(%arg0: i32) -> (i32, i32) {
    %c0_i32 = arith.constant 0 : i32
    %c0_i32_0 = arith.constant 0 : i32
    return %arg0, %c0_i32 : i32, i32
  }
  func.func @transform_1(%arg0: i32) -> (i32, i32) {
    %c0_i32 = arith.constant 0 : i32
    %c0_i32_0 = arith.constant 0 : i32
    %c0_i32_1 = arith.constant 0 : i32
    return %c0_i32, %c0_i32_0 : i32, i32
  }
  func.func @transform_2(%arg0: i32) -> (i32, i32) {
    %c0_i32 = arith.constant 0 : i32
    %c0_i32_0 = arith.constant 0 : i32
    %c0_i32_1 = arith.constant 0 : i32
    return %c0_i32, %c0_i32_0 : i32, i32
  }
  func.func @transform_3(%arg0: i32) -> (i32, i32) {
    %c0_i32 = arith.constant 0 : i32
    %c0_i32_0 = arith.constant 0 : i32
    %c0_i32_1 = arith.constant 0 : i32
    return %c0_i32, %c0_i32_0 : i32, i32
  }
  func.func @transform_4(%arg0: i32) -> (i32, i32) {
    %c0_i32 = arith.constant 0 : i32
    %c0_i32_0 = arith.constant 0 : i32
    %c0_i32_1 = arith.constant 0 : i32
    return %c0_i32, %c0_i32_0 : i32, i32
  }
  func.func @transform_5(%arg0: i32) -> (i32, i32) {
    %c0_i32 = arith.constant 0 : i32
    %c0_i32_0 = arith.constant 0 : i32
    %c0_i32_1 = arith.constant 0 : i32
    return %c0_i32, %c0_i32_0 : i32, i32
  }
  func.func @transform_6(%arg0: i32) -> (i32, i32) {
    %c0_i32 = arith.constant 0 : i32
    %c0_i32_0 = arith.constant 0 : i32
    %c0_i32_1 = arith.constant 0 : i32
    return %c0_i32, %c0_i32_0 : i32, i32
  }
  func.func @transform_7(%arg0: i32) -> (i32, i32) {
    %c0_i32 = arith.constant 0 : i32
    %c0_i32_0 = arith.constant 0 : i32
    return %arg0, %c0_i32 : i32, i32
  }
}

</mosaic_0001>

<llo_original>
// kernel: discriminator_forward.4
$region0: #{discriminator_forward.4}
  #allocation0 [shape = 'u32[]', space=smem, size = 0x4, offset = 0x4, fixed_abs, tag = 'smem constant byte address 0x4 - core index']
  #allocation1 [shape = 'u32[144,128]{1,0:T(1,128)}', space=vmem, size = 0x12000, scoped, tag = 'internal scratch']
  %s0 = inlined_call_operand.vmem [shape: bf16[2048,16], index: 0, kind: input, shape index: {}]
  %s1 = inlined_call_operand.vmem [shape: bf16[16,8], index: 1, kind: input, shape index: {}]
  %s2 = inlined_call_operand.vmem [shape: f32[1,8], index: 2, kind: input, shape index: {}]
  %s3 = inlined_call_operand.vmem [shape: bf16[2048,8], index: 3, kind: output, shape index: {}]
  %s4 = sld [smem:[#allocation0]]
  $region22: #{discriminator_forward.4} parent=0
    _
  %s6 = ssub.s32 1, %s4
  %s7 = scalar_select 0, %s6, %s4
  // Predicated region
  $region2: #{discriminator_forward.4} parent=0 // pred_check
    _
  $region3: #{discriminator_forward.4} parent=0 // pred_check_branch
    %9 = sbr.rel (0) target = $region5
  $region4: #{discriminator_forward.4} parent=0 // pred_region
    _
  $region5: #{discriminator_forward.4} parent=0 // pred_fallthru
    _
  // Predicated region
  $region6: #{discriminator_forward.4} parent=0 // pred_check
    _
  $region7: #{discriminator_forward.4} parent=0 // pred_check_branch
    %11 = sbr.rel (0) target = $region9
  $region8: #{discriminator_forward.4} parent=0 // pred_region
    _
  $region9: #{discriminator_forward.4} parent=0 // pred_fallthru
    _
  // Predicated region
  $region10: #{discriminator_forward.4} parent=0 // pred_check
    _
  $region11: #{discriminator_forward.4} parent=0 // pred_check_branch
    %13 = sbr.rel (0) target = $region13
  $region12: #{discriminator_forward.4} parent=0 // pred_region
    _
  $region13: #{discriminator_forward.4} parent=0 // pred_fallthru
    _
  %v15 = vld [vmem:[%s0] sm:$0xf]
  %v16 = vld [vmem:[%s0 + $0x4] sm:$0xf]
  %v17 = vld [vmem:[%s0 + $0x8] sm:$0xf]
  %v18 = vld [vmem:[%s0 + $0xc] sm:$0xf]
  %v19 = vld [vmem:[%s0 + $0x10] sm:$0xf]
  %v20 = vld [vmem:[%s0 + $0x14] sm:$0xf]
  %v21 = vld [vmem:[%s0 + $0x18] sm:$0xf]
  %v22 = vld [vmem:[%s0 + $0x1c] sm:$0xf]
  %v23 = vld [vmem:[%s0 + $0x20] sm:$0xf]
  %v24 = vld [vmem:[%s0 + $0x24] sm:$0xf]
  %v25 = vld [vmem:[%s0 + $0x28] sm:$0xf]
  %v26 = vld [vmem:[%s0 + $0x2c] sm:$0xf]
  %v27 = vld [vmem:[%s0 + $0x30] sm:$0xf]
  %v28 = vld [vmem:[%s0 + $0x34] sm:$0xf]
  %v29 = vld [vmem:[%s0 + $0x38] sm:$0xf]
  %v30 = vld [vmem:[%s0 + $0x3c] sm:$0xf]
  %v31 = vld [vmem:[%s0 + $0x40] sm:$0xf]
  %v32 = vld [vmem:[%s0 + $0x44] sm:$0xf]
  %v33 = vld [vmem:[%s0 + $0x48] sm:$0xf]
  %v34 = vld [vmem:[%s0 + $0x4c] sm:$0xf]
  %v35 = vld [vmem:[%s0 + $0x50] sm:$0xf]
  %v36 = vld [vmem:[%s0 + $0x54] sm:$0xf]
  %v37 = vld [vmem:[%s0 + $0x58] sm:$0xf]
  %v38 = vld [vmem:[%s0 + $0x5c] sm:$0xf]
  %v39 = vld [vmem:[%s0 + $0x60] sm:$0xf]
  %v40 = vld [vmem:[%s0 + $0x64] sm:$0xf]
  %v41 = vld [vmem:[%s0 + $0x68] sm:$0xf]
  %v42 = vld [vmem:[%s0 + $0x6c] sm:$0xf]
  %v43 = vld [vmem:[%s0 + $0x70] sm:$0xf]
  %v44 = vld [vmem:[%s0 + $0x74] sm:$0xf]
  %v45 = vld [vmem:[%s0 + $0x78] sm:$0xf]
  %v46 = vld [vmem:[%s0 + $0x7c] sm:$0xf]
  %v47 = vld [vmem:[%s0 + $0x80] sm:$0xf]
  %v48 = vld [vmem:[%s0 + $0x84] sm:$0xf]
  %v49 = vld [vmem:[%s0 + $0x88] sm:$0xf]
  %v50 = vld [vmem:[%s0 + $0x8c] sm:$0xf]
  %v51 = vld [vmem:[%s0 + $0x90] sm:$0xf]
  %v52 = vld [vmem:[%s0 + $0x94] sm:$0xf]
  %v53 = vld [vmem:[%s0 + $0x98] sm:$0xf]
  %v54 = vld [vmem:[%s0 + $0x9c] sm:$0xf]
  %v55 = vld [vmem:[%s0 + $0xa0] sm:$0xf]
  %v56 = vld [vmem:[%s0 + $0xa4] sm:$0xf]
  %v57 = vld [vmem:[%s0 + $0xa8] sm:$0xf]
  %v58 = vld [vmem:[%s0 + $0xac] sm:$0xf]
  %v59 = vld [vmem:[%s0 + $0xb0] sm:$0xf]
  %v60 = vld [vmem:[%s0 + $0xb4] sm:$0xf]
  %v61 = vld [vmem:[%s0 + $0xb8] sm:$0xf]
  %v62 = vld [vmem:[%s0 + $0xbc] sm:$0xf]
  %v63 = vld [vmem:[%s0 + $0xc0] sm:$0xf]
  %v64 = vld [vmem:[%s0 + $0xc4] sm:$0xf]
  %v65 = vld [vmem:[%s0 + $0xc8] sm:$0xf]
  %v66 = vld [vmem:[%s0 + $0xcc] sm:$0xf]
  %v67 = vld [vmem:[%s0 + $0xd0] sm:$0xf]
  %v68 = vld [vmem:[%s0 + $0xd4] sm:$0xf]
  %v69 = vld [vmem:[%s0 + $0xd8] sm:$0xf]
  %v70 = vld [vmem:[%s0 + $0xdc] sm:$0xf]
  %v71 = vld [vmem:[%s0 + $0xe0] sm:$0xf]
  %v72 = vld [vmem:[%s0 + $0xe4] sm:$0xf]
  %v73 = vld [vmem:[%s0 + $0xe8] sm:$0xf]
  %v74 = vld [vmem:[%s0 + $0xec] sm:$0xf]
  %v75 = vld [vmem:[%s0 + $0xf0] sm:$0xf]
  %v76 = vld [vmem:[%s0 + $0xf4] sm:$0xf]
  %v77 = vld [vmem:[%s0 + $0xf8] sm:$0xf]
  %v78 = vld [vmem:[%s0 + $0xfc] sm:$0xf]
  %v79 = vld [vmem:[%s0 + $0x100] sm:$0xf]
  %v80 = vld [vmem:[%s0 + $0x104] sm:$0xf]
  %v81 = vld [vmem:[%s0 + $0x108] sm:$0xf]
  %v82 = vld [vmem:[%s0 + $0x10c] sm:$0xf]
  %v83 = vld [vmem:[%s0 + $0x110] sm:$0xf]
  %v84 = vld [vmem:[%s0 + $0x114] sm:$0xf]
  %v85 = vld [vmem:[%s0 + $0x118] sm:$0xf]
  %v86 = vld [vmem:[%s0 + $0x11c] sm:$0xf]
  %v87 = vld [vmem:[%s0 + $0x120] sm:$0xf]
  %v88 = vld [vmem:[%s0 + $0x124] sm:$0xf]
  %v89 = vld [vmem:[%s0 + $0x128] sm:$0xf]
  %v90 = vld [vmem:[%s0 + $0x12c] sm:$0xf]
  %v91 = vld [vmem:[%s0 + $0x130] sm:$0xf]
  %v92 = vld [vmem:[%s0 + $0x134] sm:$0xf]
  %v93 = vld [vmem:[%s0 + $0x138] sm:$0xf]
  %v94 = vld [vmem:[%s0 + $0x13c] sm:$0xf]
  %v95 = vld [vmem:[%s0 + $0x140] sm:$0xf]
  %v96 = vld [vmem:[%s0 + $0x144] sm:$0xf]
  %v97 = vld [vmem:[%s0 + $0x148] sm:$0xf]
  %v98 = vld [vmem:[%s0 + $0x14c] sm:$0xf]
  %v99 = vld [vmem:[%s0 + $0x150] sm:$0xf]
  %v100 = vld [vmem:[%s0 + $0x154] sm:$0xf]
  %v101 = vld [vmem:[%s0 + $0x158] sm:$0xf]
  %v102 = vld [vmem:[%s0 + $0x15c] sm:$0xf]
  %v103 = vld [vmem:[%s0 + $0x160] sm:$0xf]
  %v104 = vld [vmem:[%s0 + $0x164] sm:$0xf]
  %v105 = vld [vmem:[%s0 + $0x168] sm:$0xf]
  %v106 = vld [vmem:[%s0 + $0x16c] sm:$0xf]
  %v107 = vld [vmem:[%s0 + $0x170] sm:$0xf]
  %v108 = vld [vmem:[%s0 + $0x174] sm:$0xf]
  %v109 = vld [vmem:[%s0 + $0x178] sm:$0xf]
  %v110 = vld [vmem:[%s0 + $0x17c] sm:$0xf]
  %v111 = vld [vmem:[%s0 + $0x180] sm:$0xf]
  %v112 = vld [vmem:[%s0 + $0x184] sm:$0xf]
  %v113 = vld [vmem:[%s0 + $0x188] sm:$0xf]
  %v114 = vld [vmem:[%s0 + $0x18c] sm:$0xf]
  %v115 = vld [vmem:[%s0 + $0x190] sm:$0xf]
  %v116 = vld [vmem:[%s0 + $0x194] sm:$0xf]
  %v117 = vld [vmem:[%s0 + $0x198] sm:$0xf]
  %v118 = vld [vmem:[%s0 + $0x19c] sm:$0xf]
  %v119 = vld [vmem:[%s0 + $0x1a0] sm:$0xf]
  %v120 = vld [vmem:[%s0 + $0x1a4] sm:$0xf]
  %v121 = vld [vmem:[%s0 + $0x1a8] sm:$0xf]
  %v122 = vld [vmem:[%s0 + $0x1ac] sm:$0xf]
  %v123 = vld [vmem:[%s0 + $0x1b0] sm:$0xf]
  %v124 = vld [vmem:[%s0 + $0x1b4] sm:$0xf]
  %v125 = vld [vmem:[%s0 + $0x1b8] sm:$0xf]
  %v126 = vld [vmem:[%s0 + $0x1bc] sm:$0xf]
  %v127 = vld [vmem:[%s0 + $0x1c0] sm:$0xf]
  %v128 = vld [vmem:[%s0 + $0x1c4] sm:$0xf]
  %v129 = vld [vmem:[%s0 + $0x1c8] sm:$0xf]
  %v130 = vld [vmem:[%s0 + $0x1cc] sm:$0xf]
  %v131 = vld [vmem:[%s0 + $0x1d0] sm:$0xf]
  %v132 = vld [vmem:[%s0 + $0x1d4] sm:$0xf]
  %v133 = vld [vmem:[%s0 + $0x1d8] sm:$0xf]
  %v134 = vld [vmem:[%s0 + $0x1dc] sm:$0xf]
  %v135 = vld [vmem:[%s0 + $0x1e0] sm:$0xf]
  %v136 = vld [vmem:[%s0 + $0x1e4] sm:$0xf]
  %v137 = vld [vmem:[%s0 + $0x1e8] sm:$0xf]
  %v138 = vld [vmem:[%s0 + $0x1ec] sm:$0xf]
  %v139 = vld [vmem:[%s0 + $0x1f0] sm:$0xf]
  %v140 = vld [vmem:[%s0 + $0x1f4] sm:$0xf]
  %v141 = vld [vmem:[%s0 + $0x1f8] sm:$0xf]
  %v142 = vld [vmem:[%s0 + $0x1fc] sm:$0xf]
  %v143 = vld [vmem:[%s0 + $0x200] sm:$0xf]
  %v144 = vld [vmem:[%s0 + $0x204] sm:$0xf]
  %v145 = vld [vmem:[%s0 + $0x208] sm:$0xf]
  %v146 = vld [vmem:[%s0 + $0x20c] sm:$0xf]
  %v147 = vld [vmem:[%s0 + $0x210] sm:$0xf]
  %v148 = vld [vmem:[%s0 + $0x214] sm:$0xf]
  %v149 = vld [vmem:[%s0 + $0x218] sm:$0xf]
  %v150 = vld [vmem:[%s0 + $0x21c] sm:$0xf]
  %v151 = vld [vmem:[%s0 + $0x220] sm:$0xf]
  %v152 = vld [vmem:[%s0 + $0x224] sm:$0xf]
  %v153 = vld [vmem:[%s0 + $0x228] sm:$0xf]
  %v154 = vld [vmem:[%s0 + $0x22c] sm:$0xf]
  %v155 = vld [vmem:[%s0 + $0x230] sm:$0xf]
  %v156 = vld [vmem:[%s0 + $0x234] sm:$0xf]
  %v157 = vld [vmem:[%s0 + $0x238] sm:$0xf]
  %v158 = vld [vmem:[%s0 + $0x23c] sm:$0xf]
  %v159 = vld [vmem:[%s0 + $0x240] sm:$0xf]
  %v160 = vld [vmem:[%s0 + $0x244] sm:$0xf]
  %v161 = vld [vmem:[%s0 + $0x248] sm:$0xf]
  %v162 = vld [vmem:[%s0 + $0x24c] sm:$0xf]
  %v163 = vld [vmem:[%s0 + $0x250] sm:$0xf]
  %v164 = vld [vmem:[%s0 + $0x254] sm:$0xf]
  %v165 = vld [vmem:[%s0 + $0x258] sm:$0xf]
  %v166 = vld [vmem:[%s0 + $0x25c] sm:$0xf]
  %v167 = vld [vmem:[%s0 + $0x260] sm:$0xf]
  %v168 = vld [vmem:[%s0 + $0x264] sm:$0xf]
  %v169 = vld [vmem:[%s0 + $0x268] sm:$0xf]
  %v170 = vld [vmem:[%s0 + $0x26c] sm:$0xf]
  %v171 = vld [vmem:[%s0 + $0x270] sm:$0xf]
  %v172 = vld [vmem:[%s0 + $0x274] sm:$0xf]
  %v173 = vld [vmem:[%s0 + $0x278] sm:$0xf]
  %v174 = vld [vmem:[%s0 + $0x27c] sm:$0xf]
  %v175 = vld [vmem:[%s0 + $0x280] sm:$0xf]
  %v176 = vld [vmem:[%s0 + $0x284] sm:$0xf]
  %v177 = vld [vmem:[%s0 + $0x288] sm:$0xf]
  %v178 = vld [vmem:[%s0 + $0x28c] sm:$0xf]
  %v179 = vld [vmem:[%s0 + $0x290] sm:$0xf]
  %v180 = vld [vmem:[%s0 + $0x294] sm:$0xf]
  %v181 = vld [vmem:[%s0 + $0x298] sm:$0xf]
  %v182 = vld [vmem:[%s0 + $0x29c] sm:$0xf]
  %v183 = vld [vmem:[%s0 + $0x2a0] sm:$0xf]
  %v184 = vld [vmem:[%s0 + $0x2a4] sm:$0xf]
  %v185 = vld [vmem:[%s0 + $0x2a8] sm:$0xf]
  %v186 = vld [vmem:[%s0 + $0x2ac] sm:$0xf]
  %v187 = vld [vmem:[%s0 + $0x2b0] sm:$0xf]
  %v188 = vld [vmem:[%s0 + $0x2b4] sm:$0xf]
  %v189 = vld [vmem:[%s0 + $0x2b8] sm:$0xf]
  %v190 = vld [vmem:[%s0 + $0x2bc] sm:$0xf]
  %v191 = vld [vmem:[%s0 + $0x2c0] sm:$0xf]
  %v192 = vld [vmem:[%s0 + $0x2c4] sm:$0xf]
  %v193 = vld [vmem:[%s0 + $0x2c8] sm:$0xf]
  %v194 = vld [vmem:[%s0 + $0x2cc] sm:$0xf]
  %v195 = vld [vmem:[%s0 + $0x2d0] sm:$0xf]
  %v196 = vld [vmem:[%s0 + $0x2d4] sm:$0xf]
  %v197 = vld [vmem:[%s0 + $0x2d8] sm:$0xf]
  %v198 = vld [vmem:[%s0 + $0x2dc] sm:$0xf]
  %v199 = vld [vmem:[%s0 + $0x2e0] sm:$0xf]
  %v200 = vld [vmem:[%s0 + $0x2e4] sm:$0xf]
  %v201 = vld [vmem:[%s0 + $0x2e8] sm:$0xf]
  %v202 = vld [vmem:[%s0 + $0x2ec] sm:$0xf]
  %v203 = vld [vmem:[%s0 + $0x2f0] sm:$0xf]
  %v204 = vld [vmem:[%s0 + $0x2f4] sm:$0xf]
  %v205 = vld [vmem:[%s0 + $0x2f8] sm:$0xf]
  %v206 = vld [vmem:[%s0 + $0x2fc] sm:$0xf]
  %v207 = vld [vmem:[%s0 + $0x300] sm:$0xf]
  %v208 = vld [vmem:[%s0 + $0x304] sm:$0xf]
  %v209 = vld [vmem:[%s0 + $0x308] sm:$0xf]
  %v210 = vld [vmem:[%s0 + $0x30c] sm:$0xf]
  %v211 = vld [vmem:[%s0 + $0x310] sm:$0xf]
  %v212 = vld [vmem:[%s0 + $0x314] sm:$0xf]
  %v213 = vld [vmem:[%s0 + $0x318] sm:$0xf]
  %v214 = vld [vmem:[%s0 + $0x31c] sm:$0xf]
  %v215 = vld [vmem:[%s0 + $0x320] sm:$0xf]
  %v216 = vld [vmem:[%s0 + $0x324] sm:$0xf]
  %v217 = vld [vmem:[%s0 + $0x328] sm:$0xf]
  %v218 = vld [vmem:[%s0 + $0x32c] sm:$0xf]
  %v219 = vld [vmem:[%s0 + $0x330] sm:$0xf]
  %v220 = vld [vmem:[%s0 + $0x334] sm:$0xf]
  %v221 = vld [vmem:[%s0 + $0x338] sm:$0xf]
  %v222 = vld [vmem:[%s0 + $0x33c] sm:$0xf]
  %v223 = vld [vmem:[%s0 + $0x340] sm:$0xf]
  %v224 = vld [vmem:[%s0 + $0x344] sm:$0xf]
  %v225 = vld [vmem:[%s0 + $0x348] sm:$0xf]
  %v226 = vld [vmem:[%s0 + $0x34c] sm:$0xf]
  %v227 = vld [vmem:[%s0 + $0x350] sm:$0xf]
  %v228 = vld [vmem:[%s0 + $0x354] sm:$0xf]
  %v229 = vld [vmem:[%s0 + $0x358] sm:$0xf]
  %v230 = vld [vmem:[%s0 + $0x35c] sm:$0xf]
  %v231 = vld [vmem:[%s0 + $0x360] sm:$0xf]
  %v232 = vld [vmem:[%s0 + $0x364] sm:$0xf]
  %v233 = vld [vmem:[%s0 + $0x368] sm:$0xf]
  %v234 = vld [vmem:[%s0 + $0x36c] sm:$0xf]
  %v235 = vld [vmem:[%s0 + $0x370] sm:$0xf]
  %v236 = vld [vmem:[%s0 + $0x374] sm:$0xf]
  %v237 = vld [vmem:[%s0 + $0x378] sm:$0xf]
  %v238 = vld [vmem:[%s0 + $0x37c] sm:$0xf]
  %v239 = vld [vmem:[%s0 + $0x380] sm:$0xf]
  %v240 = vld [vmem:[%s0 + $0x384] sm:$0xf]
  %v241 = vld [vmem:[%s0 + $0x388] sm:$0xf]
  %v242 = vld [vmem:[%s0 + $0x38c] sm:$0xf]
  %v243 = vld [vmem:[%s0 + $0x390] sm:$0xf]
  %v244 = vld [vmem:[%s0 + $0x394] sm:$0xf]
  %v245 = vld [vmem:[%s0 + $0x398] sm:$0xf]
  %v246 = vld [vmem:[%s0 + $0x39c] sm:$0xf]
  %v247 = vld [vmem:[%s0 + $0x3a0] sm:$0xf]
  %v248 = vld [vmem:[%s0 + $0x3a4] sm:$0xf]
  %v249 = vld [vmem:[%s0 + $0x3a8] sm:$0xf]
  %v250 = vld [vmem:[%s0 + $0x3ac] sm:$0xf]
  %v251 = vld [vmem:[%s0 + $0x3b0] sm:$0xf]
  %v252 = vld [vmem:[%s0 + $0x3b4] sm:$0xf]
  %v253 = vld [vmem:[%s0 + $0x3b8] sm:$0xf]
  %v254 = vld [vmem:[%s0 + $0x3bc] sm:$0xf]
  %v255 = vld [vmem:[%s0 + $0x3c0] sm:$0xf]
  %v256 = vld [vmem:[%s0 + $0x3c4] sm:$0xf]
  %v257 = vld [vmem:[%s0 + $0x3c8] sm:$0xf]
  %v258 = vld [vmem:[%s0 + $0x3cc] sm:$0xf]
  %v259 = vld [vmem:[%s0 + $0x3d0] sm:$0xf]
  %v260 = vld [vmem:[%s0 + $0x3d4] sm:$0xf]
  %v261 = vld [vmem:[%s0 + $0x3d8] sm:$0xf]
  %v262 = vld [vmem:[%s0 + $0x3dc] sm:$0xf]
  %v263 = vld [vmem:[%s0 + $0x3e0] sm:$0xf]
  %v264 = vld [vmem:[%s0 + $0x3e4] sm:$0xf]
  %v265 = vld [vmem:[%s0 + $0x3e8] sm:$0xf]
  %v266 = vld [vmem:[%s0 + $0x3ec] sm:$0xf]
  %v267 = vld [vmem:[%s0 + $0x3f0] sm:$0xf]
  %v268 = vld [vmem:[%s0 + $0x3f4] sm:$0xf]
  %v269 = vld [vmem:[%s0 + $0x3f8] sm:$0xf]
  %v270 = vld [vmem:[%s0 + $0x3fc] sm:$0xf]
  %v271 = vld [vmem:[%s1] sm:$0xf]
  %v272 = vld [vmem:[%s1 + $0x4] sm:$0xf]
  %v273 = vld [vmem:[%s2] sm:$0x1]
  %v275 = vlaneseq
  %v276 = vshrl.u32 %v275, 7
  %v277 = vsub.s32 0, %v276
  %v278 = vrot.slane %v273, %v277
  %v536 = vunpack.c.l.b16 %v15
  %v537 = vunpack.c.l.b16 %v16
  %v538 = vunpack.c.l.b16 %v17
  %v539 = vunpack.c.l.b16 %v18
  %v540 = vunpack.c.l.b16 %v19
  %v541 = vunpack.c.l.b16 %v20
  %v542 = vunpack.c.l.b16 %v21
  %v543 = vunpack.c.l.b16 %v22
  %v544 = vunpack.c.l.b16 %v23
  %v545 = vunpack.c.l.b16 %v24
  %v546 = vunpack.c.l.b16 %v25
  %v547 = vunpack.c.l.b16 %v26
  %v548 = vunpack.c.l.b16 %v27
  %v549 = vunpack.c.l.b16 %v28
  %v550 = vunpack.c.l.b16 %v29
  %v551 = vunpack.c.l.b16 %v30
  %v552 = vunpack.c.l.b16 %v31
  %v553 = vunpack.c.l.b16 %v32
  %v554 = vunpack.c.l.b16 %v33
  %v555 = vunpack.c.l.b16 %v34
  %v556 = vunpack.c.l.b16 %v35
  %v557 = vunpack.c.l.b16 %v36
  %v558 = vunpack.c.l.b16 %v37
  %v559 = vunpack.c.l.b16 %v38
  %v560 = vunpack.c.l.b16 %v39
  %v561 = vunpack.c.l.b16 %v40
  %v562 = vunpack.c.l.b16 %v41
  %v563 = vunpack.c.l.b16 %v42
  %v564 = vunpack.c.l.b16 %v43
  %v565 = vunpack.c.l.b16 %v44
  %v566 = vunpack.c.l.b16 %v45
  %v567 = vunpack.c.l.b16 %v46
  %v568 = vunpack.c.l.b16 %v47
  %v569 = vunpack.c.l.b16 %v48
  %v570 = vunpack.c.l.b16 %v49
  %v571 = vunpack.c.l.b16 %v50
  %v572 = vunpack.c.l.b16 %v51
  %v573 = vunpack.c.l.b16 %v52
  %v574 = vunpack.c.l.b16 %v53
  %v575 = vunpack.c.l.b16 %v54
  %v576 = vunpack.c.l.b16 %v55
  %v577 = vunpack.c.l.b16 %v56
  %v578 = vunpack.c.l.b16 %v57
  %v579 = vunpack.c.l.b16 %v58
  %v580 = vunpack.c.l.b16 %v59
  %v581 = vunpack.c.l.b16 %v60
  %v582 = vunpack.c.l.b16 %v61
  %v583 = vunpack.c.l.b16 %v62
  %v584 = vunpack.c.l.b16 %v63
  %v585 = vunpack.c.l.b16 %v64
  %v586 = vunpack.c.l.b16 %v65
  %v587 = vunpack.c.l.b16 %v66
  %v588 = vunpack.c.l.b16 %v67
  %v589 = vunpack.c.l.b16 %v68
  %v590 = vunpack.c.l.b16 %v69
  %v591 = vunpack.c.l.b16 %v70
  %v592 = vunpack.c.l.b16 %v71
  %v593 = vunpack.c.l.b16 %v72
  %v594 = vunpack.c.l.b16 %v73
  %v595 = vunpack.c.l.b16 %v74
  %v596 = vunpack.c.l.b16 %v75
  %v597 = vunpack.c.l.b16 %v76
  %v598 = vunpack.c.l.b16 %v77
  %v599 = vunpack.c.l.b16 %v78
  %v600 = vunpack.c.l.b16 %v79
  %v601 = vunpack.c.l.b16 %v80
  %v602 = vunpack.c.l.b16 %v81
  %v603 = vunpack.c.l.b16 %v82
  %v604 = vunpack.c.l.b16 %v83
  %v605 = vunpack.c.l.b16 %v84
  %v606 = vunpack.c.l.b16 %v85
  %v607 = vunpack.c.l.b16 %v86
  %v608 = vunpack.c.l.b16 %v87
  %v609 = vunpack.c.l.b16 %v88
  %v610 = vunpack.c.l.b16 %v89
  %v611 = vunpack.c.l.b16 %v90
  %v612 = vunpack.c.l.b16 %v91
  %v613 = vunpack.c.l.b16 %v92
  %v614 = vunpack.c.l.b16 %v93
  %v615 = vunpack.c.l.b16 %v94
  %v616 = vunpack.c.l.b16 %v95
  %v617 = vunpack.c.l.b16 %v96
  %v618 = vunpack.c.l.b16 %v97
  %v619 = vunpack.c.l.b16 %v98
  %v620 = vunpack.c.l.b16 %v99
  %v621 = vunpack.c.l.b16 %v100
  %v622 = vunpack.c.l.b16 %v101
  %v623 = vunpack.c.l.b16 %v102
  %v624 = vunpack.c.l.b16 %v103
  %v625 = vunpack.c.l.b16 %v104
  %v626 = vunpack.c.l.b16 %v105
  %v627 = vunpack.c.l.b16 %v106
  %v628 = vunpack.c.l.b16 %v107
  %v629 = vunpack.c.l.b16 %v108
  %v630 = vunpack.c.l.b16 %v109
  %v631 = vunpack.c.l.b16 %v110
  %v632 = vunpack.c.l.b16 %v111
  %v633 = vunpack.c.l.b16 %v112
  %v634 = vunpack.c.l.b16 %v113
  %v635 = vunpack.c.l.b16 %v114
  %v636 = vunpack.c.l.b16 %v115
  %v637 = vunpack.c.l.b16 %v116
  %v638 = vunpack.c.l.b16 %v117
  %v639 = vunpack.c.l.b16 %v118
  %v640 = vunpack.c.l.b16 %v119
  %v641 = vunpack.c.l.b16 %v120
  %v642 = vunpack.c.l.b16 %v121
  %v643 = vunpack.c.l.b16 %v122
  %v644 = vunpack.c.l.b16 %v123
  %v645 = vunpack.c.l.b16 %v124
  %v646 = vunpack.c.l.b16 %v125
  %v647 = vunpack.c.l.b16 %v126
  %v648 = vunpack.c.l.b16 %v127
  %v649 = vunpack.c.l.b16 %v128
  %v650 = vunpack.c.l.b16 %v129
  %v651 = vunpack.c.l.b16 %v130
  %v652 = vunpack.c.l.b16 %v131
  %v653 = vunpack.c.l.b16 %v132
  %v654 = vunpack.c.l.b16 %v133
  %v655 = vunpack.c.l.b16 %v134
  %v656 = vunpack.c.l.b16 %v135
  %v657 = vunpack.c.l.b16 %v136
  %v658 = vunpack.c.l.b16 %v137
  %v659 = vunpack.c.l.b16 %v138
  %v660 = vunpack.c.l.b16 %v139
  %v661 = vunpack.c.l.b16 %v140
  %v662 = vunpack.c.l.b16 %v141
  %v663 = vunpack.c.l.b16 %v142
  %v664 = vunpack.c.l.b16 %v143
  %v665 = vunpack.c.l.b16 %v144
  %v666 = vunpack.c.l.b16 %v145
  %v667 = vunpack.c.l.b16 %v146
  %v668 = vunpack.c.l.b16 %v147
  %v669 = vunpack.c.l.b16 %v148
  %v670 = vunpack.c.l.b16 %v149
  %v671 = vunpack.c.l.b16 %v150
  %v672 = vunpack.c.l.b16 %v151
  %v673 = vunpack.c.l.b16 %v152
  %v674 = vunpack.c.l.b16 %v153
  %v675 = vunpack.c.l.b16 %v154
  %v676 = vunpack.c.l.b16 %v155
  %v677 = vunpack.c.l.b16 %v156
  %v678 = vunpack.c.l.b16 %v157
  %v679 = vunpack.c.l.b16 %v158
  %v680 = vunpack.c.l.b16 %v159
  %v681 = vunpack.c.l.b16 %v160
  %v682 = vunpack.c.l.b16 %v161
  %v683 = vunpack.c.l.b16 %v162
  %v684 = vunpack.c.l.b16 %v163
  %v685 = vunpack.c.l.b16 %v164
  %v686 = vunpack.c.l.b16 %v165
  %v687 = vunpack.c.l.b16 %v166
  %v688 = vunpack.c.l.b16 %v167
  %v689 = vunpack.c.l.b16 %v168
  %v690 = vunpack.c.l.b16 %v169
  %v691 = vunpack.c.l.b16 %v170
  %v692 = vunpack.c.l.b16 %v171
  %v693 = vunpack.c.l.b16 %v172
  %v694 = vunpack.c.l.b16 %v173
  %v695 = vunpack.c.l.b16 %v174
  %v696 = vunpack.c.l.b16 %v175
  %v697 = vunpack.c.l.b16 %v176
  %v698 = vunpack.c.l.b16 %v177
  %v699 = vunpack.c.l.b16 %v178
  %v700 = vunpack.c.l.b16 %v179
  %v701 = vunpack.c.l.b16 %v180
  %v702 = vunpack.c.l.b16 %v181
  %v703 = vunpack.c.l.b16 %v182
  %v704 = vunpack.c.l.b16 %v183
  %v705 = vunpack.c.l.b16 %v184
  %v706 = vunpack.c.l.b16 %v185
  %v707 = vunpack.c.l.b16 %v186
  %v708 = vunpack.c.l.b16 %v187
  %v709 = vunpack.c.l.b16 %v188
  %v710 = vunpack.c.l.b16 %v189
  %v711 = vunpack.c.l.b16 %v190
  %v712 = vunpack.c.l.b16 %v191
  %v713 = vunpack.c.l.b16 %v192
  %v714 = vunpack.c.l.b16 %v193
  %v715 = vunpack.c.l.b16 %v194
  %v716 = vunpack.c.l.b16 %v195
  %v717 = vunpack.c.l.b16 %v196
  %v718 = vunpack.c.l.b16 %v197
  %v719 = vunpack.c.l.b16 %v198
  %v720 = vunpack.c.l.b16 %v199
  %v721 = vunpack.c.l.b16 %v200
  %v722 = vunpack.c.l.b16 %v201
  %v723 = vunpack.c.l.b16 %v202
  %v724 = vunpack.c.l.b16 %v203
  %v725 = vunpack.c.l.b16 %v204
  %v726 = vunpack.c.l.b16 %v205
  %v727 = vunpack.c.l.b16 %v206
  %v728 = vunpack.c.l.b16 %v207
  %v729 = vunpack.c.l.b16 %v208
  %v730 = vunpack.c.l.b16 %v209
  %v731 = vunpack.c.l.b16 %v210
  %v732 = vunpack.c.l.b16 %v211
  %v733 = vunpack.c.l.b16 %v212
  %v734 = vunpack.c.l.b16 %v213
  %v735 = vunpack.c.l.b16 %v214
  %v736 = vunpack.c.l.b16 %v215
  %v737 = vunpack.c.l.b16 %v216
  %v738 = vunpack.c.l.b16 %v217
  %v739 = vunpack.c.l.b16 %v218
  %v740 = vunpack.c.l.b16 %v219
  %v741 = vunpack.c.l.b16 %v220
  %v742 = vunpack.c.l.b16 %v221
  %v743 = vunpack.c.l.b16 %v222
  %v744 = vunpack.c.l.b16 %v223
  %v745 = vunpack.c.l.b16 %v224
  %v746 = vunpack.c.l.b16 %v225
  %v747 = vunpack.c.l.b16 %v226
  %v748 = vunpack.c.l.b16 %v227
  %v749 = vunpack.c.l.b16 %v228
  %v750 = vunpack.c.l.b16 %v229
  %v751 = vunpack.c.l.b16 %v230
  %v752 = vunpack.c.l.b16 %v231
  %v753 = vunpack.c.l.b16 %v232
  %v754 = vunpack.c.l.b16 %v233
  %v755 = vunpack.c.l.b16 %v234
  %v756 = vunpack.c.l.b16 %v235
  %v757 = vunpack.c.l.b16 %v236
  %v758 = vunpack.c.l.b16 %v237
  %v759 = vunpack.c.l.b16 %v238
  %v760 = vunpack.c.l.b16 %v239
  %v761 = vunpack.c.l.b16 %v240
  %v762 = vunpack.c.l.b16 %v241
  %v763 = vunpack.c.l.b16 %v242
  %v764 = vunpack.c.l.b16 %v243
  %v765 = vunpack.c.l.b16 %v244
  %v766 = vunpack.c.l.b16 %v245
  %v767 = vunpack.c.l.b16 %v246
  %v768 = vunpack.c.l.b16 %v247
  %v769 = vunpack.c.l.b16 %v248
  %v770 = vunpack.c.l.b16 %v249
  %v771 = vunpack.c.l.b16 %v250
  %v772 = vunpack.c.l.b16 %v251
  %v773 = vunpack.c.l.b16 %v252
  %v774 = vunpack.c.l.b16 %v253
  %v775 = vunpack.c.l.b16 %v254
  %v776 = vunpack.c.l.b16 %v255
  %v777 = vunpack.c.l.b16 %v256
  %v778 = vunpack.c.l.b16 %v257
  %v779 = vunpack.c.l.b16 %v258
  %v780 = vunpack.c.l.b16 %v259
  %v781 = vunpack.c.l.b16 %v260
  %v782 = vunpack.c.l.b16 %v261
  %v783 = vunpack.c.l.b16 %v262
  %v784 = vunpack.c.l.b16 %v263
  %v785 = vunpack.c.l.b16 %v264
  %v786 = vunpack.c.l.b16 %v265
  %v787 = vunpack.c.l.b16 %v266
  %v788 = vunpack.c.l.b16 %v267
  %v789 = vunpack.c.l.b16 %v268
  %v790 = vunpack.c.l.b16 %v269
  %v791 = vunpack.c.l.b16 %v270
  %v792 = vpack.c.b16 %v537, %v536
  %v793 = vpack.c.b16 %v539, %v538
  %v794 = vpack.c.b16 %v541, %v540
  %v795 = vpack.c.b16 %v543, %v542
  %v796 = vpack.c.b16 %v545, %v544
  %v797 = vpack.c.b16 %v547, %v546
  %v798 = vpack.c.b16 %v549, %v548
  %v799 = vpack.c.b16 %v551, %v550
  %v800 = vpack.c.b16 %v553, %v552
  %v801 = vpack.c.b16 %v555, %v554
  %v802 = vpack.c.b16 %v557, %v556
  %v803 = vpack.c.b16 %v559, %v558
  %v804 = vpack.c.b16 %v561, %v560
  %v805 = vpack.c.b16 %v563, %v562
  %v806 = vpack.c.b16 %v565, %v564
  %v807 = vpack.c.b16 %v567, %v566
  %v808 = vpack.c.b16 %v569, %v568
  %v809 = vpack.c.b16 %v571, %v570
  %v810 = vpack.c.b16 %v573, %v572
  %v811 = vpack.c.b16 %v575, %v574
  %v812 = vpack.c.b16 %v577, %v576
  %v813 = vpack.c.b16 %v579, %v578
  %v814 = vpack.c.b16 %v581, %v580
  %v815 = vpack.c.b16 %v583, %v582
  %v816 = vpack.c.b16 %v585, %v584
  %v817 = vpack.c.b16 %v587, %v586
  %v818 = vpack.c.b16 %v589, %v588
  %v819 = vpack.c.b16 %v591, %v590
  %v820 = vpack.c.b16 %v593, %v592
  %v821 = vpack.c.b16 %v595, %v594
  %v822 = vpack.c.b16 %v597, %v596
  %v823 = vpack.c.b16 %v599, %v598
  %v824 = vpack.c.b16 %v601, %v600
  %v825 = vpack.c.b16 %v603, %v602
  %v826 = vpack.c.b16 %v605, %v604
  %v827 = vpack.c.b16 %v607, %v606
  %v828 = vpack.c.b16 %v609, %v608
  %v829 = vpack.c.b16 %v611, %v610
  %v830 = vpack.c.b16 %v613, %v612
  %v831 = vpack.c.b16 %v615, %v614
  %v832 = vpack.c.b16 %v617, %v616
  %v833 = vpack.c.b16 %v619, %v618
  %v834 = vpack.c.b16 %v621, %v620
  %v835 = vpack.c.b16 %v623, %v622
  %v836 = vpack.c.b16 %v625, %v624
  %v837 = vpack.c.b16 %v627, %v626
  %v838 = vpack.c.b16 %v629, %v628
  %v839 = vpack.c.b16 %v631, %v630
  %v840 = vpack.c.b16 %v633, %v632
  %v841 = vpack.c.b16 %v635, %v634
  %v842 = vpack.c.b16 %v637, %v636
  %v843 = vpack.c.b16 %v639, %v638
  %v844 = vpack.c.b16 %v641, %v640
  %v845 = vpack.c.b16 %v643, %v642
  %v846 = vpack.c.b16 %v645, %v644
  %v847 = vpack.c.b16 %v647, %v646
  %v848 = vpack.c.b16 %v649, %v648
  %v849 = vpack.c.b16 %v651, %v650
  %v850 = vpack.c.b16 %v653, %v652
  %v851 = vpack.c.b16 %v655, %v654
  %v852 = vpack.c.b16 %v657, %v656
  %v853 = vpack.c.b16 %v659, %v658
  %v854 = vpack.c.b16 %v661, %v660
  %v855 = vpack.c.b16 %v663, %v662
  %v856 = vpack.c.b16 %v665, %v664
  %v857 = vpack.c.b16 %v667, %v666
  %v858 = vpack.c.b16 %v669, %v668
  %v859 = vpack.c.b16 %v671, %v670
  %v860 = vpack.c.b16 %v673, %v672
  %v861 = vpack.c.b16 %v675, %v674
  %v862 = vpack.c.b16 %v677, %v676
  %v863 = vpack.c.b16 %v679, %v678
  %v864 = vpack.c.b16 %v681, %v680
  %v865 = vpack.c.b16 %v683, %v682
  %v866 = vpack.c.b16 %v685, %v684
  %v867 = vpack.c.b16 %v687, %v686
  %v868 = vpack.c.b16 %v689, %v688
  %v869 = vpack.c.b16 %v691, %v690
  %v870 = vpack.c.b16 %v693, %v692
  %v871 = vpack.c.b16 %v695, %v694
  %v872 = vpack.c.b16 %v697, %v696
  %v873 = vpack.c.b16 %v699, %v698
  %v874 = vpack.c.b16 %v701, %v700
  %v875 = vpack.c.b16 %v703, %v702
  %v876 = vpack.c.b16 %v705, %v704
  %v877 = vpack.c.b16 %v707, %v706
  %v878 = vpack.c.b16 %v709, %v708
  %v879 = vpack.c.b16 %v711, %v710
  %v880 = vpack.c.b16 %v713, %v712
  %v881 = vpack.c.b16 %v715, %v714
  %v882 = vpack.c.b16 %v717, %v716
  %v883 = vpack.c.b16 %v719, %v718
  %v884 = vpack.c.b16 %v721, %v720
  %v885 = vpack.c.b16 %v723, %v722
  %v886 = vpack.c.b16 %v725, %v724
  %v887 = vpack.c.b16 %v727, %v726
  %v888 = vpack.c.b16 %v729, %v728
  %v889 = vpack.c.b16 %v731, %v730
  %v890 = vpack.c.b16 %v733, %v732
  %v891 = vpack.c.b16 %v735, %v734
  %v892 = vpack.c.b16 %v737, %v736
  %v893 = vpack.c.b16 %v739, %v738
  %v894 = vpack.c.b16 %v741, %v740
  %v895 = vpack.c.b16 %v743, %v742
  %v896 = vpack.c.b16 %v745, %v744
  %v897 = vpack.c.b16 %v747, %v746
  %v898 = vpack.c.b16 %v749, %v748
  %v899 = vpack.c.b16 %v751, %v750
  %v900 = vpack.c.b16 %v753, %v752
  %v901 = vpack.c.b16 %v755, %v754
  %v902 = vpack.c.b16 %v757, %v756
  %v903 = vpack.c.b16 %v759, %v758
  %v904 = vpack.c.b16 %v761, %v760
  %v905 = vpack.c.b16 %v763, %v762
  %v906 = vpack.c.b16 %v765, %v764
  %v907 = vpack.c.b16 %v767, %v766
  %v908 = vpack.c.b16 %v769, %v768
  %v909 = vpack.c.b16 %v771, %v770
  %v910 = vpack.c.b16 %v773, %v772
  %v911 = vpack.c.b16 %v775, %v774
  %v912 = vpack.c.b16 %v777, %v776
  %v913 = vpack.c.b16 %v779, %v778
  %v914 = vpack.c.b16 %v781, %v780
  %v915 = vpack.c.b16 %v783, %v782
  %v916 = vpack.c.b16 %v785, %v784
  %v917 = vpack.c.b16 %v787, %v786
  %v918 = vpack.c.b16 %v789, %v788
  %v919 = vpack.c.b16 %v791, %v790
  %v922 = vunpack.c.l.b16 %v271
  %v923 = vunpack.c.l.b16 %v272
  %v924 = vpack.c.b16 %v923, %v922
  %vm926 = vcmask 130048
  %v928 = vsel %vm926, %v792, 0
  %v931 = vsel %vm926, %v793, 0
  %v934 = vsel %vm926, %v794, 0
  %v937 = vsel %vm926, %v795, 0
  %v940 = vsel %vm926, %v796, 0
  %v943 = vsel %vm926, %v797, 0
  %v946 = vsel %vm926, %v798, 0
  %v949 = vsel %vm926, %v799, 0
  %v952 = vsel %vm926, %v800, 0
  %v955 = vsel %vm926, %v801, 0
  %v958 = vsel %vm926, %v802, 0
  %v961 = vsel %vm926, %v803, 0
  %v964 = vsel %vm926, %v804, 0
  %v967 = vsel %vm926, %v805, 0
  %v970 = vsel %vm926, %v806, 0
  %v973 = vsel %vm926, %v807, 0
  %v976 = vsel %vm926, %v808, 0
  %v979 = vsel %vm926, %v809, 0
  %v982 = vsel %vm926, %v810, 0
  %v985 = vsel %vm926, %v811, 0
  %v988 = vsel %vm926, %v812, 0
  %v991 = vsel %vm926, %v813, 0
  %v994 = vsel %vm926, %v814, 0
  %v997 = vsel %vm926, %v815, 0
  %v1000 = vsel %vm926, %v816, 0
  %v1003 = vsel %vm926, %v817, 0
  %v1006 = vsel %vm926, %v818, 0
  %v1009 = vsel %vm926, %v819, 0
  %v1012 = vsel %vm926, %v820, 0
  %v1015 = vsel %vm926, %v821, 0
  %v1018 = vsel %vm926, %v822, 0
  %v1021 = vsel %vm926, %v823, 0
  %v1024 = vsel %vm926, %v824, 0
  %v1027 = vsel %vm926, %v825, 0
  %v1030 = vsel %vm926, %v826, 0
  %v1033 = vsel %vm926, %v827, 0
  %v1036 = vsel %vm926, %v828, 0
  %v1039 = vsel %vm926, %v829, 0
  %v1042 = vsel %vm926, %v830, 0
  %v1045 = vsel %vm926, %v831, 0
  %v1048 = vsel %vm926, %v832, 0
  %v1051 = vsel %vm926, %v833, 0
  %v1054 = vsel %vm926, %v834, 0
  %v1057 = vsel %vm926, %v835, 0
  %v1060 = vsel %vm926, %v836, 0
  %v1063 = vsel %vm926, %v837, 0
  %v1066 = vsel %vm926, %v838, 0
  %v1069 = vsel %vm926, %v839, 0
  %v1072 = vsel %vm926, %v840, 0
  %v1075 = vsel %vm926, %v841, 0
  %v1078 = vsel %vm926, %v842, 0
  %v1081 = vsel %vm926, %v843, 0
  %v1084 = vsel %vm926, %v844, 0
  %v1087 = vsel %vm926, %v845, 0
  %v1090 = vsel %vm926, %v846, 0
  %v1093 = vsel %vm926, %v847, 0
  %v1096 = vsel %vm926, %v848, 0
  %v1099 = vsel %vm926, %v849, 0
  %v1102 = vsel %vm926, %v850, 0
  %v1105 = vsel %vm926, %v851, 0
  %v1108 = vsel %vm926, %v852, 0
  %v1111 = vsel %vm926, %v853, 0
  %v1114 = vsel %vm926, %v854, 0
  %v1117 = vsel %vm926, %v855, 0
  %v1120 = vsel %vm926, %v856, 0
  %v1123 = vsel %vm926, %v857, 0
  %v1126 = vsel %vm926, %v858, 0
  %v1129 = vsel %vm926, %v859, 0
  %v1132 = vsel %vm926, %v860, 0
  %v1135 = vsel %vm926, %v861, 0
  %v1138 = vsel %vm926, %v862, 0
  %v1141 = vsel %vm926, %v863, 0
  %v1144 = vsel %vm926, %v864, 0
  %v1147 = vsel %vm926, %v865, 0
  %v1150 = vsel %vm926, %v866, 0
  %v1153 = vsel %vm926, %v867, 0
  %v1156 = vsel %vm926, %v868, 0
  %v1159 = vsel %vm926, %v869, 0
  %v1162 = vsel %vm926, %v870, 0
  %v1165 = vsel %vm926, %v871, 0
  %v1168 = vsel %vm926, %v872, 0
  %v1171 = vsel %vm926, %v873, 0
  %v1174 = vsel %vm926, %v874, 0
  %v1177 = vsel %vm926, %v875, 0
  %v1180 = vsel %vm926, %v876, 0
  %v1183 = vsel %vm926, %v877, 0
  %v1186 = vsel %vm926, %v878, 0
  %v1189 = vsel %vm926, %v879, 0
  %v1192 = vsel %vm926, %v880, 0
  %v1195 = vsel %vm926, %v881, 0
  %v1198 = vsel %vm926, %v882, 0
  %v1201 = vsel %vm926, %v883, 0
  %v1204 = vsel %vm926, %v884, 0
  %v1207 = vsel %vm926, %v885, 0
  %v1210 = vsel %vm926, %v886, 0
  %v1213 = vsel %vm926, %v887, 0
  %v1216 = vsel %vm926, %v888, 0
  %v1219 = vsel %vm926, %v889, 0
  %v1222 = vsel %vm926, %v890, 0
  %v1225 = vsel %vm926, %v891, 0
  %v1228 = vsel %vm926, %v892, 0
  %v1231 = vsel %vm926, %v893, 0
  %v1234 = vsel %vm926, %v894, 0
  %v1237 = vsel %vm926, %v895, 0
  %v1240 = vsel %vm926, %v896, 0
  %v1243 = vsel %vm926, %v897, 0
  %v1246 = vsel %vm926, %v898, 0
  %v1249 = vsel %vm926, %v899, 0
  %v1252 = vsel %vm926, %v900, 0
  %v1255 = vsel %vm926, %v901, 0
  %v1258 = vsel %vm926, %v902, 0
  %v1261 = vsel %vm926, %v903, 0
  %v1264 = vsel %vm926, %v904, 0
  %v1267 = vsel %vm926, %v905, 0
  %v1270 = vsel %vm926, %v906, 0
  %v1273 = vsel %vm926, %v907, 0
  %v1276 = vsel %vm926, %v908, 0
  %v1279 = vsel %vm926, %v909, 0
  %v1282 = vsel %vm926, %v910, 0
  %v1285 = vsel %vm926, %v911, 0
  %v1288 = vsel %vm926, %v912, 0
  %v1291 = vsel %vm926, %v913, 0
  %v1294 = vsel %vm926, %v914, 0
  %v1297 = vsel %vm926, %v915, 0
  %v1300 = vsel %vm926, %v916, 0
  %v1303 = vsel %vm926, %v917, 0
  %v1306 = vsel %vm926, %v918, 0
  %v1309 = vsel %vm926, %v919, 0
  %1311 = vmatprep.subr.bf16.mxu0 0
  %1312 = vmatpush1.bf16.msra.mxu0 %v924
  %1313 = vmatprep.subr.bf16.mxu0 0
  %1314 = vmatpush1.bf16.msra.mxu0 0
  %1315 = vmatprep.subr.bf16.mxu0 0
  %1316 = vmatpush1.bf16.msra.mxu0 0
  %1317 = vmatprep.subr.bf16.mxu0 0
  %1318 = vmatpush1.bf16.msra.mxu0 0
  %1319 = vmatprep.subr.bf16.mxu0 0
  %1320 = vmatpush1.bf16.msra.mxu0 0
  %1321 = vmatprep.subr.bf16.mxu0 0
  %1322 = vmatpush1.bf16.msra.mxu0 0
  %1323 = vmatprep.subr.bf16.mxu0 0
  %1324 = vmatpush1.bf16.msra.mxu0 0
  %1325 = vmatprep.subr.bf16.mxu0 0
  %1326 = vmatpush1.bf16.msra.mxu0 0
  %1327 = vmatprep.subr.bf16.mxu0 0
  %1328 = vmatpush1.bf16.msra.mxu0 0
  %1329 = vmatprep.subr.bf16.mxu0 0
  %1330 = vmatpush1.bf16.msra.mxu0 0
  %1331 = vmatprep.subr.bf16.mxu0 0
  %1332 = vmatpush1.bf16.msra.mxu0 0
  %1333 = vmatprep.subr.bf16.mxu0 0
  %1334 = vmatpush1.bf16.msra.mxu0 0
  %1335 = vmatprep.subr.bf16.mxu0 0
  %1336 = vmatpush1.bf16.msra.mxu0 0
  %1337 = vmatprep.subr.bf16.mxu0 0
  %1338 = vmatpush1.bf16.msra.mxu0 0
  %1339 = vmatprep.subr.bf16.mxu0 0
  %1340 = vmatpush1.bf16.msra.mxu0 0
  %1341 = vmatprep.subr.bf16.mxu0 0
  %1342 = vmatpush1.bf16.msra.mxu0 0
  %1343 = vmatprep.mubr.bf16.mxu0 0
  %1344 = vmatmul.mubr.bf16.gmra.mrb[0].mxu0 %v928
  %v1345 = vpop.f32.mrb[0].mxu0
  %v1346 = vadd.f32 %v278, %v1345
  %v1347 = vpop.f32.mrb[0].mxu0
  %v1348 = vpop.f32.mrb[0].mxu0
  %v1349 = vadd.f32 %v278, %v1348
  %v1350 = vpop.f32.mrb[0].mxu0
  %1351 = vmatprep.mubr.bf16.mxu0 0
  %1352 = vmatmul.mubr.bf16.gmra.mrb[0].mxu0 %v931
  %v1353 = vpop.f32.mrb[0].mxu0
  %v1354 = vadd.f32 %v278, %v1353
  %v1355 = vpop.f32.mrb[0].mxu0
  %v1356 = vpop.f32.mrb[0].mxu0
  %v1357 = vadd.f32 %v278, %v1356
  %v1358 = vpop.f32.mrb[0].mxu0
  %1359 = vmatprep.mubr.bf16.mxu0 0
  %1360 = vmatmul.mubr.bf16.gmra.mrb[0].mxu0 %v934
  %v1361 = vpop.f32.mrb[0].mxu0
  %v1362 = vadd.f32 %v278, %v1361
  %v1363 = vpop.f32.mrb[0].mxu0
  %v1364 = vpop.f32.mrb[0].mxu0
  %v1365 = vadd.f32 %v278, %v1364
  %v1366 = vpop.f32.mrb[0].mxu0
  %1367 = vmatprep.mubr.bf16.mxu0 0
  %1368 = vmatmul.mubr.bf16.gmra.mrb[0].mxu0 %v937
  %v1369 = vpop.f32.mrb[0].mxu0
  %v1370 = vadd.f32 %v278, %v1369
  %v1371 = vpop.f32.mrb[0].mxu0
  %v1372 = vpop.f32.mrb[0].mxu0
  %v1373 = vadd.f32 %v278, %v1372
  %v1374 = vpop.f32.mrb[0].mxu0
  %1375 = vmatprep.mubr.bf16.mxu0 0
  %1376 = vmatmul.mubr.bf16.gmra.mrb[0].mxu0 %v940
  %v1377 = vpop.f32.mrb[0].mxu0
  %v1378 = vadd.f32 %v278, %v1377
  %v1379 = vpop.f32.mrb[0].mxu0
  %v1380 = vpop.f32.mrb[0].mxu0
  %v1381 = vadd.f32 %v278, %v1380
  %v1382 = vpop.f32.mrb[0].mxu0
  %1383 = vmatprep.mubr.bf16.mxu0 0
  %1384 = vmatmul.mubr.bf16.gmra.mrb[0].mxu0 %v943
  %v1385 = vpop.f32.mrb[0].mxu0
  %v1386 = vadd.f32 %v278, %v1385
  %v1387 = vpop.f32.mrb[0].mxu0
  %v1388 = vpop.f32.mrb[0].mxu0
  %v1389 = vadd.f32 %v278, %v1388
  %v1390 = vpop.f32.mrb[0].mxu0
  %1391 = vmatprep.mubr.bf16.mxu0 0
  %1392 = vmatmul.mubr.bf16.gmra.mrb[0].mxu0 %v946
  %v1393 = vpop.f32.mrb[0].mxu0
  %v1394 = vadd.f32 %v278, %v1393
  %v1395 = vpop.f32.mrb[0].mxu0
  %v1396 = vpop.f32.mrb[0].mxu0
  %v1397 = vadd.f32 %v278, %v1396
  %v1398 = vpop.f32.mrb[0].mxu0
  %1399 = vmatprep.mubr.bf16.mxu0 0
  %1400 = vmatmul.mubr.bf16.gmra.mrb[0].mxu0 %v949
  %v1401 = vpop.f32.mrb[0].mxu0
  %v1402 = vadd.f32 %v278, %v1401
  %v1403 = vpop.f32.mrb[0].mxu0
  %v1404 = vpop.f32.mrb[0].mxu0
  %v1405 = vadd.f32 %v278, %v1404
  %v1406 = vpop.f32.mrb[0].mxu0
  %1407 = vmatprep.mubr.bf16.mxu0 0
  %1408 = vmatmul.mubr.bf16.gmra.mrb[0].mxu0 %v952
  %v1409 = vpop.f32.mrb[0].mxu0
  %v1410 = vadd.f32 %v278, %v1409
  %v1411 = vpop.f32.mrb[0].mxu0
  %v1412 = vpop.f32.mrb[0].mxu0
  %v1413 = vadd.f32 %v278, %v1412
  %v1414 = vpop.f32.mrb[0].mxu0
  %1415 = vmatprep.mubr.bf16.mxu0 0
  %1416 = vmatmul.mubr.bf16.gmra.mrb[0].mxu0 %v955
  %v1417 = vpop.f32.mrb[0].mxu0
  %v1418 = vadd.f32 %v278, %v1417
  %v1419 = vpop.f32.mrb[0].mxu0
  %v1420 = vpop.f32.mrb[0].mxu0
  %v1421 = vadd.f32 %v278, %v1420
  %v1422 = vpop.f32.mrb[0].mxu0
  %1423 = vmatprep.mubr.bf16.mxu0 0
  %1424 = vmatmul.mubr.bf16.gmra.mrb[0].mxu0 %v958
  %v1425 = vpop.f32.mrb[0].mxu0
  %v1426 = vadd.f32 %v278, %v1425
  %v1427 = vpop.f32.mrb[0].mxu0
  %v1428 = vpop.f32.mrb[0].mxu0
  %v1429 = vadd.f32 %v278, %v1428
  %v1430 = vpop.f32.mrb[0].mxu0
  %1431 = vmatprep.mubr.bf16.mxu0 0
  %1432 = vmatmul.mubr.bf16.gmra.mrb[0].mxu0 %v961
  %v1433 = vpop.f32.mrb[0].mxu0
  %v1434 = vadd.f32 %v278, %v1433
  %v1435 = vpop.f32.mrb[0].mxu0
  %v1436 = vpop.f32.mrb[0].mxu0
  %v1437 = vadd.f32 %v278, %v1436
  %v1438 = vpop.f32.mrb[0].mxu0
  %1439 = vmatprep.mubr.bf16.mxu0 0
  %1440 = vmatmul.mubr.bf16.gmra.mrb[0].mxu0 %v964
  %v1441 = vpop.f32.mrb[0].mxu0
  %v1442 = vadd.f32 %v278, %v1441
  %v1443 = vpop.f32.mrb[0].mxu0
  %v1444 = vpop.f32.mrb[0].mxu0
  %v1445 = vadd.f32 %v278, %v1444
  %v1446 = vpop.f32.mrb[0].mxu0
  %1447 = vmatprep.mubr.bf16.mxu0 0
  %1448 = vmatmul.mubr.bf16.gmra.mrb[0].mxu0 %v967
  %v1449 = vpop.f32.mrb[0].mxu0
  %v1450 = vadd.f32 %v278, %v1449
  %v1451 = vpop.f32.mrb[0].mxu0
  %v1452 = vpop.f32.mrb[0].mxu0
  %v1453 = vadd.f32 %v278, %v1452
  %v1454 = vpop.f32.mrb[0].mxu0
  %1455 = vmatprep.mubr.bf16.mxu0 0
  %1456 = vmatmul.mubr.bf16.gmra.mrb[0].mxu0 %v970
  %v1457 = vpop.f32.mrb[0].mxu0
  %v1458 = vadd.f32 %v278, %v1457
  %v1459 = vpop.f32.mrb[0].mxu0
  %v1460 = vpop.f32.mrb[0].mxu0
  %v1461 = vadd.f32 %v278, %v1460
  %v1462 = vpop.f32.mrb[0].mxu0
  %1463 = vmatprep.mubr.bf16.mxu0 0
  %1464 = vmatmul.mubr.bf16.gmra.mrb[0].mxu0 %v973
  %v1465 = vpop.f32.mrb[0].mxu0
  %v1466 = vadd.f32 %v278, %v1465
  %v1467 = vpop.f32.mrb[0].mxu0
  %v1468 = vpop.f32.mrb[0].mxu0
  %v1469 = vadd.f32 %v278, %v1468
  %v1470 = vpop.f32.mrb[0].mxu0
  %1471 = vmatprep.mubr.bf16.mxu0 0
  %1472 = vmatmul.mubr.bf16.gmra.mrb[0].mxu0 %v976
  %v1473 = vpop.f32.mrb[0].mxu0
  %v1474 = vadd.f32 %v278, %v1473
  %v1475 = vpop.f32.mrb[0].mxu0
  %v1476 = vpop.f32.mrb[0].mxu0
  %v1477 = vadd.f32 %v278, %v1476
  %v1478 = vpop.f32.mrb[0].mxu0
  %1479 = vmatprep.mubr.bf16.mxu0 0
  %1480 = vmatmul.mubr.bf16.gmra.mrb[0].mxu0 %v979
  %v1481 = vpop.f32.mrb[0].mxu0
  %v1482 = vadd.f32 %v278, %v1481
  %v1483 = vpop.f32.mrb[0].mxu0
  %v1484 = vpop.f32.mrb[0].mxu0
  %v1485 = vadd.f32 %v278, %v1484
  %v1486 = vpop.f32.mrb[0].mxu0
  %1487 = vmatprep.mubr.bf16.mxu0 0
  %1488 = vmatmul.mubr.bf16.gmra.mrb[0].mxu0 %v982
  %v1489 = vpop.f32.mrb[0].mxu0
  %v1490 = vadd.f32 %v278, %v1489
  %v1491 = vpop.f32.mrb[0].mxu0
  %v1492 = vpop.f32.mrb[0].mxu0
  %v1493 = vadd.f32 %v278, %v1492
  %v1494 = vpop.f32.mrb[0].mxu0
  %1495 = vmatprep.mubr.bf16.mxu0 0
  %1496 = vmatmul.mubr.bf16.gmra.mrb[0].mxu0 %v985
  %v1497 = vpop.f32.mrb[0].mxu0
  %v1498 = vadd.f32 %v278, %v1497
  %v1499 = vpop.f32.mrb[0].mxu0
  %v1500 = vpop.f32.mrb[0].mxu0
  %v1501 = vadd.f32 %v278, %v1500
  %v1502 = vpop.f32.mrb[0].mxu0
  %1503 = vmatprep.mubr.bf16.mxu0 0
  %1504 = vmatmul.mubr.bf16.gmra.mrb[0].mxu0 %v988
  %v1505 = vpop.f32.mrb[0].mxu0
  %v1506 = vadd.f32 %v278, %v1505
  %v1507 = vpop.f32.mrb[0].mxu0
  %v1508 = vpop.f32.mrb[0].mxu0
  %v1509 = vadd.f32 %v278, %v1508
  %v1510 = vpop.f32.mrb[0].mxu0
  %1511 = vmatprep.mubr.bf16.mxu0 0
  %1512 = vmatmul.mubr.bf16.gmra.mrb[0].mxu0 %v991
  %v1513 = vpop.f32.mrb[0].mxu0
  %v1514 = vadd.f32 %v278, %v1513
  %v1515 = vpop.f32.mrb[0].mxu0
  %v1516 = vpop.f32.mrb[0].mxu0
  %v1517 = vadd.f32 %v278, %v1516
  %v1518 = vpop.f32.mrb[0].mxu0
  %1519 = vmatprep.mubr.bf16.mxu0 0
  %1520 = vmatmul.mubr.bf16.gmra.mrb[0].mxu0 %v994
  %v1521 = vpop.f32.mrb[0].mxu0
  %v1522 = vadd.f32 %v278, %v1521
  %v1523 = vpop.f32.mrb[0].mxu0
  %v1524 = vpop.f32.mrb[0].mxu0
  %v1525 = vadd.f32 %v278, %v1524
  %v1526 = vpop.f32.mrb[0].mxu0
  %1527 = vmatprep.mubr.bf16.mxu0 0
  %1528 = vmatmul.mubr.bf16.gmra.mrb[0].mxu0 %v997
  %v1529 = vpop.f32.mrb[0].mxu0
  %v1530 = vadd.f32 %v278, %v1529
  %v1531 = vpop.f32.mrb[0].mxu0
  %v1532 = vpop.f32.mrb[0].mxu0
  %v1533 = vadd.f32 %v278, %v1532
  %v1534 = vpop.f32.mrb[0].mxu0
  %1535 = vmatprep.mubr.bf16.mxu0 0
  %1536 = vmatmul.mubr.bf16.gmra.mrb[0].mxu0 %v1000
  %v1537 = vpop.f32.mrb[0].mxu0
  %v1538 = vadd.f32 %v278, %v1537
  %v1539 = vpop.f32.mrb[0].mxu0
  %v1540 = vpop.f32.mrb[0].mxu0
  %v1541 = vadd.f32 %v278, %v1540
  %v1542 = vpop.f32.mrb[0].mxu0
  %1543 = vmatprep.mubr.bf16.mxu0 0
  %1544 = vmatmul.mubr.bf16.gmra.mrb[0].mxu0 %v1003
  %v1545 = vpop.f32.mrb[0].mxu0
  %v1546 = vadd.f32 %v278, %v1545
  %v1547 = vpop.f32.mrb[0].mxu0
  %v1548 = vpop.f32.mrb[0].mxu0
  %v1549 = vadd.f32 %v278, %v1548
  %v1550 = vpop.f32.mrb[0].mxu0
  %1551 = vmatprep.mubr.bf16.mxu0 0
  %1552 = vmatmul.mubr.bf16.gmra.mrb[0].mxu0 %v1006
  %v1553 = vpop.f32.mrb[0].mxu0
  %v1554 = vadd.f32 %v278, %v1553
  %v1555 = vpop.f32.mrb[0].mxu0
  %v1556 = vpop.f32.mrb[0].mxu0
  %v1557 = vadd.f32 %v278, %v1556
  %v1558 = vpop.f32.mrb[0].mxu0
  %1559 = vmatprep.mubr.bf16.mxu0 0
  %1560 = vmatmul.mubr.bf16.gmra.mrb[0].mxu0 %v1009
  %v1561 = vpop.f32.mrb[0].mxu0
  %v1562 = vadd.f32 %v278, %v1561
  %v1563 = vpop.f32.mrb[0].mxu0
  %v1564 = vpop.f32.mrb[0].mxu0
  %v1565 = vadd.f32 %v278, %v1564
  %v1566 = vpop.f32.mrb[0].mxu0
  %1567 = vmatprep.mubr.bf16.mxu0 0
  %1568 = vmatmul.mubr.bf16.gmra.mrb[0].mxu0 %v1012
  %v1569 = vpop.f32.mrb[0].mxu0
  %v1570 = vadd.f32 %v278, %v1569
  %v1571 = vpop.f32.mrb[0].mxu0
  %v1572 = vpop.f32.mrb[0].mxu0
  %v1573 = vadd.f32 %v278, %v1572
  %v1574 = vpop.f32.mrb[0].mxu0
  %1575 = vmatprep.mubr.bf16.mxu0 0
  %1576 = vmatmul.mubr.bf16.gmra.mrb[0].mxu0 %v1015
  %v1577 = vpop.f32.mrb[0].mxu0
  %v1578 = vadd.f32 %v278, %v1577
  %v1579 = vpop.f32.mrb[0].mxu0
  %v1580 = vpop.f32.mrb[0].mxu0
  %v1581 = vadd.f32 %v278, %v1580
  %v1582 = vpop.f32.mrb[0].mxu0
  %1583 = vmatprep.mubr.bf16.mxu0 0
  %1584 = vmatmul.mubr.bf16.gmra.mrb[0].mxu0 %v1018
  %v1585 = vpop.f32.mrb[0].mxu0
  %v1586 = vadd.f32 %v278, %v1585
  %v1587 = vpop.f32.mrb[0].mxu0
  %v1588 = vpop.f32.mrb[0].mxu0
  %v1589 = vadd.f32 %v278, %v1588
  %v1590 = vpop.f32.mrb[0].mxu0
  %1591 = vmatprep.mubr.bf16.mxu0 0
  %1592 = vmatmul.mubr.bf16.gmra.mrb[0].mxu0 %v1021
  %v1593 = vpop.f32.mrb[0].mxu0
  %v1594 = vadd.f32 %v278, %v1593
  %v1595 = vpop.f32.mrb[0].mxu0
  %v1596 = vpop.f32.mrb[0].mxu0
  %v1597 = vadd.f32 %v278, %v1596
  %v1598 = vpop.f32.mrb[0].mxu0
  %1599 = vmatprep.mubr.bf16.mxu0 0
  %1600 = vmatmul.mubr.bf16.gmra.mrb[0].mxu0 %v1024
  %v1601 = vpop.f32.mrb[0].mxu0
  %v1602 = vadd.f32 %v278, %v1601
  %v1603 = vpop.f32.mrb[0].mxu0
  %v1604 = vpop.f32.mrb[0].mxu0
  %v1605 = vadd.f32 %v278, %v1604
  %v1606 = vpop.f32.mrb[0].mxu0
  %1607 = vmatprep.mubr.bf16.mxu0 0
  %1608 = vmatmul.mubr.bf16.gmra.mrb[0].mxu0 %v1027
  %v1609 = vpop.f32.mrb[0].mxu0
  %v1610 = vadd.f32 %v278, %v1609
  %v1611 = vpop.f32.mrb[0].mxu0
  %v1612 = vpop.f32.mrb[0].mxu0
  %v1613 = vadd.f32 %v278, %v1612
  %v1614 = vpop.f32.mrb[0].mxu0
  %1615 = vmatprep.mubr.bf16.mxu0 0
  %1616 = vmatmul.mubr.bf16.gmra.mrb[0].mxu0 %v1030
  %v1617 = vpop.f32.mrb[0].mxu0
  %v1618 = vadd.f32 %v278, %v1617
  %v1619 = vpop.f32.mrb[0].mxu0
  %v1620 = vpop.f32.mrb[0].mxu0
  %v1621 = vadd.f32 %v278, %v1620
  %v1622 = vpop.f32.mrb[0].mxu0
  %1623 = vmatprep.mubr.bf16.mxu0 0
  %1624 = vmatmul.mubr.bf16.gmra.mrb[0].mxu0 %v1033
  %v1625 = vpop.f32.mrb[0].mxu0
  %v1626 = vadd.f32 %v278, %v1625
  %v1627 = vpop.f32.mrb[0].mxu0
  %v1628 = vpop.f32.mrb[0].mxu0
  %v1629 = vadd.f32 %v278, %v1628
  %v1630 = vpop.f32.mrb[0].mxu0
  %1631 = vmatprep.mubr.bf16.mxu0 0
  %1632 = vmatmul.mubr.bf16.gmra.mrb[0].mxu0 %v1036
  %v1633 = vpop.f32.mrb[0].mxu0
  %v1634 = vadd.f32 %v278, %v1633
  %v1635 = vpop.f32.mrb[0].mxu0
  %v1636 = vpop.f32.mrb[0].mxu0
  %v1637 = vadd.f32 %v278, %v1636
  %v1638 = vpop.f32.mrb[0].mxu0
  %1639 = vmatprep.mubr.bf16.mxu0 0
  %1640 = vmatmul.mubr.bf16.gmra.mrb[0].mxu0 %v1039
  %v1641 = vpop.f32.mrb[0].mxu0
  %v1642 = vadd.f32 %v278, %v1641
  %v1643 = vpop.f32.mrb[0].mxu0
  %v1644 = vpop.f32.mrb[0].mxu0
  %v1645 = vadd.f32 %v278, %v1644
  %v1646 = vpop.f32.mrb[0].mxu0
  %1647 = vmatprep.mubr.bf16.mxu0 0
  %1648 = vmatmul.mubr.bf16.gmra.mrb[0].mxu0 %v1042
  %v1649 = vpop.f32.mrb[0].mxu0
  %v1650 = vadd.f32 %v278, %v1649
  %v1651 = vpop.f32.mrb[0].mxu0
  %v1652 = vpop.f32.mrb[0].mxu0
  %v1653 = vadd.f32 %v278, %v1652
  %v1654 = vpop.f32.mrb[0].mxu0
  %1655 = vmatprep.mubr.bf16.mxu0 0
  %1656 = vmatmul.mubr.bf16.gmra.mrb[0].mxu0 %v1045
  %v1657 = vpop.f32.mrb[0].mxu0
  %v1658 = vadd.f32 %v278, %v1657
  %v1659 = vpop.f32.mrb[0].mxu0
  %v1660 = vpop.f32.mrb[0].mxu0
  %v1661 = vadd.f32 %v278, %v1660
  %v1662 = vpop.f32.mrb[0].mxu0
  %1663 = vmatprep.mubr.bf16.mxu0 0
  %1664 = vmatmul.mubr.bf16.gmra.mrb[0].mxu0 %v1048
  %v1665 = vpop.f32.mrb[0].mxu0
  %v1666 = vadd.f32 %v278, %v1665
  %v1667 = vpop.f32.mrb[0].mxu0
  %v1668 = vpop.f32.mrb[0].mxu0
  %v1669 = vadd.f32 %v278, %v1668
  %v1670 = vpop.f32.mrb[0].mxu0
  %1671 = vmatprep.mubr.bf16.mxu0 0
  %1672 = vmatmul.mubr.bf16.gmra.mrb[0].mxu0 %v1051
  %v1673 = vpop.f32.mrb[0].mxu0
  %v1674 = vadd.f32 %v278, %v1673
  %v1675 = vpop.f32.mrb[0].mxu0
  %v1676 = vpop.f32.mrb[0].mxu0
  %v1677 = vadd.f32 %v278, %v1676
  %v1678 = vpop.f32.mrb[0].mxu0
  %1679 = vmatprep.mubr.bf16.mxu0 0
  %1680 = vmatmul.mubr.bf16.gmra.mrb[0].mxu0 %v1054
  %v1681 = vpop.f32.mrb[0].mxu0
  %v1682 = vadd.f32 %v278, %v1681
  %v1683 = vpop.f32.mrb[0].mxu0
  %v1684 = vpop.f32.mrb[0].mxu0
  %v1685 = vadd.f32 %v278, %v1684
  %v1686 = vpop.f32.mrb[0].mxu0
  %1687 = vmatprep.mubr.bf16.mxu0 0
  %1688 = vmatmul.mubr.bf16.gmra.mrb[0].mxu0 %v1057
  %v1689 = vpop.f32.mrb[0].mxu0
  %v1690 = vadd.f32 %v278, %v1689
  %v1691 = vpop.f32.mrb[0].mxu0
  %v1692 = vpop.f32.mrb[0].mxu0
  %v1693 = vadd.f32 %v278, %v1692
  %v1694 = vpop.f32.mrb[0].mxu0
  %1695 = vmatprep.mubr.bf16.mxu0 0
  %1696 = vmatmul.mubr.bf16.gmra.mrb[0].mxu0 %v1060
  %v1697 = vpop.f32.mrb[0].mxu0
  %v1698 = vadd.f32 %v278, %v1697
  %v1699 = vpop.f32.mrb[0].mxu0
  %v1700 = vpop.f32.mrb[0].mxu0
  %v1701 = vadd.f32 %v278, %v1700
  %v1702 = vpop.f32.mrb[0].mxu0
  %1703 = vmatprep.mubr.bf16.mxu0 0
  %1704 = vmatmul.mubr.bf16.gmra.mrb[0].mxu0 %v1063
  %v1705 = vpop.f32.mrb[0].mxu0
  %v1706 = vadd.f32 %v278, %v1705
  %v1707 = vpop.f32.mrb[0].mxu0
  %v1708 = vpop.f32.mrb[0].mxu0
  %v1709 = vadd.f32 %v278, %v1708
  %v1710 = vpop.f32.mrb[0].mxu0
  %1711 = vmatprep.mubr.bf16.mxu0 0
  %1712 = vmatmul.mubr.bf16.gmra.mrb[0].mxu0 %v1066
  %v1713 = vpop.f32.mrb[0].mxu0
  %v1714 = vadd.f32 %v278, %v1713
  %v1715 = vpop.f32.mrb[0].mxu0
  %v1716 = vpop.f32.mrb[0].mxu0
  %v1717 = vadd.f32 %v278, %v1716
  %v1718 = vpop.f32.mrb[0].mxu0
  %1719 = vmatprep.mubr.bf16.mxu0 0
  %1720 = vmatmul.mubr.bf16.gmra.mrb[0].mxu0 %v1069
  %v1721 = vpop.f32.mrb[0].mxu0
  %v1722 = vadd.f32 %v278, %v1721
  %v1723 = vpop.f32.mrb[0].mxu0
  %v1724 = vpop.f32.mrb[0].mxu0
  %v1725 = vadd.f32 %v278, %v1724
  %v1726 = vpop.f32.mrb[0].mxu0
  %1727 = vmatprep.mubr.bf16.mxu0 0
  %1728 = vmatmul.mubr.bf16.gmra.mrb[0].mxu0 %v1072
  %v1729 = vpop.f32.mrb[0].mxu0
  %v1730 = vadd.f32 %v278, %v1729
  %v1731 = vpop.f32.mrb[0].mxu0
  %v1732 = vpop.f32.mrb[0].mxu0
  %v1733 = vadd.f32 %v278, %v1732
  %v1734 = vpop.f32.mrb[0].mxu0
  %1735 = vmatprep.mubr.bf16.mxu0 0
  %1736 = vmatmul.mubr.bf16.gmra.mrb[0].mxu0 %v1075
  %v1737 = vpop.f32.mrb[0].mxu0
  %v1738 = vadd.f32 %v278, %v1737
  %v1739 = vpop.f32.mrb[0].mxu0
  %v1740 = vpop.f32.mrb[0].mxu0
  %v1741 = vadd.f32 %v278, %v1740
  %v1742 = vpop.f32.mrb[0].mxu0
  %1743 = vmatprep.mubr.bf16.mxu0 0
  %1744 = vmatmul.mubr.bf16.gmra.mrb[0].mxu0 %v1078
  %v1745 = vpop.f32.mrb[0].mxu0
  %v1746 = vadd.f32 %v278, %v1745
  %v1747 = vpop.f32.mrb[0].mxu0
  %v1748 = vpop.f32.mrb[0].mxu0
  %v1749 = vadd.f32 %v278, %v1748
  %v1750 = vpop.f32.mrb[0].mxu0
  %1751 = vmatprep.mubr.bf16.mxu0 0
  %1752 = vmatmul.mubr.bf16.gmra.mrb[0].mxu0 %v1081
  %v1753 = vpop.f32.mrb[0].mxu0
  %v1754 = vadd.f32 %v278, %v1753
  %v1755 = vpop.f32.mrb[0].mxu0
  %v1756 = vpop.f32.mrb[0].mxu0
  %v1757 = vadd.f32 %v278, %v1756
  %v1758 = vpop.f32.mrb[0].mxu0
  %1759 = vmatprep.mubr.bf16.mxu0 0
  %1760 = vmatmul.mubr.bf16.gmra.mrb[0].mxu0 %v1084
  %v1761 = vpop.f32.mrb[0].mxu0
  %v1762 = vadd.f32 %v278, %v1761
  %v1763 = vpop.f32.mrb[0].mxu0
  %v1764 = vpop.f32.mrb[0].mxu0
  %v1765 = vadd.f32 %v278, %v1764
  %v1766 = vpop.f32.mrb[0].mxu0
  %1767 = vmatprep.mubr.bf16.mxu0 0
  %1768 = vmatmul.mubr.bf16.gmra.mrb[0].mxu0 %v1087
  %v1769 = vpop.f32.mrb[0].mxu0
  %v1770 = vadd.f32 %v278, %v1769
  %v1771 = vpop.f32.mrb[0].mxu0
  %v1772 = vpop.f32.mrb[0].mxu0
  %v1773 = vadd.f32 %v278, %v1772
  %v1774 = vpop.f32.mrb[0].mxu0
  %1775 = vmatprep.mubr.bf16.mxu0 0
  %1776 = vmatmul.mubr.bf16.gmra.mrb[0].mxu0 %v1090
  %v1777 = vpop.f32.mrb[0].mxu0
  %v1778 = vadd.f32 %v278, %v1777
  %v1779 = vpop.f32.mrb[0].mxu0
  %v1780 = vpop.f32.mrb[0].mxu0
  %v1781 = vadd.f32 %v278, %v1780
  %v1782 = vpop.f32.mrb[0].mxu0
  %1783 = vmatprep.mubr.bf16.mxu0 0
  %1784 = vmatmul.mubr.bf16.gmra.mrb[0].mxu0 %v1093
  %v1785 = vpop.f32.mrb[0].mxu0
  %v1786 = vadd.f32 %v278, %v1785
  %v1787 = vpop.f32.mrb[0].mxu0
  %v1788 = vpop.f32.mrb[0].mxu0
  %v1789 = vadd.f32 %v278, %v1788
  %v1790 = vpop.f32.mrb[0].mxu0
  %1791 = vmatprep.mubr.bf16.mxu0 0
  %1792 = vmatmul.mubr.bf16.gmra.mrb[0].mxu0 %v1096
  %v1793 = vpop.f32.mrb[0].mxu0
  %v1794 = vadd.f32 %v278, %v1793
  %v1795 = vpop.f32.mrb[0].mxu0
  %v1796 = vpop.f32.mrb[0].mxu0
  %v1797 = vadd.f32 %v278, %v1796
  %v1798 = vpop.f32.mrb[0].mxu0
  %1799 = vmatprep.mubr.bf16.mxu0 0
  %1800 = vmatmul.mubr.bf16.gmra.mrb[0].mxu0 %v1099
  %v1801 = vpop.f32.mrb[0].mxu0
  %v1802 = vadd.f32 %v278, %v1801
  %v1803 = vpop.f32.mrb[0].mxu0
  %v1804 = vpop.f32.mrb[0].mxu0
  %v1805 = vadd.f32 %v278, %v1804
  %v1806 = vpop.f32.mrb[0].mxu0
  %1807 = vmatprep.mubr.bf16.mxu0 0
  %1808 = vmatmul.mubr.bf16.gmra.mrb[0].mxu0 %v1102
  %v1809 = vpop.f32.mrb[0].mxu0
  %v1810 = vadd.f32 %v278, %v1809
  %v1811 = vpop.f32.mrb[0].mxu0
  %v1812 = vpop.f32.mrb[0].mxu0
  %v1813 = vadd.f32 %v278, %v1812
  %v1814 = vpop.f32.mrb[0].mxu0
  %1815 = vmatprep.mubr.bf16.mxu0 0
  %1816 = vmatmul.mubr.bf16.gmra.mrb[0].mxu0 %v1105
  %v1817 = vpop.f32.mrb[0].mxu0
  %v1818 = vadd.f32 %v278, %v1817
  %v1819 = vpop.f32.mrb[0].mxu0
  %v1820 = vpop.f32.mrb[0].mxu0
  %v1821 = vadd.f32 %v278, %v1820
  %v1822 = vpop.f32.mrb[0].mxu0
  %1823 = vmatprep.mubr.bf16.mxu0 0
  %1824 = vmatmul.mubr.bf16.gmra.mrb[0].mxu0 %v1108
  %v1825 = vpop.f32.mrb[0].mxu0
  %v1826 = vadd.f32 %v278, %v1825
  %v1827 = vpop.f32.mrb[0].mxu0
  %v1828 = vpop.f32.mrb[0].mxu0
  %v1829 = vadd.f32 %v278, %v1828
  %v1830 = vpop.f32.mrb[0].mxu0
  %1831 = vmatprep.mubr.bf16.mxu0 0
  %1832 = vmatmul.mubr.bf16.gmra.mrb[0].mxu0 %v1111
  %v1833 = vpop.f32.mrb[0].mxu0
  %v1834 = vadd.f32 %v278, %v1833
  %v1835 = vpop.f32.mrb[0].mxu0
  %v1836 = vpop.f32.mrb[0].mxu0
  %v1837 = vadd.f32 %v278, %v1836
  %v1838 = vpop.f32.mrb[0].mxu0
  %1839 = vmatprep.mubr.bf16.mxu0 0
  %1840 = vmatmul.mubr.bf16.gmra.mrb[0].mxu0 %v1114
  %v1841 = vpop.f32.mrb[0].mxu0
  %v1842 = vadd.f32 %v278, %v1841
  %v1843 = vpop.f32.mrb[0].mxu0
  %v1844 = vpop.f32.mrb[0].mxu0
  %v1845 = vadd.f32 %v278, %v1844
  %v1846 = vpop.f32.mrb[0].mxu0
  %1847 = vmatprep.mubr.bf16.mxu0 0
  %1848 = vmatmul.mubr.bf16.gmra.mrb[0].mxu0 %v1117
  %v1849 = vpop.f32.mrb[0].mxu0
  %v1850 = vadd.f32 %v278, %v1849
  %v1851 = vpop.f32.mrb[0].mxu0
  %v1852 = vpop.f32.mrb[0].mxu0
  %v1853 = vadd.f32 %v278, %v1852
  %v1854 = vpop.f32.mrb[0].mxu0
  %1855 = vmatprep.mubr.bf16.mxu0 0
  %1856 = vmatmul.mubr.bf16.gmra.mrb[0].mxu0 %v1120
  %v1857 = vpop.f32.mrb[0].mxu0
  %v1858 = vadd.f32 %v278, %v1857
  %v1859 = vpop.f32.mrb[0].mxu0
  %v1860 = vpop.f32.mrb[0].mxu0
  %v1861 = vadd.f32 %v278, %v1860
  %v1862 = vpop.f32.mrb[0].mxu0
  %1863 = vmatprep.mubr.bf16.mxu0 0
  %1864 = vmatmul.mubr.bf16.gmra.mrb[0].mxu0 %v1123
  %v1865 = vpop.f32.mrb[0].mxu0
  %v1866 = vadd.f32 %v278, %v1865
  %v1867 = vpop.f32.mrb[0].mxu0
  %v1868 = vpop.f32.mrb[0].mxu0
  %v1869 = vadd.f32 %v278, %v1868
  %v1870 = vpop.f32.mrb[0].mxu0
  %1871 = vmatprep.mubr.bf16.mxu0 0
  %1872 = vmatmul.mubr.bf16.gmra.mrb[0].mxu0 %v1126
  %v1873 = vpop.f32.mrb[0].mxu0
  %v1874 = vadd.f32 %v278, %v1873
  %v1875 = vpop.f32.mrb[0].mxu0
  %v1876 = vpop.f32.mrb[0].mxu0
  %v1877 = vadd.f32 %v278, %v1876
  %v1878 = vpop.f32.mrb[0].mxu0
  %1879 = vmatprep.mubr.bf16.mxu0 0
  %1880 = vmatmul.mubr.bf16.gmra.mrb[0].mxu0 %v1129
  %v1881 = vpop.f32.mrb[0].mxu0
  %v1882 = vadd.f32 %v278, %v1881
  %v1883 = vpop.f32.mrb[0].mxu0
  %v1884 = vpop.f32.mrb[0].mxu0
  %v1885 = vadd.f32 %v278, %v1884
  %v1886 = vpop.f32.mrb[0].mxu0
  %1887 = vmatprep.mubr.bf16.mxu0 0
  %1888 = vmatmul.mubr.bf16.gmra.mrb[0].mxu0 %v1132
  %v1889 = vpop.f32.mrb[0].mxu0
  %v1890 = vadd.f32 %v278, %v1889
  %v1891 = vpop.f32.mrb[0].mxu0
  %v1892 = vpop.f32.mrb[0].mxu0
  %v1893 = vadd.f32 %v278, %v1892
  %v1894 = vpop.f32.mrb[0].mxu0
  %1895 = vmatprep.mubr.bf16.mxu0 0
  %1896 = vmatmul.mubr.bf16.gmra.mrb[0].mxu0 %v1135
  %v1897 = vpop.f32.mrb[0].mxu0
  %v1898 = vadd.f32 %v278, %v1897
  %v1899 = vpop.f32.mrb[0].mxu0
  %v1900 = vpop.f32.mrb[0].mxu0
  %v1901 = vadd.f32 %v278, %v1900
  %v1902 = vpop.f32.mrb[0].mxu0
  %1903 = vmatprep.mubr.bf16.mxu0 0
  %1904 = vmatmul.mubr.bf16.gmra.mrb[0].mxu0 %v1138
  %v1905 = vpop.f32.mrb[0].mxu0
  %v1906 = vadd.f32 %v278, %v1905
  %v1907 = vpop.f32.mrb[0].mxu0
  %v1908 = vpop.f32.mrb[0].mxu0
  %v1909 = vadd.f32 %v278, %v1908
  %v1910 = vpop.f32.mrb[0].mxu0
  %1911 = vmatprep.mubr.bf16.mxu0 0
  %1912 = vmatmul.mubr.bf16.gmra.mrb[0].mxu0 %v1141
  %v1913 = vpop.f32.mrb[0].mxu0
  %v1914 = vadd.f32 %v278, %v1913
  %v1915 = vpop.f32.mrb[0].mxu0
  %v1916 = vpop.f32.mrb[0].mxu0
  %v1917 = vadd.f32 %v278, %v1916
  %v1918 = vpop.f32.mrb[0].mxu0
  %1919 = vmatprep.mubr.bf16.mxu0 0
  %1920 = vmatmul.mubr.bf16.gmra.mrb[0].mxu0 %v1144
  %v1921 = vpop.f32.mrb[0].mxu0
  %v1922 = vadd.f32 %v278, %v1921
  %v1923 = vpop.f32.mrb[0].mxu0
  %v1924 = vpop.f32.mrb[0].mxu0
  %v1925 = vadd.f32 %v278, %v1924
  %v1926 = vpop.f32.mrb[0].mxu0
  %1927 = vmatprep.mubr.bf16.mxu0 0
  %1928 = vmatmul.mubr.bf16.gmra.mrb[0].mxu0 %v1147
  %v1929 = vpop.f32.mrb[0].mxu0
  %v1930 = vadd.f32 %v278, %v1929
  %v1931 = vpop.f32.mrb[0].mxu0
  %v1932 = vpop.f32.mrb[0].mxu0
  %v1933 = vadd.f32 %v278, %v1932
  %v1934 = vpop.f32.mrb[0].mxu0
  %1935 = vmatprep.mubr.bf16.mxu0 0
  %1936 = vmatmul.mubr.bf16.gmra.mrb[0].mxu0 %v1150
  %v1937 = vpop.f32.mrb[0].mxu0
  %v1938 = vadd.f32 %v278, %v1937
  %v1939 = vpop.f32.mrb[0].mxu0
  %v1940 = vpop.f32.mrb[0].mxu0
  %v1941 = vadd.f32 %v278, %v1940
  %v1942 = vpop.f32.mrb[0].mxu0
  %1943 = vmatprep.mubr.bf16.mxu0 0
  %1944 = vmatmul.mubr.bf16.gmra.mrb[0].mxu0 %v1153
  %v1945 = vpop.f32.mrb[0].mxu0
  %v1946 = vadd.f32 %v278, %v1945
  %v1947 = vpop.f32.mrb[0].mxu0
  %v1948 = vpop.f32.mrb[0].mxu0
  %v1949 = vadd.f32 %v278, %v1948
  %v1950 = vpop.f32.mrb[0].mxu0
  %1951 = vmatprep.mubr.bf16.mxu0 0
  %1952 = vmatmul.mubr.bf16.gmra.mrb[0].mxu0 %v1156
  %v1953 = vpop.f32.mrb[0].mxu0
  %v1954 = vadd.f32 %v278, %v1953
  %v1955 = vpop.f32.mrb[0].mxu0
  %v1956 = vpop.f32.mrb[0].mxu0
  %v1957 = vadd.f32 %v278, %v1956
  %v1958 = vpop.f32.mrb[0].mxu0
  %1959 = vmatprep.mubr.bf16.mxu0 0
  %1960 = vmatmul.mubr.bf16.gmra.mrb[0].mxu0 %v1159
  %v1961 = vpop.f32.mrb[0].mxu0
  %v1962 = vadd.f32 %v278, %v1961
  %v1963 = vpop.f32.mrb[0].mxu0
  %v1964 = vpop.f32.mrb[0].mxu0
  %v1965 = vadd.f32 %v278, %v1964
  %v1966 = vpop.f32.mrb[0].mxu0
  %1967 = vmatprep.mubr.bf16.mxu0 0
  %1968 = vmatmul.mubr.bf16.gmra.mrb[0].mxu0 %v1162
  %v1969 = vpop.f32.mrb[0].mxu0
  %v1970 = vadd.f32 %v278, %v1969
  %v1971 = vpop.f32.mrb[0].mxu0
  %v1972 = vpop.f32.mrb[0].mxu0
  %v1973 = vadd.f32 %v278, %v1972
  %v1974 = vpop.f32.mrb[0].mxu0
  %1975 = vmatprep.mubr.bf16.mxu0 0
  %1976 = vmatmul.mubr.bf16.gmra.mrb[0].mxu0 %v1165
  %v1977 = vpop.f32.mrb[0].mxu0
  %v1978 = vadd.f32 %v278, %v1977
  %v1979 = vpop.f32.mrb[0].mxu0
  %v1980 = vpop.f32.mrb[0].mxu0
  %v1981 = vadd.f32 %v278, %v1980
  %v1982 = vpop.f32.mrb[0].mxu0
  %1983 = vmatprep.mubr.bf16.mxu0 0
  %1984 = vmatmul.mubr.bf16.gmra.mrb[0].mxu0 %v1168
  %v1985 = vpop.f32.mrb[0].mxu0
  %v1986 = vadd.f32 %v278, %v1985
  %v1987 = vpop.f32.mrb[0].mxu0
  %v1988 = vpop.f32.mrb[0].mxu0
  %v1989 = vadd.f32 %v278, %v1988
  %v1990 = vpop.f32.mrb[0].mxu0
  %1991 = vmatprep.mubr.bf16.mxu0 0
  %1992 = vmatmul.mubr.bf16.gmra.mrb[0].mxu0 %v1171
  %v1993 = vpop.f32.mrb[0].mxu0
  %v1994 = vadd.f32 %v278, %v1993
  %v1995 = vpop.f32.mrb[0].mxu0
  %v1996 = vpop.f32.mrb[0].mxu0
  %v1997 = vadd.f32 %v278, %v1996
  %v1998 = vpop.f32.mrb[0].mxu0
  %1999 = vmatprep.mubr.bf16.mxu0 0
  %2000 = vmatmul.mubr.bf16.gmra.mrb[0].mxu0 %v1174
  %v2001 = vpop.f32.mrb[0].mxu0
  %v2002 = vadd.f32 %v278, %v2001
  %v2003 = vpop.f32.mrb[0].mxu0
  %v2004 = vpop.f32.mrb[0].mxu0
  %v2005 = vadd.f32 %v278, %v2004
  %v2006 = vpop.f32.mrb[0].mxu0
  %2007 = vmatprep.mubr.bf16.mxu0 0
  %2008 = vmatmul.mubr.bf16.gmra.mrb[0].mxu0 %v1177
  %v2009 = vpop.f32.mrb[0].mxu0
  %v2010 = vadd.f32 %v278, %v2009
  %v2011 = vpop.f32.mrb[0].mxu0
  %v2012 = vpop.f32.mrb[0].mxu0
  %v2013 = vadd.f32 %v278, %v2012
  %v2014 = vpop.f32.mrb[0].mxu0
  %2015 = vmatprep.mubr.bf16.mxu0 0
  %2016 = vmatmul.mubr.bf16.gmra.mrb[0].mxu0 %v1180
  %v2017 = vpop.f32.mrb[0].mxu0
  %v2018 = vadd.f32 %v278, %v2017
  %v2019 = vpop.f32.mrb[0].mxu0
  %v2020 = vpop.f32.mrb[0].mxu0
  %v2021 = vadd.f32 %v278, %v2020
  %v2022 = vpop.f32.mrb[0].mxu0
  %2023 = vmatprep.mubr.bf16.mxu0 0
  %2024 = vmatmul.mubr.bf16.gmra.mrb[0].mxu0 %v1183
  %v2025 = vpop.f32.mrb[0].mxu0
  %v2026 = vadd.f32 %v278, %v2025
  %v2027 = vpop.f32.mrb[0].mxu0
  %v2028 = vpop.f32.mrb[0].mxu0
  %v2029 = vadd.f32 %v278, %v2028
  %v2030 = vpop.f32.mrb[0].mxu0
  %2031 = vmatprep.mubr.bf16.mxu0 0
  %2032 = vmatmul.mubr.bf16.gmra.mrb[0].mxu0 %v1186
  %v2033 = vpop.f32.mrb[0].mxu0
  %v2034 = vadd.f32 %v278, %v2033
  %v2035 = vpop.f32.mrb[0].mxu0
  %v2036 = vpop.f32.mrb[0].mxu0
  %v2037 = vadd.f32 %v278, %v2036
  %v2038 = vpop.f32.mrb[0].mxu0
  %2039 = vmatprep.mubr.bf16.mxu0 0
  %2040 = vmatmul.mubr.bf16.gmra.mrb[0].mxu0 %v1189
  %v2041 = vpop.f32.mrb[0].mxu0
  %v2042 = vadd.f32 %v278, %v2041
  %v2043 = vpop.f32.mrb[0].mxu0
  %v2044 = vpop.f32.mrb[0].mxu0
  %v2045 = vadd.f32 %v278, %v2044
  %v2046 = vpop.f32.mrb[0].mxu0
  %2047 = vmatprep.mubr.bf16.mxu0 0
  %2048 = vmatmul.mubr.bf16.gmra.mrb[0].mxu0 %v1192
  %v2049 = vpop.f32.mrb[0].mxu0
  %v2050 = vadd.f32 %v278, %v2049
  %v2051 = vpop.f32.mrb[0].mxu0
  %v2052 = vpop.f32.mrb[0].mxu0
  %v2053 = vadd.f32 %v278, %v2052
  %v2054 = vpop.f32.mrb[0].mxu0
  %2055 = vmatprep.mubr.bf16.mxu0 0
  %2056 = vmatmul.mubr.bf16.gmra.mrb[0].mxu0 %v1195
  %v2057 = vpop.f32.mrb[0].mxu0
  %v2058 = vadd.f32 %v278, %v2057
  %v2059 = vpop.f32.mrb[0].mxu0
  %v2060 = vpop.f32.mrb[0].mxu0
  %v2061 = vadd.f32 %v278, %v2060
  %v2062 = vpop.f32.mrb[0].mxu0
  %2063 = vmatprep.mubr.bf16.mxu0 0
  %2064 = vmatmul.mubr.bf16.gmra.mrb[0].mxu0 %v1198
  %v2065 = vpop.f32.mrb[0].mxu0
  %v2066 = vadd.f32 %v278, %v2065
  %v2067 = vpop.f32.mrb[0].mxu0
  %v2068 = vpop.f32.mrb[0].mxu0
  %v2069 = vadd.f32 %v278, %v2068
  %v2070 = vpop.f32.mrb[0].mxu0
  %2071 = vmatprep.mubr.bf16.mxu0 0
  %2072 = vmatmul.mubr.bf16.gmra.mrb[0].mxu0 %v1201
  %v2073 = vpop.f32.mrb[0].mxu0
  %v2074 = vadd.f32 %v278, %v2073
  %v2075 = vpop.f32.mrb[0].mxu0
  %v2076 = vpop.f32.mrb[0].mxu0
  %v2077 = vadd.f32 %v278, %v2076
  %v2078 = vpop.f32.mrb[0].mxu0
  %2079 = vmatprep.mubr.bf16.mxu0 0
  %2080 = vmatmul.mubr.bf16.gmra.mrb[0].mxu0 %v1204
  %v2081 = vpop.f32.mrb[0].mxu0
  %v2082 = vadd.f32 %v278, %v2081
  %v2083 = vpop.f32.mrb[0].mxu0
  %v2084 = vpop.f32.mrb[0].mxu0
  %v2085 = vadd.f32 %v278, %v2084
  %v2086 = vpop.f32.mrb[0].mxu0
  %2087 = vmatprep.mubr.bf16.mxu0 0
  %2088 = vmatmul.mubr.bf16.gmra.mrb[0].mxu0 %v1207
  %v2089 = vpop.f32.mrb[0].mxu0
  %v2090 = vadd.f32 %v278, %v2089
  %v2091 = vpop.f32.mrb[0].mxu0
  %v2092 = vpop.f32.mrb[0].mxu0
  %v2093 = vadd.f32 %v278, %v2092
  %v2094 = vpop.f32.mrb[0].mxu0
  %2095 = vmatprep.mubr.bf16.mxu0 0
  %2096 = vmatmul.mubr.bf16.gmra.mrb[0].mxu0 %v1210
  %v2097 = vpop.f32.mrb[0].mxu0
  %v2098 = vadd.f32 %v278, %v2097
  %v2099 = vpop.f32.mrb[0].mxu0
  %v2100 = vpop.f32.mrb[0].mxu0
  %v2101 = vadd.f32 %v278, %v2100
  %v2102 = vpop.f32.mrb[0].mxu0
  %2103 = vmatprep.mubr.bf16.mxu0 0
  %2104 = vmatmul.mubr.bf16.gmra.mrb[0].mxu0 %v1213
  %v2105 = vpop.f32.mrb[0].mxu0
  %v2106 = vadd.f32 %v278, %v2105
  %v2107 = vpop.f32.mrb[0].mxu0
  %v2108 = vpop.f32.mrb[0].mxu0
  %v2109 = vadd.f32 %v278, %v2108
  %v2110 = vpop.f32.mrb[0].mxu0
  %2111 = vmatprep.mubr.bf16.mxu0 0
  %2112 = vmatmul.mubr.bf16.gmra.mrb[0].mxu0 %v1216
  %v2113 = vpop.f32.mrb[0].mxu0
  %v2114 = vadd.f32 %v278, %v2113
  %v2115 = vpop.f32.mrb[0].mxu0
  %v2116 = vpop.f32.mrb[0].mxu0
  %v2117 = vadd.f32 %v278, %v2116
  %v2118 = vpop.f32.mrb[0].mxu0
  %2119 = vmatprep.mubr.bf16.mxu0 0
  %2120 = vmatmul.mubr.bf16.gmra.mrb[0].mxu0 %v1219
  %v2121 = vpop.f32.mrb[0].mxu0
  %v2122 = vadd.f32 %v278, %v2121
  %v2123 = vpop.f32.mrb[0].mxu0
  %v2124 = vpop.f32.mrb[0].mxu0
  %v2125 = vadd.f32 %v278, %v2124
  %v2126 = vpop.f32.mrb[0].mxu0
  %2127 = vmatprep.mubr.bf16.mxu0 0
  %2128 = vmatmul.mubr.bf16.gmra.mrb[0].mxu0 %v1222
  %v2129 = vpop.f32.mrb[0].mxu0
  %v2130 = vadd.f32 %v278, %v2129
  %v2131 = vpop.f32.mrb[0].mxu0
  %v2132 = vpop.f32.mrb[0].mxu0
  %v2133 = vadd.f32 %v278, %v2132
  %v2134 = vpop.f32.mrb[0].mxu0
  %2135 = vmatprep.mubr.bf16.mxu0 0
  %2136 = vmatmul.mubr.bf16.gmra.mrb[0].mxu0 %v1225
  %v2137 = vpop.f32.mrb[0].mxu0
  %v2138 = vadd.f32 %v278, %v2137
  %v2139 = vpop.f32.mrb[0].mxu0
  %v2140 = vpop.f32.mrb[0].mxu0
  %v2141 = vadd.f32 %v278, %v2140
  %v2142 = vpop.f32.mrb[0].mxu0
  %2143 = vmatprep.mubr.bf16.mxu0 0
  %2144 = vmatmul.mubr.bf16.gmra.mrb[0].mxu0 %v1228
  %v2145 = vpop.f32.mrb[0].mxu0
  %v2146 = vadd.f32 %v278, %v2145
  %v2147 = vpop.f32.mrb[0].mxu0
  %v2148 = vpop.f32.mrb[0].mxu0
  %v2149 = vadd.f32 %v278, %v2148
  %v2150 = vpop.f32.mrb[0].mxu0
  %2151 = vmatprep.mubr.bf16.mxu0 0
  %2152 = vmatmul.mubr.bf16.gmra.mrb[0].mxu0 %v1231
  %v2153 = vpop.f32.mrb[0].mxu0
  %v2154 = vadd.f32 %v278, %v2153
  %v2155 = vpop.f32.mrb[0].mxu0
  %v2156 = vpop.f32.mrb[0].mxu0
  %v2157 = vadd.f32 %v278, %v2156
  %v2158 = vpop.f32.mrb[0].mxu0
  %2159 = vmatprep.mubr.bf16.mxu0 0
  %2160 = vmatmul.mubr.bf16.gmra.mrb[0].mxu0 %v1234
  %v2161 = vpop.f32.mrb[0].mxu0
  %v2162 = vadd.f32 %v278, %v2161
  %v2163 = vpop.f32.mrb[0].mxu0
  %v2164 = vpop.f32.mrb[0].mxu0
  %v2165 = vadd.f32 %v278, %v2164
  %v2166 = vpop.f32.mrb[0].mxu0
  %2167 = vmatprep.mubr.bf16.mxu0 0
  %2168 = vmatmul.mubr.bf16.gmra.mrb[0].mxu0 %v1237
  %v2169 = vpop.f32.mrb[0].mxu0
  %v2170 = vadd.f32 %v278, %v2169
  %v2171 = vpop.f32.mrb[0].mxu0
  %v2172 = vpop.f32.mrb[0].mxu0
  %v2173 = vadd.f32 %v278, %v2172
  %v2174 = vpop.f32.mrb[0].mxu0
  %2175 = vmatprep.mubr.bf16.mxu0 0
  %2176 = vmatmul.mubr.bf16.gmra.mrb[0].mxu0 %v1240
  %v2177 = vpop.f32.mrb[0].mxu0
  %v2178 = vadd.f32 %v278, %v2177
  %v2179 = vpop.f32.mrb[0].mxu0
  %v2180 = vpop.f32.mrb[0].mxu0
  %v2181 = vadd.f32 %v278, %v2180
  %v2182 = vpop.f32.mrb[0].mxu0
  %2183 = vmatprep.mubr.bf16.mxu0 0
  %2184 = vmatmul.mubr.bf16.gmra.mrb[0].mxu0 %v1243
  %v2185 = vpop.f32.mrb[0].mxu0
  %v2186 = vadd.f32 %v278, %v2185
  %v2187 = vpop.f32.mrb[0].mxu0
  %v2188 = vpop.f32.mrb[0].mxu0
  %v2189 = vadd.f32 %v278, %v2188
  %v2190 = vpop.f32.mrb[0].mxu0
  %2191 = vmatprep.mubr.bf16.mxu0 0
  %2192 = vmatmul.mubr.bf16.gmra.mrb[0].mxu0 %v1246
  %v2193 = vpop.f32.mrb[0].mxu0
  %v2194 = vadd.f32 %v278, %v2193
  %v2195 = vpop.f32.mrb[0].mxu0
  %v2196 = vpop.f32.mrb[0].mxu0
  %v2197 = vadd.f32 %v278, %v2196
  %v2198 = vpop.f32.mrb[0].mxu0
  %2199 = vmatprep.mubr.bf16.mxu0 0
  %2200 = vmatmul.mubr.bf16.gmra.mrb[0].mxu0 %v1249
  %v2201 = vpop.f32.mrb[0].mxu0
  %v2202 = vadd.f32 %v278, %v2201
  %v2203 = vpop.f32.mrb[0].mxu0
  %v2204 = vpop.f32.mrb[0].mxu0
  %v2205 = vadd.f32 %v278, %v2204
  %v2206 = vpop.f32.mrb[0].mxu0
  %2207 = vmatprep.mubr.bf16.mxu0 0
  %2208 = vmatmul.mubr.bf16.gmra.mrb[0].mxu0 %v1252
  %v2209 = vpop.f32.mrb[0].mxu0
  %v2210 = vadd.f32 %v278, %v2209
  %v2211 = vpop.f32.mrb[0].mxu0
  %v2212 = vpop.f32.mrb[0].mxu0
  %v2213 = vadd.f32 %v278, %v2212
  %v2214 = vpop.f32.mrb[0].mxu0
  %2215 = vmatprep.mubr.bf16.mxu0 0
  %2216 = vmatmul.mubr.bf16.gmra.mrb[0].mxu0 %v1255
  %v2217 = vpop.f32.mrb[0].mxu0
  %v2218 = vadd.f32 %v278, %v2217
  %v2219 = vpop.f32.mrb[0].mxu0
  %v2220 = vpop.f32.mrb[0].mxu0
  %v2221 = vadd.f32 %v278, %v2220
  %v2222 = vpop.f32.mrb[0].mxu0
  %2223 = vmatprep.mubr.bf16.mxu0 0
  %2224 = vmatmul.mubr.bf16.gmra.mrb[0].mxu0 %v1258
  %v2225 = vpop.f32.mrb[0].mxu0
  %v2226 = vadd.f32 %v278, %v2225
  %v2227 = vpop.f32.mrb[0].mxu0
  %v2228 = vpop.f32.mrb[0].mxu0
  %v2229 = vadd.f32 %v278, %v2228
  %v2230 = vpop.f32.mrb[0].mxu0
  %2231 = vmatprep.mubr.bf16.mxu0 0
  %2232 = vmatmul.mubr.bf16.gmra.mrb[0].mxu0 %v1261
  %v2233 = vpop.f32.mrb[0].mxu0
  %v2234 = vadd.f32 %v278, %v2233
  %v2235 = vpop.f32.mrb[0].mxu0
  %v2236 = vpop.f32.mrb[0].mxu0
  %v2237 = vadd.f32 %v278, %v2236
  %v2238 = vpop.f32.mrb[0].mxu0
  %2239 = vmatprep.mubr.bf16.mxu0 0
  %2240 = vmatmul.mubr.bf16.gmra.mrb[0].mxu0 %v1264
  %v2241 = vpop.f32.mrb[0].mxu0
  %v2242 = vadd.f32 %v278, %v2241
  %v2243 = vpop.f32.mrb[0].mxu0
  %v2244 = vpop.f32.mrb[0].mxu0
  %v2245 = vadd.f32 %v278, %v2244
  %v2246 = vpop.f32.mrb[0].mxu0
  %2247 = vmatprep.mubr.bf16.mxu0 0
  %2248 = vmatmul.mubr.bf16.gmra.mrb[0].mxu0 %v1267
  %v2249 = vpop.f32.mrb[0].mxu0
  %v2250 = vadd.f32 %v278, %v2249
  %v2251 = vpop.f32.mrb[0].mxu0
  %v2252 = vpop.f32.mrb[0].mxu0
  %v2253 = vadd.f32 %v278, %v2252
  %v2254 = vpop.f32.mrb[0].mxu0
  %2255 = vmatprep.mubr.bf16.mxu0 0
  %2256 = vmatmul.mubr.bf16.gmra.mrb[0].mxu0 %v1270
  %v2257 = vpop.f32.mrb[0].mxu0
  %v2258 = vadd.f32 %v278, %v2257
  %v2259 = vpop.f32.mrb[0].mxu0
  %v2260 = vpop.f32.mrb[0].mxu0
  %v2261 = vadd.f32 %v278, %v2260
  %v2262 = vpop.f32.mrb[0].mxu0
  %2263 = vmatprep.mubr.bf16.mxu0 0
  %2264 = vmatmul.mubr.bf16.gmra.mrb[0].mxu0 %v1273
  %v2265 = vpop.f32.mrb[0].mxu0
  %v2266 = vadd.f32 %v278, %v2265
  %v2267 = vpop.f32.mrb[0].mxu0
  %v2268 = vpop.f32.mrb[0].mxu0
  %v2269 = vadd.f32 %v278, %v2268
  %v2270 = vpop.f32.mrb[0].mxu0
  %2271 = vmatprep.mubr.bf16.mxu0 0
  %2272 = vmatmul.mubr.bf16.gmra.mrb[0].mxu0 %v1276
  %v2273 = vpop.f32.mrb[0].mxu0
  %v2274 = vadd.f32 %v278, %v2273
  %v2275 = vpop.f32.mrb[0].mxu0
  %v2276 = vpop.f32.mrb[0].mxu0
  %v2277 = vadd.f32 %v278, %v2276
  %v2278 = vpop.f32.mrb[0].mxu0
  %2279 = vmatprep.mubr.bf16.mxu0 0
  %2280 = vmatmul.mubr.bf16.gmra.mrb[0].mxu0 %v1279
  %v2281 = vpop.f32.mrb[0].mxu0
  %v2282 = vadd.f32 %v278, %v2281
  %v2283 = vpop.f32.mrb[0].mxu0
  %v2284 = vpop.f32.mrb[0].mxu0
  %v2285 = vadd.f32 %v278, %v2284
  %v2286 = vpop.f32.mrb[0].mxu0
  %2287 = vmatprep.mubr.bf16.mxu0 0
  %2288 = vmatmul.mubr.bf16.gmra.mrb[0].mxu0 %v1282
  %v2289 = vpop.f32.mrb[0].mxu0
  %v2290 = vadd.f32 %v278, %v2289
  %v2291 = vpop.f32.mrb[0].mxu0
  %v2292 = vpop.f32.mrb[0].mxu0
  %v2293 = vadd.f32 %v278, %v2292
  %v2294 = vpop.f32.mrb[0].mxu0
  %2295 = vmatprep.mubr.bf16.mxu0 0
  %2296 = vmatmul.mubr.bf16.gmra.mrb[0].mxu0 %v1285
  %v2297 = vpop.f32.mrb[0].mxu0
  %v2298 = vadd.f32 %v278, %v2297
  %v2299 = vpop.f32.mrb[0].mxu0
  %v2300 = vpop.f32.mrb[0].mxu0
  %v2301 = vadd.f32 %v278, %v2300
  %v2302 = vpop.f32.mrb[0].mxu0
  %2303 = vmatprep.mubr.bf16.mxu0 0
  %2304 = vmatmul.mubr.bf16.gmra.mrb[0].mxu0 %v1288
  %v2305 = vpop.f32.mrb[0].mxu0
  %v2306 = vadd.f32 %v278, %v2305
  %v2307 = vpop.f32.mrb[0].mxu0
  %v2308 = vpop.f32.mrb[0].mxu0
  %v2309 = vadd.f32 %v278, %v2308
  %v2310 = vpop.f32.mrb[0].mxu0
  %2311 = vmatprep.mubr.bf16.mxu0 0
  %2312 = vmatmul.mubr.bf16.gmra.mrb[0].mxu0 %v1291
  %v2313 = vpop.f32.mrb[0].mxu0
  %v2314 = vadd.f32 %v278, %v2313
  %v2315 = vpop.f32.mrb[0].mxu0
  %v2316 = vpop.f32.mrb[0].mxu0
  %v2317 = vadd.f32 %v278, %v2316
  %v2318 = vpop.f32.mrb[0].mxu0
  %2319 = vmatprep.mubr.bf16.mxu0 0
  %2320 = vmatmul.mubr.bf16.gmra.mrb[0].mxu0 %v1294
  %v2321 = vpop.f32.mrb[0].mxu0
  %v2322 = vadd.f32 %v278, %v2321
  %v2323 = vpop.f32.mrb[0].mxu0
  %v2324 = vpop.f32.mrb[0].mxu0
  %v2325 = vadd.f32 %v278, %v2324
  %v2326 = vpop.f32.mrb[0].mxu0
  %2327 = vmatprep.mubr.bf16.mxu0 0
  %2328 = vmatmul.mubr.bf16.gmra.mrb[0].mxu0 %v1297
  %v2329 = vpop.f32.mrb[0].mxu0
  %v2330 = vadd.f32 %v278, %v2329
  %v2331 = vpop.f32.mrb[0].mxu0
  %v2332 = vpop.f32.mrb[0].mxu0
  %v2333 = vadd.f32 %v278, %v2332
  %v2334 = vpop.f32.mrb[0].mxu0
  %2335 = vmatprep.mubr.bf16.mxu0 0
  %2336 = vmatmul.mubr.bf16.gmra.mrb[0].mxu0 %v1300
  %v2337 = vpop.f32.mrb[0].mxu0
  %v2338 = vadd.f32 %v278, %v2337
  %v2339 = vpop.f32.mrb[0].mxu0
  %v2340 = vpop.f32.mrb[0].mxu0
  %v2341 = vadd.f32 %v278, %v2340
  %v2342 = vpop.f32.mrb[0].mxu0
  %2343 = vmatprep.mubr.bf16.mxu0 0
  %2344 = vmatmul.mubr.bf16.gmra.mrb[0].mxu0 %v1303
  %v2345 = vpop.f32.mrb[0].mxu0
  %v2346 = vadd.f32 %v278, %v2345
  %v2347 = vpop.f32.mrb[0].mxu0
  %v2348 = vpop.f32.mrb[0].mxu0
  %v2349 = vadd.f32 %v278, %v2348
  %v2350 = vpop.f32.mrb[0].mxu0
  %2351 = vmatprep.mubr.bf16.mxu0 0
  %2352 = vmatmul.mubr.bf16.gmra.mrb[0].mxu0 %v1306
  %v2353 = vpop.f32.mrb[0].mxu0
  %v2354 = vadd.f32 %v278, %v2353
  %v2355 = vpop.f32.mrb[0].mxu0
  %v2356 = vpop.f32.mrb[0].mxu0
  %v2357 = vadd.f32 %v278, %v2356
  %v2358 = vpop.f32.mrb[0].mxu0
  %2359 = vmatprep.mubr.bf16.mxu0 0
  %2360 = vmatmul.mubr.bf16.gmra.mrb[0].mxu0 %v1309
  %v2361 = vpop.f32.mrb[0].mxu0
  %v2362 = vadd.f32 %v278, %v2361
  %v2363 = vpop.f32.mrb[0].mxu0
  %v2364 = vpop.f32.mrb[0].mxu0
  %v2365 = vadd.f32 %v278, %v2364
  %v2366 = vpop.f32.mrb[0].mxu0
  %2367 = vdwg.mxu0
  %vm2368 = vcmp.ge.f32.partialorder %v1346, 0.0
  %vm2369 = vcmp.ge.f32.partialorder %v1349, 0.0
  %vm2370 = vcmp.ge.f32.partialorder %v1354, 0.0
  %vm2371 = vcmp.ge.f32.partialorder %v1357, 0.0
  %vm2372 = vcmp.ge.f32.partialorder %v1362, 0.0
  %vm2373 = vcmp.ge.f32.partialorder %v1365, 0.0
  %vm2374 = vcmp.ge.f32.partialorder %v1370, 0.0
  %vm2375 = vcmp.ge.f32.partialorder %v1373, 0.0
  %vm2376 = vcmp.ge.f32.partialorder %v1378, 0.0
  %vm2377 = vcmp.ge.f32.partialorder %v1381, 0.0
  %vm2378 = vcmp.ge.f32.partialorder %v1386, 0.0
  %vm2379 = vcmp.ge.f32.partialorder %v1389, 0.0
  %vm2380 = vcmp.ge.f32.partialorder %v1394, 0.0
  %vm2381 = vcmp.ge.f32.partialorder %v1397, 0.0
  %vm2382 = vcmp.ge.f32.partialorder %v1402, 0.0
  %vm2383 = vcmp.ge.f32.partialorder %v1405, 0.0
  %vm2384 = vcmp.ge.f32.partialorder %v1410, 0.0
  %vm2385 = vcmp.ge.f32.partialorder %v1413, 0.0
  %vm2386 = vcmp.ge.f32.partialorder %v1418, 0.0
  %vm2387 = vcmp.ge.f32.partialorder %v1421, 0.0
  %vm2388 = vcmp.ge.f32.partialorder %v1426, 0.0
  %vm2389 = vcmp.ge.f32.partialorder %v1429, 0.0
  %vm2390 = vcmp.ge.f32.partialorder %v1434, 0.0
  %vm2391 = vcmp.ge.f32.partialorder %v1437, 0.0
  %vm2392 = vcmp.ge.f32.partialorder %v1442, 0.0
  %vm2393 = vcmp.ge.f32.partialorder %v1445, 0.0
  %vm2394 = vcmp.ge.f32.partialorder %v1450, 0.0
  %vm2395 = vcmp.ge.f32.partialorder %v1453, 0.0
  %vm2396 = vcmp.ge.f32.partialorder %v1458, 0.0
  %vm2397 = vcmp.ge.f32.partialorder %v1461, 0.0
  %vm2398 = vcmp.ge.f32.partialorder %v1466, 0.0
  %vm2399 = vcmp.ge.f32.partialorder %v1469, 0.0
  %vm2400 = vcmp.ge.f32.partialorder %v1474, 0.0
  %vm2401 = vcmp.ge.f32.partialorder %v1477, 0.0
  %vm2402 = vcmp.ge.f32.partialorder %v1482, 0.0
  %vm2403 = vcmp.ge.f32.partialorder %v1485, 0.0
  %vm2404 = vcmp.ge.f32.partialorder %v1490, 0.0
  %vm2405 = vcmp.ge.f32.partialorder %v1493, 0.0
  %vm2406 = vcmp.ge.f32.partialorder %v1498, 0.0
  %vm2407 = vcmp.ge.f32.partialorder %v1501, 0.0
  %vm2408 = vcmp.ge.f32.partialorder %v1506, 0.0
  %vm2409 = vcmp.ge.f32.partialorder %v1509, 0.0
  %vm2410 = vcmp.ge.f32.partialorder %v1514, 0.0
  %vm2411 = vcmp.ge.f32.partialorder %v1517, 0.0
  %vm2412 = vcmp.ge.f32.partialorder %v1522, 0.0
  %vm2413 = vcmp.ge.f32.partialorder %v1525, 0.0
  %vm2414 = vcmp.ge.f32.partialorder %v1530, 0.0
  %vm2415 = vcmp.ge.f32.partialorder %v1533, 0.0
  %vm2416 = vcmp.ge.f32.partialorder %v1538, 0.0
  %vm2417 = vcmp.ge.f32.partialorder %v1541, 0.0
  %vm2418 = vcmp.ge.f32.partialorder %v1546, 0.0
  %vm2419 = vcmp.ge.f32.partialorder %v1549, 0.0
  %vm2420 = vcmp.ge.f32.partialorder %v1554, 0.0
  %vm2421 = vcmp.ge.f32.partialorder %v1557, 0.0
  %vm2422 = vcmp.ge.f32.partialorder %v1562, 0.0
  %vm2423 = vcmp.ge.f32.partialorder %v1565, 0.0
  %vm2424 = vcmp.ge.f32.partialorder %v1570, 0.0
  %vm2425 = vcmp.ge.f32.partialorder %v1573, 0.0
  %vm2426 = vcmp.ge.f32.partialorder %v1578, 0.0
  %vm2427 = vcmp.ge.f32.partialorder %v1581, 0.0
  %vm2428 = vcmp.ge.f32.partialorder %v1586, 0.0
  %vm2429 = vcmp.ge.f32.partialorder %v1589, 0.0
  %vm2430 = vcmp.ge.f32.partialorder %v1594, 0.0
  %vm2431 = vcmp.ge.f32.partialorder %v1597, 0.0
  %vm2432 = vcmp.ge.f32.partialorder %v1602, 0.0
  %vm2433 = vcmp.ge.f32.partialorder %v1605, 0.0
  %vm2434 = vcmp.ge.f32.partialorder %v1610, 0.0
  %vm2435 = vcmp.ge.f32.partialorder %v1613, 0.0
  %vm2436 = vcmp.ge.f32.partialorder %v1618, 0.0
  %vm2437 = vcmp.ge.f32.partialorder %v1621, 0.0
  %vm2438 = vcmp.ge.f32.partialorder %v1626, 0.0
  %vm2439 = vcmp.ge.f32.partialorder %v1629, 0.0
  %vm2440 = vcmp.ge.f32.partialorder %v1634, 0.0
  %vm2441 = vcmp.ge.f32.partialorder %v1637, 0.0
  %vm2442 = vcmp.ge.f32.partialorder %v1642, 0.0
  %vm2443 = vcmp.ge.f32.partialorder %v1645, 0.0
  %vm2444 = vcmp.ge.f32.partialorder %v1650, 0.0
  %vm2445 = vcmp.ge.f32.partialorder %v1653, 0.0
  %vm2446 = vcmp.ge.f32.partialorder %v1658, 0.0
  %vm2447 = vcmp.ge.f32.partialorder %v1661, 0.0
  %vm2448 = vcmp.ge.f32.partialorder %v1666, 0.0
  %vm2449 = vcmp.ge.f32.partialorder %v1669, 0.0
  %vm2450 = vcmp.ge.f32.partialorder %v1674, 0.0
  %vm2451 = vcmp.ge.f32.partialorder %v1677, 0.0
  %vm2452 = vcmp.ge.f32.partialorder %v1682, 0.0
  %vm2453 = vcmp.ge.f32.partialorder %v1685, 0.0
  %vm2454 = vcmp.ge.f32.partialorder %v1690, 0.0
  %vm2455 = vcmp.ge.f32.partialorder %v1693, 0.0
  %vm2456 = vcmp.ge.f32.partialorder %v1698, 0.0
  %vm2457 = vcmp.ge.f32.partialorder %v1701, 0.0
  %vm2458 = vcmp.ge.f32.partialorder %v1706, 0.0
  %vm2459 = vcmp.ge.f32.partialorder %v1709, 0.0
  %vm2460 = vcmp.ge.f32.partialorder %v1714, 0.0
  %vm2461 = vcmp.ge.f32.partialorder %v1717, 0.0
  %vm2462 = vcmp.ge.f32.partialorder %v1722, 0.0
  %vm2463 = vcmp.ge.f32.partialorder %v1725, 0.0
  %vm2464 = vcmp.ge.f32.partialorder %v1730, 0.0
  %vm2465 = vcmp.ge.f32.partialorder %v1733, 0.0
  %vm2466 = vcmp.ge.f32.partialorder %v1738, 0.0
  %vm2467 = vcmp.ge.f32.partialorder %v1741, 0.0
  %vm2468 = vcmp.ge.f32.partialorder %v1746, 0.0
  %vm2469 = vcmp.ge.f32.partialorder %v1749, 0.0
  %vm2470 = vcmp.ge.f32.partialorder %v1754, 0.0
  %vm2471 = vcmp.ge.f32.partialorder %v1757, 0.0
  %vm2472 = vcmp.ge.f32.partialorder %v1762, 0.0
  %vm2473 = vcmp.ge.f32.partialorder %v1765, 0.0
  %vm2474 = vcmp.ge.f32.partialorder %v1770, 0.0
  %vm2475 = vcmp.ge.f32.partialorder %v1773, 0.0
  %vm2476 = vcmp.ge.f32.partialorder %v1778, 0.0
  %vm2477 = vcmp.ge.f32.partialorder %v1781, 0.0
  %vm2478 = vcmp.ge.f32.partialorder %v1786, 0.0
  %vm2479 = vcmp.ge.f32.partialorder %v1789, 0.0
  %vm2480 = vcmp.ge.f32.partialorder %v1794, 0.0
  %vm2481 = vcmp.ge.f32.partialorder %v1797, 0.0
  %vm2482 = vcmp.ge.f32.partialorder %v1802, 0.0
  %vm2483 = vcmp.ge.f32.partialorder %v1805, 0.0
  %vm2484 = vcmp.ge.f32.partialorder %v1810, 0.0
  %vm2485 = vcmp.ge.f32.partialorder %v1813, 0.0
  %vm2486 = vcmp.ge.f32.partialorder %v1818, 0.0
  %vm2487 = vcmp.ge.f32.partialorder %v1821, 0.0
  %vm2488 = vcmp.ge.f32.partialorder %v1826, 0.0
  %vm2489 = vcmp.ge.f32.partialorder %v1829, 0.0
  %vm2490 = vcmp.ge.f32.partialorder %v1834, 0.0
  %vm2491 = vcmp.ge.f32.partialorder %v1837, 0.0
  %vm2492 = vcmp.ge.f32.partialorder %v1842, 0.0
  %vm2493 = vcmp.ge.f32.partialorder %v1845, 0.0
  %vm2494 = vcmp.ge.f32.partialorder %v1850, 0.0
  %vm2495 = vcmp.ge.f32.partialorder %v1853, 0.0
  %vm2496 = vcmp.ge.f32.partialorder %v1858, 0.0
  %vm2497 = vcmp.ge.f32.partialorder %v1861, 0.0
  %vm2498 = vcmp.ge.f32.partialorder %v1866, 0.0
  %vm2499 = vcmp.ge.f32.partialorder %v1869, 0.0
  %vm2500 = vcmp.ge.f32.partialorder %v1874, 0.0
  %vm2501 = vcmp.ge.f32.partialorder %v1877, 0.0
  %vm2502 = vcmp.ge.f32.partialorder %v1882, 0.0
  %vm2503 = vcmp.ge.f32.partialorder %v1885, 0.0
  %vm2504 = vcmp.ge.f32.partialorder %v1890, 0.0
  %vm2505 = vcmp.ge.f32.partialorder %v1893, 0.0
  %vm2506 = vcmp.ge.f32.partialorder %v1898, 0.0
  %vm2507 = vcmp.ge.f32.partialorder %v1901, 0.0
  %vm2508 = vcmp.ge.f32.partialorder %v1906, 0.0
  %vm2509 = vcmp.ge.f32.partialorder %v1909, 0.0
  %vm2510 = vcmp.ge.f32.partialorder %v1914, 0.0
  %vm2511 = vcmp.ge.f32.partialorder %v1917, 0.0
  %vm2512 = vcmp.ge.f32.partialorder %v1922, 0.0
  %vm2513 = vcmp.ge.f32.partialorder %v1925, 0.0
  %vm2514 = vcmp.ge.f32.partialorder %v1930, 0.0
  %vm2515 = vcmp.ge.f32.partialorder %v1933, 0.0
  %vm2516 = vcmp.ge.f32.partialorder %v1938, 0.0
  %vm2517 = vcmp.ge.f32.partialorder %v1941, 0.0
  %vm2518 = vcmp.ge.f32.partialorder %v1946, 0.0
  %vm2519 = vcmp.ge.f32.partialorder %v1949, 0.0
  %vm2520 = vcmp.ge.f32.partialorder %v1954, 0.0
  %vm2521 = vcmp.ge.f32.partialorder %v1957, 0.0
  %vm2522 = vcmp.ge.f32.partialorder %v1962, 0.0
  %vm2523 = vcmp.ge.f32.partialorder %v1965, 0.0
  %vm2524 = vcmp.ge.f32.partialorder %v1970, 0.0
  %vm2525 = vcmp.ge.f32.partialorder %v1973, 0.0
  %vm2526 = vcmp.ge.f32.partialorder %v1978, 0.0
  %vm2527 = vcmp.ge.f32.partialorder %v1981, 0.0
  %vm2528 = vcmp.ge.f32.partialorder %v1986, 0.0
  %vm2529 = vcmp.ge.f32.partialorder %v1989, 0.0
  %vm2530 = vcmp.ge.f32.partialorder %v1994, 0.0
  %vm2531 = vcmp.ge.f32.partialorder %v1997, 0.0
  %vm2532 = vcmp.ge.f32.partialorder %v2002, 0.0
  %vm2533 = vcmp.ge.f32.partialorder %v2005, 0.0
  %vm2534 = vcmp.ge.f32.partialorder %v2010, 0.0
  %vm2535 = vcmp.ge.f32.partialorder %v2013, 0.0
  %vm2536 = vcmp.ge.f32.partialorder %v2018, 0.0
  %vm2537 = vcmp.ge.f32.partialorder %v2021, 0.0
  %vm2538 = vcmp.ge.f32.partialorder %v2026, 0.0
  %vm2539 = vcmp.ge.f32.partialorder %v2029, 0.0
  %vm2540 = vcmp.ge.f32.partialorder %v2034, 0.0
  %vm2541 = vcmp.ge.f32.partialorder %v2037, 0.0
  %vm2542 = vcmp.ge.f32.partialorder %v2042, 0.0
  %vm2543 = vcmp.ge.f32.partialorder %v2045, 0.0
  %vm2544 = vcmp.ge.f32.partialorder %v2050, 0.0
  %vm2545 = vcmp.ge.f32.partialorder %v2053, 0.0
  %vm2546 = vcmp.ge.f32.partialorder %v2058, 0.0
  %vm2547 = vcmp.ge.f32.partialorder %v2061, 0.0
  %vm2548 = vcmp.ge.f32.partialorder %v2066, 0.0
  %vm2549 = vcmp.ge.f32.partialorder %v2069, 0.0
  %vm2550 = vcmp.ge.f32.partialorder %v2074, 0.0
  %vm2551 = vcmp.ge.f32.partialorder %v2077, 0.0
  %vm2552 = vcmp.ge.f32.partialorder %v2082, 0.0
  %vm2553 = vcmp.ge.f32.partialorder %v2085, 0.0
  %vm2554 = vcmp.ge.f32.partialorder %v2090, 0.0
  %vm2555 = vcmp.ge.f32.partialorder %v2093, 0.0
  %vm2556 = vcmp.ge.f32.partialorder %v2098, 0.0
  %vm2557 = vcmp.ge.f32.partialorder %v2101, 0.0
  %vm2558 = vcmp.ge.f32.partialorder %v2106, 0.0
  %vm2559 = vcmp.ge.f32.partialorder %v2109, 0.0
  %vm2560 = vcmp.ge.f32.partialorder %v2114, 0.0
  %vm2561 = vcmp.ge.f32.partialorder %v2117, 0.0
  %vm2562 = vcmp.ge.f32.partialorder %v2122, 0.0
  %vm2563 = vcmp.ge.f32.partialorder %v2125, 0.0
  %vm2564 = vcmp.ge.f32.partialorder %v2130, 0.0
  %vm2565 = vcmp.ge.f32.partialorder %v2133, 0.0
  %vm2566 = vcmp.ge.f32.partialorder %v2138, 0.0
  %vm2567 = vcmp.ge.f32.partialorder %v2141, 0.0
  %vm2568 = vcmp.ge.f32.partialorder %v2146, 0.0
  %vm2569 = vcmp.ge.f32.partialorder %v2149, 0.0
  %vm2570 = vcmp.ge.f32.partialorder %v2154, 0.0
  %vm2571 = vcmp.ge.f32.partialorder %v2157, 0.0
  %vm2572 = vcmp.ge.f32.partialorder %v2162, 0.0
  %vm2573 = vcmp.ge.f32.partialorder %v2165, 0.0
  %vm2574 = vcmp.ge.f32.partialorder %v2170, 0.0
  %vm2575 = vcmp.ge.f32.partialorder %v2173, 0.0
  %vm2576 = vcmp.ge.f32.partialorder %v2178, 0.0
  %vm2577 = vcmp.ge.f32.partialorder %v2181, 0.0
  %vm2578 = vcmp.ge.f32.partialorder %v2186, 0.0
  %vm2579 = vcmp.ge.f32.partialorder %v2189, 0.0
  %vm2580 = vcmp.ge.f32.partialorder %v2194, 0.0
  %vm2581 = vcmp.ge.f32.partialorder %v2197, 0.0
  %vm2582 = vcmp.ge.f32.partialorder %v2202, 0.0
  %vm2583 = vcmp.ge.f32.partialorder %v2205, 0.0
  %vm2584 = vcmp.ge.f32.partialorder %v2210, 0.0
  %vm2585 = vcmp.ge.f32.partialorder %v2213, 0.0
  %vm2586 = vcmp.ge.f32.partialorder %v2218, 0.0
  %vm2587 = vcmp.ge.f32.partialorder %v2221, 0.0
  %vm2588 = vcmp.ge.f32.partialorder %v2226, 0.0
  %vm2589 = vcmp.ge.f32.partialorder %v2229, 0.0
  %vm2590 = vcmp.ge.f32.partialorder %v2234, 0.0
  %vm2591 = vcmp.ge.f32.partialorder %v2237, 0.0
  %vm2592 = vcmp.ge.f32.partialorder %v2242, 0.0
  %vm2593 = vcmp.ge.f32.partialorder %v2245, 0.0
  %vm2594 = vcmp.ge.f32.partialorder %v2250, 0.0
  %vm2595 = vcmp.ge.f32.partialorder %v2253, 0.0
  %vm2596 = vcmp.ge.f32.partialorder %v2258, 0.0
  %vm2597 = vcmp.ge.f32.partialorder %v2261, 0.0
  %vm2598 = vcmp.ge.f32.partialorder %v2266, 0.0
  %vm2599 = vcmp.ge.f32.partialorder %v2269, 0.0
  %vm2600 = vcmp.ge.f32.partialorder %v2274, 0.0
  %vm2601 = vcmp.ge.f32.partialorder %v2277, 0.0
  %vm2602 = vcmp.ge.f32.partialorder %v2282, 0.0
  %vm2603 = vcmp.ge.f32.partialorder %v2285, 0.0
  %vm2604 = vcmp.ge.f32.partialorder %v2290, 0.0
  %vm2605 = vcmp.ge.f32.partialorder %v2293, 0.0
  %vm2606 = vcmp.ge.f32.partialorder %v2298, 0.0
  %vm2607 = vcmp.ge.f32.partialorder %v2301, 0.0
  %vm2608 = vcmp.ge.f32.partialorder %v2306, 0.0
  %vm2609 = vcmp.ge.f32.partialorder %v2309, 0.0
  %vm2610 = vcmp.ge.f32.partialorder %v2314, 0.0
  %vm2611 = vcmp.ge.f32.partialorder %v2317, 0.0
  %vm2612 = vcmp.ge.f32.partialorder %v2322, 0.0
  %vm2613 = vcmp.ge.f32.partialorder %v2325, 0.0
  %vm2614 = vcmp.ge.f32.partialorder %v2330, 0.0
  %vm2615 = vcmp.ge.f32.partialorder %v2333, 0.0
  %vm2616 = vcmp.ge.f32.partialorder %v2338, 0.0
  %vm2617 = vcmp.ge.f32.partialorder %v2341, 0.0
  %vm2618 = vcmp.ge.f32.partialorder %v2346, 0.0
  %vm2619 = vcmp.ge.f32.partialorder %v2349, 0.0
  %vm2620 = vcmp.ge.f32.partialorder %v2354, 0.0
  %vm2621 = vcmp.ge.f32.partialorder %v2357, 0.0
  %vm2622 = vcmp.ge.f32.partialorder %v2362, 0.0
  %vm2623 = vcmp.ge.f32.partialorder %v2365, 0.0
  %v2624 = vmul.f32 %v1346, 0.2
  %v2625 = vmul.f32 %v1349, 0.2
  %v2626 = vmul.f32 %v1354, 0.2
  %v2627 = vmul.f32 %v1357, 0.2
  %v2628 = vmul.f32 %v1362, 0.2
  %v2629 = vmul.f32 %v1365, 0.2
  %v2630 = vmul.f32 %v1370, 0.2
  %v2631 = vmul.f32 %v1373, 0.2
  %v2632 = vmul.f32 %v1378, 0.2
  %v2633 = vmul.f32 %v1381, 0.2
  %v2634 = vmul.f32 %v1386, 0.2
  %v2635 = vmul.f32 %v1389, 0.2
  %v2636 = vmul.f32 %v1394, 0.2
  %v2637 = vmul.f32 %v1397, 0.2
  %v2638 = vmul.f32 %v1402, 0.2
  %v2639 = vmul.f32 %v1405, 0.2
  %v2640 = vmul.f32 %v1410, 0.2
  %v2641 = vmul.f32 %v1413, 0.2
  %v2642 = vmul.f32 %v1418, 0.2
  %v2643 = vmul.f32 %v1421, 0.2
  %v2644 = vmul.f32 %v1426, 0.2
  %v2645 = vmul.f32 %v1429, 0.2
  %v2646 = vmul.f32 %v1434, 0.2
  %v2647 = vmul.f32 %v1437, 0.2
  %v2648 = vmul.f32 %v1442, 0.2
  %v2649 = vmul.f32 %v1445, 0.2
  %v2650 = vmul.f32 %v1450, 0.2
  %v2651 = vmul.f32 %v1453, 0.2
  %v2652 = vmul.f32 %v1458, 0.2
  %v2653 = vmul.f32 %v1461, 0.2
  %v2654 = vmul.f32 %v1466, 0.2
  %v2655 = vmul.f32 %v1469, 0.2
  %v2656 = vmul.f32 %v1474, 0.2
  %v2657 = vmul.f32 %v1477, 0.2
  %v2658 = vmul.f32 %v1482, 0.2
  %v2659 = vmul.f32 %v1485, 0.2
  %v2660 = vmul.f32 %v1490, 0.2
  %v2661 = vmul.f32 %v1493, 0.2
  %v2662 = vmul.f32 %v1498, 0.2
  %v2663 = vmul.f32 %v1501, 0.2
  %v2664 = vmul.f32 %v1506, 0.2
  %v2665 = vmul.f32 %v1509, 0.2
  %v2666 = vmul.f32 %v1514, 0.2
  %v2667 = vmul.f32 %v1517, 0.2
  %v2668 = vmul.f32 %v1522, 0.2
  %v2669 = vmul.f32 %v1525, 0.2
  %v2670 = vmul.f32 %v1530, 0.2
  %v2671 = vmul.f32 %v1533, 0.2
  %v2672 = vmul.f32 %v1538, 0.2
  %v2673 = vmul.f32 %v1541, 0.2
  %v2674 = vmul.f32 %v1546, 0.2
  %v2675 = vmul.f32 %v1549, 0.2
  %v2676 = vmul.f32 %v1554, 0.2
  %v2677 = vmul.f32 %v1557, 0.2
  %v2678 = vmul.f32 %v1562, 0.2
  %v2679 = vmul.f32 %v1565, 0.2
  %v2680 = vmul.f32 %v1570, 0.2
  %v2681 = vmul.f32 %v1573, 0.2
  %v2682 = vmul.f32 %v1578, 0.2
  %v2683 = vmul.f32 %v1581, 0.2
  %v2684 = vmul.f32 %v1586, 0.2
  %v2685 = vmul.f32 %v1589, 0.2
  %v2686 = vmul.f32 %v1594, 0.2
  %v2687 = vmul.f32 %v1597, 0.2
  %v2688 = vmul.f32 %v1602, 0.2
  %v2689 = vmul.f32 %v1605, 0.2
  %v2690 = vmul.f32 %v1610, 0.2
  %v2691 = vmul.f32 %v1613, 0.2
  %v2692 = vmul.f32 %v1618, 0.2
  %v2693 = vmul.f32 %v1621, 0.2
  %v2694 = vmul.f32 %v1626, 0.2
  %v2695 = vmul.f32 %v1629, 0.2
  %v2696 = vmul.f32 %v1634, 0.2
  %v2697 = vmul.f32 %v1637, 0.2
  %v2698 = vmul.f32 %v1642, 0.2
  %v2699 = vmul.f32 %v1645, 0.2
  %v2700 = vmul.f32 %v1650, 0.2
  %v2701 = vmul.f32 %v1653, 0.2
  %v2702 = vmul.f32 %v1658, 0.2
  %v2703 = vmul.f32 %v1661, 0.2
  %v2704 = vmul.f32 %v1666, 0.2
  %v2705 = vmul.f32 %v1669, 0.2
  %v2706 = vmul.f32 %v1674, 0.2
  %v2707 = vmul.f32 %v1677, 0.2
  %v2708 = vmul.f32 %v1682, 0.2
  %v2709 = vmul.f32 %v1685, 0.2
  %v2710 = vmul.f32 %v1690, 0.2
  %v2711 = vmul.f32 %v1693, 0.2
  %v2712 = vmul.f32 %v1698, 0.2
  %v2713 = vmul.f32 %v1701, 0.2
  %v2714 = vmul.f32 %v1706, 0.2
  %v2715 = vmul.f32 %v1709, 0.2
  %v2716 = vmul.f32 %v1714, 0.2
  %v2717 = vmul.f32 %v1717, 0.2
  %v2718 = vmul.f32 %v1722, 0.2
  %v2719 = vmul.f32 %v1725, 0.2
  %v2720 = vmul.f32 %v1730, 0.2
  %v2721 = vmul.f32 %v1733, 0.2
  %v2722 = vmul.f32 %v1738, 0.2
  %v2723 = vmul.f32 %v1741, 0.2
  %v2724 = vmul.f32 %v1746, 0.2
  %v2725 = vmul.f32 %v1749, 0.2
  %v2726 = vmul.f32 %v1754, 0.2
  %v2727 = vmul.f32 %v1757, 0.2
  %v2728 = vmul.f32 %v1762, 0.2
  %v2729 = vmul.f32 %v1765, 0.2
  %v2730 = vmul.f32 %v1770, 0.2
  %v2731 = vmul.f32 %v1773, 0.2
  %v2732 = vmul.f32 %v1778, 0.2
  %v2733 = vmul.f32 %v1781, 0.2
  %v2734 = vmul.f32 %v1786, 0.2
  %v2735 = vmul.f32 %v1789, 0.2
  %v2736 = vmul.f32 %v1794, 0.2
  %v2737 = vmul.f32 %v1797, 0.2
  %v2738 = vmul.f32 %v1802, 0.2
  %v2739 = vmul.f32 %v1805, 0.2
  %v2740 = vmul.f32 %v1810, 0.2
  %v2741 = vmul.f32 %v1813, 0.2
  %v2742 = vmul.f32 %v1818, 0.2
  %v2743 = vmul.f32 %v1821, 0.2
  %v2744 = vmul.f32 %v1826, 0.2
  %v2745 = vmul.f32 %v1829, 0.2
  %v2746 = vmul.f32 %v1834, 0.2
  %v2747 = vmul.f32 %v1837, 0.2
  %v2748 = vmul.f32 %v1842, 0.2
  %v2749 = vmul.f32 %v1845, 0.2
  %v2750 = vmul.f32 %v1850, 0.2
  %v2751 = vmul.f32 %v1853, 0.2
  %v2752 = vmul.f32 %v1858, 0.2
  %v2753 = vmul.f32 %v1861, 0.2
  %v2754 = vmul.f32 %v1866, 0.2
  %v2755 = vmul.f32 %v1869, 0.2
  %v2756 = vmul.f32 %v1874, 0.2
  %v2757 = vmul.f32 %v1877, 0.2
  %v2758 = vmul.f32 %v1882, 0.2
  %v2759 = vmul.f32 %v1885, 0.2
  %v2760 = vmul.f32 %v1890, 0.2
  %v2761 = vmul.f32 %v1893, 0.2
  %v2762 = vmul.f32 %v1898, 0.2
  %v2763 = vmul.f32 %v1901, 0.2
  %v2764 = vmul.f32 %v1906, 0.2
  %v2765 = vmul.f32 %v1909, 0.2
  %v2766 = vmul.f32 %v1914, 0.2
  %v2767 = vmul.f32 %v1917, 0.2
  %v2768 = vmul.f32 %v1922, 0.2
  %v2769 = vmul.f32 %v1925, 0.2
  %v2770 = vmul.f32 %v1930, 0.2
  %v2771 = vmul.f32 %v1933, 0.2
  %v2772 = vmul.f32 %v1938, 0.2
  %v2773 = vmul.f32 %v1941, 0.2
  %v2774 = vmul.f32 %v1946, 0.2
  %v2775 = vmul.f32 %v1949, 0.2
  %v2776 = vmul.f32 %v1954, 0.2
  %v2777 = vmul.f32 %v1957, 0.2
  %v2778 = vmul.f32 %v1962, 0.2
  %v2779 = vmul.f32 %v1965, 0.2
  %v2780 = vmul.f32 %v1970, 0.2
  %v2781 = vmul.f32 %v1973, 0.2
  %v2782 = vmul.f32 %v1978, 0.2
  %v2783 = vmul.f32 %v1981, 0.2
  %v2784 = vmul.f32 %v1986, 0.2
  %v2785 = vmul.f32 %v1989, 0.2
  %v2786 = vmul.f32 %v1994, 0.2
  %v2787 = vmul.f32 %v1997, 0.2
  %v2788 = vmul.f32 %v2002, 0.2
  %v2789 = vmul.f32 %v2005, 0.2
  %v2790 = vmul.f32 %v2010, 0.2
  %v2791 = vmul.f32 %v2013, 0.2
  %v2792 = vmul.f32 %v2018, 0.2
  %v2793 = vmul.f32 %v2021, 0.2
  %v2794 = vmul.f32 %v2026, 0.2
  %v2795 = vmul.f32 %v2029, 0.2
  %v2796 = vmul.f32 %v2034, 0.2
  %v2797 = vmul.f32 %v2037, 0.2
  %v2798 = vmul.f32 %v2042, 0.2
  %v2799 = vmul.f32 %v2045, 0.2
  %v2800 = vmul.f32 %v2050, 0.2
  %v2801 = vmul.f32 %v2053, 0.2
  %v2802 = vmul.f32 %v2058, 0.2
  %v2803 = vmul.f32 %v2061, 0.2
  %v2804 = vmul.f32 %v2066, 0.2
  %v2805 = vmul.f32 %v2069, 0.2
  %v2806 = vmul.f32 %v2074, 0.2
  %v2807 = vmul.f32 %v2077, 0.2
  %v2808 = vmul.f32 %v2082, 0.2
  %v2809 = vmul.f32 %v2085, 0.2
  %v2810 = vmul.f32 %v2090, 0.2
  %v2811 = vmul.f32 %v2093, 0.2
  %v2812 = vmul.f32 %v2098, 0.2
  %v2813 = vmul.f32 %v2101, 0.2
  %v2814 = vmul.f32 %v2106, 0.2
  %v2815 = vmul.f32 %v2109, 0.2
  %v2816 = vmul.f32 %v2114, 0.2
  %v2817 = vmul.f32 %v2117, 0.2
  %v2818 = vmul.f32 %v2122, 0.2
  %v2819 = vmul.f32 %v2125, 0.2
  %v2820 = vmul.f32 %v2130, 0.2
  %v2821 = vmul.f32 %v2133, 0.2
  %v2822 = vmul.f32 %v2138, 0.2
  %v2823 = vmul.f32 %v2141, 0.2
  %v2824 = vmul.f32 %v2146, 0.2
  %v2825 = vmul.f32 %v2149, 0.2
  %v2826 = vmul.f32 %v2154, 0.2
  %v2827 = vmul.f32 %v2157, 0.2
  %v2828 = vmul.f32 %v2162, 0.2
  %v2829 = vmul.f32 %v2165, 0.2
  %v2830 = vmul.f32 %v2170, 0.2
  %v2831 = vmul.f32 %v2173, 0.2
  %v2832 = vmul.f32 %v2178, 0.2
  %v2833 = vmul.f32 %v2181, 0.2
  %v2834 = vmul.f32 %v2186, 0.2
  %v2835 = vmul.f32 %v2189, 0.2
  %v2836 = vmul.f32 %v2194, 0.2
  %v2837 = vmul.f32 %v2197, 0.2
  %v2838 = vmul.f32 %v2202, 0.2
  %v2839 = vmul.f32 %v2205, 0.2
  %v2840 = vmul.f32 %v2210, 0.2
  %v2841 = vmul.f32 %v2213, 0.2
  %v2842 = vmul.f32 %v2218, 0.2
  %v2843 = vmul.f32 %v2221, 0.2
  %v2844 = vmul.f32 %v2226, 0.2
  %v2845 = vmul.f32 %v2229, 0.2
  %v2846 = vmul.f32 %v2234, 0.2
  %v2847 = vmul.f32 %v2237, 0.2
  %v2848 = vmul.f32 %v2242, 0.2
  %v2849 = vmul.f32 %v2245, 0.2
  %v2850 = vmul.f32 %v2250, 0.2
  %v2851 = vmul.f32 %v2253, 0.2
  %v2852 = vmul.f32 %v2258, 0.2
  %v2853 = vmul.f32 %v2261, 0.2
  %v2854 = vmul.f32 %v2266, 0.2
  %v2855 = vmul.f32 %v2269, 0.2
  %v2856 = vmul.f32 %v2274, 0.2
  %v2857 = vmul.f32 %v2277, 0.2
  %v2858 = vmul.f32 %v2282, 0.2
  %v2859 = vmul.f32 %v2285, 0.2
  %v2860 = vmul.f32 %v2290, 0.2
  %v2861 = vmul.f32 %v2293, 0.2
  %v2862 = vmul.f32 %v2298, 0.2
  %v2863 = vmul.f32 %v2301, 0.2
  %v2864 = vmul.f32 %v2306, 0.2
  %v2865 = vmul.f32 %v2309, 0.2
  %v2866 = vmul.f32 %v2314, 0.2
  %v2867 = vmul.f32 %v2317, 0.2
  %v2868 = vmul.f32 %v2322, 0.2
  %v2869 = vmul.f32 %v2325, 0.2
  %v2870 = vmul.f32 %v2330, 0.2
  %v2871 = vmul.f32 %v2333, 0.2
  %v2872 = vmul.f32 %v2338, 0.2
  %v2873 = vmul.f32 %v2341, 0.2
  %v2874 = vmul.f32 %v2346, 0.2
  %v2875 = vmul.f32 %v2349, 0.2
  %v2876 = vmul.f32 %v2354, 0.2
  %v2877 = vmul.f32 %v2357, 0.2
  %v2878 = vmul.f32 %v2362, 0.2
  %v2879 = vmul.f32 %v2365, 0.2
  %v2880 = vsel %vm2368, %v1346, %v2624
  %v2881 = vsel %vm2369, %v1349, %v2625
  %v2882 = vsel %vm2370, %v1354, %v2626
  %v2883 = vsel %vm2371, %v1357, %v2627
  %v2884 = vsel %vm2372, %v1362, %v2628
  %v2885 = vsel %vm2373, %v1365, %v2629
  %v2886 = vsel %vm2374, %v1370, %v2630
  %v2887 = vsel %vm2375, %v1373, %v2631
  %v2888 = vsel %vm2376, %v1378, %v2632
  %v2889 = vsel %vm2377, %v1381, %v2633
  %v2890 = vsel %vm2378, %v1386, %v2634
  %v2891 = vsel %vm2379, %v1389, %v2635
  %v2892 = vsel %vm2380, %v1394, %v2636
  %v2893 = vsel %vm2381, %v1397, %v2637
  %v2894 = vsel %vm2382, %v1402, %v2638
  %v2895 = vsel %vm2383, %v1405, %v2639
  %v2896 = vsel %vm2384, %v1410, %v2640
  %v2897 = vsel %vm2385, %v1413, %v2641
  %v2898 = vsel %vm2386, %v1418, %v2642
  %v2899 = vsel %vm2387, %v1421, %v2643
  %v2900 = vsel %vm2388, %v1426, %v2644
  %v2901 = vsel %vm2389, %v1429, %v2645
  %v2902 = vsel %vm2390, %v1434, %v2646
  %v2903 = vsel %vm2391, %v1437, %v2647
  %v2904 = vsel %vm2392, %v1442, %v2648
  %v2905 = vsel %vm2393, %v1445, %v2649
  %v2906 = vsel %vm2394, %v1450, %v2650
  %v2907 = vsel %vm2395, %v1453, %v2651
  %v2908 = vsel %vm2396, %v1458, %v2652
  %v2909 = vsel %vm2397, %v1461, %v2653
  %v2910 = vsel %vm2398, %v1466, %v2654
  %v2911 = vsel %vm2399, %v1469, %v2655
  %v2912 = vsel %vm2400, %v1474, %v2656
  %v2913 = vsel %vm2401, %v1477, %v2657
  %v2914 = vsel %vm2402, %v1482, %v2658
  %v2915 = vsel %vm2403, %v1485, %v2659
  %v2916 = vsel %vm2404, %v1490, %v2660
  %v2917 = vsel %vm2405, %v1493, %v2661
  %v2918 = vsel %vm2406, %v1498, %v2662
  %v2919 = vsel %vm2407, %v1501, %v2663
  %v2920 = vsel %vm2408, %v1506, %v2664
  %v2921 = vsel %vm2409, %v1509, %v2665
  %v2922 = vsel %vm2410, %v1514, %v2666
  %v2923 = vsel %vm2411, %v1517, %v2667
  %v2924 = vsel %vm2412, %v1522, %v2668
  %v2925 = vsel %vm2413, %v1525, %v2669
  %v2926 = vsel %vm2414, %v1530, %v2670
  %v2927 = vsel %vm2415, %v1533, %v2671
  %v2928 = vsel %vm2416, %v1538, %v2672
  %v2929 = vsel %vm2417, %v1541, %v2673
  %v2930 = vsel %vm2418, %v1546, %v2674
  %v2931 = vsel %vm2419, %v1549, %v2675
  %v2932 = vsel %vm2420, %v1554, %v2676
  %v2933 = vsel %vm2421, %v1557, %v2677
  %v2934 = vsel %vm2422, %v1562, %v2678
  %v2935 = vsel %vm2423, %v1565, %v2679
  %v2936 = vsel %vm2424, %v1570, %v2680
  %v2937 = vsel %vm2425, %v1573, %v2681
  %v2938 = vsel %vm2426, %v1578, %v2682
  %v2939 = vsel %vm2427, %v1581, %v2683
  %v2940 = vsel %vm2428, %v1586, %v2684
  %v2941 = vsel %vm2429, %v1589, %v2685
  %v2942 = vsel %vm2430, %v1594, %v2686
  %v2943 = vsel %vm2431, %v1597, %v2687
  %v2944 = vsel %vm2432, %v1602, %v2688
  %v2945 = vsel %vm2433, %v1605, %v2689
  %v2946 = vsel %vm2434, %v1610, %v2690
  %v2947 = vsel %vm2435, %v1613, %v2691
  %v2948 = vsel %vm2436, %v1618, %v2692
  %v2949 = vsel %vm2437, %v1621, %v2693
  %v2950 = vsel %vm2438, %v1626, %v2694
  %v2951 = vsel %vm2439, %v1629, %v2695
  %v2952 = vsel %vm2440, %v1634, %v2696
  %v2953 = vsel %vm2441, %v1637, %v2697
  %v2954 = vsel %vm2442, %v1642, %v2698
  %v2955 = vsel %vm2443, %v1645, %v2699
  %v2956 = vsel %vm2444, %v1650, %v2700
  %v2957 = vsel %vm2445, %v1653, %v2701
  %v2958 = vsel %vm2446, %v1658, %v2702
  %v2959 = vsel %vm2447, %v1661, %v2703
  %v2960 = vsel %vm2448, %v1666, %v2704
  %v2961 = vsel %vm2449, %v1669, %v2705
  %v2962 = vsel %vm2450, %v1674, %v2706
  %v2963 = vsel %vm2451, %v1677, %v2707
  %v2964 = vsel %vm2452, %v1682, %v2708
  %v2965 = vsel %vm2453, %v1685, %v2709
  %v2966 = vsel %vm2454, %v1690, %v2710
  %v2967 = vsel %vm2455, %v1693, %v2711
  %v2968 = vsel %vm2456, %v1698, %v2712
  %v2969 = vsel %vm2457, %v1701, %v2713
  %v2970 = vsel %vm2458, %v1706, %v2714
  %v2971 = vsel %vm2459, %v1709, %v2715
  %v2972 = vsel %vm2460, %v1714, %v2716
  %v2973 = vsel %vm2461, %v1717, %v2717
  %v2974 = vsel %vm2462, %v1722, %v2718
  %v2975 = vsel %vm2463, %v1725, %v2719
  %v2976 = vsel %vm2464, %v1730, %v2720
  %v2977 = vsel %vm2465, %v1733, %v2721
  %v2978 = vsel %vm2466, %v1738, %v2722
  %v2979 = vsel %vm2467, %v1741, %v2723
  %v2980 = vsel %vm2468, %v1746, %v2724
  %v2981 = vsel %vm2469, %v1749, %v2725
  %v2982 = vsel %vm2470, %v1754, %v2726
  %v2983 = vsel %vm2471, %v1757, %v2727
  %v2984 = vsel %vm2472, %v1762, %v2728
  %v2985 = vsel %vm2473, %v1765, %v2729
  %v2986 = vsel %vm2474, %v1770, %v2730
  %v2987 = vsel %vm2475, %v1773, %v2731
  %v2988 = vsel %vm2476, %v1778, %v2732
  %v2989 = vsel %vm2477, %v1781, %v2733
  %v2990 = vsel %vm2478, %v1786, %v2734
  %v2991 = vsel %vm2479, %v1789, %v2735
  %v2992 = vsel %vm2480, %v1794, %v2736
  %v2993 = vsel %vm2481, %v1797, %v2737
  %v2994 = vsel %vm2482, %v1802, %v2738
  %v2995 = vsel %vm2483, %v1805, %v2739
  %v2996 = vsel %vm2484, %v1810, %v2740
  %v2997 = vsel %vm2485, %v1813, %v2741
  %v2998 = vsel %vm2486, %v1818, %v2742
  %v2999 = vsel %vm2487, %v1821, %v2743
  %v3000 = vsel %vm2488, %v1826, %v2744
  %v3001 = vsel %vm2489, %v1829, %v2745
  %v3002 = vsel %vm2490, %v1834, %v2746
  %v3003 = vsel %vm2491, %v1837, %v2747
  %v3004 = vsel %vm2492, %v1842, %v2748
  %v3005 = vsel %vm2493, %v1845, %v2749
  %v3006 = vsel %vm2494, %v1850, %v2750
  %v3007 = vsel %vm2495, %v1853, %v2751
  %v3008 = vsel %vm2496, %v1858, %v2752
  %v3009 = vsel %vm2497, %v1861, %v2753
  %v3010 = vsel %vm2498, %v1866, %v2754
  %v3011 = vsel %vm2499, %v1869, %v2755
  %v3012 = vsel %vm2500, %v1874, %v2756
  %v3013 = vsel %vm2501, %v1877, %v2757
  %v3014 = vsel %vm2502, %v1882, %v2758
  %v3015 = vsel %vm2503, %v1885, %v2759
  %v3016 = vsel %vm2504, %v1890, %v2760
  %v3017 = vsel %vm2505, %v1893, %v2761
  %v3018 = vsel %vm2506, %v1898, %v2762
  %v3019 = vsel %vm2507, %v1901, %v2763
  %v3020 = vsel %vm2508, %v1906, %v2764
  %v3021 = vsel %vm2509, %v1909, %v2765
  %v3022 = vsel %vm2510, %v1914, %v2766
  %v3023 = vsel %vm2511, %v1917, %v2767
  %v3024 = vsel %vm2512, %v1922, %v2768
  %v3025 = vsel %vm2513, %v1925, %v2769
  %v3026 = vsel %vm2514, %v1930, %v2770
  %v3027 = vsel %vm2515, %v1933, %v2771
  %v3028 = vsel %vm2516, %v1938, %v2772
  %v3029 = vsel %vm2517, %v1941, %v2773
  %v3030 = vsel %vm2518, %v1946, %v2774
  %v3031 = vsel %vm2519, %v1949, %v2775
  %v3032 = vsel %vm2520, %v1954, %v2776
  %v3033 = vsel %vm2521, %v1957, %v2777
  %v3034 = vsel %vm2522, %v1962, %v2778
  %v3035 = vsel %vm2523, %v1965, %v2779
  %v3036 = vsel %vm2524, %v1970, %v2780
  %v3037 = vsel %vm2525, %v1973, %v2781
  %v3038 = vsel %vm2526, %v1978, %v2782
  %v3039 = vsel %vm2527, %v1981, %v2783
  %v3040 = vsel %vm2528, %v1986, %v2784
  %v3041 = vsel %vm2529, %v1989, %v2785
  %v3042 = vsel %vm2530, %v1994, %v2786
  %v3043 = vsel %vm2531, %v1997, %v2787
  %v3044 = vsel %vm2532, %v2002, %v2788
  %v3045 = vsel %vm2533, %v2005, %v2789
  %v3046 = vsel %vm2534, %v2010, %v2790
  %v3047 = vsel %vm2535, %v2013, %v2791
  %v3048 = vsel %vm2536, %v2018, %v2792
  %v3049 = vsel %vm2537, %v2021, %v2793
  %v3050 = vsel %vm2538, %v2026, %v2794
  %v3051 = vsel %vm2539, %v2029, %v2795
  %v3052 = vsel %vm2540, %v2034, %v2796
  %v3053 = vsel %vm2541, %v2037, %v2797
  %v3054 = vsel %vm2542, %v2042, %v2798
  %v3055 = vsel %vm2543, %v2045, %v2799
  %v3056 = vsel %vm2544, %v2050, %v2800
  %v3057 = vsel %vm2545, %v2053, %v2801
  %v3058 = vsel %vm2546, %v2058, %v2802
  %v3059 = vsel %vm2547, %v2061, %v2803
  %v3060 = vsel %vm2548, %v2066, %v2804
  %v3061 = vsel %vm2549, %v2069, %v2805
  %v3062 = vsel %vm2550, %v2074, %v2806
  %v3063 = vsel %vm2551, %v2077, %v2807
  %v3064 = vsel %vm2552, %v2082, %v2808
  %v3065 = vsel %vm2553, %v2085, %v2809
  %v3066 = vsel %vm2554, %v2090, %v2810
  %v3067 = vsel %vm2555, %v2093, %v2811
  %v3068 = vsel %vm2556, %v2098, %v2812
  %v3069 = vsel %vm2557, %v2101, %v2813
  %v3070 = vsel %vm2558, %v2106, %v2814
  %v3071 = vsel %vm2559, %v2109, %v2815
  %v3072 = vsel %vm2560, %v2114, %v2816
  %v3073 = vsel %vm2561, %v2117, %v2817
  %v3074 = vsel %vm2562, %v2122, %v2818
  %v3075 = vsel %vm2563, %v2125, %v2819
  %v3076 = vsel %vm2564, %v2130, %v2820
  %v3077 = vsel %vm2565, %v2133, %v2821
  %v3078 = vsel %vm2566, %v2138, %v2822
  %v3079 = vsel %vm2567, %v2141, %v2823
  %v3080 = vsel %vm2568, %v2146, %v2824
  %v3081 = vsel %vm2569, %v2149, %v2825
  %v3082 = vsel %vm2570, %v2154, %v2826
  %v3083 = vsel %vm2571, %v2157, %v2827
  %v3084 = vsel %vm2572, %v2162, %v2828
  %v3085 = vsel %vm2573, %v2165, %v2829
  %v3086 = vsel %vm2574, %v2170, %v2830
  %v3087 = vsel %vm2575, %v2173, %v2831
  %v3088 = vsel %vm2576, %v2178, %v2832
  %v3089 = vsel %vm2577, %v2181, %v2833
  %v3090 = vsel %vm2578, %v2186, %v2834
  %v3091 = vsel %vm2579, %v2189, %v2835
  %v3092 = vsel %vm2580, %v2194, %v2836
  %v3093 = vsel %vm2581, %v2197, %v2837
  %v3094 = vsel %vm2582, %v2202, %v2838
  %v3095 = vsel %vm2583, %v2205, %v2839
  %v3096 = vsel %vm2584, %v2210, %v2840
  %v3097 = vsel %vm2585, %v2213, %v2841
  %v3098 = vsel %vm2586, %v2218, %v2842
  %v3099 = vsel %vm2587, %v2221, %v2843
  %v3100 = vsel %vm2588, %v2226, %v2844
  %v3101 = vsel %vm2589, %v2229, %v2845
  %v3102 = vsel %vm2590, %v2234, %v2846
  %v3103 = vsel %vm2591, %v2237, %v2847
  %v3104 = vsel %vm2592, %v2242, %v2848
  %v3105 = vsel %vm2593, %v2245, %v2849
  %v3106 = vsel %vm2594, %v2250, %v2850
  %v3107 = vsel %vm2595, %v2253, %v2851
  %v3108 = vsel %vm2596, %v2258, %v2852
  %v3109 = vsel %vm2597, %v2261, %v2853
  %v3110 = vsel %vm2598, %v2266, %v2854
  %v3111 = vsel %vm2599, %v2269, %v2855
  %v3112 = vsel %vm2600, %v2274, %v2856
  %v3113 = vsel %vm2601, %v2277, %v2857
  %v3114 = vsel %vm2602, %v2282, %v2858
  %v3115 = vsel %vm2603, %v2285, %v2859
  %v3116 = vsel %vm2604, %v2290, %v2860
  %v3117 = vsel %vm2605, %v2293, %v2861
  %v3118 = vsel %vm2606, %v2298, %v2862
  %v3119 = vsel %vm2607, %v2301, %v2863
  %v3120 = vsel %vm2608, %v2306, %v2864
  %v3121 = vsel %vm2609, %v2309, %v2865
  %v3122 = vsel %vm2610, %v2314, %v2866
  %v3123 = vsel %vm2611, %v2317, %v2867
  %v3124 = vsel %vm2612, %v2322, %v2868
  %v3125 = vsel %vm2613, %v2325, %v2869
  %v3126 = vsel %vm2614, %v2330, %v2870
  %v3127 = vsel %vm2615, %v2333, %v2871
  %v3128 = vsel %vm2616, %v2338, %v2872
  %v3129 = vsel %vm2617, %v2341, %v2873
  %v3130 = vsel %vm2618, %v2346, %v2874
  %v3131 = vsel %vm2619, %v2349, %v2875
  %v3132 = vsel %vm2620, %v2354, %v2876
  %v3133 = vsel %vm2621, %v2357, %v2877
  %v3134 = vsel %vm2622, %v2362, %v2878
  %v3135 = vsel %vm2623, %v2365, %v2879
  %v3136 = vpack.c.bf16 %v2881, %v2880
  %v3137 = vpack.c.bf16 %v2883, %v2882
  %v3138 = vpack.c.bf16 %v2885, %v2884
  %v3139 = vpack.c.bf16 %v2887, %v2886
  %v3140 = vpack.c.bf16 %v2889, %v2888
  %v3141 = vpack.c.bf16 %v2891, %v2890
  %v3142 = vpack.c.bf16 %v2893, %v2892
  %v3143 = vpack.c.bf16 %v2895, %v2894
  %v3144 = vpack.c.bf16 %v2897, %v2896
  %v3145 = vpack.c.bf16 %v2899, %v2898
  %v3146 = vpack.c.bf16 %v2901, %v2900
  %v3147 = vpack.c.bf16 %v2903, %v2902
  %v3148 = vpack.c.bf16 %v2905, %v2904
  %v3149 = vpack.c.bf16 %v2907, %v2906
  %v3150 = vpack.c.bf16 %v2909, %v2908
  %v3151 = vpack.c.bf16 %v2911, %v2910
  %v3152 = vpack.c.bf16 %v2913, %v2912
  %v3153 = vpack.c.bf16 %v2915, %v2914
  %v3154 = vpack.c.bf16 %v2917, %v2916
  %v3155 = vpack.c.bf16 %v2919, %v2918
  %v3156 = vpack.c.bf16 %v2921, %v2920
  %v3157 = vpack.c.bf16 %v2923, %v2922
  %v3158 = vpack.c.bf16 %v2925, %v2924
  %v3159 = vpack.c.bf16 %v2927, %v2926
  %v3160 = vpack.c.bf16 %v2929, %v2928
  %v3161 = vpack.c.bf16 %v2931, %v2930
  %v3162 = vpack.c.bf16 %v2933, %v2932
  %v3163 = vpack.c.bf16 %v2935, %v2934
  %v3164 = vpack.c.bf16 %v2937, %v2936
  %v3165 = vpack.c.bf16 %v2939, %v2938
  %v3166 = vpack.c.bf16 %v2941, %v2940
  %v3167 = vpack.c.bf16 %v2943, %v2942
  %v3168 = vpack.c.bf16 %v2945, %v2944
  %v3169 = vpack.c.bf16 %v2947, %v2946
  %v3170 = vpack.c.bf16 %v2949, %v2948
  %v3171 = vpack.c.bf16 %v2951, %v2950
  %v3172 = vpack.c.bf16 %v2953, %v2952
  %v3173 = vpack.c.bf16 %v2955, %v2954
  %v3174 = vpack.c.bf16 %v2957, %v2956
  %v3175 = vpack.c.bf16 %v2959, %v2958
  %v3176 = vpack.c.bf16 %v2961, %v2960
  %v3177 = vpack.c.bf16 %v2963, %v2962
  %v3178 = vpack.c.bf16 %v2965, %v2964
  %v3179 = vpack.c.bf16 %v2967, %v2966
  %v3180 = vpack.c.bf16 %v2969, %v2968
  %v3181 = vpack.c.bf16 %v2971, %v2970
  %v3182 = vpack.c.bf16 %v2973, %v2972
  %v3183 = vpack.c.bf16 %v2975, %v2974
  %v3184 = vpack.c.bf16 %v2977, %v2976
  %v3185 = vpack.c.bf16 %v2979, %v2978
  %v3186 = vpack.c.bf16 %v2981, %v2980
  %v3187 = vpack.c.bf16 %v2983, %v2982
  %v3188 = vpack.c.bf16 %v2985, %v2984
  %v3189 = vpack.c.bf16 %v2987, %v2986
  %v3190 = vpack.c.bf16 %v2989, %v2988
  %v3191 = vpack.c.bf16 %v2991, %v2990
  %v3192 = vpack.c.bf16 %v2993, %v2992
  %v3193 = vpack.c.bf16 %v2995, %v2994
  %v3194 = vpack.c.bf16 %v2997, %v2996
  %v3195 = vpack.c.bf16 %v2999, %v2998
  %v3196 = vpack.c.bf16 %v3001, %v3000
  %v3197 = vpack.c.bf16 %v3003, %v3002
  %v3198 = vpack.c.bf16 %v3005, %v3004
  %v3199 = vpack.c.bf16 %v3007, %v3006
  %v3200 = vpack.c.bf16 %v3009, %v3008
  %v3201 = vpack.c.bf16 %v3011, %v3010
  %v3202 = vpack.c.bf16 %v3013, %v3012
  %v3203 = vpack.c.bf16 %v3015, %v3014
  %v3204 = vpack.c.bf16 %v3017, %v3016
  %v3205 = vpack.c.bf16 %v3019, %v3018
  %v3206 = vpack.c.bf16 %v3021, %v3020
  %v3207 = vpack.c.bf16 %v3023, %v3022
  %v3208 = vpack.c.bf16 %v3025, %v3024
  %v3209 = vpack.c.bf16 %v3027, %v3026
  %v3210 = vpack.c.bf16 %v3029, %v3028
  %v3211 = vpack.c.bf16 %v3031, %v3030
  %v3212 = vpack.c.bf16 %v3033, %v3032
  %v3213 = vpack.c.bf16 %v3035, %v3034
  %v3214 = vpack.c.bf16 %v3037, %v3036
  %v3215 = vpack.c.bf16 %v3039, %v3038
  %v3216 = vpack.c.bf16 %v3041, %v3040
  %v3217 = vpack.c.bf16 %v3043, %v3042
  %v3218 = vpack.c.bf16 %v3045, %v3044
  %v3219 = vpack.c.bf16 %v3047, %v3046
  %v3220 = vpack.c.bf16 %v3049, %v3048
  %v3221 = vpack.c.bf16 %v3051, %v3050
  %v3222 = vpack.c.bf16 %v3053, %v3052
  %v3223 = vpack.c.bf16 %v3055, %v3054
  %v3224 = vpack.c.bf16 %v3057, %v3056
  %v3225 = vpack.c.bf16 %v3059, %v3058
  %v3226 = vpack.c.bf16 %v3061, %v3060
  %v3227 = vpack.c.bf16 %v3063, %v3062
  %v3228 = vpack.c.bf16 %v3065, %v3064
  %v3229 = vpack.c.bf16 %v3067, %v3066
  %v3230 = vpack.c.bf16 %v3069, %v3068
  %v3231 = vpack.c.bf16 %v3071, %v3070
  %v3232 = vpack.c.bf16 %v3073, %v3072
  %v3233 = vpack.c.bf16 %v3075, %v3074
  %v3234 = vpack.c.bf16 %v3077, %v3076
  %v3235 = vpack.c.bf16 %v3079, %v3078
  %v3236 = vpack.c.bf16 %v3081, %v3080
  %v3237 = vpack.c.bf16 %v3083, %v3082
  %v3238 = vpack.c.bf16 %v3085, %v3084
  %v3239 = vpack.c.bf16 %v3087, %v3086
  %v3240 = vpack.c.bf16 %v3089, %v3088
  %v3241 = vpack.c.bf16 %v3091, %v3090
  %v3242 = vpack.c.bf16 %v3093, %v3092
  %v3243 = vpack.c.bf16 %v3095, %v3094
  %v3244 = vpack.c.bf16 %v3097, %v3096
  %v3245 = vpack.c.bf16 %v3099, %v3098
  %v3246 = vpack.c.bf16 %v3101, %v3100
  %v3247 = vpack.c.bf16 %v3103, %v3102
  %v3248 = vpack.c.bf16 %v3105, %v3104
  %v3249 = vpack.c.bf16 %v3107, %v3106
  %v3250 = vpack.c.bf16 %v3109, %v3108
  %v3251 = vpack.c.bf16 %v3111, %v3110
  %v3252 = vpack.c.bf16 %v3113, %v3112
  %v3253 = vpack.c.bf16 %v3115, %v3114
  %v3254 = vpack.c.bf16 %v3117, %v3116
  %v3255 = vpack.c.bf16 %v3119, %v3118
  %v3256 = vpack.c.bf16 %v3121, %v3120
  %v3257 = vpack.c.bf16 %v3123, %v3122
  %v3258 = vpack.c.bf16 %v3125, %v3124
  %v3259 = vpack.c.bf16 %v3127, %v3126
  %v3260 = vpack.c.bf16 %v3129, %v3128
  %v3261 = vpack.c.bf16 %v3131, %v3130
  %v3262 = vpack.c.bf16 %v3133, %v3132
  %v3263 = vpack.c.bf16 %v3135, %v3134
  %v3392 = vunpack.c.l.b16 %v3136
  %v3393 = vunpack.c.h.b16 %v3136
  %v3394 = vunpack.c.l.b16 %v3137
  %v3395 = vunpack.c.h.b16 %v3137
  %v3396 = vunpack.c.l.b16 %v3138
  %v3397 = vunpack.c.h.b16 %v3138
  %v3398 = vunpack.c.l.b16 %v3139
  %v3399 = vunpack.c.h.b16 %v3139
  %v3400 = vunpack.c.l.b16 %v3140
  %v3401 = vunpack.c.h.b16 %v3140
  %v3402 = vunpack.c.l.b16 %v3141
  %v3403 = vunpack.c.h.b16 %v3141
  %v3404 = vunpack.c.l.b16 %v3142
  %v3405 = vunpack.c.h.b16 %v3142
  %v3406 = vunpack.c.l.b16 %v3143
  %v3407 = vunpack.c.h.b16 %v3143
  %v3408 = vunpack.c.l.b16 %v3144
  %v3409 = vunpack.c.h.b16 %v3144
  %v3410 = vunpack.c.l.b16 %v3145
  %v3411 = vunpack.c.h.b16 %v3145
  %v3412 = vunpack.c.l.b16 %v3146
  %v3413 = vunpack.c.h.b16 %v3146
  %v3414 = vunpack.c.l.b16 %v3147
  %v3415 = vunpack.c.h.b16 %v3147
  %v3416 = vunpack.c.l.b16 %v3148
  %v3417 = vunpack.c.h.b16 %v3148
  %v3418 = vunpack.c.l.b16 %v3149
  %v3419 = vunpack.c.h.b16 %v3149
  %v3420 = vunpack.c.l.b16 %v3150
  %v3421 = vunpack.c.h.b16 %v3150
  %v3422 = vunpack.c.l.b16 %v3151
  %v3423 = vunpack.c.h.b16 %v3151
  %v3424 = vunpack.c.l.b16 %v3152
  %v3425 = vunpack.c.h.b16 %v3152
  %v3426 = vunpack.c.l.b16 %v3153
  %v3427 = vunpack.c.h.b16 %v3153
  %v3428 = vunpack.c.l.b16 %v3154
  %v3429 = vunpack.c.h.b16 %v3154
  %v3430 = vunpack.c.l.b16 %v3155
  %v3431 = vunpack.c.h.b16 %v3155
  %v3432 = vunpack.c.l.b16 %v3156
  %v3433 = vunpack.c.h.b16 %v3156
  %v3434 = vunpack.c.l.b16 %v3157
  %v3435 = vunpack.c.h.b16 %v3157
  %v3436 = vunpack.c.l.b16 %v3158
  %v3437 = vunpack.c.h.b16 %v3158
  %v3438 = vunpack.c.l.b16 %v3159
  %v3439 = vunpack.c.h.b16 %v3159
  %v3440 = vunpack.c.l.b16 %v3160
  %v3441 = vunpack.c.h.b16 %v3160
  %v3442 = vunpack.c.l.b16 %v3161
  %v3443 = vunpack.c.h.b16 %v3161
  %v3444 = vunpack.c.l.b16 %v3162
  %v3445 = vunpack.c.h.b16 %v3162
  %v3446 = vunpack.c.l.b16 %v3163
  %v3447 = vunpack.c.h.b16 %v3163
  %v3448 = vunpack.c.l.b16 %v3164
  %v3449 = vunpack.c.h.b16 %v3164
  %v3450 = vunpack.c.l.b16 %v3165
  %v3451 = vunpack.c.h.b16 %v3165
  %v3452 = vunpack.c.l.b16 %v3166
  %v3453 = vunpack.c.h.b16 %v3166
  %v3454 = vunpack.c.l.b16 %v3167
  %v3455 = vunpack.c.h.b16 %v3167
  %v3456 = vunpack.c.l.b16 %v3168
  %v3457 = vunpack.c.h.b16 %v3168
  %v3458 = vunpack.c.l.b16 %v3169
  %v3459 = vunpack.c.h.b16 %v3169
  %v3460 = vunpack.c.l.b16 %v3170
  %v3461 = vunpack.c.h.b16 %v3170
  %v3462 = vunpack.c.l.b16 %v3171
  %v3463 = vunpack.c.h.b16 %v3171
  %v3464 = vunpack.c.l.b16 %v3172
  %v3465 = vunpack.c.h.b16 %v3172
  %v3466 = vunpack.c.l.b16 %v3173
  %v3467 = vunpack.c.h.b16 %v3173
  %v3468 = vunpack.c.l.b16 %v3174
  %v3469 = vunpack.c.h.b16 %v3174
  %v3470 = vunpack.c.l.b16 %v3175
  %v3471 = vunpack.c.h.b16 %v3175
  %v3472 = vunpack.c.l.b16 %v3176
  %v3473 = vunpack.c.h.b16 %v3176
  %v3474 = vunpack.c.l.b16 %v3177
  %v3475 = vunpack.c.h.b16 %v3177
  %v3476 = vunpack.c.l.b16 %v3178
  %v3477 = vunpack.c.h.b16 %v3178
  %v3478 = vunpack.c.l.b16 %v3179
  %v3479 = vunpack.c.h.b16 %v3179
  %v3480 = vunpack.c.l.b16 %v3180
  %v3481 = vunpack.c.h.b16 %v3180
  %v3482 = vunpack.c.l.b16 %v3181
  %v3483 = vunpack.c.h.b16 %v3181
  %v3484 = vunpack.c.l.b16 %v3182
  %v3485 = vunpack.c.h.b16 %v3182
  %v3486 = vunpack.c.l.b16 %v3183
  %v3487 = vunpack.c.h.b16 %v3183
  %v3488 = vunpack.c.l.b16 %v3184
  %v3489 = vunpack.c.h.b16 %v3184
  %v3490 = vunpack.c.l.b16 %v3185
  %v3491 = vunpack.c.h.b16 %v3185
  %v3492 = vunpack.c.l.b16 %v3186
  %v3493 = vunpack.c.h.b16 %v3186
  %v3494 = vunpack.c.l.b16 %v3187
  %v3495 = vunpack.c.h.b16 %v3187
  %v3496 = vunpack.c.l.b16 %v3188
  %v3497 = vunpack.c.h.b16 %v3188
  %v3498 = vunpack.c.l.b16 %v3189
  %v3499 = vunpack.c.h.b16 %v3189
  %v3500 = vunpack.c.l.b16 %v3190
  %v3501 = vunpack.c.h.b16 %v3190
  %v3502 = vunpack.c.l.b16 %v3191
  %v3503 = vunpack.c.h.b16 %v3191
  %v3504 = vunpack.c.l.b16 %v3192
  %v3505 = vunpack.c.h.b16 %v3192
  %v3506 = vunpack.c.l.b16 %v3193
  %v3507 = vunpack.c.h.b16 %v3193
  %v3508 = vunpack.c.l.b16 %v3194
  %v3509 = vunpack.c.h.b16 %v3194
  %v3510 = vunpack.c.l.b16 %v3195
  %v3511 = vunpack.c.h.b16 %v3195
  %v3512 = vunpack.c.l.b16 %v3196
  %v3513 = vunpack.c.h.b16 %v3196
  %v3514 = vunpack.c.l.b16 %v3197
  %v3515 = vunpack.c.h.b16 %v3197
  %v3516 = vunpack.c.l.b16 %v3198
  %v3517 = vunpack.c.h.b16 %v3198
  %v3518 = vunpack.c.l.b16 %v3199
  %v3519 = vunpack.c.h.b16 %v3199
  %v3520 = vunpack.c.l.b16 %v3200
  %v3521 = vunpack.c.h.b16 %v3200
  %v3522 = vunpack.c.l.b16 %v3201
  %v3523 = vunpack.c.h.b16 %v3201
  %v3524 = vunpack.c.l.b16 %v3202
  %v3525 = vunpack.c.h.b16 %v3202
  %v3526 = vunpack.c.l.b16 %v3203
  %v3527 = vunpack.c.h.b16 %v3203
  %v3528 = vunpack.c.l.b16 %v3204
  %v3529 = vunpack.c.h.b16 %v3204
  %v3530 = vunpack.c.l.b16 %v3205
  %v3531 = vunpack.c.h.b16 %v3205
  %v3532 = vunpack.c.l.b16 %v3206
  %v3533 = vunpack.c.h.b16 %v3206
  %v3534 = vunpack.c.l.b16 %v3207
  %v3535 = vunpack.c.h.b16 %v3207
  %v3536 = vunpack.c.l.b16 %v3208
  %v3537 = vunpack.c.h.b16 %v3208
  %v3538 = vunpack.c.l.b16 %v3209
  %v3539 = vunpack.c.h.b16 %v3209
  %v3540 = vunpack.c.l.b16 %v3210
  %v3541 = vunpack.c.h.b16 %v3210
  %v3542 = vunpack.c.l.b16 %v3211
  %v3543 = vunpack.c.h.b16 %v3211
  %v3544 = vunpack.c.l.b16 %v3212
  %v3545 = vunpack.c.h.b16 %v3212
  %v3546 = vunpack.c.l.b16 %v3213
  %v3547 = vunpack.c.h.b16 %v3213
  %v3548 = vunpack.c.l.b16 %v3214
  %v3549 = vunpack.c.h.b16 %v3214
  %v3550 = vunpack.c.l.b16 %v3215
  %v3551 = vunpack.c.h.b16 %v3215
  %v3552 = vunpack.c.l.b16 %v3216
  %v3553 = vunpack.c.h.b16 %v3216
  %v3554 = vunpack.c.l.b16 %v3217
  %v3555 = vunpack.c.h.b16 %v3217
  %v3556 = vunpack.c.l.b16 %v3218
  %v3557 = vunpack.c.h.b16 %v3218
  %v3558 = vunpack.c.l.b16 %v3219
  %v3559 = vunpack.c.h.b16 %v3219
  %v3560 = vunpack.c.l.b16 %v3220
  %v3561 = vunpack.c.h.b16 %v3220
  %v3562 = vunpack.c.l.b16 %v3221
  %v3563 = vunpack.c.h.b16 %v3221
  %v3564 = vunpack.c.l.b16 %v3222
  %v3565 = vunpack.c.h.b16 %v3222
  %v3566 = vunpack.c.l.b16 %v3223
  %v3567 = vunpack.c.h.b16 %v3223
  %v3568 = vunpack.c.l.b16 %v3224
  %v3569 = vunpack.c.h.b16 %v3224
  %v3570 = vunpack.c.l.b16 %v3225
  %v3571 = vunpack.c.h.b16 %v3225
  %v3572 = vunpack.c.l.b16 %v3226
  %v3573 = vunpack.c.h.b16 %v3226
  %v3574 = vunpack.c.l.b16 %v3227
  %v3575 = vunpack.c.h.b16 %v3227
  %v3576 = vunpack.c.l.b16 %v3228
  %v3577 = vunpack.c.h.b16 %v3228
  %v3578 = vunpack.c.l.b16 %v3229
  %v3579 = vunpack.c.h.b16 %v3229
  %v3580 = vunpack.c.l.b16 %v3230
  %v3581 = vunpack.c.h.b16 %v3230
  %v3582 = vunpack.c.l.b16 %v3231
  %v3583 = vunpack.c.h.b16 %v3231
  %v3584 = vunpack.c.l.b16 %v3232
  %v3585 = vunpack.c.h.b16 %v3232
  %v3586 = vunpack.c.l.b16 %v3233
  %v3587 = vunpack.c.h.b16 %v3233
  %v3588 = vunpack.c.l.b16 %v3234
  %v3589 = vunpack.c.h.b16 %v3234
  %v3590 = vunpack.c.l.b16 %v3235
  %v3591 = vunpack.c.h.b16 %v3235
  %v3592 = vunpack.c.l.b16 %v3236
  %v3593 = vunpack.c.h.b16 %v3236
  %v3594 = vunpack.c.l.b16 %v3237
  %v3595 = vunpack.c.h.b16 %v3237
  %v3596 = vunpack.c.l.b16 %v3238
  %v3597 = vunpack.c.h.b16 %v3238
  %v3598 = vunpack.c.l.b16 %v3239
  %v3599 = vunpack.c.h.b16 %v3239
  %v3600 = vunpack.c.l.b16 %v3240
  %v3601 = vunpack.c.h.b16 %v3240
  %v3602 = vunpack.c.l.b16 %v3241
  %v3603 = vunpack.c.h.b16 %v3241
  %v3604 = vunpack.c.l.b16 %v3242
  %v3605 = vunpack.c.h.b16 %v3242
  %v3606 = vunpack.c.l.b16 %v3243
  %v3607 = vunpack.c.h.b16 %v3243
  %v3608 = vunpack.c.l.b16 %v3244
  %v3609 = vunpack.c.h.b16 %v3244
  %v3610 = vunpack.c.l.b16 %v3245
  %v3611 = vunpack.c.h.b16 %v3245
  %v3612 = vunpack.c.l.b16 %v3246
  %v3613 = vunpack.c.h.b16 %v3246
  %v3614 = vunpack.c.l.b16 %v3247
  %v3615 = vunpack.c.h.b16 %v3247
  %v3616 = vunpack.c.l.b16 %v3248
  %v3617 = vunpack.c.h.b16 %v3248
  %v3618 = vunpack.c.l.b16 %v3249
  %v3619 = vunpack.c.h.b16 %v3249
  %v3620 = vunpack.c.l.b16 %v3250
  %v3621 = vunpack.c.h.b16 %v3250
  %v3622 = vunpack.c.l.b16 %v3251
  %v3623 = vunpack.c.h.b16 %v3251
  %v3624 = vunpack.c.l.b16 %v3252
  %v3625 = vunpack.c.h.b16 %v3252
  %v3626 = vunpack.c.l.b16 %v3253
  %v3627 = vunpack.c.h.b16 %v3253
  %v3628 = vunpack.c.l.b16 %v3254
  %v3629 = vunpack.c.h.b16 %v3254
  %v3630 = vunpack.c.l.b16 %v3255
  %v3631 = vunpack.c.h.b16 %v3255
  %v3632 = vunpack.c.l.b16 %v3256
  %v3633 = vunpack.c.h.b16 %v3256
  %v3634 = vunpack.c.l.b16 %v3257
  %v3635 = vunpack.c.h.b16 %v3257
  %v3636 = vunpack.c.l.b16 %v3258
  %v3637 = vunpack.c.h.b16 %v3258
  %v3638 = vunpack.c.l.b16 %v3259
  %v3639 = vunpack.c.h.b16 %v3259
  %v3640 = vunpack.c.l.b16 %v3260
  %v3641 = vunpack.c.h.b16 %v3260
  %v3642 = vunpack.c.l.b16 %v3261
  %v3643 = vunpack.c.h.b16 %v3261
  %v3644 = vunpack.c.l.b16 %v3262
  %v3645 = vunpack.c.h.b16 %v3262
  %v3646 = vunpack.c.l.b16 %v3263
  %v3647 = vunpack.c.h.b16 %v3263
  %v3648 = vpack.c.b16 %v3392, %v3392
  %v3649 = vpack.c.b16 %v3393, %v3393
  %v3650 = vpack.c.b16 %v3394, %v3394
  %v3651 = vpack.c.b16 %v3395, %v3395
  %v3652 = vpack.c.b16 %v3396, %v3396
  %v3653 = vpack.c.b16 %v3397, %v3397
  %v3654 = vpack.c.b16 %v3398, %v3398
  %v3655 = vpack.c.b16 %v3399, %v3399
  %v3656 = vpack.c.b16 %v3400, %v3400
  %v3657 = vpack.c.b16 %v3401, %v3401
  %v3658 = vpack.c.b16 %v3402, %v3402
  %v3659 = vpack.c.b16 %v3403, %v3403
  %v3660 = vpack.c.b16 %v3404, %v3404
  %v3661 = vpack.c.b16 %v3405, %v3405
  %v3662 = vpack.c.b16 %v3406, %v3406
  %v3663 = vpack.c.b16 %v3407, %v3407
  %v3664 = vpack.c.b16 %v3408, %v3408
  %v3665 = vpack.c.b16 %v3409, %v3409
  %v3666 = vpack.c.b16 %v3410, %v3410
  %v3667 = vpack.c.b16 %v3411, %v3411
  %v3668 = vpack.c.b16 %v3412, %v3412
  %v3669 = vpack.c.b16 %v3413, %v3413
  %v3670 = vpack.c.b16 %v3414, %v3414
  %v3671 = vpack.c.b16 %v3415, %v3415
  %v3672 = vpack.c.b16 %v3416, %v3416
  %v3673 = vpack.c.b16 %v3417, %v3417
  %v3674 = vpack.c.b16 %v3418, %v3418
  %v3675 = vpack.c.b16 %v3419, %v3419
  %v3676 = vpack.c.b16 %v3420, %v3420
  %v3677 = vpack.c.b16 %v3421, %v3421
  %v3678 = vpack.c.b16 %v3422, %v3422
  %v3679 = vpack.c.b16 %v3423, %v3423
  %v3680 = vpack.c.b16 %v3424, %v3424
  %v3681 = vpack.c.b16 %v3425, %v3425
  %v3682 = vpack.c.b16 %v3426, %v3426
  %v3683 = vpack.c.b16 %v3427, %v3427
  %v3684 = vpack.c.b16 %v3428, %v3428
  %v3685 = vpack.c.b16 %v3429, %v3429
  %v3686 = vpack.c.b16 %v3430, %v3430
  %v3687 = vpack.c.b16 %v3431, %v3431
  %v3688 = vpack.c.b16 %v3432, %v3432
  %v3689 = vpack.c.b16 %v3433, %v3433
  %v3690 = vpack.c.b16 %v3434, %v3434
  %v3691 = vpack.c.b16 %v3435, %v3435
  %v3692 = vpack.c.b16 %v3436, %v3436
  %v3693 = vpack.c.b16 %v3437, %v3437
  %v3694 = vpack.c.b16 %v3438, %v3438
  %v3695 = vpack.c.b16 %v3439, %v3439
  %v3696 = vpack.c.b16 %v3440, %v3440
  %v3697 = vpack.c.b16 %v3441, %v3441
  %v3698 = vpack.c.b16 %v3442, %v3442
  %v3699 = vpack.c.b16 %v3443, %v3443
  %v3700 = vpack.c.b16 %v3444, %v3444
  %v3701 = vpack.c.b16 %v3445, %v3445
  %v3702 = vpack.c.b16 %v3446, %v3446
  %v3703 = vpack.c.b16 %v3447, %v3447
  %v3704 = vpack.c.b16 %v3448, %v3448
  %v3705 = vpack.c.b16 %v3449, %v3449
  %v3706 = vpack.c.b16 %v3450, %v3450
  %v3707 = vpack.c.b16 %v3451, %v3451
  %v3708 = vpack.c.b16 %v3452, %v3452
  %v3709 = vpack.c.b16 %v3453, %v3453
  %v3710 = vpack.c.b16 %v3454, %v3454
  %v3711 = vpack.c.b16 %v3455, %v3455
  %v3712 = vpack.c.b16 %v3456, %v3456
  %v3713 = vpack.c.b16 %v3457, %v3457
  %v3714 = vpack.c.b16 %v3458, %v3458
  %v3715 = vpack.c.b16 %v3459, %v3459
  %v3716 = vpack.c.b16 %v3460, %v3460
  %v3717 = vpack.c.b16 %v3461, %v3461
  %v3718 = vpack.c.b16 %v3462, %v3462
  %v3719 = vpack.c.b16 %v3463, %v3463
  %v3720 = vpack.c.b16 %v3464, %v3464
  %v3721 = vpack.c.b16 %v3465, %v3465
  %v3722 = vpack.c.b16 %v3466, %v3466
  %v3723 = vpack.c.b16 %v3467, %v3467
  %v3724 = vpack.c.b16 %v3468, %v3468
  %v3725 = vpack.c.b16 %v3469, %v3469
  %v3726 = vpack.c.b16 %v3470, %v3470
  %v3727 = vpack.c.b16 %v3471, %v3471
  %v3728 = vpack.c.b16 %v3472, %v3472
  %v3729 = vpack.c.b16 %v3473, %v3473
  %v3730 = vpack.c.b16 %v3474, %v3474
  %v3731 = vpack.c.b16 %v3475, %v3475
  %v3732 = vpack.c.b16 %v3476, %v3476
  %v3733 = vpack.c.b16 %v3477, %v3477
  %v3734 = vpack.c.b16 %v3478, %v3478
  %v3735 = vpack.c.b16 %v3479, %v3479
  %v3736 = vpack.c.b16 %v3480, %v3480
  %v3737 = vpack.c.b16 %v3481, %v3481
  %v3738 = vpack.c.b16 %v3482, %v3482
  %v3739 = vpack.c.b16 %v3483, %v3483
  %v3740 = vpack.c.b16 %v3484, %v3484
  %v3741 = vpack.c.b16 %v3485, %v3485
  %v3742 = vpack.c.b16 %v3486, %v3486
  %v3743 = vpack.c.b16 %v3487, %v3487
  %v3744 = vpack.c.b16 %v3488, %v3488
  %v3745 = vpack.c.b16 %v3489, %v3489
  %v3746 = vpack.c.b16 %v3490, %v3490
  %v3747 = vpack.c.b16 %v3491, %v3491
  %v3748 = vpack.c.b16 %v3492, %v3492
  %v3749 = vpack.c.b16 %v3493, %v3493
  %v3750 = vpack.c.b16 %v3494, %v3494
  %v3751 = vpack.c.b16 %v3495, %v3495
  %v3752 = vpack.c.b16 %v3496, %v3496
  %v3753 = vpack.c.b16 %v3497, %v3497
  %v3754 = vpack.c.b16 %v3498, %v3498
  %v3755 = vpack.c.b16 %v3499, %v3499
  %v3756 = vpack.c.b16 %v3500, %v3500
  %v3757 = vpack.c.b16 %v3501, %v3501
  %v3758 = vpack.c.b16 %v3502, %v3502
  %v3759 = vpack.c.b16 %v3503, %v3503
  %v3760 = vpack.c.b16 %v3504, %v3504
  %v3761 = vpack.c.b16 %v3505, %v3505
  %v3762 = vpack.c.b16 %v3506, %v3506
  %v3763 = vpack.c.b16 %v3507, %v3507
  %v3764 = vpack.c.b16 %v3508, %v3508
  %v3765 = vpack.c.b16 %v3509, %v3509
  %v3766 = vpack.c.b16 %v3510, %v3510
  %v3767 = vpack.c.b16 %v3511, %v3511
  %v3768 = vpack.c.b16 %v3512, %v3512
  %v3769 = vpack.c.b16 %v3513, %v3513
  %v3770 = vpack.c.b16 %v3514, %v3514
  %v3771 = vpack.c.b16 %v3515, %v3515
  %v3772 = vpack.c.b16 %v3516, %v3516
  %v3773 = vpack.c.b16 %v3517, %v3517
  %v3774 = vpack.c.b16 %v3518, %v3518
  %v3775 = vpack.c.b16 %v3519, %v3519
  %v3776 = vpack.c.b16 %v3520, %v3520
  %v3777 = vpack.c.b16 %v3521, %v3521
  %v3778 = vpack.c.b16 %v3522, %v3522
  %v3779 = vpack.c.b16 %v3523, %v3523
  %v3780 = vpack.c.b16 %v3524, %v3524
  %v3781 = vpack.c.b16 %v3525, %v3525
  %v3782 = vpack.c.b16 %v3526, %v3526
  %v3783 = vpack.c.b16 %v3527, %v3527
  %v3784 = vpack.c.b16 %v3528, %v3528
  %v3785 = vpack.c.b16 %v3529, %v3529
  %v3786 = vpack.c.b16 %v3530, %v3530
  %v3787 = vpack.c.b16 %v3531, %v3531
  %v3788 = vpack.c.b16 %v3532, %v3532
  %v3789 = vpack.c.b16 %v3533, %v3533
  %v3790 = vpack.c.b16 %v3534, %v3534
  %v3791 = vpack.c.b16 %v3535, %v3535
  %v3792 = vpack.c.b16 %v3536, %v3536
  %v3793 = vpack.c.b16 %v3537, %v3537
  %v3794 = vpack.c.b16 %v3538, %v3538
  %v3795 = vpack.c.b16 %v3539, %v3539
  %v3796 = vpack.c.b16 %v3540, %v3540
  %v3797 = vpack.c.b16 %v3541, %v3541
  %v3798 = vpack.c.b16 %v3542, %v3542
  %v3799 = vpack.c.b16 %v3543, %v3543
  %v3800 = vpack.c.b16 %v3544, %v3544
  %v3801 = vpack.c.b16 %v3545, %v3545
  %v3802 = vpack.c.b16 %v3546, %v3546
  %v3803 = vpack.c.b16 %v3547, %v3547
  %v3804 = vpack.c.b16 %v3548, %v3548
  %v3805 = vpack.c.b16 %v3549, %v3549
  %v3806 = vpack.c.b16 %v3550, %v3550
  %v3807 = vpack.c.b16 %v3551, %v3551
  %v3808 = vpack.c.b16 %v3552, %v3552
  %v3809 = vpack.c.b16 %v3553, %v3553
  %v3810 = vpack.c.b16 %v3554, %v3554
  %v3811 = vpack.c.b16 %v3555, %v3555
  %v3812 = vpack.c.b16 %v3556, %v3556
  %v3813 = vpack.c.b16 %v3557, %v3557
  %v3814 = vpack.c.b16 %v3558, %v3558
  %v3815 = vpack.c.b16 %v3559, %v3559
  %v3816 = vpack.c.b16 %v3560, %v3560
  %v3817 = vpack.c.b16 %v3561, %v3561
  %v3818 = vpack.c.b16 %v3562, %v3562
  %v3819 = vpack.c.b16 %v3563, %v3563
  %v3820 = vpack.c.b16 %v3564, %v3564
  %v3821 = vpack.c.b16 %v3565, %v3565
  %v3822 = vpack.c.b16 %v3566, %v3566
  %v3823 = vpack.c.b16 %v3567, %v3567
  %v3824 = vpack.c.b16 %v3568, %v3568
  %v3825 = vpack.c.b16 %v3569, %v3569
  %v3826 = vpack.c.b16 %v3570, %v3570
  %v3827 = vpack.c.b16 %v3571, %v3571
  %v3828 = vpack.c.b16 %v3572, %v3572
  %v3829 = vpack.c.b16 %v3573, %v3573
  %v3830 = vpack.c.b16 %v3574, %v3574
  %v3831 = vpack.c.b16 %v3575, %v3575
  %v3832 = vpack.c.b16 %v3576, %v3576
  %v3833 = vpack.c.b16 %v3577, %v3577
  %v3834 = vpack.c.b16 %v3578, %v3578
  %v3835 = vpack.c.b16 %v3579, %v3579
  %v3836 = vpack.c.b16 %v3580, %v3580
  %v3837 = vpack.c.b16 %v3581, %v3581
  %v3838 = vpack.c.b16 %v3582, %v3582
  %v3839 = vpack.c.b16 %v3583, %v3583
  %v3840 = vpack.c.b16 %v3584, %v3584
  %v3841 = vpack.c.b16 %v3585, %v3585
  %v3842 = vpack.c.b16 %v3586, %v3586
  %v3843 = vpack.c.b16 %v3587, %v3587
  %v3844 = vpack.c.b16 %v3588, %v3588
  %v3845 = vpack.c.b16 %v3589, %v3589
  %v3846 = vpack.c.b16 %v3590, %v3590
  %v3847 = vpack.c.b16 %v3591, %v3591
  %v3848 = vpack.c.b16 %v3592, %v3592
  %v3849 = vpack.c.b16 %v3593, %v3593
  %v3850 = vpack.c.b16 %v3594, %v3594
  %v3851 = vpack.c.b16 %v3595, %v3595
  %v3852 = vpack.c.b16 %v3596, %v3596
  %v3853 = vpack.c.b16 %v3597, %v3597
  %v3854 = vpack.c.b16 %v3598, %v3598
  %v3855 = vpack.c.b16 %v3599, %v3599
  %v3856 = vpack.c.b16 %v3600, %v3600
  %v3857 = vpack.c.b16 %v3601, %v3601
  %v3858 = vpack.c.b16 %v3602, %v3602
  %v3859 = vpack.c.b16 %v3603, %v3603
  %v3860 = vpack.c.b16 %v3604, %v3604
  %v3861 = vpack.c.b16 %v3605, %v3605
  %v3862 = vpack.c.b16 %v3606, %v3606
  %v3863 = vpack.c.b16 %v3607, %v3607
  %v3864 = vpack.c.b16 %v3608, %v3608
  %v3865 = vpack.c.b16 %v3609, %v3609
  %v3866 = vpack.c.b16 %v3610, %v3610
  %v3867 = vpack.c.b16 %v3611, %v3611
  %v3868 = vpack.c.b16 %v3612, %v3612
  %v3869 = vpack.c.b16 %v3613, %v3613
  %v3870 = vpack.c.b16 %v3614, %v3614
  %v3871 = vpack.c.b16 %v3615, %v3615
  %v3872 = vpack.c.b16 %v3616, %v3616
  %v3873 = vpack.c.b16 %v3617, %v3617
  %v3874 = vpack.c.b16 %v3618, %v3618
  %v3875 = vpack.c.b16 %v3619, %v3619
  %v3876 = vpack.c.b16 %v3620, %v3620
  %v3877 = vpack.c.b16 %v3621, %v3621
  %v3878 = vpack.c.b16 %v3622, %v3622
  %v3879 = vpack.c.b16 %v3623, %v3623
  %v3880 = vpack.c.b16 %v3624, %v3624
  %v3881 = vpack.c.b16 %v3625, %v3625
  %v3882 = vpack.c.b16 %v3626, %v3626
  %v3883 = vpack.c.b16 %v3627, %v3627
  %v3884 = vpack.c.b16 %v3628, %v3628
  %v3885 = vpack.c.b16 %v3629, %v3629
  %v3886 = vpack.c.b16 %v3630, %v3630
  %v3887 = vpack.c.b16 %v3631, %v3631
  %v3888 = vpack.c.b16 %v3632, %v3632
  %v3889 = vpack.c.b16 %v3633, %v3633
  %v3890 = vpack.c.b16 %v3634, %v3634
  %v3891 = vpack.c.b16 %v3635, %v3635
  %v3892 = vpack.c.b16 %v3636, %v3636
  %v3893 = vpack.c.b16 %v3637, %v3637
  %v3894 = vpack.c.b16 %v3638, %v3638
  %v3895 = vpack.c.b16 %v3639, %v3639
  %v3896 = vpack.c.b16 %v3640, %v3640
  %v3897 = vpack.c.b16 %v3641, %v3641
  %v3898 = vpack.c.b16 %v3642, %v3642
  %v3899 = vpack.c.b16 %v3643, %v3643
  %v3900 = vpack.c.b16 %v3644, %v3644
  %v3901 = vpack.c.b16 %v3645, %v3645
  %v3902 = vpack.c.b16 %v3646, %v3646
  %v3903 = vpack.c.b16 %v3647, %v3647
  %vm4160 = vcmask 60416
  %4161 = vst.msk [vmem:[%s3] sm:$0xf] %vm4160, %v3648
  %4162 = vst.msk [vmem:[%s3 + $0x4] sm:$0xf] %vm4160, %v3649
  %4163 = vst.msk [vmem:[%s3 + $0x8] sm:$0xf] %vm4160, %v3650
  %4164 = vst.msk [vmem:[%s3 + $0xc] sm:$0xf] %vm4160, %v3651
  %4165 = vst.msk [vmem:[%s3 + $0x10] sm:$0xf] %vm4160, %v3652
  %4166 = vst.msk [vmem:[%s3 + $0x14] sm:$0xf] %vm4160, %v3653
  %4167 = vst.msk [vmem:[%s3 + $0x18] sm:$0xf] %vm4160, %v3654
  %4168 = vst.msk [vmem:[%s3 + $0x1c] sm:$0xf] %vm4160, %v3655
  %4169 = vst.msk [vmem:[%s3 + $0x20] sm:$0xf] %vm4160, %v3656
  %4170 = vst.msk [vmem:[%s3 + $0x24] sm:$0xf] %vm4160, %v3657
  %4171 = vst.msk [vmem:[%s3 + $0x28] sm:$0xf] %vm4160, %v3658
  %4172 = vst.msk [vmem:[%s3 + $0x2c] sm:$0xf] %vm4160, %v3659
  %4173 = vst.msk [vmem:[%s3 + $0x30] sm:$0xf] %vm4160, %v3660
  %4174 = vst.msk [vmem:[%s3 + $0x34] sm:$0xf] %vm4160, %v3661
  %4175 = vst.msk [vmem:[%s3 + $0x38] sm:$0xf] %vm4160, %v3662
  %4176 = vst.msk [vmem:[%s3 + $0x3c] sm:$0xf] %vm4160, %v3663
  %4177 = vst.msk [vmem:[%s3 + $0x40] sm:$0xf] %vm4160, %v3664
  %4178 = vst.msk [vmem:[%s3 + $0x44] sm:$0xf] %vm4160, %v3665
  %4179 = vst.msk [vmem:[%s3 + $0x48] sm:$0xf] %vm4160, %v3666
  %4180 = vst.msk [vmem:[%s3 + $0x4c] sm:$0xf] %vm4160, %v3667
  %4181 = vst.msk [vmem:[%s3 + $0x50] sm:$0xf] %vm4160, %v3668
  %4182 = vst.msk [vmem:[%s3 + $0x54] sm:$0xf] %vm4160, %v3669
  %4183 = vst.msk [vmem:[%s3 + $0x58] sm:$0xf] %vm4160, %v3670
  %4184 = vst.msk [vmem:[%s3 + $0x5c] sm:$0xf] %vm4160, %v3671
  %4185 = vst.msk [vmem:[%s3 + $0x60] sm:$0xf] %vm4160, %v3672
  %4186 = vst.msk [vmem:[%s3 + $0x64] sm:$0xf] %vm4160, %v3673
  %4187 = vst.msk [vmem:[%s3 + $0x68] sm:$0xf] %vm4160, %v3674
  %4188 = vst.msk [vmem:[%s3 + $0x6c] sm:$0xf] %vm4160, %v3675
  %4189 = vst.msk [vmem:[%s3 + $0x70] sm:$0xf] %vm4160, %v3676
  %4190 = vst.msk [vmem:[%s3 + $0x74] sm:$0xf] %vm4160, %v3677
  %4191 = vst.msk [vmem:[%s3 + $0x78] sm:$0xf] %vm4160, %v3678
  %4192 = vst.msk [vmem:[%s3 + $0x7c] sm:$0xf] %vm4160, %v3679
  %4193 = vst.msk [vmem:[%s3 + $0x80] sm:$0xf] %vm4160, %v3680
  %4194 = vst.msk [vmem:[%s3 + $0x84] sm:$0xf] %vm4160, %v3681
  %4195 = vst.msk [vmem:[%s3 + $0x88] sm:$0xf] %vm4160, %v3682
  %4196 = vst.msk [vmem:[%s3 + $0x8c] sm:$0xf] %vm4160, %v3683
  %4197 = vst.msk [vmem:[%s3 + $0x90] sm:$0xf] %vm4160, %v3684
  %4198 = vst.msk [vmem:[%s3 + $0x94] sm:$0xf] %vm4160, %v3685
  %4199 = vst.msk [vmem:[%s3 + $0x98] sm:$0xf] %vm4160, %v3686
  %4200 = vst.msk [vmem:[%s3 + $0x9c] sm:$0xf] %vm4160, %v3687
  %4201 = vst.msk [vmem:[%s3 + $0xa0] sm:$0xf] %vm4160, %v3688
  %4202 = vst.msk [vmem:[%s3 + $0xa4] sm:$0xf] %vm4160, %v3689
  %4203 = vst.msk [vmem:[%s3 + $0xa8] sm:$0xf] %vm4160, %v3690
  %4204 = vst.msk [vmem:[%s3 + $0xac] sm:$0xf] %vm4160, %v3691
  %4205 = vst.msk [vmem:[%s3 + $0xb0] sm:$0xf] %vm4160, %v3692
  %4206 = vst.msk [vmem:[%s3 + $0xb4] sm:$0xf] %vm4160, %v3693
  %4207 = vst.msk [vmem:[%s3 + $0xb8] sm:$0xf] %vm4160, %v3694
  %4208 = vst.msk [vmem:[%s3 + $0xbc] sm:$0xf] %vm4160, %v3695
  %4209 = vst.msk [vmem:[%s3 + $0xc0] sm:$0xf] %vm4160, %v3696
  %4210 = vst.msk [vmem:[%s3 + $0xc4] sm:$0xf] %vm4160, %v3697
  %4211 = vst.msk [vmem:[%s3 + $0xc8] sm:$0xf] %vm4160, %v3698
  %4212 = vst.msk [vmem:[%s3 + $0xcc] sm:$0xf] %vm4160, %v3699
  %4213 = vst.msk [vmem:[%s3 + $0xd0] sm:$0xf] %vm4160, %v3700
  %4214 = vst.msk [vmem:[%s3 + $0xd4] sm:$0xf] %vm4160, %v3701
  %4215 = vst.msk [vmem:[%s3 + $0xd8] sm:$0xf] %vm4160, %v3702
  %4216 = vst.msk [vmem:[%s3 + $0xdc] sm:$0xf] %vm4160, %v3703
  %4217 = vst.msk [vmem:[%s3 + $0xe0] sm:$0xf] %vm4160, %v3704
  %4218 = vst.msk [vmem:[%s3 + $0xe4] sm:$0xf] %vm4160, %v3705
  %4219 = vst.msk [vmem:[%s3 + $0xe8] sm:$0xf] %vm4160, %v3706
  %4220 = vst.msk [vmem:[%s3 + $0xec] sm:$0xf] %vm4160, %v3707
  %4221 = vst.msk [vmem:[%s3 + $0xf0] sm:$0xf] %vm4160, %v3708
  %4222 = vst.msk [vmem:[%s3 + $0xf4] sm:$0xf] %vm4160, %v3709
  %4223 = vst.msk [vmem:[%s3 + $0xf8] sm:$0xf] %vm4160, %v3710
  %4224 = vst.msk [vmem:[%s3 + $0xfc] sm:$0xf] %vm4160, %v3711
  %4225 = vst.msk [vmem:[%s3 + $0x100] sm:$0xf] %vm4160, %v3712
  %4226 = vst.msk [vmem:[%s3 + $0x104] sm:$0xf] %vm4160, %v3713
  %4227 = vst.msk [vmem:[%s3 + $0x108] sm:$0xf] %vm4160, %v3714
  %4228 = vst.msk [vmem:[%s3 + $0x10c] sm:$0xf] %vm4160, %v3715
  %4229 = vst.msk [vmem:[%s3 + $0x110] sm:$0xf] %vm4160, %v3716
  %4230 = vst.msk [vmem:[%s3 + $0x114] sm:$0xf] %vm4160, %v3717
  %4231 = vst.msk [vmem:[%s3 + $0x118] sm:$0xf] %vm4160, %v3718
  %4232 = vst.msk [vmem:[%s3 + $0x11c] sm:$0xf] %vm4160, %v3719
  %4233 = vst.msk [vmem:[%s3 + $0x120] sm:$0xf] %vm4160, %v3720
  %4234 = vst.msk [vmem:[%s3 + $0x124] sm:$0xf] %vm4160, %v3721
  %4235 = vst.msk [vmem:[%s3 + $0x128] sm:$0xf] %vm4160, %v3722
  %4236 = vst.msk [vmem:[%s3 + $0x12c] sm:$0xf] %vm4160, %v3723
  %4237 = vst.msk [vmem:[%s3 + $0x130] sm:$0xf] %vm4160, %v3724
  %4238 = vst.msk [vmem:[%s3 + $0x134] sm:$0xf] %vm4160, %v3725
  %4239 = vst.msk [vmem:[%s3 + $0x138] sm:$0xf] %vm4160, %v3726
  %4240 = vst.msk [vmem:[%s3 + $0x13c] sm:$0xf] %vm4160, %v3727
  %4241 = vst.msk [vmem:[%s3 + $0x140] sm:$0xf] %vm4160, %v3728
  %4242 = vst.msk [vmem:[%s3 + $0x144] sm:$0xf] %vm4160, %v3729
  %4243 = vst.msk [vmem:[%s3 + $0x148] sm:$0xf] %vm4160, %v3730
  %4244 = vst.msk [vmem:[%s3 + $0x14c] sm:$0xf] %vm4160, %v3731
  %4245 = vst.msk [vmem:[%s3 + $0x150] sm:$0xf] %vm4160, %v3732
  %4246 = vst.msk [vmem:[%s3 + $0x154] sm:$0xf] %vm4160, %v3733
  %4247 = vst.msk [vmem:[%s3 + $0x158] sm:$0xf] %vm4160, %v3734
  %4248 = vst.msk [vmem:[%s3 + $0x15c] sm:$0xf] %vm4160, %v3735
  %4249 = vst.msk [vmem:[%s3 + $0x160] sm:$0xf] %vm4160, %v3736
  %4250 = vst.msk [vmem:[%s3 + $0x164] sm:$0xf] %vm4160, %v3737
  %4251 = vst.msk [vmem:[%s3 + $0x168] sm:$0xf] %vm4160, %v3738
  %4252 = vst.msk [vmem:[%s3 + $0x16c] sm:$0xf] %vm4160, %v3739
  %4253 = vst.msk [vmem:[%s3 + $0x170] sm:$0xf] %vm4160, %v3740
  %4254 = vst.msk [vmem:[%s3 + $0x174] sm:$0xf] %vm4160, %v3741
  %4255 = vst.msk [vmem:[%s3 + $0x178] sm:$0xf] %vm4160, %v3742
  %4256 = vst.msk [vmem:[%s3 + $0x17c] sm:$0xf] %vm4160, %v3743
  %4257 = vst.msk [vmem:[%s3 + $0x180] sm:$0xf] %vm4160, %v3744
  %4258 = vst.msk [vmem:[%s3 + $0x184] sm:$0xf] %vm4160, %v3745
  %4259 = vst.msk [vmem:[%s3 + $0x188] sm:$0xf] %vm4160, %v3746
  %4260 = vst.msk [vmem:[%s3 + $0x18c] sm:$0xf] %vm4160, %v3747
  %4261 = vst.msk [vmem:[%s3 + $0x190] sm:$0xf] %vm4160, %v3748
  %4262 = vst.msk [vmem:[%s3 + $0x194] sm:$0xf] %vm4160, %v3749
  %4263 = vst.msk [vmem:[%s3 + $0x198] sm:$0xf] %vm4160, %v3750
  %4264 = vst.msk [vmem:[%s3 + $0x19c] sm:$0xf] %vm4160, %v3751
  %4265 = vst.msk [vmem:[%s3 + $0x1a0] sm:$0xf] %vm4160, %v3752
  %4266 = vst.msk [vmem:[%s3 + $0x1a4] sm:$0xf] %vm4160, %v3753
  %4267 = vst.msk [vmem:[%s3 + $0x1a8] sm:$0xf] %vm4160, %v3754
  %4268 = vst.msk [vmem:[%s3 + $0x1ac] sm:$0xf] %vm4160, %v3755
  %4269 = vst.msk [vmem:[%s3 + $0x1b0] sm:$0xf] %vm4160, %v3756
  %4270 = vst.msk [vmem:[%s3 + $0x1b4] sm:$0xf] %vm4160, %v3757
  %4271 = vst.msk [vmem:[%s3 + $0x1b8] sm:$0xf] %vm4160, %v3758
  %4272 = vst.msk [vmem:[%s3 + $0x1bc] sm:$0xf] %vm4160, %v3759
  %4273 = vst.msk [vmem:[%s3 + $0x1c0] sm:$0xf] %vm4160, %v3760
  %4274 = vst.msk [vmem:[%s3 + $0x1c4] sm:$0xf] %vm4160, %v3761
  %4275 = vst.msk [vmem:[%s3 + $0x1c8] sm:$0xf] %vm4160, %v3762
  %4276 = vst.msk [vmem:[%s3 + $0x1cc] sm:$0xf] %vm4160, %v3763
  %4277 = vst.msk [vmem:[%s3 + $0x1d0] sm:$0xf] %vm4160, %v3764
  %4278 = vst.msk [vmem:[%s3 + $0x1d4] sm:$0xf] %vm4160, %v3765
  %4279 = vst.msk [vmem:[%s3 + $0x1d8] sm:$0xf] %vm4160, %v3766
  %4280 = vst.msk [vmem:[%s3 + $0x1dc] sm:$0xf] %vm4160, %v3767
  %4281 = vst.msk [vmem:[%s3 + $0x1e0] sm:$0xf] %vm4160, %v3768
  %4282 = vst.msk [vmem:[%s3 + $0x1e4] sm:$0xf] %vm4160, %v3769
  %4283 = vst.msk [vmem:[%s3 + $0x1e8] sm:$0xf] %vm4160, %v3770
  %4284 = vst.msk [vmem:[%s3 + $0x1ec] sm:$0xf] %vm4160, %v3771
  %4285 = vst.msk [vmem:[%s3 + $0x1f0] sm:$0xf] %vm4160, %v3772
  %4286 = vst.msk [vmem:[%s3 + $0x1f4] sm:$0xf] %vm4160, %v3773
  %4287 = vst.msk [vmem:[%s3 + $0x1f8] sm:$0xf] %vm4160, %v3774
  %4288 = vst.msk [vmem:[%s3 + $0x1fc] sm:$0xf] %vm4160, %v3775
  %4289 = vst.msk [vmem:[%s3 + $0x200] sm:$0xf] %vm4160, %v3776
  %4290 = vst.msk [vmem:[%s3 + $0x204] sm:$0xf] %vm4160, %v3777
  %4291 = vst.msk [vmem:[%s3 + $0x208] sm:$0xf] %vm4160, %v3778
  %4292 = vst.msk [vmem:[%s3 + $0x20c] sm:$0xf] %vm4160, %v3779
  %4293 = vst.msk [vmem:[%s3 + $0x210] sm:$0xf] %vm4160, %v3780
  %4294 = vst.msk [vmem:[%s3 + $0x214] sm:$0xf] %vm4160, %v3781
  %4295 = vst.msk [vmem:[%s3 + $0x218] sm:$0xf] %vm4160, %v3782
  %4296 = vst.msk [vmem:[%s3 + $0x21c] sm:$0xf] %vm4160, %v3783
  %4297 = vst.msk [vmem:[%s3 + $0x220] sm:$0xf] %vm4160, %v3784
  %4298 = vst.msk [vmem:[%s3 + $0x224] sm:$0xf] %vm4160, %v3785
  %4299 = vst.msk [vmem:[%s3 + $0x228] sm:$0xf] %vm4160, %v3786
  %4300 = vst.msk [vmem:[%s3 + $0x22c] sm:$0xf] %vm4160, %v3787
  %4301 = vst.msk [vmem:[%s3 + $0x230] sm:$0xf] %vm4160, %v3788
  %4302 = vst.msk [vmem:[%s3 + $0x234] sm:$0xf] %vm4160, %v3789
  %4303 = vst.msk [vmem:[%s3 + $0x238] sm:$0xf] %vm4160, %v3790
  %4304 = vst.msk [vmem:[%s3 + $0x23c] sm:$0xf] %vm4160, %v3791
  %4305 = vst.msk [vmem:[%s3 + $0x240] sm:$0xf] %vm4160, %v3792
  %4306 = vst.msk [vmem:[%s3 + $0x244] sm:$0xf] %vm4160, %v3793
  %4307 = vst.msk [vmem:[%s3 + $0x248] sm:$0xf] %vm4160, %v3794
  %4308 = vst.msk [vmem:[%s3 + $0x24c] sm:$0xf] %vm4160, %v3795
  %4309 = vst.msk [vmem:[%s3 + $0x250] sm:$0xf] %vm4160, %v3796
  %4310 = vst.msk [vmem:[%s3 + $0x254] sm:$0xf] %vm4160, %v3797
  %4311 = vst.msk [vmem:[%s3 + $0x258] sm:$0xf] %vm4160, %v3798
  %4312 = vst.msk [vmem:[%s3 + $0x25c] sm:$0xf] %vm4160, %v3799
  %4313 = vst.msk [vmem:[%s3 + $0x260] sm:$0xf] %vm4160, %v3800
  %4314 = vst.msk [vmem:[%s3 + $0x264] sm:$0xf] %vm4160, %v3801
  %4315 = vst.msk [vmem:[%s3 + $0x268] sm:$0xf] %vm4160, %v3802
  %4316 = vst.msk [vmem:[%s3 + $0x26c] sm:$0xf] %vm4160, %v3803
  %4317 = vst.msk [vmem:[%s3 + $0x270] sm:$0xf] %vm4160, %v3804
  %4318 = vst.msk [vmem:[%s3 + $0x274] sm:$0xf] %vm4160, %v3805
  %4319 = vst.msk [vmem:[%s3 + $0x278] sm:$0xf] %vm4160, %v3806
  %4320 = vst.msk [vmem:[%s3 + $0x27c] sm:$0xf] %vm4160, %v3807
  %4321 = vst.msk [vmem:[%s3 + $0x280] sm:$0xf] %vm4160, %v3808
  %4322 = vst.msk [vmem:[%s3 + $0x284] sm:$0xf] %vm4160, %v3809
  %4323 = vst.msk [vmem:[%s3 + $0x288] sm:$0xf] %vm4160, %v3810
  %4324 = vst.msk [vmem:[%s3 + $0x28c] sm:$0xf] %vm4160, %v3811
  %4325 = vst.msk [vmem:[%s3 + $0x290] sm:$0xf] %vm4160, %v3812
  %4326 = vst.msk [vmem:[%s3 + $0x294] sm:$0xf] %vm4160, %v3813
  %4327 = vst.msk [vmem:[%s3 + $0x298] sm:$0xf] %vm4160, %v3814
  %4328 = vst.msk [vmem:[%s3 + $0x29c] sm:$0xf] %vm4160, %v3815
  %4329 = vst.msk [vmem:[%s3 + $0x2a0] sm:$0xf] %vm4160, %v3816
  %4330 = vst.msk [vmem:[%s3 + $0x2a4] sm:$0xf] %vm4160, %v3817
  %4331 = vst.msk [vmem:[%s3 + $0x2a8] sm:$0xf] %vm4160, %v3818
  %4332 = vst.msk [vmem:[%s3 + $0x2ac] sm:$0xf] %vm4160, %v3819
  %4333 = vst.msk [vmem:[%s3 + $0x2b0] sm:$0xf] %vm4160, %v3820
  %4334 = vst.msk [vmem:[%s3 + $0x2b4] sm:$0xf] %vm4160, %v3821
  %4335 = vst.msk [vmem:[%s3 + $0x2b8] sm:$0xf] %vm4160, %v3822
  %4336 = vst.msk [vmem:[%s3 + $0x2bc] sm:$0xf] %vm4160, %v3823
  %4337 = vst.msk [vmem:[%s3 + $0x2c0] sm:$0xf] %vm4160, %v3824
  %4338 = vst.msk [vmem:[%s3 + $0x2c4] sm:$0xf] %vm4160, %v3825
  %4339 = vst.msk [vmem:[%s3 + $0x2c8] sm:$0xf] %vm4160, %v3826
  %4340 = vst.msk [vmem:[%s3 + $0x2cc] sm:$0xf] %vm4160, %v3827
  %4341 = vst.msk [vmem:[%s3 + $0x2d0] sm:$0xf] %vm4160, %v3828
  %4342 = vst.msk [vmem:[%s3 + $0x2d4] sm:$0xf] %vm4160, %v3829
  %4343 = vst.msk [vmem:[%s3 + $0x2d8] sm:$0xf] %vm4160, %v3830
  %4344 = vst.msk [vmem:[%s3 + $0x2dc] sm:$0xf] %vm4160, %v3831
  %4345 = vst.msk [vmem:[%s3 + $0x2e0] sm:$0xf] %vm4160, %v3832
  %4346 = vst.msk [vmem:[%s3 + $0x2e4] sm:$0xf] %vm4160, %v3833
  %4347 = vst.msk [vmem:[%s3 + $0x2e8] sm:$0xf] %vm4160, %v3834
  %4348 = vst.msk [vmem:[%s3 + $0x2ec] sm:$0xf] %vm4160, %v3835
  %4349 = vst.msk [vmem:[%s3 + $0x2f0] sm:$0xf] %vm4160, %v3836
  %4350 = vst.msk [vmem:[%s3 + $0x2f4] sm:$0xf] %vm4160, %v3837
  %4351 = vst.msk [vmem:[%s3 + $0x2f8] sm:$0xf] %vm4160, %v3838
  %4352 = vst.msk [vmem:[%s3 + $0x2fc] sm:$0xf] %vm4160, %v3839
  %4353 = vst.msk [vmem:[%s3 + $0x300] sm:$0xf] %vm4160, %v3840
  %4354 = vst.msk [vmem:[%s3 + $0x304] sm:$0xf] %vm4160, %v3841
  %4355 = vst.msk [vmem:[%s3 + $0x308] sm:$0xf] %vm4160, %v3842
  %4356 = vst.msk [vmem:[%s3 + $0x30c] sm:$0xf] %vm4160, %v3843
  %4357 = vst.msk [vmem:[%s3 + $0x310] sm:$0xf] %vm4160, %v3844
  %4358 = vst.msk [vmem:[%s3 + $0x314] sm:$0xf] %vm4160, %v3845
  %4359 = vst.msk [vmem:[%s3 + $0x318] sm:$0xf] %vm4160, %v3846
  %4360 = vst.msk [vmem:[%s3 + $0x31c] sm:$0xf] %vm4160, %v3847
  %4361 = vst.msk [vmem:[%s3 + $0x320] sm:$0xf] %vm4160, %v3848
  %4362 = vst.msk [vmem:[%s3 + $0x324] sm:$0xf] %vm4160, %v3849
  %4363 = vst.msk [vmem:[%s3 + $0x328] sm:$0xf] %vm4160, %v3850
  %4364 = vst.msk [vmem:[%s3 + $0x32c] sm:$0xf] %vm4160, %v3851
  %4365 = vst.msk [vmem:[%s3 + $0x330] sm:$0xf] %vm4160, %v3852
  %4366 = vst.msk [vmem:[%s3 + $0x334] sm:$0xf] %vm4160, %v3853
  %4367 = vst.msk [vmem:[%s3 + $0x338] sm:$0xf] %vm4160, %v3854
  %4368 = vst.msk [vmem:[%s3 + $0x33c] sm:$0xf] %vm4160, %v3855
  %4369 = vst.msk [vmem:[%s3 + $0x340] sm:$0xf] %vm4160, %v3856
  %4370 = vst.msk [vmem:[%s3 + $0x344] sm:$0xf] %vm4160, %v3857
  %4371 = vst.msk [vmem:[%s3 + $0x348] sm:$0xf] %vm4160, %v3858
  %4372 = vst.msk [vmem:[%s3 + $0x34c] sm:$0xf] %vm4160, %v3859
  %4373 = vst.msk [vmem:[%s3 + $0x350] sm:$0xf] %vm4160, %v3860
  %4374 = vst.msk [vmem:[%s3 + $0x354] sm:$0xf] %vm4160, %v3861
  %4375 = vst.msk [vmem:[%s3 + $0x358] sm:$0xf] %vm4160, %v3862
  %4376 = vst.msk [vmem:[%s3 + $0x35c] sm:$0xf] %vm4160, %v3863
  %4377 = vst.msk [vmem:[%s3 + $0x360] sm:$0xf] %vm4160, %v3864
  %4378 = vst.msk [vmem:[%s3 + $0x364] sm:$0xf] %vm4160, %v3865
  %4379 = vst.msk [vmem:[%s3 + $0x368] sm:$0xf] %vm4160, %v3866
  %4380 = vst.msk [vmem:[%s3 + $0x36c] sm:$0xf] %vm4160, %v3867
  %4381 = vst.msk [vmem:[%s3 + $0x370] sm:$0xf] %vm4160, %v3868
  %4382 = vst.msk [vmem:[%s3 + $0x374] sm:$0xf] %vm4160, %v3869
  %4383 = vst.msk [vmem:[%s3 + $0x378] sm:$0xf] %vm4160, %v3870
  %4384 = vst.msk [vmem:[%s3 + $0x37c] sm:$0xf] %vm4160, %v3871
  %4385 = vst.msk [vmem:[%s3 + $0x380] sm:$0xf] %vm4160, %v3872
  %4386 = vst.msk [vmem:[%s3 + $0x384] sm:$0xf] %vm4160, %v3873
  %4387 = vst.msk [vmem:[%s3 + $0x388] sm:$0xf] %vm4160, %v3874
  %4388 = vst.msk [vmem:[%s3 + $0x38c] sm:$0xf] %vm4160, %v3875
  %4389 = vst.msk [vmem:[%s3 + $0x390] sm:$0xf] %vm4160, %v3876
  %4390 = vst.msk [vmem:[%s3 + $0x394] sm:$0xf] %vm4160, %v3877
  %4391 = vst.msk [vmem:[%s3 + $0x398] sm:$0xf] %vm4160, %v3878
  %4392 = vst.msk [vmem:[%s3 + $0x39c] sm:$0xf] %vm4160, %v3879
  %4393 = vst.msk [vmem:[%s3 + $0x3a0] sm:$0xf] %vm4160, %v3880
  %4394 = vst.msk [vmem:[%s3 + $0x3a4] sm:$0xf] %vm4160, %v3881
  %4395 = vst.msk [vmem:[%s3 + $0x3a8] sm:$0xf] %vm4160, %v3882
  %4396 = vst.msk [vmem:[%s3 + $0x3ac] sm:$0xf] %vm4160, %v3883
  %4397 = vst.msk [vmem:[%s3 + $0x3b0] sm:$0xf] %vm4160, %v3884
  %4398 = vst.msk [vmem:[%s3 + $0x3b4] sm:$0xf] %vm4160, %v3885
  %4399 = vst.msk [vmem:[%s3 + $0x3b8] sm:$0xf] %vm4160, %v3886
  %4400 = vst.msk [vmem:[%s3 + $0x3bc] sm:$0xf] %vm4160, %v3887
  %4401 = vst.msk [vmem:[%s3 + $0x3c0] sm:$0xf] %vm4160, %v3888
  %4402 = vst.msk [vmem:[%s3 + $0x3c4] sm:$0xf] %vm4160, %v3889
  %4403 = vst.msk [vmem:[%s3 + $0x3c8] sm:$0xf] %vm4160, %v3890
  %4404 = vst.msk [vmem:[%s3 + $0x3cc] sm:$0xf] %vm4160, %v3891
  %4405 = vst.msk [vmem:[%s3 + $0x3d0] sm:$0xf] %vm4160, %v3892
  %4406 = vst.msk [vmem:[%s3 + $0x3d4] sm:$0xf] %vm4160, %v3893
  %4407 = vst.msk [vmem:[%s3 + $0x3d8] sm:$0xf] %vm4160, %v3894
  %4408 = vst.msk [vmem:[%s3 + $0x3dc] sm:$0xf] %vm4160, %v3895
  %4409 = vst.msk [vmem:[%s3 + $0x3e0] sm:$0xf] %vm4160, %v3896
  %4410 = vst.msk [vmem:[%s3 + $0x3e4] sm:$0xf] %vm4160, %v3897
  %4411 = vst.msk [vmem:[%s3 + $0x3e8] sm:$0xf] %vm4160, %v3898
  %4412 = vst.msk [vmem:[%s3 + $0x3ec] sm:$0xf] %vm4160, %v3899
  %4413 = vst.msk [vmem:[%s3 + $0x3f0] sm:$0xf] %vm4160, %v3900
  %4414 = vst.msk [vmem:[%s3 + $0x3f4] sm:$0xf] %vm4160, %v3901
  %4415 = vst.msk [vmem:[%s3 + $0x3f8] sm:$0xf] %vm4160, %v3902
  %4416 = vst.msk [vmem:[%s3 + $0x3fc] sm:$0xf] %vm4160, %v3903
  // Predicated region
  $region14: #{discriminator_forward.4} parent=0 // pred_check
    _
  $region15: #{discriminator_forward.4} parent=0 // pred_check_branch
    %4418 = sbr.rel (0) target = $region17
  $region16: #{discriminator_forward.4} parent=0 // pred_region
    _
  $region17: #{discriminator_forward.4} parent=0 // pred_fallthru
    _
  // Predicated region
  $region18: #{discriminator_forward.4} parent=0 // pred_check
    _
  $region19: #{discriminator_forward.4} parent=0 // pred_check_branch
    %4420 = sbr.rel (0) target = $region21
  $region20: #{discriminator_forward.4} parent=0 // pred_region
    _
  $region21: #{discriminator_forward.4} parent=0 // pred_fallthru
    _

// kernel: discriminator_forward.5
$region0: #{discriminator_forward.5}
  #allocation0 [shape = 'u32[]', space=smem, size = 0x4, offset = 0x4, fixed_abs, tag = 'smem constant byte address 0x4 - core index']
  #allocation1 [shape = 'u32[144,128]{1,0:T(1,128)}', space=vmem, size = 0x12000, scoped, tag = 'internal scratch']
  %s0 = inlined_call_operand.vmem [shape: bf16[512,128], index: 0, kind: input, shape index: {}]
  %s1 = inlined_call_operand.vmem [shape: bf16[128,16], index: 1, kind: input, shape index: {}]
  %s2 = inlined_call_operand.vmem [shape: f32[1,16], index: 2, kind: input, shape index: {}]
  %s3 = inlined_call_operand.vmem [shape: bf16[512,16], index: 3, kind: output, shape index: {}]
  %s4 = sld [smem:[#allocation0]]
  $region22: #{discriminator_forward.5} parent=0
    _
  %s6 = ssub.s32 1, %s4
  %s7 = scalar_select 0, %s6, %s4
  // Predicated region
  $region2: #{discriminator_forward.5} parent=0 // pred_check
    _
  $region3: #{discriminator_forward.5} parent=0 // pred_check_branch
    %9 = sbr.rel (0) target = $region5
  $region4: #{discriminator_forward.5} parent=0 // pred_region
    _
  $region5: #{discriminator_forward.5} parent=0 // pred_fallthru
    _
  // Predicated region
  $region6: #{discriminator_forward.5} parent=0 // pred_check
    _
  $region7: #{discriminator_forward.5} parent=0 // pred_check_branch
    %11 = sbr.rel (0) target = $region9
  $region8: #{discriminator_forward.5} parent=0 // pred_region
    _
  $region9: #{discriminator_forward.5} parent=0 // pred_fallthru
    _
  // Predicated region
  $region10: #{discriminator_forward.5} parent=0 // pred_check
    _
  $region11: #{discriminator_forward.5} parent=0 // pred_check_branch
    %13 = sbr.rel (0) target = $region13
  $region12: #{discriminator_forward.5} parent=0 // pred_region
    _
  $region13: #{discriminator_forward.5} parent=0 // pred_fallthru
    _
  %v15 = vld [vmem:[%s0] sm:$0xf]
  %v16 = vld [vmem:[%s0 + $0x4] sm:$0xf]
  %v17 = vld [vmem:[%s0 + $0x8] sm:$0xf]
  %v18 = vld [vmem:[%s0 + $0xc] sm:$0xf]
  %v19 = vld [vmem:[%s0 + $0x10] sm:$0xf]
  %v20 = vld [vmem:[%s0 + $0x14] sm:$0xf]
  %v21 = vld [vmem:[%s0 + $0x18] sm:$0xf]
  %v22 = vld [vmem:[%s0 + $0x1c] sm:$0xf]
  %v23 = vld [vmem:[%s0 + $0x20] sm:$0xf]
  %v24 = vld [vmem:[%s0 + $0x24] sm:$0xf]
  %v25 = vld [vmem:[%s0 + $0x28] sm:$0xf]
  %v26 = vld [vmem:[%s0 + $0x2c] sm:$0xf]
  %v27 = vld [vmem:[%s0 + $0x30] sm:$0xf]
  %v28 = vld [vmem:[%s0 + $0x34] sm:$0xf]
  %v29 = vld [vmem:[%s0 + $0x38] sm:$0xf]
  %v30 = vld [vmem:[%s0 + $0x3c] sm:$0xf]
  %v31 = vld [vmem:[%s0 + $0x40] sm:$0xf]
  %v32 = vld [vmem:[%s0 + $0x44] sm:$0xf]
  %v33 = vld [vmem:[%s0 + $0x48] sm:$0xf]
  %v34 = vld [vmem:[%s0 + $0x4c] sm:$0xf]
  %v35 = vld [vmem:[%s0 + $0x50] sm:$0xf]
  %v36 = vld [vmem:[%s0 + $0x54] sm:$0xf]
  %v37 = vld [vmem:[%s0 + $0x58] sm:$0xf]
  %v38 = vld [vmem:[%s0 + $0x5c] sm:$0xf]
  %v39 = vld [vmem:[%s0 + $0x60] sm:$0xf]
  %v40 = vld [vmem:[%s0 + $0x64] sm:$0xf]
  %v41 = vld [vmem:[%s0 + $0x68] sm:$0xf]
  %v42 = vld [vmem:[%s0 + $0x6c] sm:$0xf]
  %v43 = vld [vmem:[%s0 + $0x70] sm:$0xf]
  %v44 = vld [vmem:[%s0 + $0x74] sm:$0xf]
  %v45 = vld [vmem:[%s0 + $0x78] sm:$0xf]
  %v46 = vld [vmem:[%s0 + $0x7c] sm:$0xf]
  %v47 = vld [vmem:[%s0 + $0x80] sm:$0xf]
  %v48 = vld [vmem:[%s0 + $0x84] sm:$0xf]
  %v49 = vld [vmem:[%s0 + $0x88] sm:$0xf]
  %v50 = vld [vmem:[%s0 + $0x8c] sm:$0xf]
  %v51 = vld [vmem:[%s0 + $0x90] sm:$0xf]
  %v52 = vld [vmem:[%s0 + $0x94] sm:$0xf]
  %v53 = vld [vmem:[%s0 + $0x98] sm:$0xf]
  %v54 = vld [vmem:[%s0 + $0x9c] sm:$0xf]
  %v55 = vld [vmem:[%s0 + $0xa0] sm:$0xf]
  %v56 = vld [vmem:[%s0 + $0xa4] sm:$0xf]
  %v57 = vld [vmem:[%s0 + $0xa8] sm:$0xf]
  %v58 = vld [vmem:[%s0 + $0xac] sm:$0xf]
  %v59 = vld [vmem:[%s0 + $0xb0] sm:$0xf]
  %v60 = vld [vmem:[%s0 + $0xb4] sm:$0xf]
  %v61 = vld [vmem:[%s0 + $0xb8] sm:$0xf]
  %v62 = vld [vmem:[%s0 + $0xbc] sm:$0xf]
  %v63 = vld [vmem:[%s0 + $0xc0] sm:$0xf]
  %v64 = vld [vmem:[%s0 + $0xc4] sm:$0xf]
  %v65 = vld [vmem:[%s0 + $0xc8] sm:$0xf]
  %v66 = vld [vmem:[%s0 + $0xcc] sm:$0xf]
  %v67 = vld [vmem:[%s0 + $0xd0] sm:$0xf]
  %v68 = vld [vmem:[%s0 + $0xd4] sm:$0xf]
  %v69 = vld [vmem:[%s0 + $0xd8] sm:$0xf]
  %v70 = vld [vmem:[%s0 + $0xdc] sm:$0xf]
  %v71 = vld [vmem:[%s0 + $0xe0] sm:$0xf]
  %v72 = vld [vmem:[%s0 + $0xe4] sm:$0xf]
  %v73 = vld [vmem:[%s0 + $0xe8] sm:$0xf]
  %v74 = vld [vmem:[%s0 + $0xec] sm:$0xf]
  %v75 = vld [vmem:[%s0 + $0xf0] sm:$0xf]
  %v76 = vld [vmem:[%s0 + $0xf4] sm:$0xf]
  %v77 = vld [vmem:[%s0 + $0xf8] sm:$0xf]
  %v78 = vld [vmem:[%s0 + $0xfc] sm:$0xf]
  %v79 = vld [vmem:[%s1] sm:$0xf]
  %v80 = vld [vmem:[%s1 + $0x4] sm:$0xf]
  %v81 = vld [vmem:[%s1 + $0x8] sm:$0xf]
  %v82 = vld [vmem:[%s1 + $0xc] sm:$0xf]
  %v83 = vld [vmem:[%s1 + $0x10] sm:$0xf]
  %v84 = vld [vmem:[%s1 + $0x14] sm:$0xf]
  %v85 = vld [vmem:[%s1 + $0x18] sm:$0xf]
  %v86 = vld [vmem:[%s1 + $0x1c] sm:$0xf]
  %v87 = vld [vmem:[%s1 + $0x20] sm:$0xf]
  %v88 = vld [vmem:[%s1 + $0x24] sm:$0xf]
  %v89 = vld [vmem:[%s1 + $0x28] sm:$0xf]
  %v90 = vld [vmem:[%s1 + $0x2c] sm:$0xf]
  %v91 = vld [vmem:[%s1 + $0x30] sm:$0xf]
  %v92 = vld [vmem:[%s1 + $0x34] sm:$0xf]
  %v93 = vld [vmem:[%s1 + $0x38] sm:$0xf]
  %v94 = vld [vmem:[%s1 + $0x3c] sm:$0xf]
  %v95 = vld [vmem:[%s2] sm:$0x1]
  %v97 = vlaneseq
  %v98 = vshrl.u32 %v97, 7
  %v99 = vsub.s32 0, %v98
  %v100 = vrot.slane %v95, %v99
  %v166 = vunpack.c.l.b16 %v15
  %v167 = vunpack.c.l.b16 %v16
  %v168 = vunpack.c.l.b16 %v17
  %v169 = vunpack.c.l.b16 %v18
  %v170 = vunpack.c.l.b16 %v19
  %v171 = vunpack.c.l.b16 %v20
  %v172 = vunpack.c.l.b16 %v21
  %v173 = vunpack.c.l.b16 %v22
  %v174 = vunpack.c.l.b16 %v23
  %v175 = vunpack.c.l.b16 %v24
  %v176 = vunpack.c.l.b16 %v25
  %v177 = vunpack.c.l.b16 %v26
  %v178 = vunpack.c.l.b16 %v27
  %v179 = vunpack.c.l.b16 %v28
  %v180 = vunpack.c.l.b16 %v29
  %v181 = vunpack.c.l.b16 %v30
  %v182 = vunpack.c.l.b16 %v31
  %v183 = vunpack.c.l.b16 %v32
  %v184 = vunpack.c.l.b16 %v33
  %v185 = vunpack.c.l.b16 %v34
  %v186 = vunpack.c.l.b16 %v35
  %v187 = vunpack.c.l.b16 %v36
  %v188 = vunpack.c.l.b16 %v37
  %v189 = vunpack.c.l.b16 %v38
  %v190 = vunpack.c.l.b16 %v39
  %v191 = vunpack.c.l.b16 %v40
  %v192 = vunpack.c.l.b16 %v41
  %v193 = vunpack.c.l.b16 %v42
  %v194 = vunpack.c.l.b16 %v43
  %v195 = vunpack.c.l.b16 %v44
  %v196 = vunpack.c.l.b16 %v45
  %v197 = vunpack.c.l.b16 %v46
  %v198 = vunpack.c.l.b16 %v47
  %v199 = vunpack.c.l.b16 %v48
  %v200 = vunpack.c.l.b16 %v49
  %v201 = vunpack.c.l.b16 %v50
  %v202 = vunpack.c.l.b16 %v51
  %v203 = vunpack.c.l.b16 %v52
  %v204 = vunpack.c.l.b16 %v53
  %v205 = vunpack.c.l.b16 %v54
  %v206 = vunpack.c.l.b16 %v55
  %v207 = vunpack.c.l.b16 %v56
  %v208 = vunpack.c.l.b16 %v57
  %v209 = vunpack.c.l.b16 %v58
  %v210 = vunpack.c.l.b16 %v59
  %v211 = vunpack.c.l.b16 %v60
  %v212 = vunpack.c.l.b16 %v61
  %v213 = vunpack.c.l.b16 %v62
  %v214 = vunpack.c.l.b16 %v63
  %v215 = vunpack.c.l.b16 %v64
  %v216 = vunpack.c.l.b16 %v65
  %v217 = vunpack.c.l.b16 %v66
  %v218 = vunpack.c.l.b16 %v67
  %v219 = vunpack.c.l.b16 %v68
  %v220 = vunpack.c.l.b16 %v69
  %v221 = vunpack.c.l.b16 %v70
  %v222 = vunpack.c.l.b16 %v71
  %v223 = vunpack.c.l.b16 %v72
  %v224 = vunpack.c.l.b16 %v73
  %v225 = vunpack.c.l.b16 %v74
  %v226 = vunpack.c.l.b16 %v75
  %v227 = vunpack.c.l.b16 %v76
  %v228 = vunpack.c.l.b16 %v77
  %v229 = vunpack.c.l.b16 %v78
  %v230 = vpack.c.b16 %v167, %v166
  %v231 = vpack.c.b16 %v169, %v168
  %v232 = vpack.c.b16 %v171, %v170
  %v233 = vpack.c.b16 %v173, %v172
  %v234 = vpack.c.b16 %v175, %v174
  %v235 = vpack.c.b16 %v177, %v176
  %v236 = vpack.c.b16 %v179, %v178
  %v237 = vpack.c.b16 %v181, %v180
  %v238 = vpack.c.b16 %v183, %v182
  %v239 = vpack.c.b16 %v185, %v184
  %v240 = vpack.c.b16 %v187, %v186
  %v241 = vpack.c.b16 %v189, %v188
  %v242 = vpack.c.b16 %v191, %v190
  %v243 = vpack.c.b16 %v193, %v192
  %v244 = vpack.c.b16 %v195, %v194
  %v245 = vpack.c.b16 %v197, %v196
  %v246 = vpack.c.b16 %v199, %v198
  %v247 = vpack.c.b16 %v201, %v200
  %v248 = vpack.c.b16 %v203, %v202
  %v249 = vpack.c.b16 %v205, %v204
  %v250 = vpack.c.b16 %v207, %v206
  %v251 = vpack.c.b16 %v209, %v208
  %v252 = vpack.c.b16 %v211, %v210
  %v253 = vpack.c.b16 %v213, %v212
  %v254 = vpack.c.b16 %v215, %v214
  %v255 = vpack.c.b16 %v217, %v216
  %v256 = vpack.c.b16 %v219, %v218
  %v257 = vpack.c.b16 %v221, %v220
  %v258 = vpack.c.b16 %v223, %v222
  %v259 = vpack.c.b16 %v225, %v224
  %v260 = vpack.c.b16 %v227, %v226
  %v261 = vpack.c.b16 %v229, %v228
  %v310 = vunpack.c.l.b16 %v79
  %v311 = vunpack.c.l.b16 %v80
  %v312 = vunpack.c.l.b16 %v81
  %v313 = vunpack.c.l.b16 %v82
  %v314 = vunpack.c.l.b16 %v83
  %v315 = vunpack.c.l.b16 %v84
  %v316 = vunpack.c.l.b16 %v85
  %v317 = vunpack.c.l.b16 %v86
  %v318 = vunpack.c.l.b16 %v87
  %v319 = vunpack.c.l.b16 %v88
  %v320 = vunpack.c.l.b16 %v89
  %v321 = vunpack.c.l.b16 %v90
  %v322 = vunpack.c.l.b16 %v91
  %v323 = vunpack.c.l.b16 %v92
  %v324 = vunpack.c.l.b16 %v93
  %v325 = vunpack.c.l.b16 %v94
  %v326 = vpack.c.b16 %v311, %v310
  %v327 = vpack.c.b16 %v313, %v312
  %v328 = vpack.c.b16 %v315, %v314
  %v329 = vpack.c.b16 %v317, %v316
  %v330 = vpack.c.b16 %v319, %v318
  %v331 = vpack.c.b16 %v321, %v320
  %v332 = vpack.c.b16 %v323, %v322
  %v333 = vpack.c.b16 %v325, %v324
  %342 = vmatprep.subr.bf16.mxu0 0
  %343 = vmatpush1.bf16.msra.mxu0 %v326
  %344 = vmatprep.subr.bf16.mxu0 0
  %345 = vmatpush1.bf16.msra.mxu0 %v327
  %346 = vmatprep.subr.bf16.mxu0 0
  %347 = vmatpush1.bf16.msra.mxu0 %v328
  %348 = vmatprep.subr.bf16.mxu0 0
  %349 = vmatpush1.bf16.msra.mxu0 %v329
  %350 = vmatprep.subr.bf16.mxu0 0
  %351 = vmatpush1.bf16.msra.mxu0 %v330
  %352 = vmatprep.subr.bf16.mxu0 0
  %353 = vmatpush1.bf16.msra.mxu0 %v331
  %354 = vmatprep.subr.bf16.mxu0 0
  %355 = vmatpush1.bf16.msra.mxu0 %v332
  %356 = vmatprep.subr.bf16.mxu0 0
  %357 = vmatpush1.bf16.msra.mxu0 %v333
  %358 = vmatprep.subr.bf16.mxu0 0
  %359 = vmatpush1.bf16.msra.mxu0 0
  %360 = vmatprep.subr.bf16.mxu0 0
  %361 = vmatpush1.bf16.msra.mxu0 0
  %362 = vmatprep.subr.bf16.mxu0 0
  %363 = vmatpush1.bf16.msra.mxu0 0
  %364 = vmatprep.subr.bf16.mxu0 0
  %365 = vmatpush1.bf16.msra.mxu0 0
  %366 = vmatprep.subr.bf16.mxu0 0
  %367 = vmatpush1.bf16.msra.mxu0 0
  %368 = vmatprep.subr.bf16.mxu0 0
  %369 = vmatpush1.bf16.msra.mxu0 0
  %370 = vmatprep.subr.bf16.mxu0 0
  %371 = vmatpush1.bf16.msra.mxu0 0
  %372 = vmatprep.subr.bf16.mxu0 0
  %373 = vmatpush1.bf16.msra.mxu0 0
  %374 = vmatprep.mubr.bf16.mxu0 0
  %375 = vmatmul.mubr.bf16.gmra.mrb[0].mxu0 %v230
  %v376 = vpop.f32.mrb[0].mxu0
  %v377 = vadd.f32 %v100, %v376
  %v378 = vpop.f32.mrb[0].mxu0
  %v379 = vpop.f32.mrb[0].mxu0
  %v380 = vadd.f32 %v100, %v379
  %v381 = vpop.f32.mrb[0].mxu0
  %382 = vmatprep.mubr.bf16.mxu0 0
  %383 = vmatmul.mubr.bf16.gmra.mrb[0].mxu0 %v231
  %v384 = vpop.f32.mrb[0].mxu0
  %v385 = vadd.f32 %v100, %v384
  %v386 = vpop.f32.mrb[0].mxu0
  %v387 = vpop.f32.mrb[0].mxu0
  %v388 = vadd.f32 %v100, %v387
  %v389 = vpop.f32.mrb[0].mxu0
  %390 = vmatprep.mubr.bf16.mxu0 0
  %391 = vmatmul.mubr.bf16.gmra.mrb[0].mxu0 %v232
  %v392 = vpop.f32.mrb[0].mxu0
  %v393 = vadd.f32 %v100, %v392
  %v394 = vpop.f32.mrb[0].mxu0
  %v395 = vpop.f32.mrb[0].mxu0
  %v396 = vadd.f32 %v100, %v395
  %v397 = vpop.f32.mrb[0].mxu0
  %398 = vmatprep.mubr.bf16.mxu0 0
  %399 = vmatmul.mubr.bf16.gmra.mrb[0].mxu0 %v233
  %v400 = vpop.f32.mrb[0].mxu0
  %v401 = vadd.f32 %v100, %v400
  %v402 = vpop.f32.mrb[0].mxu0
  %v403 = vpop.f32.mrb[0].mxu0
  %v404 = vadd.f32 %v100, %v403
  %v405 = vpop.f32.mrb[0].mxu0
  %406 = vmatprep.mubr.bf16.mxu0 0
  %407 = vmatmul.mubr.bf16.gmra.mrb[0].mxu0 %v234
  %v408 = vpop.f32.mrb[0].mxu0
  %v409 = vadd.f32 %v100, %v408
  %v410 = vpop.f32.mrb[0].mxu0
  %v411 = vpop.f32.mrb[0].mxu0
  %v412 = vadd.f32 %v100, %v411
  %v413 = vpop.f32.mrb[0].mxu0
  %414 = vmatprep.mubr.bf16.mxu0 0
  %415 = vmatmul.mubr.bf16.gmra.mrb[0].mxu0 %v235
  %v416 = vpop.f32.mrb[0].mxu0
  %v417 = vadd.f32 %v100, %v416
  %v418 = vpop.f32.mrb[0].mxu0
  %v419 = vpop.f32.mrb[0].mxu0
  %v420 = vadd.f32 %v100, %v419
  %v421 = vpop.f32.mrb[0].mxu0
  %422 = vmatprep.mubr.bf16.mxu0 0
  %423 = vmatmul.mubr.bf16.gmra.mrb[0].mxu0 %v236
  %v424 = vpop.f32.mrb[0].mxu0
  %v425 = vadd.f32 %v100, %v424
  %v426 = vpop.f32.mrb[0].mxu0
  %v427 = vpop.f32.mrb[0].mxu0
  %v428 = vadd.f32 %v100, %v427
  %v429 = vpop.f32.mrb[0].mxu0
  %430 = vmatprep.mubr.bf16.mxu0 0
  %431 = vmatmul.mubr.bf16.gmra.mrb[0].mxu0 %v237
  %v432 = vpop.f32.mrb[0].mxu0
  %v433 = vadd.f32 %v100, %v432
  %v434 = vpop.f32.mrb[0].mxu0
  %v435 = vpop.f32.mrb[0].mxu0
  %v436 = vadd.f32 %v100, %v435
  %v437 = vpop.f32.mrb[0].mxu0
  %438 = vmatprep.mubr.bf16.mxu0 0
  %439 = vmatmul.mubr.bf16.gmra.mrb[0].mxu0 %v238
  %v440 = vpop.f32.mrb[0].mxu0
  %v441 = vadd.f32 %v100, %v440
  %v442 = vpop.f32.mrb[0].mxu0
  %v443 = vpop.f32.mrb[0].mxu0
  %v444 = vadd.f32 %v100, %v443
  %v445 = vpop.f32.mrb[0].mxu0
  %446 = vmatprep.mubr.bf16.mxu0 0
  %447 = vmatmul.mubr.bf16.gmra.mrb[0].mxu0 %v239
  %v448 = vpop.f32.mrb[0].mxu0
  %v449 = vadd.f32 %v100, %v448
  %v450 = vpop.f32.mrb[0].mxu0
  %v451 = vpop.f32.mrb[0].mxu0
  %v452 = vadd.f32 %v100, %v451
  %v453 = vpop.f32.mrb[0].mxu0
  %454 = vmatprep.mubr.bf16.mxu0 0
  %455 = vmatmul.mubr.bf16.gmra.mrb[0].mxu0 %v240
  %v456 = vpop.f32.mrb[0].mxu0
  %v457 = vadd.f32 %v100, %v456
  %v458 = vpop.f32.mrb[0].mxu0
  %v459 = vpop.f32.mrb[0].mxu0
  %v460 = vadd.f32 %v100, %v459
  %v461 = vpop.f32.mrb[0].mxu0
  %462 = vmatprep.mubr.bf16.mxu0 0
  %463 = vmatmul.mubr.bf16.gmra.mrb[0].mxu0 %v241
  %v464 = vpop.f32.mrb[0].mxu0
  %v465 = vadd.f32 %v100, %v464
  %v466 = vpop.f32.mrb[0].mxu0
  %v467 = vpop.f32.mrb[0].mxu0
  %v468 = vadd.f32 %v100, %v467
  %v469 = vpop.f32.mrb[0].mxu0
  %470 = vmatprep.mubr.bf16.mxu0 0
  %471 = vmatmul.mubr.bf16.gmra.mrb[0].mxu0 %v242
  %v472 = vpop.f32.mrb[0].mxu0
  %v473 = vadd.f32 %v100, %v472
  %v474 = vpop.f32.mrb[0].mxu0
  %v475 = vpop.f32.mrb[0].mxu0
  %v476 = vadd.f32 %v100, %v475
  %v477 = vpop.f32.mrb[0].mxu0
  %478 = vmatprep.mubr.bf16.mxu0 0
  %479 = vmatmul.mubr.bf16.gmra.mrb[0].mxu0 %v243
  %v480 = vpop.f32.mrb[0].mxu0
  %v481 = vadd.f32 %v100, %v480
  %v482 = vpop.f32.mrb[0].mxu0
  %v483 = vpop.f32.mrb[0].mxu0
  %v484 = vadd.f32 %v100, %v483
  %v485 = vpop.f32.mrb[0].mxu0
  %486 = vmatprep.mubr.bf16.mxu0 0
  %487 = vmatmul.mubr.bf16.gmra.mrb[0].mxu0 %v244
  %v488 = vpop.f32.mrb[0].mxu0
  %v489 = vadd.f32 %v100, %v488
  %v490 = vpop.f32.mrb[0].mxu0
  %v491 = vpop.f32.mrb[0].mxu0
  %v492 = vadd.f32 %v100, %v491
  %v493 = vpop.f32.mrb[0].mxu0
  %494 = vmatprep.mubr.bf16.mxu0 0
  %495 = vmatmul.mubr.bf16.gmra.mrb[0].mxu0 %v245
  %v496 = vpop.f32.mrb[0].mxu0
  %v497 = vadd.f32 %v100, %v496
  %v498 = vpop.f32.mrb[0].mxu0
  %v499 = vpop.f32.mrb[0].mxu0
  %v500 = vadd.f32 %v100, %v499
  %v501 = vpop.f32.mrb[0].mxu0
  %502 = vmatprep.mubr.bf16.mxu0 0
  %503 = vmatmul.mubr.bf16.gmra.mrb[0].mxu0 %v246
  %v504 = vpop.f32.mrb[0].mxu0
  %v505 = vadd.f32 %v100, %v504
  %v506 = vpop.f32.mrb[0].mxu0
  %v507 = vpop.f32.mrb[0].mxu0
  %v508 = vadd.f32 %v100, %v507
  %v509 = vpop.f32.mrb[0].mxu0
  %510 = vmatprep.mubr.bf16.mxu0 0
  %511 = vmatmul.mubr.bf16.gmra.mrb[0].mxu0 %v247
  %v512 = vpop.f32.mrb[0].mxu0
  %v513 = vadd.f32 %v100, %v512
  %v514 = vpop.f32.mrb[0].mxu0
  %v515 = vpop.f32.mrb[0].mxu0
  %v516 = vadd.f32 %v100, %v515
  %v517 = vpop.f32.mrb[0].mxu0
  %518 = vmatprep.mubr.bf16.mxu0 0
  %519 = vmatmul.mubr.bf16.gmra.mrb[0].mxu0 %v248
  %v520 = vpop.f32.mrb[0].mxu0
  %v521 = vadd.f32 %v100, %v520
  %v522 = vpop.f32.mrb[0].mxu0
  %v523 = vpop.f32.mrb[0].mxu0
  %v524 = vadd.f32 %v100, %v523
  %v525 = vpop.f32.mrb[0].mxu0
  %526 = vmatprep.mubr.bf16.mxu0 0
  %527 = vmatmul.mubr.bf16.gmra.mrb[0].mxu0 %v249
  %v528 = vpop.f32.mrb[0].mxu0
  %v529 = vadd.f32 %v100, %v528
  %v530 = vpop.f32.mrb[0].mxu0
  %v531 = vpop.f32.mrb[0].mxu0
  %v532 = vadd.f32 %v100, %v531
  %v533 = vpop.f32.mrb[0].mxu0
  %534 = vmatprep.mubr.bf16.mxu0 0
  %535 = vmatmul.mubr.bf16.gmra.mrb[0].mxu0 %v250
  %v536 = vpop.f32.mrb[0].mxu0
  %v537 = vadd.f32 %v100, %v536
  %v538 = vpop.f32.mrb[0].mxu0
  %v539 = vpop.f32.mrb[0].mxu0
  %v540 = vadd.f32 %v100, %v539
  %v541 = vpop.f32.mrb[0].mxu0
  %542 = vmatprep.mubr.bf16.mxu0 0
  %543 = vmatmul.mubr.bf16.gmra.mrb[0].mxu0 %v251
  %v544 = vpop.f32.mrb[0].mxu0
  %v545 = vadd.f32 %v100, %v544
  %v546 = vpop.f32.mrb[0].mxu0
  %v547 = vpop.f32.mrb[0].mxu0
  %v548 = vadd.f32 %v100, %v547
  %v549 = vpop.f32.mrb[0].mxu0
  %550 = vmatprep.mubr.bf16.mxu0 0
  %551 = vmatmul.mubr.bf16.gmra.mrb[0].mxu0 %v252
  %v552 = vpop.f32.mrb[0].mxu0
  %v553 = vadd.f32 %v100, %v552
  %v554 = vpop.f32.mrb[0].mxu0
  %v555 = vpop.f32.mrb[0].mxu0
  %v556 = vadd.f32 %v100, %v555
  %v557 = vpop.f32.mrb[0].mxu0
  %558 = vmatprep.mubr.bf16.mxu0 0
  %559 = vmatmul.mubr.bf16.gmra.mrb[0].mxu0 %v253
  %v560 = vpop.f32.mrb[0].mxu0
  %v561 = vadd.f32 %v100, %v560
  %v562 = vpop.f32.mrb[0].mxu0
  %v563 = vpop.f32.mrb[0].mxu0
  %v564 = vadd.f32 %v100, %v563
  %v565 = vpop.f32.mrb[0].mxu0
  %566 = vmatprep.mubr.bf16.mxu0 0
  %567 = vmatmul.mubr.bf16.gmra.mrb[0].mxu0 %v254
  %v568 = vpop.f32.mrb[0].mxu0
  %v569 = vadd.f32 %v100, %v568
  %v570 = vpop.f32.mrb[0].mxu0
  %v571 = vpop.f32.mrb[0].mxu0
  %v572 = vadd.f32 %v100, %v571
  %v573 = vpop.f32.mrb[0].mxu0
  %574 = vmatprep.mubr.bf16.mxu0 0
  %575 = vmatmul.mubr.bf16.gmra.mrb[0].mxu0 %v255
  %v576 = vpop.f32.mrb[0].mxu0
  %v577 = vadd.f32 %v100, %v576
  %v578 = vpop.f32.mrb[0].mxu0
  %v579 = vpop.f32.mrb[0].mxu0
  %v580 = vadd.f32 %v100, %v579
  %v581 = vpop.f32.mrb[0].mxu0
  %582 = vmatprep.mubr.bf16.mxu0 0
  %583 = vmatmul.mubr.bf16.gmra.mrb[0].mxu0 %v256
  %v584 = vpop.f32.mrb[0].mxu0
  %v585 = vadd.f32 %v100, %v584
  %v586 = vpop.f32.mrb[0].mxu0
  %v587 = vpop.f32.mrb[0].mxu0
  %v588 = vadd.f32 %v100, %v587
  %v589 = vpop.f32.mrb[0].mxu0
  %590 = vmatprep.mubr.bf16.mxu0 0
  %591 = vmatmul.mubr.bf16.gmra.mrb[0].mxu0 %v257
  %v592 = vpop.f32.mrb[0].mxu0
  %v593 = vadd.f32 %v100, %v592
  %v594 = vpop.f32.mrb[0].mxu0
  %v595 = vpop.f32.mrb[0].mxu0
  %v596 = vadd.f32 %v100, %v595
  %v597 = vpop.f32.mrb[0].mxu0
  %598 = vmatprep.mubr.bf16.mxu0 0
  %599 = vmatmul.mubr.bf16.gmra.mrb[0].mxu0 %v258
  %v600 = vpop.f32.mrb[0].mxu0
  %v601 = vadd.f32 %v100, %v600
  %v602 = vpop.f32.mrb[0].mxu0
  %v603 = vpop.f32.mrb[0].mxu0
  %v604 = vadd.f32 %v100, %v603
  %v605 = vpop.f32.mrb[0].mxu0
  %606 = vmatprep.mubr.bf16.mxu0 0
  %607 = vmatmul.mubr.bf16.gmra.mrb[0].mxu0 %v259
  %v608 = vpop.f32.mrb[0].mxu0
  %v609 = vadd.f32 %v100, %v608
  %v610 = vpop.f32.mrb[0].mxu0
  %v611 = vpop.f32.mrb[0].mxu0
  %v612 = vadd.f32 %v100, %v611
  %v613 = vpop.f32.mrb[0].mxu0
  %614 = vmatprep.mubr.bf16.mxu0 0
  %615 = vmatmul.mubr.bf16.gmra.mrb[0].mxu0 %v260
  %v616 = vpop.f32.mrb[0].mxu0
  %v617 = vadd.f32 %v100, %v616
  %v618 = vpop.f32.mrb[0].mxu0
  %v619 = vpop.f32.mrb[0].mxu0
  %v620 = vadd.f32 %v100, %v619
  %v621 = vpop.f32.mrb[0].mxu0
  %622 = vmatprep.mubr.bf16.mxu0 0
  %623 = vmatmul.mubr.bf16.gmra.mrb[0].mxu0 %v261
  %v624 = vpop.f32.mrb[0].mxu0
  %v625 = vadd.f32 %v100, %v624
  %v626 = vpop.f32.mrb[0].mxu0
  %v627 = vpop.f32.mrb[0].mxu0
  %v628 = vadd.f32 %v100, %v627
  %v629 = vpop.f32.mrb[0].mxu0
  %630 = vdwg.mxu0
  %vm631 = vcmp.ge.f32.partialorder %v377, 0.0
  %vm632 = vcmp.ge.f32.partialorder %v380, 0.0
  %vm633 = vcmp.ge.f32.partialorder %v385, 0.0
  %vm634 = vcmp.ge.f32.partialorder %v388, 0.0
  %vm635 = vcmp.ge.f32.partialorder %v393, 0.0
  %vm636 = vcmp.ge.f32.partialorder %v396, 0.0
  %vm637 = vcmp.ge.f32.partialorder %v401, 0.0
  %vm638 = vcmp.ge.f32.partialorder %v404, 0.0
  %vm639 = vcmp.ge.f32.partialorder %v409, 0.0
  %vm640 = vcmp.ge.f32.partialorder %v412, 0.0
  %vm641 = vcmp.ge.f32.partialorder %v417, 0.0
  %vm642 = vcmp.ge.f32.partialorder %v420, 0.0
  %vm643 = vcmp.ge.f32.partialorder %v425, 0.0
  %vm644 = vcmp.ge.f32.partialorder %v428, 0.0
  %vm645 = vcmp.ge.f32.partialorder %v433, 0.0
  %vm646 = vcmp.ge.f32.partialorder %v436, 0.0
  %vm647 = vcmp.ge.f32.partialorder %v441, 0.0
  %vm648 = vcmp.ge.f32.partialorder %v444, 0.0
  %vm649 = vcmp.ge.f32.partialorder %v449, 0.0
  %vm650 = vcmp.ge.f32.partialorder %v452, 0.0
  %vm651 = vcmp.ge.f32.partialorder %v457, 0.0
  %vm652 = vcmp.ge.f32.partialorder %v460, 0.0
  %vm653 = vcmp.ge.f32.partialorder %v465, 0.0
  %vm654 = vcmp.ge.f32.partialorder %v468, 0.0
  %vm655 = vcmp.ge.f32.partialorder %v473, 0.0
  %vm656 = vcmp.ge.f32.partialorder %v476, 0.0
  %vm657 = vcmp.ge.f32.partialorder %v481, 0.0
  %vm658 = vcmp.ge.f32.partialorder %v484, 0.0
  %vm659 = vcmp.ge.f32.partialorder %v489, 0.0
  %vm660 = vcmp.ge.f32.partialorder %v492, 0.0
  %vm661 = vcmp.ge.f32.partialorder %v497, 0.0
  %vm662 = vcmp.ge.f32.partialorder %v500, 0.0
  %vm663 = vcmp.ge.f32.partialorder %v505, 0.0
  %vm664 = vcmp.ge.f32.partialorder %v508, 0.0
  %vm665 = vcmp.ge.f32.partialorder %v513, 0.0
  %vm666 = vcmp.ge.f32.partialorder %v516, 0.0
  %vm667 = vcmp.ge.f32.partialorder %v521, 0.0
  %vm668 = vcmp.ge.f32.partialorder %v524, 0.0
  %vm669 = vcmp.ge.f32.partialorder %v529, 0.0
  %vm670 = vcmp.ge.f32.partialorder %v532, 0.0
  %vm671 = vcmp.ge.f32.partialorder %v537, 0.0
  %vm672 = vcmp.ge.f32.partialorder %v540, 0.0
  %vm673 = vcmp.ge.f32.partialorder %v545, 0.0
  %vm674 = vcmp.ge.f32.partialorder %v548, 0.0
  %vm675 = vcmp.ge.f32.partialorder %v553, 0.0
  %vm676 = vcmp.ge.f32.partialorder %v556, 0.0
  %vm677 = vcmp.ge.f32.partialorder %v561, 0.0
  %vm678 = vcmp.ge.f32.partialorder %v564, 0.0
  %vm679 = vcmp.ge.f32.partialorder %v569, 0.0
  %vm680 = vcmp.ge.f32.partialorder %v572, 0.0
  %vm681 = vcmp.ge.f32.partialorder %v577, 0.0
  %vm682 = vcmp.ge.f32.partialorder %v580, 0.0
  %vm683 = vcmp.ge.f32.partialorder %v585, 0.0
  %vm684 = vcmp.ge.f32.partialorder %v588, 0.0
  %vm685 = vcmp.ge.f32.partialorder %v593, 0.0
  %vm686 = vcmp.ge.f32.partialorder %v596, 0.0
  %vm687 = vcmp.ge.f32.partialorder %v601, 0.0
  %vm688 = vcmp.ge.f32.partialorder %v604, 0.0
  %vm689 = vcmp.ge.f32.partialorder %v609, 0.0
  %vm690 = vcmp.ge.f32.partialorder %v612, 0.0
  %vm691 = vcmp.ge.f32.partialorder %v617, 0.0
  %vm692 = vcmp.ge.f32.partialorder %v620, 0.0
  %vm693 = vcmp.ge.f32.partialorder %v625, 0.0
  %vm694 = vcmp.ge.f32.partialorder %v628, 0.0
  %v695 = vmul.f32 %v377, 0.2
  %v696 = vmul.f32 %v380, 0.2
  %v697 = vmul.f32 %v385, 0.2
  %v698 = vmul.f32 %v388, 0.2
  %v699 = vmul.f32 %v393, 0.2
  %v700 = vmul.f32 %v396, 0.2
  %v701 = vmul.f32 %v401, 0.2
  %v702 = vmul.f32 %v404, 0.2
  %v703 = vmul.f32 %v409, 0.2
  %v704 = vmul.f32 %v412, 0.2
  %v705 = vmul.f32 %v417, 0.2
  %v706 = vmul.f32 %v420, 0.2
  %v707 = vmul.f32 %v425, 0.2
  %v708 = vmul.f32 %v428, 0.2
  %v709 = vmul.f32 %v433, 0.2
  %v710 = vmul.f32 %v436, 0.2
  %v711 = vmul.f32 %v441, 0.2
  %v712 = vmul.f32 %v444, 0.2
  %v713 = vmul.f32 %v449, 0.2
  %v714 = vmul.f32 %v452, 0.2
  %v715 = vmul.f32 %v457, 0.2
  %v716 = vmul.f32 %v460, 0.2
  %v717 = vmul.f32 %v465, 0.2
  %v718 = vmul.f32 %v468, 0.2
  %v719 = vmul.f32 %v473, 0.2
  %v720 = vmul.f32 %v476, 0.2
  %v721 = vmul.f32 %v481, 0.2
  %v722 = vmul.f32 %v484, 0.2
  %v723 = vmul.f32 %v489, 0.2
  %v724 = vmul.f32 %v492, 0.2
  %v725 = vmul.f32 %v497, 0.2
  %v726 = vmul.f32 %v500, 0.2
  %v727 = vmul.f32 %v505, 0.2
  %v728 = vmul.f32 %v508, 0.2
  %v729 = vmul.f32 %v513, 0.2
  %v730 = vmul.f32 %v516, 0.2
  %v731 = vmul.f32 %v521, 0.2
  %v732 = vmul.f32 %v524, 0.2
  %v733 = vmul.f32 %v529, 0.2
  %v734 = vmul.f32 %v532, 0.2
  %v735 = vmul.f32 %v537, 0.2
  %v736 = vmul.f32 %v540, 0.2
  %v737 = vmul.f32 %v545, 0.2
  %v738 = vmul.f32 %v548, 0.2
  %v739 = vmul.f32 %v553, 0.2
  %v740 = vmul.f32 %v556, 0.2
  %v741 = vmul.f32 %v561, 0.2
  %v742 = vmul.f32 %v564, 0.2
  %v743 = vmul.f32 %v569, 0.2
  %v744 = vmul.f32 %v572, 0.2
  %v745 = vmul.f32 %v577, 0.2
  %v746 = vmul.f32 %v580, 0.2
  %v747 = vmul.f32 %v585, 0.2
  %v748 = vmul.f32 %v588, 0.2
  %v749 = vmul.f32 %v593, 0.2
  %v750 = vmul.f32 %v596, 0.2
  %v751 = vmul.f32 %v601, 0.2
  %v752 = vmul.f32 %v604, 0.2
  %v753 = vmul.f32 %v609, 0.2
  %v754 = vmul.f32 %v612, 0.2
  %v755 = vmul.f32 %v617, 0.2
  %v756 = vmul.f32 %v620, 0.2
  %v757 = vmul.f32 %v625, 0.2
  %v758 = vmul.f32 %v628, 0.2
  %v759 = vsel %vm631, %v377, %v695
  %v760 = vsel %vm632, %v380, %v696
  %v761 = vsel %vm633, %v385, %v697
  %v762 = vsel %vm634, %v388, %v698
  %v763 = vsel %vm635, %v393, %v699
  %v764 = vsel %vm636, %v396, %v700
  %v765 = vsel %vm637, %v401, %v701
  %v766 = vsel %vm638, %v404, %v702
  %v767 = vsel %vm639, %v409, %v703
  %v768 = vsel %vm640, %v412, %v704
  %v769 = vsel %vm641, %v417, %v705
  %v770 = vsel %vm642, %v420, %v706
  %v771 = vsel %vm643, %v425, %v707
  %v772 = vsel %vm644, %v428, %v708
  %v773 = vsel %vm645, %v433, %v709
  %v774 = vsel %vm646, %v436, %v710
  %v775 = vsel %vm647, %v441, %v711
  %v776 = vsel %vm648, %v444, %v712
  %v777 = vsel %vm649, %v449, %v713
  %v778 = vsel %vm650, %v452, %v714
  %v779 = vsel %vm651, %v457, %v715
  %v780 = vsel %vm652, %v460, %v716
  %v781 = vsel %vm653, %v465, %v717
  %v782 = vsel %vm654, %v468, %v718
  %v783 = vsel %vm655, %v473, %v719
  %v784 = vsel %vm656, %v476, %v720
  %v785 = vsel %vm657, %v481, %v721
  %v786 = vsel %vm658, %v484, %v722
  %v787 = vsel %vm659, %v489, %v723
  %v788 = vsel %vm660, %v492, %v724
  %v789 = vsel %vm661, %v497, %v725
  %v790 = vsel %vm662, %v500, %v726
  %v791 = vsel %vm663, %v505, %v727
  %v792 = vsel %vm664, %v508, %v728
  %v793 = vsel %vm665, %v513, %v729
  %v794 = vsel %vm666, %v516, %v730
  %v795 = vsel %vm667, %v521, %v731
  %v796 = vsel %vm668, %v524, %v732
  %v797 = vsel %vm669, %v529, %v733
  %v798 = vsel %vm670, %v532, %v734
  %v799 = vsel %vm671, %v537, %v735
  %v800 = vsel %vm672, %v540, %v736
  %v801 = vsel %vm673, %v545, %v737
  %v802 = vsel %vm674, %v548, %v738
  %v803 = vsel %vm675, %v553, %v739
  %v804 = vsel %vm676, %v556, %v740
  %v805 = vsel %vm677, %v561, %v741
  %v806 = vsel %vm678, %v564, %v742
  %v807 = vsel %vm679, %v569, %v743
  %v808 = vsel %vm680, %v572, %v744
  %v809 = vsel %vm681, %v577, %v745
  %v810 = vsel %vm682, %v580, %v746
  %v811 = vsel %vm683, %v585, %v747
  %v812 = vsel %vm684, %v588, %v748
  %v813 = vsel %vm685, %v593, %v749
  %v814 = vsel %vm686, %v596, %v750
  %v815 = vsel %vm687, %v601, %v751
  %v816 = vsel %vm688, %v604, %v752
  %v817 = vsel %vm689, %v609, %v753
  %v818 = vsel %vm690, %v612, %v754
  %v819 = vsel %vm691, %v617, %v755
  %v820 = vsel %vm692, %v620, %v756
  %v821 = vsel %vm693, %v625, %v757
  %v822 = vsel %vm694, %v628, %v758
  %v823 = vpack.c.bf16 %v760, %v759
  %v824 = vpack.c.bf16 %v762, %v761
  %v825 = vpack.c.bf16 %v764, %v763
  %v826 = vpack.c.bf16 %v766, %v765
  %v827 = vpack.c.bf16 %v768, %v767
  %v828 = vpack.c.bf16 %v770, %v769
  %v829 = vpack.c.bf16 %v772, %v771
  %v830 = vpack.c.bf16 %v774, %v773
  %v831 = vpack.c.bf16 %v776, %v775
  %v832 = vpack.c.bf16 %v778, %v777
  %v833 = vpack.c.bf16 %v780, %v779
  %v834 = vpack.c.bf16 %v782, %v781
  %v835 = vpack.c.bf16 %v784, %v783
  %v836 = vpack.c.bf16 %v786, %v785
  %v837 = vpack.c.bf16 %v788, %v787
  %v838 = vpack.c.bf16 %v790, %v789
  %v839 = vpack.c.bf16 %v792, %v791
  %v840 = vpack.c.bf16 %v794, %v793
  %v841 = vpack.c.bf16 %v796, %v795
  %v842 = vpack.c.bf16 %v798, %v797
  %v843 = vpack.c.bf16 %v800, %v799
  %v844 = vpack.c.bf16 %v802, %v801
  %v845 = vpack.c.bf16 %v804, %v803
  %v846 = vpack.c.bf16 %v806, %v805
  %v847 = vpack.c.bf16 %v808, %v807
  %v848 = vpack.c.bf16 %v810, %v809
  %v849 = vpack.c.bf16 %v812, %v811
  %v850 = vpack.c.bf16 %v814, %v813
  %v851 = vpack.c.bf16 %v816, %v815
  %v852 = vpack.c.bf16 %v818, %v817
  %v853 = vpack.c.bf16 %v820, %v819
  %v854 = vpack.c.bf16 %v822, %v821
  %v887 = vunpack.c.l.b16 %v823
  %v888 = vunpack.c.h.b16 %v823
  %v889 = vunpack.c.l.b16 %v824
  %v890 = vunpack.c.h.b16 %v824
  %v891 = vunpack.c.l.b16 %v825
  %v892 = vunpack.c.h.b16 %v825
  %v893 = vunpack.c.l.b16 %v826
  %v894 = vunpack.c.h.b16 %v826
  %v895 = vunpack.c.l.b16 %v827
  %v896 = vunpack.c.h.b16 %v827
  %v897 = vunpack.c.l.b16 %v828
  %v898 = vunpack.c.h.b16 %v828
  %v899 = vunpack.c.l.b16 %v829
  %v900 = vunpack.c.h.b16 %v829
  %v901 = vunpack.c.l.b16 %v830
  %v902 = vunpack.c.h.b16 %v830
  %v903 = vunpack.c.l.b16 %v831
  %v904 = vunpack.c.h.b16 %v831
  %v905 = vunpack.c.l.b16 %v832
  %v906 = vunpack.c.h.b16 %v832
  %v907 = vunpack.c.l.b16 %v833
  %v908 = vunpack.c.h.b16 %v833
  %v909 = vunpack.c.l.b16 %v834
  %v910 = vunpack.c.h.b16 %v834
  %v911 = vunpack.c.l.b16 %v835
  %v912 = vunpack.c.h.b16 %v835
  %v913 = vunpack.c.l.b16 %v836
  %v914 = vunpack.c.h.b16 %v836
  %v915 = vunpack.c.l.b16 %v837
  %v916 = vunpack.c.h.b16 %v837
  %v917 = vunpack.c.l.b16 %v838
  %v918 = vunpack.c.h.b16 %v838
  %v919 = vunpack.c.l.b16 %v839
  %v920 = vunpack.c.h.b16 %v839
  %v921 = vunpack.c.l.b16 %v840
  %v922 = vunpack.c.h.b16 %v840
  %v923 = vunpack.c.l.b16 %v841
  %v924 = vunpack.c.h.b16 %v841
  %v925 = vunpack.c.l.b16 %v842
  %v926 = vunpack.c.h.b16 %v842
  %v927 = vunpack.c.l.b16 %v843
  %v928 = vunpack.c.h.b16 %v843
  %v929 = vunpack.c.l.b16 %v844
  %v930 = vunpack.c.h.b16 %v844
  %v931 = vunpack.c.l.b16 %v845
  %v932 = vunpack.c.h.b16 %v845
  %v933 = vunpack.c.l.b16 %v846
  %v934 = vunpack.c.h.b16 %v846
  %v935 = vunpack.c.l.b16 %v847
  %v936 = vunpack.c.h.b16 %v847
  %v937 = vunpack.c.l.b16 %v848
  %v938 = vunpack.c.h.b16 %v848
  %v939 = vunpack.c.l.b16 %v849
  %v940 = vunpack.c.h.b16 %v849
  %v941 = vunpack.c.l.b16 %v850
  %v942 = vunpack.c.h.b16 %v850
  %v943 = vunpack.c.l.b16 %v851
  %v944 = vunpack.c.h.b16 %v851
  %v945 = vunpack.c.l.b16 %v852
  %v946 = vunpack.c.h.b16 %v852
  %v947 = vunpack.c.l.b16 %v853
  %v948 = vunpack.c.h.b16 %v853
  %v949 = vunpack.c.l.b16 %v854
  %v950 = vunpack.c.h.b16 %v854
  %v951 = vpack.c.b16 %v887, %v887
  %v952 = vpack.c.b16 %v888, %v888
  %v953 = vpack.c.b16 %v889, %v889
  %v954 = vpack.c.b16 %v890, %v890
  %v955 = vpack.c.b16 %v891, %v891
  %v956 = vpack.c.b16 %v892, %v892
  %v957 = vpack.c.b16 %v893, %v893
  %v958 = vpack.c.b16 %v894, %v894
  %v959 = vpack.c.b16 %v895, %v895
  %v960 = vpack.c.b16 %v896, %v896
  %v961 = vpack.c.b16 %v897, %v897
  %v962 = vpack.c.b16 %v898, %v898
  %v963 = vpack.c.b16 %v899, %v899
  %v964 = vpack.c.b16 %v900, %v900
  %v965 = vpack.c.b16 %v901, %v901
  %v966 = vpack.c.b16 %v902, %v902
  %v967 = vpack.c.b16 %v903, %v903
  %v968 = vpack.c.b16 %v904, %v904
  %v969 = vpack.c.b16 %v905, %v905
  %v970 = vpack.c.b16 %v906, %v906
  %v971 = vpack.c.b16 %v907, %v907
  %v972 = vpack.c.b16 %v908, %v908
  %v973 = vpack.c.b16 %v909, %v909
  %v974 = vpack.c.b16 %v910, %v910
  %v975 = vpack.c.b16 %v911, %v911
  %v976 = vpack.c.b16 %v912, %v912
  %v977 = vpack.c.b16 %v913, %v913
  %v978 = vpack.c.b16 %v914, %v914
  %v979 = vpack.c.b16 %v915, %v915
  %v980 = vpack.c.b16 %v916, %v916
  %v981 = vpack.c.b16 %v917, %v917
  %v982 = vpack.c.b16 %v918, %v918
  %v983 = vpack.c.b16 %v919, %v919
  %v984 = vpack.c.b16 %v920, %v920
  %v985 = vpack.c.b16 %v921, %v921
  %v986 = vpack.c.b16 %v922, %v922
  %v987 = vpack.c.b16 %v923, %v923
  %v988 = vpack.c.b16 %v924, %v924
  %v989 = vpack.c.b16 %v925, %v925
  %v990 = vpack.c.b16 %v926, %v926
  %v991 = vpack.c.b16 %v927, %v927
  %v992 = vpack.c.b16 %v928, %v928
  %v993 = vpack.c.b16 %v929, %v929
  %v994 = vpack.c.b16 %v930, %v930
  %v995 = vpack.c.b16 %v931, %v931
  %v996 = vpack.c.b16 %v932, %v932
  %v997 = vpack.c.b16 %v933, %v933
  %v998 = vpack.c.b16 %v934, %v934
  %v999 = vpack.c.b16 %v935, %v935
  %v1000 = vpack.c.b16 %v936, %v936
  %v1001 = vpack.c.b16 %v937, %v937
  %v1002 = vpack.c.b16 %v938, %v938
  %v1003 = vpack.c.b16 %v939, %v939
  %v1004 = vpack.c.b16 %v940, %v940
  %v1005 = vpack.c.b16 %v941, %v941
  %v1006 = vpack.c.b16 %v942, %v942
  %v1007 = vpack.c.b16 %v943, %v943
  %v1008 = vpack.c.b16 %v944, %v944
  %v1009 = vpack.c.b16 %v945, %v945
  %v1010 = vpack.c.b16 %v946, %v946
  %v1011 = vpack.c.b16 %v947, %v947
  %v1012 = vpack.c.b16 %v948, %v948
  %v1013 = vpack.c.b16 %v949, %v949
  %v1014 = vpack.c.b16 %v950, %v950
  %vm1079 = vcmask 125952
  %1080 = vst.msk [vmem:[%s3] sm:$0xf] %vm1079, %v951
  %1081 = vst.msk [vmem:[%s3 + $0x4] sm:$0xf] %vm1079, %v952
  %1082 = vst.msk [vmem:[%s3 + $0x8] sm:$0xf] %vm1079, %v953
  %1083 = vst.msk [vmem:[%s3 + $0xc] sm:$0xf] %vm1079, %v954
  %1084 = vst.msk [vmem:[%s3 + $0x10] sm:$0xf] %vm1079, %v955
  %1085 = vst.msk [vmem:[%s3 + $0x14] sm:$0xf] %vm1079, %v956
  %1086 = vst.msk [vmem:[%s3 + $0x18] sm:$0xf] %vm1079, %v957
  %1087 = vst.msk [vmem:[%s3 + $0x1c] sm:$0xf] %vm1079, %v958
  %1088 = vst.msk [vmem:[%s3 + $0x20] sm:$0xf] %vm1079, %v959
  %1089 = vst.msk [vmem:[%s3 + $0x24] sm:$0xf] %vm1079, %v960
  %1090 = vst.msk [vmem:[%s3 + $0x28] sm:$0xf] %vm1079, %v961
  %1091 = vst.msk [vmem:[%s3 + $0x2c] sm:$0xf] %vm1079, %v962
  %1092 = vst.msk [vmem:[%s3 + $0x30] sm:$0xf] %vm1079, %v963
  %1093 = vst.msk [vmem:[%s3 + $0x34] sm:$0xf] %vm1079, %v964
  %1094 = vst.msk [vmem:[%s3 + $0x38] sm:$0xf] %vm1079, %v965
  %1095 = vst.msk [vmem:[%s3 + $0x3c] sm:$0xf] %vm1079, %v966
  %1096 = vst.msk [vmem:[%s3 + $0x40] sm:$0xf] %vm1079, %v967
  %1097 = vst.msk [vmem:[%s3 + $0x44] sm:$0xf] %vm1079, %v968
  %1098 = vst.msk [vmem:[%s3 + $0x48] sm:$0xf] %vm1079, %v969
  %1099 = vst.msk [vmem:[%s3 + $0x4c] sm:$0xf] %vm1079, %v970
  %1100 = vst.msk [vmem:[%s3 + $0x50] sm:$0xf] %vm1079, %v971
  %1101 = vst.msk [vmem:[%s3 + $0x54] sm:$0xf] %vm1079, %v972
  %1102 = vst.msk [vmem:[%s3 + $0x58] sm:$0xf] %vm1079, %v973
  %1103 = vst.msk [vmem:[%s3 + $0x5c] sm:$0xf] %vm1079, %v974
  %1104 = vst.msk [vmem:[%s3 + $0x60] sm:$0xf] %vm1079, %v975
  %1105 = vst.msk [vmem:[%s3 + $0x64] sm:$0xf] %vm1079, %v976
  %1106 = vst.msk [vmem:[%s3 + $0x68] sm:$0xf] %vm1079, %v977
  %1107 = vst.msk [vmem:[%s3 + $0x6c] sm:$0xf] %vm1079, %v978
  %1108 = vst.msk [vmem:[%s3 + $0x70] sm:$0xf] %vm1079, %v979
  %1109 = vst.msk [vmem:[%s3 + $0x74] sm:$0xf] %vm1079, %v980
  %1110 = vst.msk [vmem:[%s3 + $0x78] sm:$0xf] %vm1079, %v981
  %1111 = vst.msk [vmem:[%s3 + $0x7c] sm:$0xf] %vm1079, %v982
  %1112 = vst.msk [vmem:[%s3 + $0x80] sm:$0xf] %vm1079, %v983
  %1113 = vst.msk [vmem:[%s3 + $0x84] sm:$0xf] %vm1079, %v984
  %1114 = vst.msk [vmem:[%s3 + $0x88] sm:$0xf] %vm1079, %v985
  %1115 = vst.msk [vmem:[%s3 + $0x8c] sm:$0xf] %vm1079, %v986
  %1116 = vst.msk [vmem:[%s3 + $0x90] sm:$0xf] %vm1079, %v987
  %1117 = vst.msk [vmem:[%s3 + $0x94] sm:$0xf] %vm1079, %v988
  %1118 = vst.msk [vmem:[%s3 + $0x98] sm:$0xf] %vm1079, %v989
  %1119 = vst.msk [vmem:[%s3 + $0x9c] sm:$0xf] %vm1079, %v990
  %1120 = vst.msk [vmem:[%s3 + $0xa0] sm:$0xf] %vm1079, %v991
  %1121 = vst.msk [vmem:[%s3 + $0xa4] sm:$0xf] %vm1079, %v992
  %1122 = vst.msk [vmem:[%s3 + $0xa8] sm:$0xf] %vm1079, %v993
  %1123 = vst.msk [vmem:[%s3 + $0xac] sm:$0xf] %vm1079, %v994
  %1124 = vst.msk [vmem:[%s3 + $0xb0] sm:$0xf] %vm1079, %v995
  %1125 = vst.msk [vmem:[%s3 + $0xb4] sm:$0xf] %vm1079, %v996
  %1126 = vst.msk [vmem:[%s3 + $0xb8] sm:$0xf] %vm1079, %v997
  %1127 = vst.msk [vmem:[%s3 + $0xbc] sm:$0xf] %vm1079, %v998
  %1128 = vst.msk [vmem:[%s3 + $0xc0] sm:$0xf] %vm1079, %v999
  %1129 = vst.msk [vmem:[%s3 + $0xc4] sm:$0xf] %vm1079, %v1000
  %1130 = vst.msk [vmem:[%s3 + $0xc8] sm:$0xf] %vm1079, %v1001
  %1131 = vst.msk [vmem:[%s3 + $0xcc] sm:$0xf] %vm1079, %v1002
  %1132 = vst.msk [vmem:[%s3 + $0xd0] sm:$0xf] %vm1079, %v1003
  %1133 = vst.msk [vmem:[%s3 + $0xd4] sm:$0xf] %vm1079, %v1004
  %1134 = vst.msk [vmem:[%s3 + $0xd8] sm:$0xf] %vm1079, %v1005
  %1135 = vst.msk [vmem:[%s3 + $0xdc] sm:$0xf] %vm1079, %v1006
  %1136 = vst.msk [vmem:[%s3 + $0xe0] sm:$0xf] %vm1079, %v1007
  %1137 = vst.msk [vmem:[%s3 + $0xe4] sm:$0xf] %vm1079, %v1008
  %1138 = vst.msk [vmem:[%s3 + $0xe8] sm:$0xf] %vm1079, %v1009
  %1139 = vst.msk [vmem:[%s3 + $0xec] sm:$0xf] %vm1079, %v1010
  %1140 = vst.msk [vmem:[%s3 + $0xf0] sm:$0xf] %vm1079, %v1011
  %1141 = vst.msk [vmem:[%s3 + $0xf4] sm:$0xf] %vm1079, %v1012
  %1142 = vst.msk [vmem:[%s3 + $0xf8] sm:$0xf] %vm1079, %v1013
  %1143 = vst.msk [vmem:[%s3 + $0xfc] sm:$0xf] %vm1079, %v1014
  // Predicated region
  $region14: #{discriminator_forward.5} parent=0 // pred_check
    _
  $region15: #{discriminator_forward.5} parent=0 // pred_check_branch
    %1145 = sbr.rel (0) target = $region17
  $region16: #{discriminator_forward.5} parent=0 // pred_region
    _
  $region17: #{discriminator_forward.5} parent=0 // pred_fallthru
    _
  // Predicated region
  $region18: #{discriminator_forward.5} parent=0 // pred_check
    _
  $region19: #{discriminator_forward.5} parent=0 // pred_check_branch
    %1147 = sbr.rel (0) target = $region21
  $region20: #{discriminator_forward.5} parent=0 // pred_region
    _
  $region21: #{discriminator_forward.5} parent=0 // pred_fallthru
    _

// kernel: discriminator_forward.6
$region0: #{discriminator_forward.6}
  #allocation0 [shape = 'u32[]', space=smem, size = 0x4, offset = 0x4, fixed_abs, tag = 'smem constant byte address 0x4 - core index']
  #allocation1 [shape = 'u32[144,128]{1,0:T(1,128)}', space=vmem, size = 0x12000, scoped, tag = 'internal scratch']
  %s0 = inlined_call_operand.vmem [shape: bf16[128,256], index: 0, kind: input, shape index: {}]
  %s1 = inlined_call_operand.vmem [shape: bf16[256,32], index: 1, kind: input, shape index: {}]
  %s2 = inlined_call_operand.vmem [shape: f32[1,32], index: 2, kind: input, shape index: {}]
  %s3 = inlined_call_operand.vmem [shape: bf16[128,32], index: 3, kind: output, shape index: {}]
  %s4 = sld [smem:[#allocation0]]
  $region22: #{discriminator_forward.6} parent=0
    _
  %s6 = ssub.s32 1, %s4
  %s7 = scalar_select 0, %s6, %s4
  // Predicated region
  $region2: #{discriminator_forward.6} parent=0 // pred_check
    _
  $region3: #{discriminator_forward.6} parent=0 // pred_check_branch
    %9 = sbr.rel (0) target = $region5
  $region4: #{discriminator_forward.6} parent=0 // pred_region
    _
  $region5: #{discriminator_forward.6} parent=0 // pred_fallthru
    _
  // Predicated region
  $region6: #{discriminator_forward.6} parent=0 // pred_check
    _
  $region7: #{discriminator_forward.6} parent=0 // pred_check_branch
    %11 = sbr.rel (0) target = $region9
  $region8: #{discriminator_forward.6} parent=0 // pred_region
    _
  $region9: #{discriminator_forward.6} parent=0 // pred_fallthru
    _
  // Predicated region
  $region10: #{discriminator_forward.6} parent=0 // pred_check
    _
  $region11: #{discriminator_forward.6} parent=0 // pred_check_branch
    %13 = sbr.rel (0) target = $region13
  $region12: #{discriminator_forward.6} parent=0 // pred_region
    _
  $region13: #{discriminator_forward.6} parent=0 // pred_fallthru
    _
  %v15 = vld [vmem:[%s0] sm:$0xff]
  %v16 = vld [vmem:[%s0 + $0x8] sm:$0xff]
  %v17 = vld [vmem:[%s0 + $0x10] sm:$0xff]
  %v18 = vld [vmem:[%s0 + $0x18] sm:$0xff]
  %v19 = vld [vmem:[%s0 + $0x20] sm:$0xff]
  %v20 = vld [vmem:[%s0 + $0x28] sm:$0xff]
  %v21 = vld [vmem:[%s0 + $0x30] sm:$0xff]
  %v22 = vld [vmem:[%s0 + $0x38] sm:$0xff]
  %v23 = vld [vmem:[%s0 + $0x40] sm:$0xff]
  %v24 = vld [vmem:[%s0 + $0x48] sm:$0xff]
  %v25 = vld [vmem:[%s0 + $0x50] sm:$0xff]
  %v26 = vld [vmem:[%s0 + $0x58] sm:$0xff]
  %v27 = vld [vmem:[%s0 + $0x60] sm:$0xff]
  %v28 = vld [vmem:[%s0 + $0x68] sm:$0xff]
  %v29 = vld [vmem:[%s0 + $0x70] sm:$0xff]
  %v30 = vld [vmem:[%s0 + $0x78] sm:$0xff]
  %v31 = vld [vmem:[%s1] sm:$0xf]
  %v32 = vld [vmem:[%s1 + $0x4] sm:$0xf]
  %v33 = vld [vmem:[%s1 + $0x8] sm:$0xf]
  %v34 = vld [vmem:[%s1 + $0xc] sm:$0xf]
  %v35 = vld [vmem:[%s1 + $0x10] sm:$0xf]
  %v36 = vld [vmem:[%s1 + $0x14] sm:$0xf]
  %v37 = vld [vmem:[%s1 + $0x18] sm:$0xf]
  %v38 = vld [vmem:[%s1 + $0x1c] sm:$0xf]
  %v39 = vld [vmem:[%s1 + $0x20] sm:$0xf]
  %v40 = vld [vmem:[%s1 + $0x24] sm:$0xf]
  %v41 = vld [vmem:[%s1 + $0x28] sm:$0xf]
  %v42 = vld [vmem:[%s1 + $0x2c] sm:$0xf]
  %v43 = vld [vmem:[%s1 + $0x30] sm:$0xf]
  %v44 = vld [vmem:[%s1 + $0x34] sm:$0xf]
  %v45 = vld [vmem:[%s1 + $0x38] sm:$0xf]
  %v46 = vld [vmem:[%s1 + $0x3c] sm:$0xf]
  %v47 = vld [vmem:[%s1 + $0x40] sm:$0xf]
  %v48 = vld [vmem:[%s1 + $0x44] sm:$0xf]
  %v49 = vld [vmem:[%s1 + $0x48] sm:$0xf]
  %v50 = vld [vmem:[%s1 + $0x4c] sm:$0xf]
  %v51 = vld [vmem:[%s1 + $0x50] sm:$0xf]
  %v52 = vld [vmem:[%s1 + $0x54] sm:$0xf]
  %v53 = vld [vmem:[%s1 + $0x58] sm:$0xf]
  %v54 = vld [vmem:[%s1 + $0x5c] sm:$0xf]
  %v55 = vld [vmem:[%s1 + $0x60] sm:$0xf]
  %v56 = vld [vmem:[%s1 + $0x64] sm:$0xf]
  %v57 = vld [vmem:[%s1 + $0x68] sm:$0xf]
  %v58 = vld [vmem:[%s1 + $0x6c] sm:$0xf]
  %v59 = vld [vmem:[%s1 + $0x70] sm:$0xf]
  %v60 = vld [vmem:[%s1 + $0x74] sm:$0xf]
  %v61 = vld [vmem:[%s1 + $0x78] sm:$0xf]
  %v62 = vld [vmem:[%s1 + $0x7c] sm:$0xf]
  %v63 = vld [vmem:[%s2] sm:$0x1]
  %v65 = vlaneseq
  %v66 = vshrl.u32 %v65, 7
  %v67 = vsub.s32 0, %v66
  %v68 = vrot.slane %v63, %v67
  %v86 = vunpack.c.l.b16 %v15
  %v87 = vunpack.c.h.b16 %v15
  %v88 = vunpack.c.l.b16 %v16
  %v89 = vunpack.c.h.b16 %v16
  %v90 = vunpack.c.l.b16 %v17
  %v91 = vunpack.c.h.b16 %v17
  %v92 = vunpack.c.l.b16 %v18
  %v93 = vunpack.c.h.b16 %v18
  %v94 = vunpack.c.l.b16 %v19
  %v95 = vunpack.c.h.b16 %v19
  %v96 = vunpack.c.l.b16 %v20
  %v97 = vunpack.c.h.b16 %v20
  %v98 = vunpack.c.l.b16 %v21
  %v99 = vunpack.c.h.b16 %v21
  %v100 = vunpack.c.l.b16 %v22
  %v101 = vunpack.c.h.b16 %v22
  %v102 = vunpack.c.l.b16 %v23
  %v103 = vunpack.c.h.b16 %v23
  %v104 = vunpack.c.l.b16 %v24
  %v105 = vunpack.c.h.b16 %v24
  %v106 = vunpack.c.l.b16 %v25
  %v107 = vunpack.c.h.b16 %v25
  %v108 = vunpack.c.l.b16 %v26
  %v109 = vunpack.c.h.b16 %v26
  %v110 = vunpack.c.l.b16 %v27
  %v111 = vunpack.c.h.b16 %v27
  %v112 = vunpack.c.l.b16 %v28
  %v113 = vunpack.c.h.b16 %v28
  %v114 = vunpack.c.l.b16 %v29
  %v115 = vunpack.c.h.b16 %v29
  %v116 = vunpack.c.l.b16 %v30
  %v117 = vunpack.c.h.b16 %v30
  %v118 = vpack.c.b16 %v88, %v86
  %v119 = vpack.c.b16 %v89, %v87
  %v120 = vpack.c.b16 %v92, %v90
  %v121 = vpack.c.b16 %v93, %v91
  %v122 = vpack.c.b16 %v96, %v94
  %v123 = vpack.c.b16 %v97, %v95
  %v124 = vpack.c.b16 %v100, %v98
  %v125 = vpack.c.b16 %v101, %v99
  %v126 = vpack.c.b16 %v104, %v102
  %v127 = vpack.c.b16 %v105, %v103
  %v128 = vpack.c.b16 %v108, %v106
  %v129 = vpack.c.b16 %v109, %v107
  %v130 = vpack.c.b16 %v112, %v110
  %v131 = vpack.c.b16 %v113, %v111
  %v132 = vpack.c.b16 %v116, %v114
  %v133 = vpack.c.b16 %v117, %v115
  %v182 = vunpack.c.l.b16 %v31
  %v183 = vunpack.c.l.b16 %v32
  %v184 = vunpack.c.l.b16 %v33
  %v185 = vunpack.c.l.b16 %v34
  %v186 = vunpack.c.l.b16 %v35
  %v187 = vunpack.c.l.b16 %v36
  %v188 = vunpack.c.l.b16 %v37
  %v189 = vunpack.c.l.b16 %v38
  %v190 = vunpack.c.l.b16 %v39
  %v191 = vunpack.c.l.b16 %v40
  %v192 = vunpack.c.l.b16 %v41
  %v193 = vunpack.c.l.b16 %v42
  %v194 = vunpack.c.l.b16 %v43
  %v195 = vunpack.c.l.b16 %v44
  %v196 = vunpack.c.l.b16 %v45
  %v197 = vunpack.c.l.b16 %v46
  %v198 = vunpack.c.l.b16 %v47
  %v199 = vunpack.c.l.b16 %v48
  %v200 = vunpack.c.l.b16 %v49
  %v201 = vunpack.c.l.b16 %v50
  %v202 = vunpack.c.l.b16 %v51
  %v203 = vunpack.c.l.b16 %v52
  %v204 = vunpack.c.l.b16 %v53
  %v205 = vunpack.c.l.b16 %v54
  %v206 = vunpack.c.l.b16 %v55
  %v207 = vunpack.c.l.b16 %v56
  %v208 = vunpack.c.l.b16 %v57
  %v209 = vunpack.c.l.b16 %v58
  %v210 = vunpack.c.l.b16 %v59
  %v211 = vunpack.c.l.b16 %v60
  %v212 = vunpack.c.l.b16 %v61
  %v213 = vunpack.c.l.b16 %v62
  %v214 = vpack.c.b16 %v183, %v182
  %v215 = vpack.c.b16 %v185, %v184
  %v216 = vpack.c.b16 %v187, %v186
  %v217 = vpack.c.b16 %v189, %v188
  %v218 = vpack.c.b16 %v191, %v190
  %v219 = vpack.c.b16 %v193, %v192
  %v220 = vpack.c.b16 %v195, %v194
  %v221 = vpack.c.b16 %v197, %v196
  %v222 = vpack.c.b16 %v199, %v198
  %v223 = vpack.c.b16 %v201, %v200
  %v224 = vpack.c.b16 %v203, %v202
  %v225 = vpack.c.b16 %v205, %v204
  %v226 = vpack.c.b16 %v207, %v206
  %v227 = vpack.c.b16 %v209, %v208
  %v228 = vpack.c.b16 %v211, %v210
  %v229 = vpack.c.b16 %v213, %v212
  %246 = vmatprep.subr.bf16.mxu0 0
  %247 = vmatpush1.bf16.msra.mxu0 %v214
  %248 = vmatprep.subr.bf16.mxu0 0
  %249 = vmatpush1.bf16.msra.mxu0 %v215
  %250 = vmatprep.subr.bf16.mxu0 0
  %251 = vmatpush1.bf16.msra.mxu0 %v216
  %252 = vmatprep.subr.bf16.mxu0 0
  %253 = vmatpush1.bf16.msra.mxu0 %v217
  %254 = vmatprep.subr.bf16.mxu0 0
  %255 = vmatpush1.bf16.msra.mxu0 %v218
  %256 = vmatprep.subr.bf16.mxu0 0
  %257 = vmatpush1.bf16.msra.mxu0 %v219
  %258 = vmatprep.subr.bf16.mxu0 0
  %259 = vmatpush1.bf16.msra.mxu0 %v220
  %260 = vmatprep.subr.bf16.mxu0 0
  %261 = vmatpush1.bf16.msra.mxu0 %v221
  %262 = vmatprep.subr.bf16.mxu0 0
  %263 = vmatpush1.bf16.msra.mxu0 %v222
  %264 = vmatprep.subr.bf16.mxu0 0
  %265 = vmatpush1.bf16.msra.mxu0 %v223
  %266 = vmatprep.subr.bf16.mxu0 0
  %267 = vmatpush1.bf16.msra.mxu0 %v224
  %268 = vmatprep.subr.bf16.mxu0 0
  %269 = vmatpush1.bf16.msra.mxu0 %v225
  %270 = vmatprep.subr.bf16.mxu0 0
  %271 = vmatpush1.bf16.msra.mxu0 %v226
  %272 = vmatprep.subr.bf16.mxu0 0
  %273 = vmatpush1.bf16.msra.mxu0 %v227
  %274 = vmatprep.subr.bf16.mxu0 0
  %275 = vmatpush1.bf16.msra.mxu0 %v228
  %276 = vmatprep.subr.bf16.mxu0 0
  %277 = vmatpush1.bf16.msra.mxu0 %v229
  %278 = vmatprep.mubr.bf16.mxu0 %v119
  %279 = vmatmul.mubr.bf16.gmra.mrb[0].mxu0 %v118
  %v280 = vpop.f32.mrb[0].mxu0
  %v281 = vadd.f32 %v68, %v280
  %v282 = vpop.f32.mrb[0].mxu0
  %v283 = vpop.f32.mrb[0].mxu0
  %v284 = vadd.f32 %v68, %v283
  %v285 = vpop.f32.mrb[0].mxu0
  %286 = vmatprep.mubr.bf16.mxu0 %v121
  %287 = vmatmul.mubr.bf16.gmra.mrb[0].mxu0 %v120
  %v288 = vpop.f32.mrb[0].mxu0
  %v289 = vadd.f32 %v68, %v288
  %v290 = vpop.f32.mrb[0].mxu0
  %v291 = vpop.f32.mrb[0].mxu0
  %v292 = vadd.f32 %v68, %v291
  %v293 = vpop.f32.mrb[0].mxu0
  %294 = vmatprep.mubr.bf16.mxu0 %v123
  %295 = vmatmul.mubr.bf16.gmra.mrb[0].mxu0 %v122
  %v296 = vpop.f32.mrb[0].mxu0
  %v297 = vadd.f32 %v68, %v296
  %v298 = vpop.f32.mrb[0].mxu0
  %v299 = vpop.f32.mrb[0].mxu0
  %v300 = vadd.f32 %v68, %v299
  %v301 = vpop.f32.mrb[0].mxu0
  %302 = vmatprep.mubr.bf16.mxu0 %v125
  %303 = vmatmul.mubr.bf16.gmra.mrb[0].mxu0 %v124
  %v304 = vpop.f32.mrb[0].mxu0
  %v305 = vadd.f32 %v68, %v304
  %v306 = vpop.f32.mrb[0].mxu0
  %v307 = vpop.f32.mrb[0].mxu0
  %v308 = vadd.f32 %v68, %v307
  %v309 = vpop.f32.mrb[0].mxu0
  %310 = vmatprep.mubr.bf16.mxu0 %v127
  %311 = vmatmul.mubr.bf16.gmra.mrb[0].mxu0 %v126
  %v312 = vpop.f32.mrb[0].mxu0
  %v313 = vadd.f32 %v68, %v312
  %v314 = vpop.f32.mrb[0].mxu0
  %v315 = vpop.f32.mrb[0].mxu0
  %v316 = vadd.f32 %v68, %v315
  %v317 = vpop.f32.mrb[0].mxu0
  %318 = vmatprep.mubr.bf16.mxu0 %v129
  %319 = vmatmul.mubr.bf16.gmra.mrb[0].mxu0 %v128
  %v320 = vpop.f32.mrb[0].mxu0
  %v321 = vadd.f32 %v68, %v320
  %v322 = vpop.f32.mrb[0].mxu0
  %v323 = vpop.f32.mrb[0].mxu0
  %v324 = vadd.f32 %v68, %v323
  %v325 = vpop.f32.mrb[0].mxu0
  %326 = vmatprep.mubr.bf16.mxu0 %v131
  %327 = vmatmul.mubr.bf16.gmra.mrb[0].mxu0 %v130
  %v328 = vpop.f32.mrb[0].mxu0
  %v329 = vadd.f32 %v68, %v328
  %v330 = vpop.f32.mrb[0].mxu0
  %v331 = vpop.f32.mrb[0].mxu0
  %v332 = vadd.f32 %v68, %v331
  %v333 = vpop.f32.mrb[0].mxu0
  %334 = vmatprep.mubr.bf16.mxu0 %v133
  %335 = vmatmul.mubr.bf16.gmra.mrb[0].mxu0 %v132
  %v336 = vpop.f32.mrb[0].mxu0
  %v337 = vadd.f32 %v68, %v336
  %v338 = vpop.f32.mrb[0].mxu0
  %v339 = vpop.f32.mrb[0].mxu0
  %v340 = vadd.f32 %v68, %v339
  %v341 = vpop.f32.mrb[0].mxu0
  %342 = vdwg.mxu0
  %vm343 = vcmp.ge.f32.partialorder %v281, 0.0
  %vm344 = vcmp.ge.f32.partialorder %v284, 0.0
  %vm345 = vcmp.ge.f32.partialorder %v289, 0.0
  %vm346 = vcmp.ge.f32.partialorder %v292, 0.0
  %vm347 = vcmp.ge.f32.partialorder %v297, 0.0
  %vm348 = vcmp.ge.f32.partialorder %v300, 0.0
  %vm349 = vcmp.ge.f32.partialorder %v305, 0.0
  %vm350 = vcmp.ge.f32.partialorder %v308, 0.0
  %vm351 = vcmp.ge.f32.partialorder %v313, 0.0
  %vm352 = vcmp.ge.f32.partialorder %v316, 0.0
  %vm353 = vcmp.ge.f32.partialorder %v321, 0.0
  %vm354 = vcmp.ge.f32.partialorder %v324, 0.0
  %vm355 = vcmp.ge.f32.partialorder %v329, 0.0
  %vm356 = vcmp.ge.f32.partialorder %v332, 0.0
  %vm357 = vcmp.ge.f32.partialorder %v337, 0.0
  %vm358 = vcmp.ge.f32.partialorder %v340, 0.0
  %v359 = vmul.f32 %v281, 0.2
  %v360 = vmul.f32 %v284, 0.2
  %v361 = vmul.f32 %v289, 0.2
  %v362 = vmul.f32 %v292, 0.2
  %v363 = vmul.f32 %v297, 0.2
  %v364 = vmul.f32 %v300, 0.2
  %v365 = vmul.f32 %v305, 0.2
  %v366 = vmul.f32 %v308, 0.2
  %v367 = vmul.f32 %v313, 0.2
  %v368 = vmul.f32 %v316, 0.2
  %v369 = vmul.f32 %v321, 0.2
  %v370 = vmul.f32 %v324, 0.2
  %v371 = vmul.f32 %v329, 0.2
  %v372 = vmul.f32 %v332, 0.2
  %v373 = vmul.f32 %v337, 0.2
  %v374 = vmul.f32 %v340, 0.2
  %v375 = vsel %vm343, %v281, %v359
  %v376 = vsel %vm344, %v284, %v360
  %v377 = vsel %vm345, %v289, %v361
  %v378 = vsel %vm346, %v292, %v362
  %v379 = vsel %vm347, %v297, %v363
  %v380 = vsel %vm348, %v300, %v364
  %v381 = vsel %vm349, %v305, %v365
  %v382 = vsel %vm350, %v308, %v366
  %v383 = vsel %vm351, %v313, %v367
  %v384 = vsel %vm352, %v316, %v368
  %v385 = vsel %vm353, %v321, %v369
  %v386 = vsel %vm354, %v324, %v370
  %v387 = vsel %vm355, %v329, %v371
  %v388 = vsel %vm356, %v332, %v372
  %v389 = vsel %vm357, %v337, %v373
  %v390 = vsel %vm358, %v340, %v374
  %v391 = vpack.c.bf16 %v376, %v375
  %v392 = vpack.c.bf16 %v378, %v377
  %v393 = vpack.c.bf16 %v380, %v379
  %v394 = vpack.c.bf16 %v382, %v381
  %v395 = vpack.c.bf16 %v384, %v383
  %v396 = vpack.c.bf16 %v386, %v385
  %v397 = vpack.c.bf16 %v388, %v387
  %v398 = vpack.c.bf16 %v390, %v389
  %v407 = vunpack.c.l.b16 %v391
  %v408 = vunpack.c.h.b16 %v391
  %v409 = vunpack.c.l.b16 %v392
  %v410 = vunpack.c.h.b16 %v392
  %v411 = vunpack.c.l.b16 %v393
  %v412 = vunpack.c.h.b16 %v393
  %v413 = vunpack.c.l.b16 %v394
  %v414 = vunpack.c.h.b16 %v394
  %v415 = vunpack.c.l.b16 %v395
  %v416 = vunpack.c.h.b16 %v395
  %v417 = vunpack.c.l.b16 %v396
  %v418 = vunpack.c.h.b16 %v396
  %v419 = vunpack.c.l.b16 %v397
  %v420 = vunpack.c.h.b16 %v397
  %v421 = vunpack.c.l.b16 %v398
  %v422 = vunpack.c.h.b16 %v398
  %v423 = vpack.c.b16 %v407, %v407
  %v424 = vpack.c.b16 %v408, %v408
  %v425 = vpack.c.b16 %v409, %v409
  %v426 = vpack.c.b16 %v410, %v410
  %v427 = vpack.c.b16 %v411, %v411
  %v428 = vpack.c.b16 %v412, %v412
  %v429 = vpack.c.b16 %v413, %v413
  %v430 = vpack.c.b16 %v414, %v414
  %v431 = vpack.c.b16 %v415, %v415
  %v432 = vpack.c.b16 %v416, %v416
  %v433 = vpack.c.b16 %v417, %v417
  %v434 = vpack.c.b16 %v418, %v418
  %v435 = vpack.c.b16 %v419, %v419
  %v436 = vpack.c.b16 %v420, %v420
  %v437 = vpack.c.b16 %v421, %v421
  %v438 = vpack.c.b16 %v422, %v422
  %vm455 = vcmask 257024
  %456 = vst.msk [vmem:[%s3] sm:$0xf] %vm455, %v423
  %457 = vst.msk [vmem:[%s3 + $0x4] sm:$0xf] %vm455, %v424
  %458 = vst.msk [vmem:[%s3 + $0x8] sm:$0xf] %vm455, %v425
  %459 = vst.msk [vmem:[%s3 + $0xc] sm:$0xf] %vm455, %v426
  %460 = vst.msk [vmem:[%s3 + $0x10] sm:$0xf] %vm455, %v427
  %461 = vst.msk [vmem:[%s3 + $0x14] sm:$0xf] %vm455, %v428
  %462 = vst.msk [vmem:[%s3 + $0x18] sm:$0xf] %vm455, %v429
  %463 = vst.msk [vmem:[%s3 + $0x1c] sm:$0xf] %vm455, %v430
  %464 = vst.msk [vmem:[%s3 + $0x20] sm:$0xf] %vm455, %v431
  %465 = vst.msk [vmem:[%s3 + $0x24] sm:$0xf] %vm455, %v432
  %466 = vst.msk [vmem:[%s3 + $0x28] sm:$0xf] %vm455, %v433
  %467 = vst.msk [vmem:[%s3 + $0x2c] sm:$0xf] %vm455, %v434
  %468 = vst.msk [vmem:[%s3 + $0x30] sm:$0xf] %vm455, %v435
  %469 = vst.msk [vmem:[%s3 + $0x34] sm:$0xf] %vm455, %v436
  %470 = vst.msk [vmem:[%s3 + $0x38] sm:$0xf] %vm455, %v437
  %471 = vst.msk [vmem:[%s3 + $0x3c] sm:$0xf] %vm455, %v438
  // Predicated region
  $region14: #{discriminator_forward.6} parent=0 // pred_check
    _
  $region15: #{discriminator_forward.6} parent=0 // pred_check_branch
    %473 = sbr.rel (0) target = $region17
  $region16: #{discriminator_forward.6} parent=0 // pred_region
    _
  $region17: #{discriminator_forward.6} parent=0 // pred_fallthru
    _
  // Predicated region
  $region18: #{discriminator_forward.6} parent=0 // pred_check
    _
  $region19: #{discriminator_forward.6} parent=0 // pred_check_branch
    %475 = sbr.rel (0) target = $region21
  $region20: #{discriminator_forward.6} parent=0 // pred_region
    _
  $region21: #{discriminator_forward.6} parent=0 // pred_fallthru
    _

// kernel: discriminator_forward.7
$region0: #{discriminator_forward.7}
  #allocation0 [shape = 'u32[]', space=smem, size = 0x4, offset = 0x4, fixed_abs, tag = 'smem constant byte address 0x4 - core index']
  #allocation1 [shape = 'u32[144,128]{1,0:T(1,128)}', space=vmem, size = 0x12000, scoped, tag = 'internal scratch']
  #allocation2 [shape = 'bf16[8,1024]{1,0:T(8,128)(2,1)}', space=vmem, size = 0x4000, scoped, tag = 'scratch operand']
  #allocation3 [shape = 'f32[1,1]{1,0:T(1,128)S(1)}', space=vmem, size = 0x200, scoped, tag = 'scoped memory for discriminator_forward.7']
  %s0 = inlined_call_operand.vmem [shape: bf16[128,512], index: 0, kind: input, shape index: {}]
  %s1 = inlined_call_operand.vmem [shape: bf16[512,64], index: 1, kind: input, shape index: {}]
  %s2 = inlined_call_operand.vmem [shape: f32[1,64], index: 2, kind: input, shape index: {}]
  %s3 = inlined_call_operand.vmem [shape: bf16[1024,64], index: 3, kind: input, shape index: {}]
  %s4 = inlined_call_operand.vmem [shape: f32[1,64], index: 4, kind: input, shape index: {}]
  %s5 = inlined_call_operand.vmem [shape: f32[64,1], index: 5, kind: input, shape index: {}]
  %s6 = inlined_call_operand.<no memory space> [shape: f32[1,1], index: 6, kind: input, shape index: {}]
  %s7 = inlined_call_operand.vmem [shape: f32[8,1], index: 7, kind: output, shape index: {}]
  %s8 = sld [smem:[#allocation0]]
  $region38: #{discriminator_forward.7} parent=0
    _
  %s10 = ssub.s32 1, %s8
  %s11 = scalar_select 0, %s10, %s8
  %v12 = vstv %s6
  %13 = vst [vmem:[#allocation3] sm:$0x1] %v12
  // Predicated region
  $region2: #{discriminator_forward.7} parent=0 // pred_check
    _
  $region3: #{discriminator_forward.7} parent=0 // pred_check_branch
    %15 = sbr.rel (0) target = $region5
  $region4: #{discriminator_forward.7} parent=0 // pred_region
    _
  $region5: #{discriminator_forward.7} parent=0 // pred_fallthru
    _
  // Predicated region
  $region6: #{discriminator_forward.7} parent=0 // pred_check
    _
  $region7: #{discriminator_forward.7} parent=0 // pred_check_branch
    %17 = sbr.rel (0) target = $region9
  $region8: #{discriminator_forward.7} parent=0 // pred_region
    _
  $region9: #{discriminator_forward.7} parent=0 // pred_fallthru
    _
  // Predicated region
  $region10: #{discriminator_forward.7} parent=0 // pred_check
    _
  $region11: #{discriminator_forward.7} parent=0 // pred_check_branch
    %19 = sbr.rel (0) target = $region13
  $region12: #{discriminator_forward.7} parent=0 // pred_region
    _
  $region13: #{discriminator_forward.7} parent=0 // pred_fallthru
    _
  // Predicated region
  $region14: #{discriminator_forward.7} parent=0 // pred_check
    _
  $region15: #{discriminator_forward.7} parent=0 // pred_check_branch
    %21 = sbr.rel (0) target = $region17
  $region16: #{discriminator_forward.7} parent=0 // pred_region
    _
  $region17: #{discriminator_forward.7} parent=0 // pred_fallthru
    _
  // Predicated region
  $region18: #{discriminator_forward.7} parent=0 // pred_check
    _
  $region19: #{discriminator_forward.7} parent=0 // pred_check_branch
    %23 = sbr.rel (0) target = $region21
  $region20: #{discriminator_forward.7} parent=0 // pred_region
    _
  $region21: #{discriminator_forward.7} parent=0 // pred_fallthru
    _
  // Predicated region
  $region22: #{discriminator_forward.7} parent=0 // pred_check
    _
  $region23: #{discriminator_forward.7} parent=0 // pred_check_branch
    %25 = sbr.rel (0) target = $region25
  $region24: #{discriminator_forward.7} parent=0 // pred_region
    _
  $region25: #{discriminator_forward.7} parent=0 // pred_fallthru
    _
  // Predicated region
  $region26: #{discriminator_forward.7} parent=0 // pred_check
    _
  $region27: #{discriminator_forward.7} parent=0 // pred_check_branch
    %27 = sbr.rel (0) target = $region29
  $region28: #{discriminator_forward.7} parent=0 // pred_region
    _
  $region29: #{discriminator_forward.7} parent=0 // pred_fallthru
    _
  %v29 = vld [vmem:[%s0] sm:$0xff]
  %v30 = vld [vmem:[%s0 + $0x8] sm:$0xff]
  %v31 = vld [vmem:[%s0 + $0x10] sm:$0xff]
  %v32 = vld [vmem:[%s0 + $0x18] sm:$0xff]
  %v33 = vld [vmem:[%s0 + $0x20] sm:$0xff]
  %v34 = vld [vmem:[%s0 + $0x28] sm:$0xff]
  %v35 = vld [vmem:[%s0 + $0x30] sm:$0xff]
  %v36 = vld [vmem:[%s0 + $0x38] sm:$0xff]
  %v37 = vld [vmem:[%s0 + $0x40] sm:$0xff]
  %v38 = vld [vmem:[%s0 + $0x48] sm:$0xff]
  %v39 = vld [vmem:[%s0 + $0x50] sm:$0xff]
  %v40 = vld [vmem:[%s0 + $0x58] sm:$0xff]
  %v41 = vld [vmem:[%s0 + $0x60] sm:$0xff]
  %v42 = vld [vmem:[%s0 + $0x68] sm:$0xff]
  %v43 = vld [vmem:[%s0 + $0x70] sm:$0xff]
  %v44 = vld [vmem:[%s0 + $0x78] sm:$0xff]
  %v45 = vld [vmem:[%s0 + $0x80] sm:$0xff]
  %v46 = vld [vmem:[%s0 + $0x88] sm:$0xff]
  %v47 = vld [vmem:[%s0 + $0x90] sm:$0xff]
  %v48 = vld [vmem:[%s0 + $0x98] sm:$0xff]
  %v49 = vld [vmem:[%s0 + $0xa0] sm:$0xff]
  %v50 = vld [vmem:[%s0 + $0xa8] sm:$0xff]
  %v51 = vld [vmem:[%s0 + $0xb0] sm:$0xff]
  %v52 = vld [vmem:[%s0 + $0xb8] sm:$0xff]
  %v53 = vld [vmem:[%s0 + $0xc0] sm:$0xff]
  %v54 = vld [vmem:[%s0 + $0xc8] sm:$0xff]
  %v55 = vld [vmem:[%s0 + $0xd0] sm:$0xff]
  %v56 = vld [vmem:[%s0 + $0xd8] sm:$0xff]
  %v57 = vld [vmem:[%s0 + $0xe0] sm:$0xff]
  %v58 = vld [vmem:[%s0 + $0xe8] sm:$0xff]
  %v59 = vld [vmem:[%s0 + $0xf0] sm:$0xff]
  %v60 = vld [vmem:[%s0 + $0xf8] sm:$0xff]
  %v61 = vld [vmem:[%s1] sm:$0xf]
  %v62 = vld [vmem:[%s1 + $0x4] sm:$0xf]
  %v63 = vld [vmem:[%s1 + $0x8] sm:$0xf]
  %v64 = vld [vmem:[%s1 + $0xc] sm:$0xf]
  %v65 = vld [vmem:[%s1 + $0x10] sm:$0xf]
  %v66 = vld [vmem:[%s1 + $0x14] sm:$0xf]
  %v67 = vld [vmem:[%s1 + $0x18] sm:$0xf]
  %v68 = vld [vmem:[%s1 + $0x1c] sm:$0xf]
  %v69 = vld [vmem:[%s1 + $0x20] sm:$0xf]
  %v70 = vld [vmem:[%s1 + $0x24] sm:$0xf]
  %v71 = vld [vmem:[%s1 + $0x28] sm:$0xf]
  %v72 = vld [vmem:[%s1 + $0x2c] sm:$0xf]
  %v73 = vld [vmem:[%s1 + $0x30] sm:$0xf]
  %v74 = vld [vmem:[%s1 + $0x34] sm:$0xf]
  %v75 = vld [vmem:[%s1 + $0x38] sm:$0xf]
  %v76 = vld [vmem:[%s1 + $0x3c] sm:$0xf]
  %v77 = vld [vmem:[%s1 + $0x40] sm:$0xf]
  %v78 = vld [vmem:[%s1 + $0x44] sm:$0xf]
  %v79 = vld [vmem:[%s1 + $0x48] sm:$0xf]
  %v80 = vld [vmem:[%s1 + $0x4c] sm:$0xf]
  %v81 = vld [vmem:[%s1 + $0x50] sm:$0xf]
  %v82 = vld [vmem:[%s1 + $0x54] sm:$0xf]
  %v83 = vld [vmem:[%s1 + $0x58] sm:$0xf]
  %v84 = vld [vmem:[%s1 + $0x5c] sm:$0xf]
  %v85 = vld [vmem:[%s1 + $0x60] sm:$0xf]
  %v86 = vld [vmem:[%s1 + $0x64] sm:$0xf]
  %v87 = vld [vmem:[%s1 + $0x68] sm:$0xf]
  %v88 = vld [vmem:[%s1 + $0x6c] sm:$0xf]
  %v89 = vld [vmem:[%s1 + $0x70] sm:$0xf]
  %v90 = vld [vmem:[%s1 + $0x74] sm:$0xf]
  %v91 = vld [vmem:[%s1 + $0x78] sm:$0xf]
  %v92 = vld [vmem:[%s1 + $0x7c] sm:$0xf]
  %v93 = vld [vmem:[%s1 + $0x80] sm:$0xf]
  %v94 = vld [vmem:[%s1 + $0x84] sm:$0xf]
  %v95 = vld [vmem:[%s1 + $0x88] sm:$0xf]
  %v96 = vld [vmem:[%s1 + $0x8c] sm:$0xf]
  %v97 = vld [vmem:[%s1 + $0x90] sm:$0xf]
  %v98 = vld [vmem:[%s1 + $0x94] sm:$0xf]
  %v99 = vld [vmem:[%s1 + $0x98] sm:$0xf]
  %v100 = vld [vmem:[%s1 + $0x9c] sm:$0xf]
  %v101 = vld [vmem:[%s1 + $0xa0] sm:$0xf]
  %v102 = vld [vmem:[%s1 + $0xa4] sm:$0xf]
  %v103 = vld [vmem:[%s1 + $0xa8] sm:$0xf]
  %v104 = vld [vmem:[%s1 + $0xac] sm:$0xf]
  %v105 = vld [vmem:[%s1 + $0xb0] sm:$0xf]
  %v106 = vld [vmem:[%s1 + $0xb4] sm:$0xf]
  %v107 = vld [vmem:[%s1 + $0xb8] sm:$0xf]
  %v108 = vld [vmem:[%s1 + $0xbc] sm:$0xf]
  %v109 = vld [vmem:[%s1 + $0xc0] sm:$0xf]
  %v110 = vld [vmem:[%s1 + $0xc4] sm:$0xf]
  %v111 = vld [vmem:[%s1 + $0xc8] sm:$0xf]
  %v112 = vld [vmem:[%s1 + $0xcc] sm:$0xf]
  %v113 = vld [vmem:[%s1 + $0xd0] sm:$0xf]
  %v114 = vld [vmem:[%s1 + $0xd4] sm:$0xf]
  %v115 = vld [vmem:[%s1 + $0xd8] sm:$0xf]
  %v116 = vld [vmem:[%s1 + $0xdc] sm:$0xf]
  %v117 = vld [vmem:[%s1 + $0xe0] sm:$0xf]
  %v118 = vld [vmem:[%s1 + $0xe4] sm:$0xf]
  %v119 = vld [vmem:[%s1 + $0xe8] sm:$0xf]
  %v120 = vld [vmem:[%s1 + $0xec] sm:$0xf]
  %v121 = vld [vmem:[%s1 + $0xf0] sm:$0xf]
  %v122 = vld [vmem:[%s1 + $0xf4] sm:$0xf]
  %v123 = vld [vmem:[%s1 + $0xf8] sm:$0xf]
  %v124 = vld [vmem:[%s1 + $0xfc] sm:$0xf]
  %v125 = vld [vmem:[%s2] sm:$0x1]
  %v127 = vlaneseq
  %v128 = vshrl.u32 %v127, 7
  %v129 = vsub.s32 0, %v128
  %v130 = vrot.slane %v125, %v129
  %v164 = vunpack.c.l.b16 %v29
  %v165 = vunpack.c.h.b16 %v29
  %v166 = vunpack.c.l.b16 %v30
  %v167 = vunpack.c.h.b16 %v30
  %v168 = vunpack.c.l.b16 %v31
  %v169 = vunpack.c.h.b16 %v31
  %v170 = vunpack.c.l.b16 %v32
  %v171 = vunpack.c.h.b16 %v32
  %v172 = vunpack.c.l.b16 %v33
  %v173 = vunpack.c.h.b16 %v33
  %v174 = vunpack.c.l.b16 %v34
  %v175 = vunpack.c.h.b16 %v34
  %v176 = vunpack.c.l.b16 %v35
  %v177 = vunpack.c.h.b16 %v35
  %v178 = vunpack.c.l.b16 %v36
  %v179 = vunpack.c.h.b16 %v36
  %v180 = vunpack.c.l.b16 %v37
  %v181 = vunpack.c.h.b16 %v37
  %v182 = vunpack.c.l.b16 %v38
  %v183 = vunpack.c.h.b16 %v38
  %v184 = vunpack.c.l.b16 %v39
  %v185 = vunpack.c.h.b16 %v39
  %v186 = vunpack.c.l.b16 %v40
  %v187 = vunpack.c.h.b16 %v40
  %v188 = vunpack.c.l.b16 %v41
  %v189 = vunpack.c.h.b16 %v41
  %v190 = vunpack.c.l.b16 %v42
  %v191 = vunpack.c.h.b16 %v42
  %v192 = vunpack.c.l.b16 %v43
  %v193 = vunpack.c.h.b16 %v43
  %v194 = vunpack.c.l.b16 %v44
  %v195 = vunpack.c.h.b16 %v44
  %v196 = vunpack.c.l.b16 %v45
  %v197 = vunpack.c.h.b16 %v45
  %v198 = vunpack.c.l.b16 %v46
  %v199 = vunpack.c.h.b16 %v46
  %v200 = vunpack.c.l.b16 %v47
  %v201 = vunpack.c.h.b16 %v47
  %v202 = vunpack.c.l.b16 %v48
  %v203 = vunpack.c.h.b16 %v48
  %v204 = vunpack.c.l.b16 %v49
  %v205 = vunpack.c.h.b16 %v49
  %v206 = vunpack.c.l.b16 %v50
  %v207 = vunpack.c.h.b16 %v50
  %v208 = vunpack.c.l.b16 %v51
  %v209 = vunpack.c.h.b16 %v51
  %v210 = vunpack.c.l.b16 %v52
  %v211 = vunpack.c.h.b16 %v52
  %v212 = vunpack.c.l.b16 %v53
  %v213 = vunpack.c.h.b16 %v53
  %v214 = vunpack.c.l.b16 %v54
  %v215 = vunpack.c.h.b16 %v54
  %v216 = vunpack.c.l.b16 %v55
  %v217 = vunpack.c.h.b16 %v55
  %v218 = vunpack.c.l.b16 %v56
  %v219 = vunpack.c.h.b16 %v56
  %v220 = vunpack.c.l.b16 %v57
  %v221 = vunpack.c.h.b16 %v57
  %v222 = vunpack.c.l.b16 %v58
  %v223 = vunpack.c.h.b16 %v58
  %v224 = vunpack.c.l.b16 %v59
  %v225 = vunpack.c.h.b16 %v59
  %v226 = vunpack.c.l.b16 %v60
  %v227 = vunpack.c.h.b16 %v60
  %v228 = vpack.c.b16 %v168, %v164
  %v229 = vpack.c.b16 %v169, %v165
  %v230 = vpack.c.b16 %v170, %v166
  %v231 = vpack.c.b16 %v171, %v167
  %v232 = vpack.c.b16 %v176, %v172
  %v233 = vpack.c.b16 %v177, %v173
  %v234 = vpack.c.b16 %v178, %v174
  %v235 = vpack.c.b16 %v179, %v175
  %v236 = vpack.c.b16 %v184, %v180
  %v237 = vpack.c.b16 %v185, %v181
  %v238 = vpack.c.b16 %v186, %v182
  %v239 = vpack.c.b16 %v187, %v183
  %v240 = vpack.c.b16 %v192, %v188
  %v241 = vpack.c.b16 %v193, %v189
  %v242 = vpack.c.b16 %v194, %v190
  %v243 = vpack.c.b16 %v195, %v191
  %v244 = vpack.c.b16 %v200, %v196
  %v245 = vpack.c.b16 %v201, %v197
  %v246 = vpack.c.b16 %v202, %v198
  %v247 = vpack.c.b16 %v203, %v199
  %v248 = vpack.c.b16 %v208, %v204
  %v249 = vpack.c.b16 %v209, %v205
  %v250 = vpack.c.b16 %v210, %v206
  %v251 = vpack.c.b16 %v211, %v207
  %v252 = vpack.c.b16 %v216, %v212
  %v253 = vpack.c.b16 %v217, %v213
  %v254 = vpack.c.b16 %v218, %v214
  %v255 = vpack.c.b16 %v219, %v215
  %v256 = vpack.c.b16 %v224, %v220
  %v257 = vpack.c.b16 %v225, %v221
  %v258 = vpack.c.b16 %v226, %v222
  %v259 = vpack.c.b16 %v227, %v223
  %v356 = vunpack.c.l.b16 %v61
  %v357 = vunpack.c.l.b16 %v62
  %v358 = vunpack.c.l.b16 %v63
  %v359 = vunpack.c.l.b16 %v64
  %v360 = vunpack.c.l.b16 %v65
  %v361 = vunpack.c.l.b16 %v66
  %v362 = vunpack.c.l.b16 %v67
  %v363 = vunpack.c.l.b16 %v68
  %v364 = vunpack.c.l.b16 %v69
  %v365 = vunpack.c.l.b16 %v70
  %v366 = vunpack.c.l.b16 %v71
  %v367 = vunpack.c.l.b16 %v72
  %v368 = vunpack.c.l.b16 %v73
  %v369 = vunpack.c.l.b16 %v74
  %v370 = vunpack.c.l.b16 %v75
  %v371 = vunpack.c.l.b16 %v76
  %v372 = vunpack.c.l.b16 %v77
  %v373 = vunpack.c.l.b16 %v78
  %v374 = vunpack.c.l.b16 %v79
  %v375 = vunpack.c.l.b16 %v80
  %v376 = vunpack.c.l.b16 %v81
  %v377 = vunpack.c.l.b16 %v82
  %v378 = vunpack.c.l.b16 %v83
  %v379 = vunpack.c.l.b16 %v84
  %v380 = vunpack.c.l.b16 %v85
  %v381 = vunpack.c.l.b16 %v86
  %v382 = vunpack.c.l.b16 %v87
  %v383 = vunpack.c.l.b16 %v88
  %v384 = vunpack.c.l.b16 %v89
  %v385 = vunpack.c.l.b16 %v90
  %v386 = vunpack.c.l.b16 %v91
  %v387 = vunpack.c.l.b16 %v92
  %v388 = vunpack.c.l.b16 %v93
  %v389 = vunpack.c.l.b16 %v94
  %v390 = vunpack.c.l.b16 %v95
  %v391 = vunpack.c.l.b16 %v96
  %v392 = vunpack.c.l.b16 %v97
  %v393 = vunpack.c.l.b16 %v98
  %v394 = vunpack.c.l.b16 %v99
  %v395 = vunpack.c.l.b16 %v100
  %v396 = vunpack.c.l.b16 %v101
  %v397 = vunpack.c.l.b16 %v102
  %v398 = vunpack.c.l.b16 %v103
  %v399 = vunpack.c.l.b16 %v104
  %v400 = vunpack.c.l.b16 %v105
  %v401 = vunpack.c.l.b16 %v106
  %v402 = vunpack.c.l.b16 %v107
  %v403 = vunpack.c.l.b16 %v108
  %v404 = vunpack.c.l.b16 %v109
  %v405 = vunpack.c.l.b16 %v110
  %v406 = vunpack.c.l.b16 %v111
  %v407 = vunpack.c.l.b16 %v112
  %v408 = vunpack.c.l.b16 %v113
  %v409 = vunpack.c.l.b16 %v114
  %v410 = vunpack.c.l.b16 %v115
  %v411 = vunpack.c.l.b16 %v116
  %v412 = vunpack.c.l.b16 %v117
  %v413 = vunpack.c.l.b16 %v118
  %v414 = vunpack.c.l.b16 %v119
  %v415 = vunpack.c.l.b16 %v120
  %v416 = vunpack.c.l.b16 %v121
  %v417 = vunpack.c.l.b16 %v122
  %v418 = vunpack.c.l.b16 %v123
  %v419 = vunpack.c.l.b16 %v124
  %v420 = vpack.c.b16 %v357, %v356
  %v421 = vpack.c.b16 %v359, %v358
  %v422 = vpack.c.b16 %v361, %v360
  %v423 = vpack.c.b16 %v363, %v362
  %v424 = vpack.c.b16 %v365, %v364
  %v425 = vpack.c.b16 %v367, %v366
  %v426 = vpack.c.b16 %v369, %v368
  %v427 = vpack.c.b16 %v371, %v370
  %v428 = vpack.c.b16 %v373, %v372
  %v429 = vpack.c.b16 %v375, %v374
  %v430 = vpack.c.b16 %v377, %v376
  %v431 = vpack.c.b16 %v379, %v378
  %v432 = vpack.c.b16 %v381, %v380
  %v433 = vpack.c.b16 %v383, %v382
  %v434 = vpack.c.b16 %v385, %v384
  %v435 = vpack.c.b16 %v387, %v386
  %v436 = vpack.c.b16 %v389, %v388
  %v437 = vpack.c.b16 %v391, %v390
  %v438 = vpack.c.b16 %v393, %v392
  %v439 = vpack.c.b16 %v395, %v394
  %v440 = vpack.c.b16 %v397, %v396
  %v441 = vpack.c.b16 %v399, %v398
  %v442 = vpack.c.b16 %v401, %v400
  %v443 = vpack.c.b16 %v403, %v402
  %v444 = vpack.c.b16 %v405, %v404
  %v445 = vpack.c.b16 %v407, %v406
  %v446 = vpack.c.b16 %v409, %v408
  %v447 = vpack.c.b16 %v411, %v410
  %v448 = vpack.c.b16 %v413, %v412
  %v449 = vpack.c.b16 %v415, %v414
  %v450 = vpack.c.b16 %v417, %v416
  %v451 = vpack.c.b16 %v419, %v418
  %484 = vmatprep.subr.bf16.mxu0 0
  %485 = vmatpush1.bf16.msra.mxu0 %v420
  %486 = vmatprep.subr.bf16.mxu0 0
  %487 = vmatpush1.bf16.msra.mxu0 %v421
  %488 = vmatprep.subr.bf16.mxu0 0
  %489 = vmatpush1.bf16.msra.mxu0 %v422
  %490 = vmatprep.subr.bf16.mxu0 0
  %491 = vmatpush1.bf16.msra.mxu0 %v423
  %492 = vmatprep.subr.bf16.mxu0 0
  %493 = vmatpush1.bf16.msra.mxu0 %v424
  %494 = vmatprep.subr.bf16.mxu0 0
  %495 = vmatpush1.bf16.msra.mxu0 %v425
  %496 = vmatprep.subr.bf16.mxu0 0
  %497 = vmatpush1.bf16.msra.mxu0 %v426
  %498 = vmatprep.subr.bf16.mxu0 0
  %499 = vmatpush1.bf16.msra.mxu0 %v427
  %500 = vmatprep.subr.bf16.mxu0 0
  %501 = vmatpush1.bf16.msra.mxu0 %v428
  %502 = vmatprep.subr.bf16.mxu0 0
  %503 = vmatpush1.bf16.msra.mxu0 %v429
  %504 = vmatprep.subr.bf16.mxu0 0
  %505 = vmatpush1.bf16.msra.mxu0 %v430
  %506 = vmatprep.subr.bf16.mxu0 0
  %507 = vmatpush1.bf16.msra.mxu0 %v431
  %508 = vmatprep.subr.bf16.mxu0 0
  %509 = vmatpush1.bf16.msra.mxu0 %v432
  %510 = vmatprep.subr.bf16.mxu0 0
  %511 = vmatpush1.bf16.msra.mxu0 %v433
  %512 = vmatprep.subr.bf16.mxu0 0
  %513 = vmatpush1.bf16.msra.mxu0 %v434
  %514 = vmatprep.subr.bf16.mxu0 0
  %515 = vmatpush1.bf16.msra.mxu0 %v435
  %516 = vmatprep.mubr.bf16.mxu0 %v229
  %517 = vmatmul.mubr.bf16.gmra.mrb[0].mxu0 %v228
  %v518 = vpop.f32.mrb[0].mxu0
  %v519 = vadd.f32 %v130, %v518
  %v520 = vpop.f32.mrb[0].mxu0
  %v521 = vpop.f32.mrb[0].mxu0
  %v522 = vadd.f32 %v130, %v521
  %v523 = vpop.f32.mrb[0].mxu0
  %524 = vmatprep.mubr.bf16.mxu0 %v233
  %525 = vmatmul.mubr.bf16.gmra.mrb[0].mxu0 %v232
  %v526 = vpop.f32.mrb[0].mxu0
  %v527 = vadd.f32 %v130, %v526
  %v528 = vpop.f32.mrb[0].mxu0
  %v529 = vpop.f32.mrb[0].mxu0
  %v530 = vadd.f32 %v130, %v529
  %v531 = vpop.f32.mrb[0].mxu0
  %532 = vmatprep.mubr.bf16.mxu0 %v237
  %533 = vmatmul.mubr.bf16.gmra.mrb[0].mxu0 %v236
  %v534 = vpop.f32.mrb[0].mxu0
  %v535 = vadd.f32 %v130, %v534
  %v536 = vpop.f32.mrb[0].mxu0
  %v537 = vpop.f32.mrb[0].mxu0
  %v538 = vadd.f32 %v130, %v537
  %v539 = vpop.f32.mrb[0].mxu0
  %540 = vmatprep.mubr.bf16.mxu0 %v241
  %541 = vmatmul.mubr.bf16.gmra.mrb[0].mxu0 %v240
  %v542 = vpop.f32.mrb[0].mxu0
  %v543 = vadd.f32 %v130, %v542
  %v544 = vpop.f32.mrb[0].mxu0
  %v545 = vpop.f32.mrb[0].mxu0
  %v546 = vadd.f32 %v130, %v545
  %v547 = vpop.f32.mrb[0].mxu0
  %548 = vmatprep.mubr.bf16.mxu0 %v245
  %549 = vmatmul.mubr.bf16.gmra.mrb[0].mxu0 %v244
  %v550 = vpop.f32.mrb[0].mxu0
  %v551 = vadd.f32 %v130, %v550
  %v552 = vpop.f32.mrb[0].mxu0
  %v553 = vpop.f32.mrb[0].mxu0
  %v554 = vadd.f32 %v130, %v553
  %v555 = vpop.f32.mrb[0].mxu0
  %556 = vmatprep.mubr.bf16.mxu0 %v249
  %557 = vmatmul.mubr.bf16.gmra.mrb[0].mxu0 %v248
  %v558 = vpop.f32.mrb[0].mxu0
  %v559 = vadd.f32 %v130, %v558
  %v560 = vpop.f32.mrb[0].mxu0
  %v561 = vpop.f32.mrb[0].mxu0
  %v562 = vadd.f32 %v130, %v561
  %v563 = vpop.f32.mrb[0].mxu0
  %564 = vmatprep.mubr.bf16.mxu0 %v253
  %565 = vmatmul.mubr.bf16.gmra.mrb[0].mxu0 %v252
  %v566 = vpop.f32.mrb[0].mxu0
  %v567 = vadd.f32 %v130, %v566
  %v568 = vpop.f32.mrb[0].mxu0
  %v569 = vpop.f32.mrb[0].mxu0
  %v570 = vadd.f32 %v130, %v569
  %v571 = vpop.f32.mrb[0].mxu0
  %572 = vmatprep.mubr.bf16.mxu0 %v257
  %573 = vmatmul.mubr.bf16.gmra.mrb[0].mxu0 %v256
  %v574 = vpop.f32.mrb[0].mxu0
  %v575 = vadd.f32 %v130, %v574
  %v576 = vpop.f32.mrb[0].mxu0
  %v577 = vpop.f32.mrb[0].mxu0
  %v578 = vadd.f32 %v130, %v577
  %v579 = vpop.f32.mrb[0].mxu0
  %580 = vdwg.mxu0
  %581 = vmatprep.subr.bf16.mxu0 0
  %582 = vmatpush1.bf16.msra.mxu0 %v436
  %583 = vmatprep.subr.bf16.mxu0 0
  %584 = vmatpush1.bf16.msra.mxu0 %v437
  %585 = vmatprep.subr.bf16.mxu0 0
  %586 = vmatpush1.bf16.msra.mxu0 %v438
  %587 = vmatprep.subr.bf16.mxu0 0
  %588 = vmatpush1.bf16.msra.mxu0 %v439
  %589 = vmatprep.subr.bf16.mxu0 0
  %590 = vmatpush1.bf16.msra.mxu0 %v440
  %591 = vmatprep.subr.bf16.mxu0 0
  %592 = vmatpush1.bf16.msra.mxu0 %v441
  %593 = vmatprep.subr.bf16.mxu0 0
  %594 = vmatpush1.bf16.msra.mxu0 %v442
  %595 = vmatprep.subr.bf16.mxu0 0
  %596 = vmatpush1.bf16.msra.mxu0 %v443
  %597 = vmatprep.subr.bf16.mxu0 0
  %598 = vmatpush1.bf16.msra.mxu0 %v444
  %599 = vmatprep.subr.bf16.mxu0 0
  %600 = vmatpush1.bf16.msra.mxu0 %v445
  %601 = vmatprep.subr.bf16.mxu0 0
  %602 = vmatpush1.bf16.msra.mxu0 %v446
  %603 = vmatprep.subr.bf16.mxu0 0
  %604 = vmatpush1.bf16.msra.mxu0 %v447
  %605 = vmatprep.subr.bf16.mxu0 0
  %606 = vmatpush1.bf16.msra.mxu0 %v448
  %607 = vmatprep.subr.bf16.mxu0 0
  %608 = vmatpush1.bf16.msra.mxu0 %v449
  %609 = vmatprep.subr.bf16.mxu0 0
  %610 = vmatpush1.bf16.msra.mxu0 %v450
  %611 = vmatprep.subr.bf16.mxu0 0
  %612 = vmatpush1.bf16.msra.mxu0 %v451
  %613 = vmatprep.mubr.bf16.mxu0 %v231
  %614 = vmatmul.mubr.bf16.gmra.mrb[0].mxu0 %v230
  %v615 = vpop.f32.mrb[0].mxu0
  %v616 = vadd.f32 %v519, %v615
  %v617 = vpop.f32.mrb[0].mxu0
  %v618 = vpop.f32.mrb[0].mxu0
  %v619 = vadd.f32 %v522, %v618
  %v620 = vpop.f32.mrb[0].mxu0
  %621 = vmatprep.mubr.bf16.mxu0 %v235
  %622 = vmatmul.mubr.bf16.gmra.mrb[0].mxu0 %v234
  %v623 = vpop.f32.mrb[0].mxu0
  %v624 = vadd.f32 %v527, %v623
  %v625 = vpop.f32.mrb[0].mxu0
  %v626 = vpop.f32.mrb[0].mxu0
  %v627 = vadd.f32 %v530, %v626
  %v628 = vpop.f32.mrb[0].mxu0
  %629 = vmatprep.mubr.bf16.mxu0 %v239
  %630 = vmatmul.mubr.bf16.gmra.mrb[0].mxu0 %v238
  %v631 = vpop.f32.mrb[0].mxu0
  %v632 = vadd.f32 %v535, %v631
  %v633 = vpop.f32.mrb[0].mxu0
  %v634 = vpop.f32.mrb[0].mxu0
  %v635 = vadd.f32 %v538, %v634
  %v636 = vpop.f32.mrb[0].mxu0
  %637 = vmatprep.mubr.bf16.mxu0 %v243
  %638 = vmatmul.mubr.bf16.gmra.mrb[0].mxu0 %v242
  %v639 = vpop.f32.mrb[0].mxu0
  %v640 = vadd.f32 %v543, %v639
  %v641 = vpop.f32.mrb[0].mxu0
  %v642 = vpop.f32.mrb[0].mxu0
  %v643 = vadd.f32 %v546, %v642
  %v644 = vpop.f32.mrb[0].mxu0
  %645 = vmatprep.mubr.bf16.mxu0 %v247
  %646 = vmatmul.mubr.bf16.gmra.mrb[0].mxu0 %v246
  %v647 = vpop.f32.mrb[0].mxu0
  %v648 = vadd.f32 %v551, %v647
  %v649 = vpop.f32.mrb[0].mxu0
  %v650 = vpop.f32.mrb[0].mxu0
  %v651 = vadd.f32 %v554, %v650
  %v652 = vpop.f32.mrb[0].mxu0
  %653 = vmatprep.mubr.bf16.mxu0 %v251
  %654 = vmatmul.mubr.bf16.gmra.mrb[0].mxu0 %v250
  %v655 = vpop.f32.mrb[0].mxu0
  %v656 = vadd.f32 %v559, %v655
  %v657 = vpop.f32.mrb[0].mxu0
  %v658 = vpop.f32.mrb[0].mxu0
  %v659 = vadd.f32 %v562, %v658
  %v660 = vpop.f32.mrb[0].mxu0
  %661 = vmatprep.mubr.bf16.mxu0 %v255
  %662 = vmatmul.mubr.bf16.gmra.mrb[0].mxu0 %v254
  %v663 = vpop.f32.mrb[0].mxu0
  %v664 = vadd.f32 %v567, %v663
  %v665 = vpop.f32.mrb[0].mxu0
  %v666 = vpop.f32.mrb[0].mxu0
  %v667 = vadd.f32 %v570, %v666
  %v668 = vpop.f32.mrb[0].mxu0
  %669 = vmatprep.mubr.bf16.mxu0 %v259
  %670 = vmatmul.mubr.bf16.gmra.mrb[0].mxu0 %v258
  %v671 = vpop.f32.mrb[0].mxu0
  %v672 = vadd.f32 %v575, %v671
  %v673 = vpop.f32.mrb[0].mxu0
  %v674 = vpop.f32.mrb[0].mxu0
  %v675 = vadd.f32 %v578, %v674
  %v676 = vpop.f32.mrb[0].mxu0
  %677 = vdwg.mxu0
  %vm678 = vcmp.ge.f32.partialorder %v616, 0.0
  %vm679 = vcmp.ge.f32.partialorder %v619, 0.0
  %vm680 = vcmp.ge.f32.partialorder %v624, 0.0
  %vm681 = vcmp.ge.f32.partialorder %v627, 0.0
  %vm682 = vcmp.ge.f32.partialorder %v632, 0.0
  %vm683 = vcmp.ge.f32.partialorder %v635, 0.0
  %vm684 = vcmp.ge.f32.partialorder %v640, 0.0
  %vm685 = vcmp.ge.f32.partialorder %v643, 0.0
  %vm686 = vcmp.ge.f32.partialorder %v648, 0.0
  %vm687 = vcmp.ge.f32.partialorder %v651, 0.0
  %vm688 = vcmp.ge.f32.partialorder %v656, 0.0
  %vm689 = vcmp.ge.f32.partialorder %v659, 0.0
  %vm690 = vcmp.ge.f32.partialorder %v664, 0.0
  %vm691 = vcmp.ge.f32.partialorder %v667, 0.0
  %vm692 = vcmp.ge.f32.partialorder %v672, 0.0
  %vm693 = vcmp.ge.f32.partialorder %v675, 0.0
  %v694 = vmul.f32 %v616, 0.2
  %v695 = vmul.f32 %v619, 0.2
  %v696 = vmul.f32 %v624, 0.2
  %v697 = vmul.f32 %v627, 0.2
  %v698 = vmul.f32 %v632, 0.2
  %v699 = vmul.f32 %v635, 0.2
  %v700 = vmul.f32 %v640, 0.2
  %v701 = vmul.f32 %v643, 0.2
  %v702 = vmul.f32 %v648, 0.2
  %v703 = vmul.f32 %v651, 0.2
  %v704 = vmul.f32 %v656, 0.2
  %v705 = vmul.f32 %v659, 0.2
  %v706 = vmul.f32 %v664, 0.2
  %v707 = vmul.f32 %v667, 0.2
  %v708 = vmul.f32 %v672, 0.2
  %v709 = vmul.f32 %v675, 0.2
  %v710 = vsel %vm678, %v616, %v694
  %v711 = vsel %vm679, %v619, %v695
  %v712 = vsel %vm680, %v624, %v696
  %v713 = vsel %vm681, %v627, %v697
  %v714 = vsel %vm682, %v632, %v698
  %v715 = vsel %vm683, %v635, %v699
  %v716 = vsel %vm684, %v640, %v700
  %v717 = vsel %vm685, %v643, %v701
  %v718 = vsel %vm686, %v648, %v702
  %v719 = vsel %vm687, %v651, %v703
  %v720 = vsel %vm688, %v656, %v704
  %v721 = vsel %vm689, %v659, %v705
  %v722 = vsel %vm690, %v664, %v706
  %v723 = vsel %vm691, %v667, %v707
  %v724 = vsel %vm692, %v672, %v708
  %v725 = vsel %vm693, %v675, %v709
  %v726 = vpack.c.bf16 %v710, %v710
  %vm727 = vcmask 519168
  %728 = vst.msk [vmem:[#allocation2] sm:$0xf] %vm727, %v726
  %v729 = vpack.c.bf16 %v711, %v711
  %v731 = vunpack.c.l.b16 %v729
  %v732 = vpack.c.b16 %v731, %v731
  %733 = vrot.lane.b32.xlu0 %v732, 64
  %v734 = vpop.permute.xlu0 %733
  %vm736 = vcmask 1043968
  %737 = vst.msk [vmem:[#allocation2] sm:$0xf] %vm736, %v734
  %v738 = vpack.c.bf16 %v712, %v712
  %739 = vst.msk [vmem:[#allocation2 + $0x4] sm:$0xf] %vm727, %v738
  %v740 = vpack.c.bf16 %v713, %v713
  %v742 = vunpack.c.l.b16 %v740
  %v743 = vpack.c.b16 %v742, %v742
  %744 = vrot.lane.b32.xlu0 %v743, 64
  %v745 = vpop.permute.xlu0 %744
  %747 = vst.msk [vmem:[#allocation2 + $0x4] sm:$0xf] %vm736, %v745
  %v748 = vpack.c.bf16 %v714, %v714
  %749 = vst.msk [vmem:[#allocation2 + $0x8] sm:$0xf] %vm727, %v748
  %v750 = vpack.c.bf16 %v715, %v715
  %v752 = vunpack.c.l.b16 %v750
  %v753 = vpack.c.b16 %v752, %v752
  %754 = vrot.lane.b32.xlu0 %v753, 64
  %v755 = vpop.permute.xlu0 %754
  %757 = vst.msk [vmem:[#allocation2 + $0x8] sm:$0xf] %vm736, %v755
  %v758 = vpack.c.bf16 %v716, %v716
  %759 = vst.msk [vmem:[#allocation2 + $0xc] sm:$0xf] %vm727, %v758
  %v760 = vpack.c.bf16 %v717, %v717
  %v762 = vunpack.c.l.b16 %v760
  %v763 = vpack.c.b16 %v762, %v762
  %764 = vrot.lane.b32.xlu0 %v763, 64
  %v765 = vpop.permute.xlu0 %764
  %767 = vst.msk [vmem:[#allocation2 + $0xc] sm:$0xf] %vm736, %v765
  %v768 = vpack.c.bf16 %v718, %v718
  %769 = vst.msk [vmem:[#allocation2 + $0x10] sm:$0xf] %vm727, %v768
  %v770 = vpack.c.bf16 %v719, %v719
  %v772 = vunpack.c.l.b16 %v770
  %v773 = vpack.c.b16 %v772, %v772
  %774 = vrot.lane.b32.xlu0 %v773, 64
  %v775 = vpop.permute.xlu0 %774
  %777 = vst.msk [vmem:[#allocation2 + $0x10] sm:$0xf] %vm736, %v775
  %v778 = vpack.c.bf16 %v720, %v720
  %779 = vst.msk [vmem:[#allocation2 + $0x14] sm:$0xf] %vm727, %v778
  %v780 = vpack.c.bf16 %v721, %v721
  %v782 = vunpack.c.l.b16 %v780
  %v783 = vpack.c.b16 %v782, %v782
  %784 = vrot.lane.b32.xlu0 %v783, 64
  %v785 = vpop.permute.xlu0 %784
  %787 = vst.msk [vmem:[#allocation2 + $0x14] sm:$0xf] %vm736, %v785
  %v788 = vpack.c.bf16 %v722, %v722
  %789 = vst.msk [vmem:[#allocation2 + $0x18] sm:$0xf] %vm727, %v788
  %v790 = vpack.c.bf16 %v723, %v723
  %v792 = vunpack.c.l.b16 %v790
  %v793 = vpack.c.b16 %v792, %v792
  %794 = vrot.lane.b32.xlu0 %v793, 64
  %v795 = vpop.permute.xlu0 %794
  %797 = vst.msk [vmem:[#allocation2 + $0x18] sm:$0xf] %vm736, %v795
  %v798 = vpack.c.bf16 %v724, %v724
  %799 = vst.msk [vmem:[#allocation2 + $0x1c] sm:$0xf] %vm727, %v798
  %v800 = vpack.c.bf16 %v725, %v725
  %v802 = vunpack.c.l.b16 %v800
  %v803 = vpack.c.b16 %v802, %v802
  %804 = vrot.lane.b32.xlu0 %v803, 64
  %v805 = vpop.permute.xlu0 %804
  %807 = vst.msk [vmem:[#allocation2 + $0x1c] sm:$0xf] %vm736, %v805
  %v808 = vld [vmem:[#allocation2] sm:$0xff]
  %v809 = vld [vmem:[#allocation2 + $0x8] sm:$0xff]
  %v810 = vld [vmem:[#allocation2 + $0x10] sm:$0xff]
  %v811 = vld [vmem:[#allocation2 + $0x18] sm:$0xff]
  %v812 = vld [vmem:[%s3] sm:$0xf]
  %v813 = vld [vmem:[%s3 + $0x4] sm:$0xf]
  %v814 = vld [vmem:[%s3 + $0x8] sm:$0xf]
  %v815 = vld [vmem:[%s3 + $0xc] sm:$0xf]
  %v816 = vld [vmem:[%s3 + $0x10] sm:$0xf]
  %v817 = vld [vmem:[%s3 + $0x14] sm:$0xf]
  %v818 = vld [vmem:[%s3 + $0x18] sm:$0xf]
  %v819 = vld [vmem:[%s3 + $0x1c] sm:$0xf]
  %v820 = vld [vmem:[%s3 + $0x20] sm:$0xf]
  %v821 = vld [vmem:[%s3 + $0x24] sm:$0xf]
  %v822 = vld [vmem:[%s3 + $0x28] sm:$0xf]
  %v823 = vld [vmem:[%s3 + $0x2c] sm:$0xf]
  %v824 = vld [vmem:[%s3 + $0x30] sm:$0xf]
  %v825 = vld [vmem:[%s3 + $0x34] sm:$0xf]
  %v826 = vld [vmem:[%s3 + $0x38] sm:$0xf]
  %v827 = vld [vmem:[%s3 + $0x3c] sm:$0xf]
  %v828 = vld [vmem:[%s3 + $0x40] sm:$0xf]
  %v829 = vld [vmem:[%s3 + $0x44] sm:$0xf]
  %v830 = vld [vmem:[%s3 + $0x48] sm:$0xf]
  %v831 = vld [vmem:[%s3 + $0x4c] sm:$0xf]
  %v832 = vld [vmem:[%s3 + $0x50] sm:$0xf]
  %v833 = vld [vmem:[%s3 + $0x54] sm:$0xf]
  %v834 = vld [vmem:[%s3 + $0x58] sm:$0xf]
  %v835 = vld [vmem:[%s3 + $0x5c] sm:$0xf]
  %v836 = vld [vmem:[%s3 + $0x60] sm:$0xf]
  %v837 = vld [vmem:[%s3 + $0x64] sm:$0xf]
  %v838 = vld [vmem:[%s3 + $0x68] sm:$0xf]
  %v839 = vld [vmem:[%s3 + $0x6c] sm:$0xf]
  %v840 = vld [vmem:[%s3 + $0x70] sm:$0xf]
  %v841 = vld [vmem:[%s3 + $0x74] sm:$0xf]
  %v842 = vld [vmem:[%s3 + $0x78] sm:$0xf]
  %v843 = vld [vmem:[%s3 + $0x7c] sm:$0xf]
  %v844 = vld [vmem:[%s3 + $0x80] sm:$0xf]
  %v845 = vld [vmem:[%s3 + $0x84] sm:$0xf]
  %v846 = vld [vmem:[%s3 + $0x88] sm:$0xf]
  %v847 = vld [vmem:[%s3 + $0x8c] sm:$0xf]
  %v848 = vld [vmem:[%s3 + $0x90] sm:$0xf]
  %v849 = vld [vmem:[%s3 + $0x94] sm:$0xf]
  %v850 = vld [vmem:[%s3 + $0x98] sm:$0xf]
  %v851 = vld [vmem:[%s3 + $0x9c] sm:$0xf]
  %v852 = vld [vmem:[%s3 + $0xa0] sm:$0xf]
  %v853 = vld [vmem:[%s3 + $0xa4] sm:$0xf]
  %v854 = vld [vmem:[%s3 + $0xa8] sm:$0xf]
  %v855 = vld [vmem:[%s3 + $0xac] sm:$0xf]
  %v856 = vld [vmem:[%s3 + $0xb0] sm:$0xf]
  %v857 = vld [vmem:[%s3 + $0xb4] sm:$0xf]
  %v858 = vld [vmem:[%s3 + $0xb8] sm:$0xf]
  %v859 = vld [vmem:[%s3 + $0xbc] sm:$0xf]
  %v860 = vld [vmem:[%s3 + $0xc0] sm:$0xf]
  %v861 = vld [vmem:[%s3 + $0xc4] sm:$0xf]
  %v862 = vld [vmem:[%s3 + $0xc8] sm:$0xf]
  %v863 = vld [vmem:[%s3 + $0xcc] sm:$0xf]
  %v864 = vld [vmem:[%s3 + $0xd0] sm:$0xf]
  %v865 = vld [vmem:[%s3 + $0xd4] sm:$0xf]
  %v866 = vld [vmem:[%s3 + $0xd8] sm:$0xf]
  %v867 = vld [vmem:[%s3 + $0xdc] sm:$0xf]
  %v868 = vld [vmem:[%s3 + $0xe0] sm:$0xf]
  %v869 = vld [vmem:[%s3 + $0xe4] sm:$0xf]
  %v870 = vld [vmem:[%s3 + $0xe8] sm:$0xf]
  %v871 = vld [vmem:[%s3 + $0xec] sm:$0xf]
  %v872 = vld [vmem:[%s3 + $0xf0] sm:$0xf]
  %v873 = vld [vmem:[%s3 + $0xf4] sm:$0xf]
  %v874 = vld [vmem:[%s3 + $0xf8] sm:$0xf]
  %v875 = vld [vmem:[%s3 + $0xfc] sm:$0xf]
  %v876 = vld [vmem:[%s3 + $0x100] sm:$0xf]
  %v877 = vld [vmem:[%s3 + $0x104] sm:$0xf]
  %v878 = vld [vmem:[%s3 + $0x108] sm:$0xf]
  %v879 = vld [vmem:[%s3 + $0x10c] sm:$0xf]
  %v880 = vld [vmem:[%s3 + $0x110] sm:$0xf]
  %v881 = vld [vmem:[%s3 + $0x114] sm:$0xf]
  %v882 = vld [vmem:[%s3 + $0x118] sm:$0xf]
  %v883 = vld [vmem:[%s3 + $0x11c] sm:$0xf]
  %v884 = vld [vmem:[%s3 + $0x120] sm:$0xf]
  %v885 = vld [vmem:[%s3 + $0x124] sm:$0xf]
  %v886 = vld [vmem:[%s3 + $0x128] sm:$0xf]
  %v887 = vld [vmem:[%s3 + $0x12c] sm:$0xf]
  %v888 = vld [vmem:[%s3 + $0x130] sm:$0xf]
  %v889 = vld [vmem:[%s3 + $0x134] sm:$0xf]
  %v890 = vld [vmem:[%s3 + $0x138] sm:$0xf]
  %v891 = vld [vmem:[%s3 + $0x13c] sm:$0xf]
  %v892 = vld [vmem:[%s3 + $0x140] sm:$0xf]
  %v893 = vld [vmem:[%s3 + $0x144] sm:$0xf]
  %v894 = vld [vmem:[%s3 + $0x148] sm:$0xf]
  %v895 = vld [vmem:[%s3 + $0x14c] sm:$0xf]
  %v896 = vld [vmem:[%s3 + $0x150] sm:$0xf]
  %v897 = vld [vmem:[%s3 + $0x154] sm:$0xf]
  %v898 = vld [vmem:[%s3 + $0x158] sm:$0xf]
  %v899 = vld [vmem:[%s3 + $0x15c] sm:$0xf]
  %v900 = vld [vmem:[%s3 + $0x160] sm:$0xf]
  %v901 = vld [vmem:[%s3 + $0x164] sm:$0xf]
  %v902 = vld [vmem:[%s3 + $0x168] sm:$0xf]
  %v903 = vld [vmem:[%s3 + $0x16c] sm:$0xf]
  %v904 = vld [vmem:[%s3 + $0x170] sm:$0xf]
  %v905 = vld [vmem:[%s3 + $0x174] sm:$0xf]
  %v906 = vld [vmem:[%s3 + $0x178] sm:$0xf]
  %v907 = vld [vmem:[%s3 + $0x17c] sm:$0xf]
  %v908 = vld [vmem:[%s3 + $0x180] sm:$0xf]
  %v909 = vld [vmem:[%s3 + $0x184] sm:$0xf]
  %v910 = vld [vmem:[%s3 + $0x188] sm:$0xf]
  %v911 = vld [vmem:[%s3 + $0x18c] sm:$0xf]
  %v912 = vld [vmem:[%s3 + $0x190] sm:$0xf]
  %v913 = vld [vmem:[%s3 + $0x194] sm:$0xf]
  %v914 = vld [vmem:[%s3 + $0x198] sm:$0xf]
  %v915 = vld [vmem:[%s3 + $0x19c] sm:$0xf]
  %v916 = vld [vmem:[%s3 + $0x1a0] sm:$0xf]
  %v917 = vld [vmem:[%s3 + $0x1a4] sm:$0xf]
  %v918 = vld [vmem:[%s3 + $0x1a8] sm:$0xf]
  %v919 = vld [vmem:[%s3 + $0x1ac] sm:$0xf]
  %v920 = vld [vmem:[%s3 + $0x1b0] sm:$0xf]
  %v921 = vld [vmem:[%s3 + $0x1b4] sm:$0xf]
  %v922 = vld [vmem:[%s3 + $0x1b8] sm:$0xf]
  %v923 = vld [vmem:[%s3 + $0x1bc] sm:$0xf]
  %v924 = vld [vmem:[%s3 + $0x1c0] sm:$0xf]
  %v925 = vld [vmem:[%s3 + $0x1c4] sm:$0xf]
  %v926 = vld [vmem:[%s3 + $0x1c8] sm:$0xf]
  %v927 = vld [vmem:[%s3 + $0x1cc] sm:$0xf]
  %v928 = vld [vmem:[%s3 + $0x1d0] sm:$0xf]
  %v929 = vld [vmem:[%s3 + $0x1d4] sm:$0xf]
  %v930 = vld [vmem:[%s3 + $0x1d8] sm:$0xf]
  %v931 = vld [vmem:[%s3 + $0x1dc] sm:$0xf]
  %v932 = vld [vmem:[%s3 + $0x1e0] sm:$0xf]
  %v933 = vld [vmem:[%s3 + $0x1e4] sm:$0xf]
  %v934 = vld [vmem:[%s3 + $0x1e8] sm:$0xf]
  %v935 = vld [vmem:[%s3 + $0x1ec] sm:$0xf]
  %v936 = vld [vmem:[%s3 + $0x1f0] sm:$0xf]
  %v937 = vld [vmem:[%s3 + $0x1f4] sm:$0xf]
  %v938 = vld [vmem:[%s3 + $0x1f8] sm:$0xf]
  %v939 = vld [vmem:[%s3 + $0x1fc] sm:$0xf]
  %v940 = vld [vmem:[%s4] sm:$0x1]
  %v942 = vlaneseq
  %v943 = vshrl.u32 %v942, 7
  %v944 = vsub.s32 0, %v943
  %v945 = vrot.slane %v940, %v944
  %v951 = vunpack.c.l.b16 %v808
  %v952 = vunpack.c.h.b16 %v808
  %v953 = vunpack.c.l.b16 %v809
  %v954 = vunpack.c.h.b16 %v809
  %v955 = vunpack.c.l.b16 %v810
  %v956 = vunpack.c.h.b16 %v810
  %v957 = vunpack.c.l.b16 %v811
  %v958 = vunpack.c.h.b16 %v811
  %v959 = vpack.c.b16 %v951, %v951
  %v960 = vpack.c.b16 %v952, %v952
  %v961 = vpack.c.b16 %v953, %v953
  %v962 = vpack.c.b16 %v954, %v954
  %v963 = vpack.c.b16 %v955, %v955
  %v964 = vpack.c.b16 %v956, %v956
  %v965 = vpack.c.b16 %v957, %v957
  %v966 = vpack.c.b16 %v958, %v958
  %v1103 = vunpack.c.l.b16 %v812
  %v1104 = vunpack.c.l.b16 %v813
  %v1105 = vunpack.c.l.b16 %v814
  %v1106 = vunpack.c.l.b16 %v815
  %v1107 = vunpack.c.l.b16 %v816
  %v1108 = vunpack.c.l.b16 %v817
  %v1109 = vunpack.c.l.b16 %v818
  %v1110 = vunpack.c.l.b16 %v819
  %v1111 = vunpack.c.l.b16 %v820
  %v1112 = vunpack.c.l.b16 %v821
  %v1113 = vunpack.c.l.b16 %v822
  %v1114 = vunpack.c.l.b16 %v823
  %v1115 = vunpack.c.l.b16 %v824
  %v1116 = vunpack.c.l.b16 %v825
  %v1117 = vunpack.c.l.b16 %v826
  %v1118 = vunpack.c.l.b16 %v827
  %v1119 = vunpack.c.l.b16 %v828
  %v1120 = vunpack.c.l.b16 %v829
  %v1121 = vunpack.c.l.b16 %v830
  %v1122 = vunpack.c.l.b16 %v831
  %v1123 = vunpack.c.l.b16 %v832
  %v1124 = vunpack.c.l.b16 %v833
  %v1125 = vunpack.c.l.b16 %v834
  %v1126 = vunpack.c.l.b16 %v835
  %v1127 = vunpack.c.l.b16 %v836
  %v1128 = vunpack.c.l.b16 %v837
  %v1129 = vunpack.c.l.b16 %v838
  %v1130 = vunpack.c.l.b16 %v839
  %v1131 = vunpack.c.l.b16 %v840
  %v1132 = vunpack.c.l.b16 %v841
  %v1133 = vunpack.c.l.b16 %v842
  %v1134 = vunpack.c.l.b16 %v843
  %v1135 = vunpack.c.l.b16 %v844
  %v1136 = vunpack.c.l.b16 %v845
  %v1137 = vunpack.c.l.b16 %v846
  %v1138 = vunpack.c.l.b16 %v847
  %v1139 = vunpack.c.l.b16 %v848
  %v1140 = vunpack.c.l.b16 %v849
  %v1141 = vunpack.c.l.b16 %v850
  %v1142 = vunpack.c.l.b16 %v851
  %v1143 = vunpack.c.l.b16 %v852
  %v1144 = vunpack.c.l.b16 %v853
  %v1145 = vunpack.c.l.b16 %v854
  %v1146 = vunpack.c.l.b16 %v855
  %v1147 = vunpack.c.l.b16 %v856
  %v1148 = vunpack.c.l.b16 %v857
  %v1149 = vunpack.c.l.b16 %v858
  %v1150 = vunpack.c.l.b16 %v859
  %v1151 = vunpack.c.l.b16 %v860
  %v1152 = vunpack.c.l.b16 %v861
  %v1153 = vunpack.c.l.b16 %v862
  %v1154 = vunpack.c.l.b16 %v863
  %v1155 = vunpack.c.l.b16 %v864
  %v1156 = vunpack.c.l.b16 %v865
  %v1157 = vunpack.c.l.b16 %v866
  %v1158 = vunpack.c.l.b16 %v867
  %v1159 = vunpack.c.l.b16 %v868
  %v1160 = vunpack.c.l.b16 %v869
  %v1161 = vunpack.c.l.b16 %v870
  %v1162 = vunpack.c.l.b16 %v871
  %v1163 = vunpack.c.l.b16 %v872
  %v1164 = vunpack.c.l.b16 %v873
  %v1165 = vunpack.c.l.b16 %v874
  %v1166 = vunpack.c.l.b16 %v875
  %v1167 = vunpack.c.l.b16 %v876
  %v1168 = vunpack.c.l.b16 %v877
  %v1169 = vunpack.c.l.b16 %v878
  %v1170 = vunpack.c.l.b16 %v879
  %v1171 = vunpack.c.l.b16 %v880
  %v1172 = vunpack.c.l.b16 %v881
  %v1173 = vunpack.c.l.b16 %v882
  %v1174 = vunpack.c.l.b16 %v883
  %v1175 = vunpack.c.l.b16 %v884
  %v1176 = vunpack.c.l.b16 %v885
  %v1177 = vunpack.c.l.b16 %v886
  %v1178 = vunpack.c.l.b16 %v887
  %v1179 = vunpack.c.l.b16 %v888
  %v1180 = vunpack.c.l.b16 %v889
  %v1181 = vunpack.c.l.b16 %v890
  %v1182 = vunpack.c.l.b16 %v891
  %v1183 = vunpack.c.l.b16 %v892
  %v1184 = vunpack.c.l.b16 %v893
  %v1185 = vunpack.c.l.b16 %v894
  %v1186 = vunpack.c.l.b16 %v895
  %v1187 = vunpack.c.l.b16 %v896
  %v1188 = vunpack.c.l.b16 %v897
  %v1189 = vunpack.c.l.b16 %v898
  %v1190 = vunpack.c.l.b16 %v899
  %v1191 = vunpack.c.l.b16 %v900
  %v1192 = vunpack.c.l.b16 %v901
  %v1193 = vunpack.c.l.b16 %v902
  %v1194 = vunpack.c.l.b16 %v903
  %v1195 = vunpack.c.l.b16 %v904
  %v1196 = vunpack.c.l.b16 %v905
  %v1197 = vunpack.c.l.b16 %v906
  %v1198 = vunpack.c.l.b16 %v907
  %v1199 = vunpack.c.l.b16 %v908
  %v1200 = vunpack.c.l.b16 %v909
  %v1201 = vunpack.c.l.b16 %v910
  %v1202 = vunpack.c.l.b16 %v911
  %v1203 = vunpack.c.l.b16 %v912
  %v1204 = vunpack.c.l.b16 %v913
  %v1205 = vunpack.c.l.b16 %v914
  %v1206 = vunpack.c.l.b16 %v915
  %v1207 = vunpack.c.l.b16 %v916
  %v1208 = vunpack.c.l.b16 %v917
  %v1209 = vunpack.c.l.b16 %v918
  %v1210 = vunpack.c.l.b16 %v919
  %v1211 = vunpack.c.l.b16 %v920
  %v1212 = vunpack.c.l.b16 %v921
  %v1213 = vunpack.c.l.b16 %v922
  %v1214 = vunpack.c.l.b16 %v923
  %v1215 = vunpack.c.l.b16 %v924
  %v1216 = vunpack.c.l.b16 %v925
  %v1217 = vunpack.c.l.b16 %v926
  %v1218 = vunpack.c.l.b16 %v927
  %v1219 = vunpack.c.l.b16 %v928
  %v1220 = vunpack.c.l.b16 %v929
  %v1221 = vunpack.c.l.b16 %v930
  %v1222 = vunpack.c.l.b16 %v931
  %v1223 = vunpack.c.l.b16 %v932
  %v1224 = vunpack.c.l.b16 %v933
  %v1225 = vunpack.c.l.b16 %v934
  %v1226 = vunpack.c.l.b16 %v935
  %v1227 = vunpack.c.l.b16 %v936
  %v1228 = vunpack.c.l.b16 %v937
  %v1229 = vunpack.c.l.b16 %v938
  %v1230 = vunpack.c.l.b16 %v939
  %v1231 = vpack.c.b16 %v1104, %v1103
  %v1232 = vpack.c.b16 %v1106, %v1105
  %v1233 = vpack.c.b16 %v1108, %v1107
  %v1234 = vpack.c.b16 %v1110, %v1109
  %v1235 = vpack.c.b16 %v1112, %v1111
  %v1236 = vpack.c.b16 %v1114, %v1113
  %v1237 = vpack.c.b16 %v1116, %v1115
  %v1238 = vpack.c.b16 %v1118, %v1117
  %v1239 = vpack.c.b16 %v1120, %v1119
  %v1240 = vpack.c.b16 %v1122, %v1121
  %v1241 = vpack.c.b16 %v1124, %v1123
  %v1242 = vpack.c.b16 %v1126, %v1125
  %v1243 = vpack.c.b16 %v1128, %v1127
  %v1244 = vpack.c.b16 %v1130, %v1129
  %v1245 = vpack.c.b16 %v1132, %v1131
  %v1246 = vpack.c.b16 %v1134, %v1133
  %v1247 = vpack.c.b16 %v1136, %v1135
  %v1248 = vpack.c.b16 %v1138, %v1137
  %v1249 = vpack.c.b16 %v1140, %v1139
  %v1250 = vpack.c.b16 %v1142, %v1141
  %v1251 = vpack.c.b16 %v1144, %v1143
  %v1252 = vpack.c.b16 %v1146, %v1145
  %v1253 = vpack.c.b16 %v1148, %v1147
  %v1254 = vpack.c.b16 %v1150, %v1149
  %v1255 = vpack.c.b16 %v1152, %v1151
  %v1256 = vpack.c.b16 %v1154, %v1153
  %v1257 = vpack.c.b16 %v1156, %v1155
  %v1258 = vpack.c.b16 %v1158, %v1157
  %v1259 = vpack.c.b16 %v1160, %v1159
  %v1260 = vpack.c.b16 %v1162, %v1161
  %v1261 = vpack.c.b16 %v1164, %v1163
  %v1262 = vpack.c.b16 %v1166, %v1165
  %v1263 = vpack.c.b16 %v1168, %v1167
  %v1264 = vpack.c.b16 %v1170, %v1169
  %v1265 = vpack.c.b16 %v1172, %v1171
  %v1266 = vpack.c.b16 %v1174, %v1173
  %v1267 = vpack.c.b16 %v1176, %v1175
  %v1268 = vpack.c.b16 %v1178, %v1177
  %v1269 = vpack.c.b16 %v1180, %v1179
  %v1270 = vpack.c.b16 %v1182, %v1181
  %v1271 = vpack.c.b16 %v1184, %v1183
  %v1272 = vpack.c.b16 %v1186, %v1185
  %v1273 = vpack.c.b16 %v1188, %v1187
  %v1274 = vpack.c.b16 %v1190, %v1189
  %v1275 = vpack.c.b16 %v1192, %v1191
  %v1276 = vpack.c.b16 %v1194, %v1193
  %v1277 = vpack.c.b16 %v1196, %v1195
  %v1278 = vpack.c.b16 %v1198, %v1197
  %v1279 = vpack.c.b16 %v1200, %v1199
  %v1280 = vpack.c.b16 %v1202, %v1201
  %v1281 = vpack.c.b16 %v1204, %v1203
  %v1282 = vpack.c.b16 %v1206, %v1205
  %v1283 = vpack.c.b16 %v1208, %v1207
  %v1284 = vpack.c.b16 %v1210, %v1209
  %v1285 = vpack.c.b16 %v1212, %v1211
  %v1286 = vpack.c.b16 %v1214, %v1213
  %v1287 = vpack.c.b16 %v1216, %v1215
  %v1288 = vpack.c.b16 %v1218, %v1217
  %v1289 = vpack.c.b16 %v1220, %v1219
  %v1290 = vpack.c.b16 %v1222, %v1221
  %v1291 = vpack.c.b16 %v1224, %v1223
  %v1292 = vpack.c.b16 %v1226, %v1225
  %v1293 = vpack.c.b16 %v1228, %v1227
  %v1294 = vpack.c.b16 %v1230, %v1229
  %1359 = vmatprep.subr.bf16.mxu0 0
  %1360 = vmatpush1.bf16.msra.mxu0 %v1231
  %1361 = vmatprep.subr.bf16.mxu0 0
  %1362 = vmatpush1.bf16.msra.mxu0 %v1232
  %1363 = vmatprep.subr.bf16.mxu0 0
  %1364 = vmatpush1.bf16.msra.mxu0 %v1233
  %1365 = vmatprep.subr.bf16.mxu0 0
  %1366 = vmatpush1.bf16.msra.mxu0 %v1234
  %1367 = vmatprep.subr.bf16.mxu0 0
  %1368 = vmatpush1.bf16.msra.mxu0 %v1235
  %1369 = vmatprep.subr.bf16.mxu0 0
  %1370 = vmatpush1.bf16.msra.mxu0 %v1236
  %1371 = vmatprep.subr.bf16.mxu0 0
  %1372 = vmatpush1.bf16.msra.mxu0 %v1237
  %1373 = vmatprep.subr.bf16.mxu0 0
  %1374 = vmatpush1.bf16.msra.mxu0 %v1238
  %1375 = vmatprep.subr.bf16.mxu0 0
  %1376 = vmatpush1.bf16.msra.mxu0 %v1239
  %1377 = vmatprep.subr.bf16.mxu0 0
  %1378 = vmatpush1.bf16.msra.mxu0 %v1240
  %1379 = vmatprep.subr.bf16.mxu0 0
  %1380 = vmatpush1.bf16.msra.mxu0 %v1241
  %1381 = vmatprep.subr.bf16.mxu0 0
  %1382 = vmatpush1.bf16.msra.mxu0 %v1242
  %1383 = vmatprep.subr.bf16.mxu0 0
  %1384 = vmatpush1.bf16.msra.mxu0 %v1243
  %1385 = vmatprep.subr.bf16.mxu0 0
  %1386 = vmatpush1.bf16.msra.mxu0 %v1244
  %1387 = vmatprep.subr.bf16.mxu0 0
  %1388 = vmatpush1.bf16.msra.mxu0 %v1245
  %1389 = vmatprep.subr.bf16.mxu0 0
  %1390 = vmatpush1.bf16.msra.mxu0 %v1246
  %1391 = vmatprep.mubr.bf16.mxu0 %v960
  %1392 = vmatmul.mubr.bf16.gmra.mrb[0].mxu0 %v959
  %v1393 = vpop.f32.mrb[0].mxu0
  %v1394 = vadd.f32 %v945, %v1393
  %v1395 = vpop.f32.mrb[0].mxu0
  %v1396 = vpop.f32.mrb[0].mxu0
  %v1397 = vpop.f32.mrb[0].mxu0
  %1398 = vdwg.mxu0
  %1399 = vmatprep.subr.bf16.mxu0 0
  %1400 = vmatpush1.bf16.msra.mxu0 %v1247
  %1401 = vmatprep.subr.bf16.mxu0 0
  %1402 = vmatpush1.bf16.msra.mxu0 %v1248
  %1403 = vmatprep.subr.bf16.mxu0 0
  %1404 = vmatpush1.bf16.msra.mxu0 %v1249
  %1405 = vmatprep.subr.bf16.mxu0 0
  %1406 = vmatpush1.bf16.msra.mxu0 %v1250
  %1407 = vmatprep.subr.bf16.mxu0 0
  %1408 = vmatpush1.bf16.msra.mxu0 %v1251
  %1409 = vmatprep.subr.bf16.mxu0 0
  %1410 = vmatpush1.bf16.msra.mxu0 %v1252
  %1411 = vmatprep.subr.bf16.mxu0 0
  %1412 = vmatpush1.bf16.msra.mxu0 %v1253
  %1413 = vmatprep.subr.bf16.mxu0 0
  %1414 = vmatpush1.bf16.msra.mxu0 %v1254
  %1415 = vmatprep.subr.bf16.mxu0 0
  %1416 = vmatpush1.bf16.msra.mxu0 %v1255
  %1417 = vmatprep.subr.bf16.mxu0 0
  %1418 = vmatpush1.bf16.msra.mxu0 %v1256
  %1419 = vmatprep.subr.bf16.mxu0 0
  %1420 = vmatpush1.bf16.msra.mxu0 %v1257
  %1421 = vmatprep.subr.bf16.mxu0 0
  %1422 = vmatpush1.bf16.msra.mxu0 %v1258
  %1423 = vmatprep.subr.bf16.mxu0 0
  %1424 = vmatpush1.bf16.msra.mxu0 %v1259
  %1425 = vmatprep.subr.bf16.mxu0 0
  %1426 = vmatpush1.bf16.msra.mxu0 %v1260
  %1427 = vmatprep.subr.bf16.mxu0 0
  %1428 = vmatpush1.bf16.msra.mxu0 %v1261
  %1429 = vmatprep.subr.bf16.mxu0 0
  %1430 = vmatpush1.bf16.msra.mxu0 %v1262
  %1431 = vmatprep.mubr.bf16.mxu0 %v962
  %1432 = vmatmul.mubr.bf16.gmra.mrb[0].mxu0 %v961
  %v1433 = vpop.f32.mrb[0].mxu0
  %v1434 = vadd.f32 %v1394, %v1433
  %v1435 = vpop.f32.mrb[0].mxu0
  %v1436 = vpop.f32.mrb[0].mxu0
  %v1437 = vpop.f32.mrb[0].mxu0
  %1438 = vdwg.mxu0
  %1439 = vmatprep.subr.bf16.mxu0 0
  %1440 = vmatpush1.bf16.msra.mxu0 %v1263
  %1441 = vmatprep.subr.bf16.mxu0 0
  %1442 = vmatpush1.bf16.msra.mxu0 %v1264
  %1443 = vmatprep.subr.bf16.mxu0 0
  %1444 = vmatpush1.bf16.msra.mxu0 %v1265
  %1445 = vmatprep.subr.bf16.mxu0 0
  %1446 = vmatpush1.bf16.msra.mxu0 %v1266
  %1447 = vmatprep.subr.bf16.mxu0 0
  %1448 = vmatpush1.bf16.msra.mxu0 %v1267
  %1449 = vmatprep.subr.bf16.mxu0 0
  %1450 = vmatpush1.bf16.msra.mxu0 %v1268
  %1451 = vmatprep.subr.bf16.mxu0 0
  %1452 = vmatpush1.bf16.msra.mxu0 %v1269
  %1453 = vmatprep.subr.bf16.mxu0 0
  %1454 = vmatpush1.bf16.msra.mxu0 %v1270
  %1455 = vmatprep.subr.bf16.mxu0 0
  %1456 = vmatpush1.bf16.msra.mxu0 %v1271
  %1457 = vmatprep.subr.bf16.mxu0 0
  %1458 = vmatpush1.bf16.msra.mxu0 %v1272
  %1459 = vmatprep.subr.bf16.mxu0 0
  %1460 = vmatpush1.bf16.msra.mxu0 %v1273
  %1461 = vmatprep.subr.bf16.mxu0 0
  %1462 = vmatpush1.bf16.msra.mxu0 %v1274
  %1463 = vmatprep.subr.bf16.mxu0 0
  %1464 = vmatpush1.bf16.msra.mxu0 %v1275
  %1465 = vmatprep.subr.bf16.mxu0 0
  %1466 = vmatpush1.bf16.msra.mxu0 %v1276
  %1467 = vmatprep.subr.bf16.mxu0 0
  %1468 = vmatpush1.bf16.msra.mxu0 %v1277
  %1469 = vmatprep.subr.bf16.mxu0 0
  %1470 = vmatpush1.bf16.msra.mxu0 %v1278
  %1471 = vmatprep.mubr.bf16.mxu0 %v964
  %1472 = vmatmul.mubr.bf16.gmra.mrb[0].mxu0 %v963
  %v1473 = vpop.f32.mrb[0].mxu0
  %v1474 = vadd.f32 %v1434, %v1473
  %v1475 = vpop.f32.mrb[0].mxu0
  %v1476 = vpop.f32.mrb[0].mxu0
  %v1477 = vpop.f32.mrb[0].mxu0
  %1478 = vdwg.mxu0
  %1479 = vmatprep.subr.bf16.mxu0 0
  %1480 = vmatpush1.bf16.msra.mxu0 %v1279
  %1481 = vmatprep.subr.bf16.mxu0 0
  %1482 = vmatpush1.bf16.msra.mxu0 %v1280
  %1483 = vmatprep.subr.bf16.mxu0 0
  %1484 = vmatpush1.bf16.msra.mxu0 %v1281
  %1485 = vmatprep.subr.bf16.mxu0 0
  %1486 = vmatpush1.bf16.msra.mxu0 %v1282
  %1487 = vmatprep.subr.bf16.mxu0 0
  %1488 = vmatpush1.bf16.msra.mxu0 %v1283
  %1489 = vmatprep.subr.bf16.mxu0 0
  %1490 = vmatpush1.bf16.msra.mxu0 %v1284
  %1491 = vmatprep.subr.bf16.mxu0 0
  %1492 = vmatpush1.bf16.msra.mxu0 %v1285
  %1493 = vmatprep.subr.bf16.mxu0 0
  %1494 = vmatpush1.bf16.msra.mxu0 %v1286
  %1495 = vmatprep.subr.bf16.mxu0 0
  %1496 = vmatpush1.bf16.msra.mxu0 %v1287
  %1497 = vmatprep.subr.bf16.mxu0 0
  %1498 = vmatpush1.bf16.msra.mxu0 %v1288
  %1499 = vmatprep.subr.bf16.mxu0 0
  %1500 = vmatpush1.bf16.msra.mxu0 %v1289
  %1501 = vmatprep.subr.bf16.mxu0 0
  %1502 = vmatpush1.bf16.msra.mxu0 %v1290
  %1503 = vmatprep.subr.bf16.mxu0 0
  %1504 = vmatpush1.bf16.msra.mxu0 %v1291
  %1505 = vmatprep.subr.bf16.mxu0 0
  %1506 = vmatpush1.bf16.msra.mxu0 %v1292
  %1507 = vmatprep.subr.bf16.mxu0 0
  %1508 = vmatpush1.bf16.msra.mxu0 %v1293
  %1509 = vmatprep.subr.bf16.mxu0 0
  %1510 = vmatpush1.bf16.msra.mxu0 %v1294
  %1511 = vmatprep.mubr.bf16.mxu0 %v966
  %1512 = vmatmul.mubr.bf16.gmra.mrb[0].mxu0 %v965
  %v1513 = vpop.f32.mrb[0].mxu0
  %v1514 = vadd.f32 %v1474, %v1513
  %v1515 = vpop.f32.mrb[0].mxu0
  %v1516 = vpop.f32.mrb[0].mxu0
  %v1517 = vpop.f32.mrb[0].mxu0
  %1518 = vdwg.mxu0
  %v1519 = vmax.f32 %v1514, 0.0
  %v1520 = vld [vmem:[%s5] sm:$0xff]
  %v1521 = vld [vmem:[%s5 + $0x8] sm:$0xff]
  %v1522 = vld [vmem:[%s5 + $0x10] sm:$0xff]
  %v1523 = vld [vmem:[%s5 + $0x18] sm:$0xff]
  %v1524 = vld [vmem:[%s5 + $0x20] sm:$0xff]
  %v1525 = vld [vmem:[%s5 + $0x28] sm:$0xff]
  %v1526 = vld [vmem:[%s5 + $0x30] sm:$0xff]
  %v1527 = vld [vmem:[%s5 + $0x38] sm:$0xff]
  %v1528 = vld [vmem:[#allocation3] sm:$0x1]
  %v1530 = vlaneseq
  %v1531 = vshrl.u32 %v1530, 7
  %v1532 = vsub.s32 0, %v1531
  %v1533 = vrot.slane %v1528, %v1532
  %vm1535 = vcmask 523264
  %v1537 = vsel %vm1535, %v1519, 0
  %1539 = vmatprep.subr.mxu0 0.0
  %1540 = vmatpush1.msra.mxu0 %v1520
  %1541 = vmatprep.subr.mxu0 0.0
  %1542 = vmatpush1.msra.mxu0 %v1521
  %1543 = vmatprep.subr.mxu0 0.0
  %1544 = vmatpush1.msra.mxu0 %v1522
  %1545 = vmatprep.subr.mxu0 0.0
  %1546 = vmatpush1.msra.mxu0 %v1523
  %1547 = vmatprep.subr.mxu0 0.0
  %1548 = vmatpush1.msra.mxu0 %v1524
  %1549 = vmatprep.subr.mxu0 0.0
  %1550 = vmatpush1.msra.mxu0 %v1525
  %1551 = vmatprep.subr.mxu0 0.0
  %1552 = vmatpush1.msra.mxu0 %v1526
  %1553 = vmatprep.subr.mxu0 0.0
  %1554 = vmatpush1.msra.mxu0 %v1527
  %1555 = vmatprep.subr.mxu0 0.0
  %1556 = vmatpush1.msra.mxu0 0.0
  %1557 = vmatprep.subr.mxu0 0.0
  %1558 = vmatpush1.msra.mxu0 0.0
  %1559 = vmatprep.subr.mxu0 0.0
  %1560 = vmatpush1.msra.mxu0 0.0
  %1561 = vmatprep.subr.mxu0 0.0
  %1562 = vmatpush1.msra.mxu0 0.0
  %1563 = vmatprep.subr.mxu0 0.0
  %1564 = vmatpush1.msra.mxu0 0.0
  %1565 = vmatprep.subr.mxu0 0.0
  %1566 = vmatpush1.msra.mxu0 0.0
  %1567 = vmatprep.subr.mxu0 0.0
  %1568 = vmatpush1.msra.mxu0 0.0
  %1569 = vmatprep.subr.mxu0 0.0
  %1570 = vmatpush1.msra.mxu0 0.0
  %1571 = vmatprep.subr.mxu0 0.0
  %1572 = vmatpush1.msra.mxu0 0.0
  %1573 = vmatprep.subr.mxu0 0.0
  %1574 = vmatpush1.msra.mxu0 0.0
  %1575 = vmatprep.subr.mxu0 0.0
  %1576 = vmatpush1.msra.mxu0 0.0
  %1577 = vmatprep.subr.mxu0 0.0
  %1578 = vmatpush1.msra.mxu0 0.0
  %1579 = vmatprep.subr.mxu0 0.0
  %1580 = vmatpush1.msra.mxu0 0.0
  %1581 = vmatprep.subr.mxu0 0.0
  %1582 = vmatpush1.msra.mxu0 0.0
  %1583 = vmatprep.subr.mxu0 0.0
  %1584 = vmatpush1.msra.mxu0 0.0
  %1585 = vmatprep.subr.mxu0 0.0
  %1586 = vmatpush1.msra.mxu0 0.0
  %1587 = vmatprep.subr.mxu0 0.0
  %1588 = vmatpush1.msra.mxu0 0.0
  %1589 = vmatprep.subr.mxu0 0.0
  %1590 = vmatpush1.msra.mxu0 0.0
  %1591 = vmatprep.subr.mxu0 0.0
  %1592 = vmatpush1.msra.mxu0 0.0
  %1593 = vmatprep.subr.mxu0 0.0
  %1594 = vmatpush1.msra.mxu0 0.0
  %1595 = vmatprep.subr.mxu0 0.0
  %1596 = vmatpush1.msra.mxu0 0.0
  %1597 = vmatprep.subr.mxu0 0.0
  %1598 = vmatpush1.msra.mxu0 0.0
  %1599 = vmatprep.subr.mxu0 0.0
  %1600 = vmatpush1.msra.mxu0 0.0
  %1601 = vmatprep.subr.mxu0 0.0
  %1602 = vmatpush1.msra.mxu0 0.0
  %1603 = vmatprep.mubr.f32.mxu0 0.0
  %1604 = vmatmul.mubr.f32.gmra.mrb[0].mxu0 %v1537
  %v1605 = vpop.f32.mrb[0].mxu0
  %v1606 = vadd.f32 %v1533, %v1605
  %v1607 = vpop.f32.mrb[0].mxu0
  %1608 = vdwg.mxu0
  %v1609 = vsub.f32 0.0, %v1606
  %v1610 = vmul.f32 %v1609, 1.442695
  %v1611 = vpow.pop %v1610
  %v1612 = vadd.f32 %v1611, 1.0
  %v1613 = vrcp.pop %v1612
  %v1614 = vmul.f32 1.0, %v1613
  %vm1615 = vcmask 7168
  %1616 = vst.msk [vmem:[%s7] sm:$0xff] %vm1615, %v1614
  // Predicated region
  $region30: #{discriminator_forward.7} parent=0 // pred_check
    _
  $region31: #{discriminator_forward.7} parent=0 // pred_check_branch
    %1618 = sbr.rel (0) target = $region33
  $region32: #{discriminator_forward.7} parent=0 // pred_region
    _
  $region33: #{discriminator_forward.7} parent=0 // pred_fallthru
    _
  // Predicated region
  $region34: #{discriminator_forward.7} parent=0 // pred_check
    _
  $region35: #{discriminator_forward.7} parent=0 // pred_check_branch
    %1620 = sbr.rel (0) target = $region37
  $region36: #{discriminator_forward.7} parent=0 // pred_region
    _
  $region37: #{discriminator_forward.7} parent=0 // pred_fallthru
    _

</llo_original>
